<compile_context>
chip_gen: v6e
topology: v6e:2x2x1
jax: 0.10.0
libtpu: 0.0.40
codegen_flags: <defaults>
</compile_context>

<pallas_src>
import jax
import jax.numpy as jnp
from jax.experimental import pallas as pl
from jax.experimental.pallas import tpu as pltpu


# ----------------------------- fused kernel --------------------------------

def _make_fused_kernel(H, W, C1, C2):
    """Whole forward (layer1 + layer2 + NCHW flatten) for ONE image."""
    Hf, Wf = H // 2, W // 2

    def conv(pad_ref, w_ref, b_ref, *, K, base, stride, Ho, Wo, Cin, relu):
        # im2col: gather the K*K taps (strided for stride-2) from the
        # zero-padded VMEM scratch, then a single GEMM of depth K*K*Cin.
        taps = []
        for dy in range(K):
            for dx in range(K):
                if stride == 1:
                    t = pad_ref[base + dy:base + dy + Ho,
                                base + dx:base + dx + Wo, :]
                else:
                    t = pad_ref[pl.ds(base + dy, Ho, stride=stride),
                                pl.ds(base + dx, Wo, stride=stride), :]
                taps.append(t.reshape(Ho * Wo, Cin))
        col = taps[0] if len(taps) == 1 else jnp.concatenate(taps, axis=-1)
        y = jnp.dot(col.astype(jnp.bfloat16), w_ref[...],
                    preferred_element_type=jnp.float32)   # MXU, bf16 in / f32 acc
        y = y + b_ref[...]                                # folded-BN bias (f32)
        if relu:
            y = jnp.maximum(y, 0.0)
        return y                                          # (Ho*Wo, Cout) f32

    def kernel(x_ref, *rest):
        (w0, b0, w1, b1, w2, b2, w3, b3, w4, b4,
         w5, b5, w6, b6, w7, b7, w8, b8) = rest[:18]
        o_ref, pad4, pad8 = rest[18:]

        # Zero the halos once per image; interiors are fully overwritten
        # before every conv, so the borders stay zero throughout.
        pad4[...] = jnp.zeros_like(pad4)
        pad8[...] = jnp.zeros_like(pad8)

        def put4(y2d):   # stage a (H*W, C1) activation into the padded scratch
            pad4[1:1 + H, 1:1 + W, :] = y2d.reshape(H, W, C1)

        def put8(y2d):
            pad8[1:1 + Hf, 1:1 + Wf, :] = y2d.reshape(Hf, Wf, C2)

        x0 = x_ref[0].reshape(H * W, C1)

        # -------- layer1, block 0 (stride 1, identity residual) --------
        put4(x0)
        y = conv(pad4, w0, b0, K=3, base=0, stride=1, Ho=H, Wo=W, Cin=C1, relu=True)
        put4(y)
        y = conv(pad4, w1, b1, K=3, base=0, stride=1, Ho=H, Wo=W, Cin=C1, relu=False)
        a = jnp.maximum(y + x0, 0.0)

        # -------- layer1, block 1 --------
        put4(a)
        y = conv(pad4, w2, b2, K=3, base=0, stride=1, Ho=H, Wo=W, Cin=C1, relu=True)
        put4(y)
        y = conv(pad4, w3, b3, K=3, base=0, stride=1, Ho=H, Wo=W, Cin=C1, relu=False)
        b = jnp.maximum(y + a, 0.0)

        # -------- layer2, block 0 (stride 2 + 1x1 downsample projection) ----
        put4(b)
        y = conv(pad4, w4, b4, K=3, base=0, stride=2, Ho=Hf, Wo=Wf, Cin=C1, relu=True)
        ds = conv(pad4, w5, b5, K=1, base=1, stride=2, Ho=Hf, Wo=Wf, Cin=C1, relu=False)
        put8(y)
        y = conv(pad8, w6, b6, K=3, base=0, stride=1, Ho=Hf, Wo=Wf, Cin=C2, relu=False)
        c = jnp.maximum(y + ds, 0.0)

        # -------- layer2, block 1 --------
        put8(c)
        y = conv(pad8, w7, b7, K=3, base=0, stride=1, Ho=Hf, Wo=Wf, Cin=C2, relu=True)
        put8(y)
        y = conv(pad8, w8, b8, K=3, base=0, stride=1, Ho=Hf, Wo=Wf, Cin=C2, relu=False)
        d = jnp.maximum(y + c, 0.0)               # (Hf*Wf, C2)

        # nn.Flatten on NCHW == channel-major order: emit (C2, Hf*Wf) so the
        # wrapper's reshape to (N, C2*Hf*Wf) is a free row-major reshape.
        o_ref[0] = d.T

    return kernel


# ----------------------------- host wrapper ---------------------------------

def _fold_conv_bn(p):
    """Fold eval-mode BN scale into the conv weight, reshape to the im2col
    GEMM layout (K*K*Cin, Cout) in bf16; keep the additive bias in f32."""
    K, _, Cin, Cout = p["w"].shape
    w = (p["w"] * p["scale"].reshape(1, 1, 1, Cout)).reshape(K * K * Cin, Cout)
    return w.astype(jnp.bfloat16), p["bias"].reshape(1, Cout).astype(jnp.float32)


def layer2_forward(params, x_nchw):
    N, C1, H, W = x_nchw.shape
    C2 = params["layer2"][0]["conv1"]["w"].shape[-1]
    Hf, Wf = H // 2, W // 2

    x = jnp.transpose(x_nchw, (0, 2, 3, 1)).astype(jnp.float32)   # NCHW -> NHWC

    conv_params = [
        params["layer1"][0]["conv1"], params["layer1"][0]["conv2"],
        params["layer1"][1]["conv1"], params["layer1"][1]["conv2"],
        params["layer2"][0]["conv1"], params["layer2"][0]["downsample"],
        params["layer2"][0]["conv2"],
        params["layer2"][1]["conv1"], params["layer2"][1]["conv2"],
    ]

    wb_args = []
    in_specs = [pl.BlockSpec((1, H, W, C1), lambda n: (n, 0, 0, 0))]
    for p in conv_params:
        w, b = _fold_conv_bn(p)
        wb_args += [w, b]
        in_specs.append(pl.BlockSpec(w.shape, lambda n: (0, 0)))
        in_specs.append(pl.BlockSpec(b.shape, lambda n: (0, 0)))

    out = pl.pallas_call(
        _make_fused_kernel(H, W, C1, C2),
        out_shape=jax.ShapeDtypeStruct((N, C2, Hf * Wf), jnp.float32),
        grid=(N,),
        in_specs=in_specs,
        out_specs=pl.BlockSpec((1, C2, Hf * Wf), lambda n: (n, 0, 0)),
        scratch_shapes=[
            pltpu.VMEM((H + 2, W + 2, C1), jnp.float32),    # padded 16x16 acts
            pltpu.VMEM((Hf + 2, Wf + 2, C2), jnp.float32),  # padded 8x8 acts
        ],
        compiler_params=pltpu.CompilerParams(
            dimension_semantics=("parallel",)),              # shards over v7x TCs
    )(x, *wb_args)

    feat = out.reshape(N, C2 * Hf * Wf)   # already NCHW (channel-major) order
    # DoubleOutput (assumed): return the flattened features twice.
    return feat, feat


# ------------------------- pure-JAX reference -------------------------------

def _ref_conv_bn(x, p, *, stride, pad, relu, residual=None):
    y = jax.lax.conv_general_dilated(
        x, p["w"], window_strides=(stride, stride),
        padding=((pad, pad), (pad, pad)),
        dimension_numbers=("NHWC", "HWIO", "NHWC"))
    y = y * p["scale"] + p["bias"]
    if residual is not None:
        y = y + residual
    return jnp.maximum(y, 0.0) if relu else y


def _ref_block(x, p, *, stride):
    identity = x
    y = _ref_conv_bn(x, p["conv1"], stride=stride, pad=1, relu=True)
    if "downsample" in p:
        identity = _ref_conv_bn(x, p["downsample"], stride=stride, pad=0, relu=False)
    return _ref_conv_bn(y, p["conv2"], stride=1, pad=1, relu=True, residual=identity)


def layer2_forward_ref(params, x_nchw):
    x = jnp.transpose(x_nchw, (0, 2, 3, 1)).astype(jnp.float32)
    for bp in params["layer1"]:
        x = _ref_block(x, bp, stride=1)
    x = _ref_block(x, params["layer2"][0], stride=2)
    x = _ref_block(x, params["layer2"][1], stride=1)
    feat = jnp.transpose(x, (0, 3, 1, 2)).reshape(x.shape[0], -1)
    return feat, feat


# ---------------------------- deterministic init ----------------------------

def _init_conv_bn(key, k, cin, cout):
    kw, kg, kb, km, kv = jax.random.split(key, 5)
    w = 0.1 * jax.random.normal(kw, (k, k, cin, cout), jnp.float32)
    gamma = 1.0 + 0.1 * jax.random.normal(kg, (cout,), jnp.float32)
    beta = 0.1 * jax.random.normal(kb, (cout,), jnp.float32)
    mean = 0.05 * jax.random.normal(km, (cout,), jnp.float32)
    var = 1.0 + 0.1 * jax.random.uniform(kv, (cout,), jnp.float32)
    eps = 1e-5
    scale = gamma / jnp.sqrt(var + eps)     # fold eval-mode BN into an affine
    bias = beta - mean * scale
    return {"w": w, "scale": scale, "bias": bias}


def _init_basic_block(key, cin, cout, with_downsample):
    k1, k2, k3 = jax.random.split(key, 3)
    p = {"conv1": _init_conv_bn(k1, 3, cin, cout),
         "conv2": _init_conv_bn(k2, 3, cout, cout)}
    if with_downsample:
        p["downsample"] = _init_conv_bn(k3, 1, cin, cout)
    return p


if __name__ == "__main__":
    key = jax.random.PRNGKey(0)
    kx, kp = jax.random.split(key)

    N, C1, H, W = 2, 4, 16, 16          # small shapes; x is PyTorch-style NCHW
    C2 = 2 * C1

    x = jax.random.normal(kx, (N, C1, H, W), jnp.float32)

    k11, k12, k21, k22 = jax.random.split(kp, 4)
    params = {
        "layer1": [_init_basic_block(k11, C1, C1, False),
                   _init_basic_block(k12, C1, C1, False)],
        "layer2": [_init_basic_block(k21, C1, C2, True),
                   _init_basic_block(k22, C2, C2, False)],
    }

    fwd = jax.jit(layer2_forward)
    out_a, out_b = fwd(params, x)
    jax.block_until_ready((out_a, out_b))

    assert out_a.shape == (N, C2 * (H // 2) * (W // 2))
    assert out_b.shape == out_a.shape

    # Correctness vs. a pure-JAX f32 reference (bf16 MXU operands -> loose tol).
    ref_a, _ = jax.jit(layer2_forward_ref)(params, x)
    assert jnp.allclose(out_a, ref_a, rtol=5e-2, atol=5e-2)

    print("KERNEL_OK")
</pallas_src>

<mosaic_0001>
module attributes {stable_mosaic.version = 11 : i64} {
  func.func @kernel(%arg0: i32, %arg1: memref<1x16x16x4xf32, #tpu.memory_space<vmem>>, %arg2: memref<36x4xbf16, #tpu.memory_space<vmem>>, %arg3: memref<1x4xf32, #tpu.memory_space<vmem>>, %arg4: memref<36x4xbf16, #tpu.memory_space<vmem>>, %arg5: memref<1x4xf32, #tpu.memory_space<vmem>>, %arg6: memref<36x4xbf16, #tpu.memory_space<vmem>>, %arg7: memref<1x4xf32, #tpu.memory_space<vmem>>, %arg8: memref<36x4xbf16, #tpu.memory_space<vmem>>, %arg9: memref<1x4xf32, #tpu.memory_space<vmem>>, %arg10: memref<36x8xbf16, #tpu.memory_space<vmem>>, %arg11: memref<1x8xf32, #tpu.memory_space<vmem>>, %arg12: memref<4x8xbf16, #tpu.memory_space<vmem>>, %arg13: memref<1x8xf32, #tpu.memory_space<vmem>>, %arg14: memref<72x8xbf16, #tpu.memory_space<vmem>>, %arg15: memref<1x8xf32, #tpu.memory_space<vmem>>, %arg16: memref<72x8xbf16, #tpu.memory_space<vmem>>, %arg17: memref<1x8xf32, #tpu.memory_space<vmem>>, %arg18: memref<72x8xbf16, #tpu.memory_space<vmem>>, %arg19: memref<1x8xf32, #tpu.memory_space<vmem>>, %arg20: memref<1x8x64xf32, #tpu.memory_space<vmem>>, %arg21: memref<18x18x4xf32, #tpu.memory_space<vmem>>, %arg22: memref<10x10x8xf32, #tpu.memory_space<vmem>>) attributes {dimension_semantics = [#tpu.dimension_semantics<parallel>], iteration_bounds = array<i64: 2>, scalar_prefetch = 0 : i64, scratch_operands = 2 : i64, tpu.core_type = #tpu.core_type<tc>, window_params = [{transform_indices = @transform_0, window_bounds = array<i64: 1, 16, 16, 4>}, {pipeline_mode = #tpu.pipeline_mode<synchronous>, transform_indices = @transform_1, window_bounds = array<i64: 36, 4>}, {pipeline_mode = #tpu.pipeline_mode<synchronous>, transform_indices = @transform_2, window_bounds = array<i64: 1, 4>}, {pipeline_mode = #tpu.pipeline_mode<synchronous>, transform_indices = @transform_3, window_bounds = array<i64: 36, 4>}, {pipeline_mode = #tpu.pipeline_mode<synchronous>, transform_indices = @transform_4, window_bounds = array<i64: 1, 4>}, {pipeline_mode = #tpu.pipeline_mode<synchronous>, transform_indices = @transform_5, window_bounds = array<i64: 36, 4>}, {pipeline_mode = #tpu.pipeline_mode<synchronous>, transform_indices = @transform_6, window_bounds = array<i64: 1, 4>}, {pipeline_mode = #tpu.pipeline_mode<synchronous>, transform_indices = @transform_7, window_bounds = array<i64: 36, 4>}, {pipeline_mode = #tpu.pipeline_mode<synchronous>, transform_indices = @transform_8, window_bounds = array<i64: 1, 4>}, {pipeline_mode = #tpu.pipeline_mode<synchronous>, transform_indices = @transform_9, window_bounds = array<i64: 36, 8>}, {pipeline_mode = #tpu.pipeline_mode<synchronous>, transform_indices = @transform_10, window_bounds = array<i64: 1, 8>}, {pipeline_mode = #tpu.pipeline_mode<synchronous>, transform_indices = @transform_11, window_bounds = array<i64: 4, 8>}, {pipeline_mode = #tpu.pipeline_mode<synchronous>, transform_indices = @transform_12, window_bounds = array<i64: 1, 8>}, {pipeline_mode = #tpu.pipeline_mode<synchronous>, transform_indices = @transform_13, window_bounds = array<i64: 72, 8>}, {pipeline_mode = #tpu.pipeline_mode<synchronous>, transform_indices = @transform_14, window_bounds = array<i64: 1, 8>}, {pipeline_mode = #tpu.pipeline_mode<synchronous>, transform_indices = @transform_15, window_bounds = array<i64: 72, 8>}, {pipeline_mode = #tpu.pipeline_mode<synchronous>, transform_indices = @transform_16, window_bounds = array<i64: 1, 8>}, {pipeline_mode = #tpu.pipeline_mode<synchronous>, transform_indices = @transform_17, window_bounds = array<i64: 72, 8>}, {pipeline_mode = #tpu.pipeline_mode<synchronous>, transform_indices = @transform_18, window_bounds = array<i64: 1, 8>}, {transform_indices = @transform_19, window_bounds = array<i64: 1, 8, 64>}]} {
    %cst = arith.constant 0.000000e+00 : f32
    %0 = vector.broadcast %cst : f32 to vector<18x18x4xf32>
    %c0 = arith.constant 0 : index
    %c0_0 = arith.constant 0 : index
    %c0_1 = arith.constant 0 : index
    %1 = vector.load %arg21[%c0, %c0_0, %c0_1] : memref<18x18x4xf32, #tpu.memory_space<vmem>>, vector<18x18x4xf32>
    tpu.vector_store %arg21[%c0, %c0_0, %c0_1], %0 {strides = array<i32>} : memref<18x18x4xf32, #tpu.memory_space<vmem>>, vector<18x18x4xf32>,
    %cst_2 = arith.constant 0.000000e+00 : f32
    %2 = vector.broadcast %cst_2 : f32 to vector<10x10x8xf32>
    %c0_3 = arith.constant 0 : index
    %c0_4 = arith.constant 0 : index
    %c0_5 = arith.constant 0 : index
    %3 = vector.load %arg22[%c0_3, %c0_4, %c0_5] : memref<10x10x8xf32, #tpu.memory_space<vmem>>, vector<10x10x8xf32>
    tpu.vector_store %arg22[%c0_3, %c0_4, %c0_5], %2 {strides = array<i32>} : memref<10x10x8xf32, #tpu.memory_space<vmem>>, vector<10x10x8xf32>,
    %c0_6 = arith.constant 0 : index
    %c0_7 = arith.constant 0 : index
    %c0_8 = arith.constant 0 : index
    %c0_9 = arith.constant 0 : index
    %4 = vector.load %arg1[%c0_6, %c0_7, %c0_8, %c0_9] : memref<1x16x16x4xf32, #tpu.memory_space<vmem>>, vector<1x16x16x4xf32>
    %5 = vector.shape_cast %4 : vector<1x16x16x4xf32> to vector<16x16x4xf32>
    %6 = vector.shape_cast %5 : vector<16x16x4xf32> to vector<256x4xf32>
    %7 = vector.shape_cast %6 : vector<256x4xf32> to vector<16x16x4xf32>
    %c1 = arith.constant 1 : index
    %c1_10 = arith.constant 1 : index
    %c0_11 = arith.constant 0 : index
    %8 = vector.load %arg21[%c1, %c1_10, %c0_11] : memref<18x18x4xf32, #tpu.memory_space<vmem>>, vector<16x16x4xf32>
    tpu.vector_store %arg21[%c1, %c1_10, %c0_11], %7 {strides = array<i32>} : memref<18x18x4xf32, #tpu.memory_space<vmem>>, vector<16x16x4xf32>,
    %c0_12 = arith.constant 0 : index
    %c0_13 = arith.constant 0 : index
    %c0_14 = arith.constant 0 : index
    %9 = vector.load %arg21[%c0_12, %c0_13, %c0_14] : memref<18x18x4xf32, #tpu.memory_space<vmem>>, vector<16x16x4xf32>
    %10 = vector.shape_cast %9 : vector<16x16x4xf32> to vector<256x4xf32>
    %c0_15 = arith.constant 0 : index
    %c1_16 = arith.constant 1 : index
    %c0_17 = arith.constant 0 : index
    %11 = vector.load %arg21[%c0_15, %c1_16, %c0_17] : memref<18x18x4xf32, #tpu.memory_space<vmem>>, vector<16x16x4xf32>
    %12 = vector.shape_cast %11 : vector<16x16x4xf32> to vector<256x4xf32>
    %c0_18 = arith.constant 0 : index
    %c2 = arith.constant 2 : index
    %c0_19 = arith.constant 0 : index
    %13 = vector.load %arg21[%c0_18, %c2, %c0_19] : memref<18x18x4xf32, #tpu.memory_space<vmem>>, vector<16x16x4xf32>
    %14 = vector.shape_cast %13 : vector<16x16x4xf32> to vector<256x4xf32>
    %c1_20 = arith.constant 1 : index
    %c0_21 = arith.constant 0 : index
    %c0_22 = arith.constant 0 : index
    %15 = vector.load %arg21[%c1_20, %c0_21, %c0_22] : memref<18x18x4xf32, #tpu.memory_space<vmem>>, vector<16x16x4xf32>
    %16 = vector.shape_cast %15 : vector<16x16x4xf32> to vector<256x4xf32>
    %c1_23 = arith.constant 1 : index
    %c1_24 = arith.constant 1 : index
    %c0_25 = arith.constant 0 : index
    %17 = vector.load %arg21[%c1_23, %c1_24, %c0_25] : memref<18x18x4xf32, #tpu.memory_space<vmem>>, vector<16x16x4xf32>
    %18 = vector.shape_cast %17 : vector<16x16x4xf32> to vector<256x4xf32>
    %c1_26 = arith.constant 1 : index
    %c2_27 = arith.constant 2 : index
    %c0_28 = arith.constant 0 : index
    %19 = vector.load %arg21[%c1_26, %c2_27, %c0_28] : memref<18x18x4xf32, #tpu.memory_space<vmem>>, vector<16x16x4xf32>
    %20 = vector.shape_cast %19 : vector<16x16x4xf32> to vector<256x4xf32>
    %c2_29 = arith.constant 2 : index
    %c0_30 = arith.constant 0 : index
    %c0_31 = arith.constant 0 : index
    %21 = vector.load %arg21[%c2_29, %c0_30, %c0_31] : memref<18x18x4xf32, #tpu.memory_space<vmem>>, vector<16x16x4xf32>
    %22 = vector.shape_cast %21 : vector<16x16x4xf32> to vector<256x4xf32>
    %c2_32 = arith.constant 2 : index
    %c1_33 = arith.constant 1 : index
    %c0_34 = arith.constant 0 : index
    %23 = vector.load %arg21[%c2_32, %c1_33, %c0_34] : memref<18x18x4xf32, #tpu.memory_space<vmem>>, vector<16x16x4xf32>
    %24 = vector.shape_cast %23 : vector<16x16x4xf32> to vector<256x4xf32>
    %c2_35 = arith.constant 2 : index
    %c2_36 = arith.constant 2 : index
    %c0_37 = arith.constant 0 : index
    %25 = vector.load %arg21[%c2_35, %c2_36, %c0_37] : memref<18x18x4xf32, #tpu.memory_space<vmem>>, vector<16x16x4xf32>
    %26 = vector.shape_cast %25 : vector<16x16x4xf32> to vector<256x4xf32>
    %27 = tpu.concatenate %10, %12, %14, %16, %18, %20, %22, %24, %26 in 1 : vector<256x4xf32>, vector<256x4xf32>, vector<256x4xf32>, vector<256x4xf32>, vector<256x4xf32>, vector<256x4xf32>, vector<256x4xf32>, vector<256x4xf32>, vector<256x4xf32> -> vector<256x36xf32>
    %28 = arith.truncf %27 : vector<256x36xf32> to vector<256x36xbf16>
    %c0_38 = arith.constant 0 : index
    %c0_39 = arith.constant 0 : index
    %29 = vector.load %arg2[%c0_38, %c0_39] : memref<36x4xbf16, #tpu.memory_space<vmem>>, vector<36x4xbf16>
    %cst_40 = arith.constant dense<0.000000e+00> : vector<256x4xf32>
    %30 = tpu.matmul %28, %29, %cst_40 {dimension_numbers = #tpu.dot_dimension_numbers<[1], [0], [0], [1], [0, 0, 1, 1], [], []>} : vector<256x36xbf16>, vector<36x4xbf16>, vector<256x4xf32> -> vector<256x4xf32>
    %c0_41 = arith.constant 0 : index
    %c0_42 = arith.constant 0 : index
    %31 = vector.load %arg3[%c0_41, %c0_42] : memref<1x4xf32, #tpu.memory_space<vmem>>, vector<1x4xf32>
    %32 = vector.broadcast %31 : vector<1x4xf32> to vector<256x4xf32>
    %33 = arith.addf %30, %32 : vector<256x4xf32>
    %cst_43 = arith.constant 0.000000e+00 : f32
    %34 = vector.broadcast %cst_43 : f32 to vector<256x4xf32>
    %35 = arith.maximumf %33, %34 : vector<256x4xf32>
    %36 = vector.shape_cast %35 : vector<256x4xf32> to vector<16x16x4xf32>
    %c1_44 = arith.constant 1 : index
    %c1_45 = arith.constant 1 : index
    %c0_46 = arith.constant 0 : index
    %37 = vector.load %arg21[%c1_44, %c1_45, %c0_46] : memref<18x18x4xf32, #tpu.memory_space<vmem>>, vector<16x16x4xf32>
    tpu.vector_store %arg21[%c1_44, %c1_45, %c0_46], %36 {strides = array<i32>} : memref<18x18x4xf32, #tpu.memory_space<vmem>>, vector<16x16x4xf32>,
    %c0_47 = arith.constant 0 : index
    %c0_48 = arith.constant 0 : index
    %c0_49 = arith.constant 0 : index
    %38 = vector.load %arg21[%c0_47, %c0_48, %c0_49] : memref<18x18x4xf32, #tpu.memory_space<vmem>>, vector<16x16x4xf32>
    %39 = vector.shape_cast %38 : vector<16x16x4xf32> to vector<256x4xf32>
    %c0_50 = arith.constant 0 : index
    %c1_51 = arith.constant 1 : index
    %c0_52 = arith.constant 0 : index
    %40 = vector.load %arg21[%c0_50, %c1_51, %c0_52] : memref<18x18x4xf32, #tpu.memory_space<vmem>>, vector<16x16x4xf32>
    %41 = vector.shape_cast %40 : vector<16x16x4xf32> to vector<256x4xf32>
    %c0_53 = arith.constant 0 : index
    %c2_54 = arith.constant 2 : index
    %c0_55 = arith.constant 0 : index
    %42 = vector.load %arg21[%c0_53, %c2_54, %c0_55] : memref<18x18x4xf32, #tpu.memory_space<vmem>>, vector<16x16x4xf32>
    %43 = vector.shape_cast %42 : vector<16x16x4xf32> to vector<256x4xf32>
    %c1_56 = arith.constant 1 : index
    %c0_57 = arith.constant 0 : index
    %c0_58 = arith.constant 0 : index
    %44 = vector.load %arg21[%c1_56, %c0_57, %c0_58] : memref<18x18x4xf32, #tpu.memory_space<vmem>>, vector<16x16x4xf32>
    %45 = vector.shape_cast %44 : vector<16x16x4xf32> to vector<256x4xf32>
    %c1_59 = arith.constant 1 : index
    %c1_60 = arith.constant 1 : index
    %c0_61 = arith.constant 0 : index
    %46 = vector.load %arg21[%c1_59, %c1_60, %c0_61] : memref<18x18x4xf32, #tpu.memory_space<vmem>>, vector<16x16x4xf32>
    %47 = vector.shape_cast %46 : vector<16x16x4xf32> to vector<256x4xf32>
    %c1_62 = arith.constant 1 : index
    %c2_63 = arith.constant 2 : index
    %c0_64 = arith.constant 0 : index
    %48 = vector.load %arg21[%c1_62, %c2_63, %c0_64] : memref<18x18x4xf32, #tpu.memory_space<vmem>>, vector<16x16x4xf32>
    %49 = vector.shape_cast %48 : vector<16x16x4xf32> to vector<256x4xf32>
    %c2_65 = arith.constant 2 : index
    %c0_66 = arith.constant 0 : index
    %c0_67 = arith.constant 0 : index
    %50 = vector.load %arg21[%c2_65, %c0_66, %c0_67] : memref<18x18x4xf32, #tpu.memory_space<vmem>>, vector<16x16x4xf32>
    %51 = vector.shape_cast %50 : vector<16x16x4xf32> to vector<256x4xf32>
    %c2_68 = arith.constant 2 : index
    %c1_69 = arith.constant 1 : index
    %c0_70 = arith.constant 0 : index
    %52 = vector.load %arg21[%c2_68, %c1_69, %c0_70] : memref<18x18x4xf32, #tpu.memory_space<vmem>>, vector<16x16x4xf32>
    %53 = vector.shape_cast %52 : vector<16x16x4xf32> to vector<256x4xf32>
    %c2_71 = arith.constant 2 : index
    %c2_72 = arith.constant 2 : index
    %c0_73 = arith.constant 0 : index
    %54 = vector.load %arg21[%c2_71, %c2_72, %c0_73] : memref<18x18x4xf32, #tpu.memory_space<vmem>>, vector<16x16x4xf32>
    %55 = vector.shape_cast %54 : vector<16x16x4xf32> to vector<256x4xf32>
    %56 = tpu.concatenate %39, %41, %43, %45, %47, %49, %51, %53, %55 in 1 : vector<256x4xf32>, vector<256x4xf32>, vector<256x4xf32>, vector<256x4xf32>, vector<256x4xf32>, vector<256x4xf32>, vector<256x4xf32>, vector<256x4xf32>, vector<256x4xf32> -> vector<256x36xf32>
    %57 = arith.truncf %56 : vector<256x36xf32> to vector<256x36xbf16>
    %c0_74 = arith.constant 0 : index
    %c0_75 = arith.constant 0 : index
    %58 = vector.load %arg4[%c0_74, %c0_75] : memref<36x4xbf16, #tpu.memory_space<vmem>>, vector<36x4xbf16>
    %cst_76 = arith.constant dense<0.000000e+00> : vector<256x4xf32>
    %59 = tpu.matmul %57, %58, %cst_76 {dimension_numbers = #tpu.dot_dimension_numbers<[1], [0], [0], [1], [0, 0, 1, 1], [], []>} : vector<256x36xbf16>, vector<36x4xbf16>, vector<256x4xf32> -> vector<256x4xf32>
    %c0_77 = arith.constant 0 : index
    %c0_78 = arith.constant 0 : index
    %60 = vector.load %arg5[%c0_77, %c0_78] : memref<1x4xf32, #tpu.memory_space<vmem>>, vector<1x4xf32>
    %61 = vector.broadcast %60 : vector<1x4xf32> to vector<256x4xf32>
    %62 = arith.addf %59, %61 : vector<256x4xf32>
    %63 = arith.addf %62, %6 : vector<256x4xf32>
    %cst_79 = arith.constant 0.000000e+00 : f32
    %64 = vector.broadcast %cst_79 : f32 to vector<256x4xf32>
    %65 = arith.maximumf %63, %64 : vector<256x4xf32>
    %66 = vector.shape_cast %65 : vector<256x4xf32> to vector<16x16x4xf32>
    %c1_80 = arith.constant 1 : index
    %c1_81 = arith.constant 1 : index
    %c0_82 = arith.constant 0 : index
    %67 = vector.load %arg21[%c1_80, %c1_81, %c0_82] : memref<18x18x4xf32, #tpu.memory_space<vmem>>, vector<16x16x4xf32>
    tpu.vector_store %arg21[%c1_80, %c1_81, %c0_82], %66 {strides = array<i32>} : memref<18x18x4xf32, #tpu.memory_space<vmem>>, vector<16x16x4xf32>,
    %c0_83 = arith.constant 0 : index
    %c0_84 = arith.constant 0 : index
    %c0_85 = arith.constant 0 : index
    %68 = vector.load %arg21[%c0_83, %c0_84, %c0_85] : memref<18x18x4xf32, #tpu.memory_space<vmem>>, vector<16x16x4xf32>
    %69 = vector.shape_cast %68 : vector<16x16x4xf32> to vector<256x4xf32>
    %c0_86 = arith.constant 0 : index
    %c1_87 = arith.constant 1 : index
    %c0_88 = arith.constant 0 : index
    %70 = vector.load %arg21[%c0_86, %c1_87, %c0_88] : memref<18x18x4xf32, #tpu.memory_space<vmem>>, vector<16x16x4xf32>
    %71 = vector.shape_cast %70 : vector<16x16x4xf32> to vector<256x4xf32>
    %c0_89 = arith.constant 0 : index
    %c2_90 = arith.constant 2 : index
    %c0_91 = arith.constant 0 : index
    %72 = vector.load %arg21[%c0_89, %c2_90, %c0_91] : memref<18x18x4xf32, #tpu.memory_space<vmem>>, vector<16x16x4xf32>
    %73 = vector.shape_cast %72 : vector<16x16x4xf32> to vector<256x4xf32>
    %c1_92 = arith.constant 1 : index
    %c0_93 = arith.constant 0 : index
    %c0_94 = arith.constant 0 : index
    %74 = vector.load %arg21[%c1_92, %c0_93, %c0_94] : memref<18x18x4xf32, #tpu.memory_space<vmem>>, vector<16x16x4xf32>
    %75 = vector.shape_cast %74 : vector<16x16x4xf32> to vector<256x4xf32>
    %c1_95 = arith.constant 1 : index
    %c1_96 = arith.constant 1 : index
    %c0_97 = arith.constant 0 : index
    %76 = vector.load %arg21[%c1_95, %c1_96, %c0_97] : memref<18x18x4xf32, #tpu.memory_space<vmem>>, vector<16x16x4xf32>
    %77 = vector.shape_cast %76 : vector<16x16x4xf32> to vector<256x4xf32>
    %c1_98 = arith.constant 1 : index
    %c2_99 = arith.constant 2 : index
    %c0_100 = arith.constant 0 : index
    %78 = vector.load %arg21[%c1_98, %c2_99, %c0_100] : memref<18x18x4xf32, #tpu.memory_space<vmem>>, vector<16x16x4xf32>
    %79 = vector.shape_cast %78 : vector<16x16x4xf32> to vector<256x4xf32>
    %c2_101 = arith.constant 2 : index
    %c0_102 = arith.constant 0 : index
    %c0_103 = arith.constant 0 : index
    %80 = vector.load %arg21[%c2_101, %c0_102, %c0_103] : memref<18x18x4xf32, #tpu.memory_space<vmem>>, vector<16x16x4xf32>
    %81 = vector.shape_cast %80 : vector<16x16x4xf32> to vector<256x4xf32>
    %c2_104 = arith.constant 2 : index
    %c1_105 = arith.constant 1 : index
    %c0_106 = arith.constant 0 : index
    %82 = vector.load %arg21[%c2_104, %c1_105, %c0_106] : memref<18x18x4xf32, #tpu.memory_space<vmem>>, vector<16x16x4xf32>
    %83 = vector.shape_cast %82 : vector<16x16x4xf32> to vector<256x4xf32>
    %c2_107 = arith.constant 2 : index
    %c2_108 = arith.constant 2 : index
    %c0_109 = arith.constant 0 : index
    %84 = vector.load %arg21[%c2_107, %c2_108, %c0_109] : memref<18x18x4xf32, #tpu.memory_space<vmem>>, vector<16x16x4xf32>
    %85 = vector.shape_cast %84 : vector<16x16x4xf32> to vector<256x4xf32>
    %86 = tpu.concatenate %69, %71, %73, %75, %77, %79, %81, %83, %85 in 1 : vector<256x4xf32>, vector<256x4xf32>, vector<256x4xf32>, vector<256x4xf32>, vector<256x4xf32>, vector<256x4xf32>, vector<256x4xf32>, vector<256x4xf32>, vector<256x4xf32> -> vector<256x36xf32>
    %87 = arith.truncf %86 : vector<256x36xf32> to vector<256x36xbf16>
    %c0_110 = arith.constant 0 : index
    %c0_111 = arith.constant 0 : index
    %88 = vector.load %arg6[%c0_110, %c0_111] : memref<36x4xbf16, #tpu.memory_space<vmem>>, vector<36x4xbf16>
    %cst_112 = arith.constant dense<0.000000e+00> : vector<256x4xf32>
    %89 = tpu.matmul %87, %88, %cst_112 {dimension_numbers = #tpu.dot_dimension_numbers<[1], [0], [0], [1], [0, 0, 1, 1], [], []>} : vector<256x36xbf16>, vector<36x4xbf16>, vector<256x4xf32> -> vector<256x4xf32>
    %c0_113 = arith.constant 0 : index
    %c0_114 = arith.constant 0 : index
    %90 = vector.load %arg7[%c0_113, %c0_114] : memref<1x4xf32, #tpu.memory_space<vmem>>, vector<1x4xf32>
    %91 = vector.broadcast %90 : vector<1x4xf32> to vector<256x4xf32>
    %92 = arith.addf %89, %91 : vector<256x4xf32>
    %cst_115 = arith.constant 0.000000e+00 : f32
    %93 = vector.broadcast %cst_115 : f32 to vector<256x4xf32>
    %94 = arith.maximumf %92, %93 : vector<256x4xf32>
    %95 = vector.shape_cast %94 : vector<256x4xf32> to vector<16x16x4xf32>
    %c1_116 = arith.constant 1 : index
    %c1_117 = arith.constant 1 : index
    %c0_118 = arith.constant 0 : index
    %96 = vector.load %arg21[%c1_116, %c1_117, %c0_118] : memref<18x18x4xf32, #tpu.memory_space<vmem>>, vector<16x16x4xf32>
    tpu.vector_store %arg21[%c1_116, %c1_117, %c0_118], %95 {strides = array<i32>} : memref<18x18x4xf32, #tpu.memory_space<vmem>>, vector<16x16x4xf32>,
    %c0_119 = arith.constant 0 : index
    %c0_120 = arith.constant 0 : index
    %c0_121 = arith.constant 0 : index
    %97 = vector.load %arg21[%c0_119, %c0_120, %c0_121] : memref<18x18x4xf32, #tpu.memory_space<vmem>>, vector<16x16x4xf32>
    %98 = vector.shape_cast %97 : vector<16x16x4xf32> to vector<256x4xf32>
    %c0_122 = arith.constant 0 : index
    %c1_123 = arith.constant 1 : index
    %c0_124 = arith.constant 0 : index
    %99 = vector.load %arg21[%c0_122, %c1_123, %c0_124] : memref<18x18x4xf32, #tpu.memory_space<vmem>>, vector<16x16x4xf32>
    %100 = vector.shape_cast %99 : vector<16x16x4xf32> to vector<256x4xf32>
    %c0_125 = arith.constant 0 : index
    %c2_126 = arith.constant 2 : index
    %c0_127 = arith.constant 0 : index
    %101 = vector.load %arg21[%c0_125, %c2_126, %c0_127] : memref<18x18x4xf32, #tpu.memory_space<vmem>>, vector<16x16x4xf32>
    %102 = vector.shape_cast %101 : vector<16x16x4xf32> to vector<256x4xf32>
    %c1_128 = arith.constant 1 : index
    %c0_129 = arith.constant 0 : index
    %c0_130 = arith.constant 0 : index
    %103 = vector.load %arg21[%c1_128, %c0_129, %c0_130] : memref<18x18x4xf32, #tpu.memory_space<vmem>>, vector<16x16x4xf32>
    %104 = vector.shape_cast %103 : vector<16x16x4xf32> to vector<256x4xf32>
    %c1_131 = arith.constant 1 : index
    %c1_132 = arith.constant 1 : index
    %c0_133 = arith.constant 0 : index
    %105 = vector.load %arg21[%c1_131, %c1_132, %c0_133] : memref<18x18x4xf32, #tpu.memory_space<vmem>>, vector<16x16x4xf32>
    %106 = vector.shape_cast %105 : vector<16x16x4xf32> to vector<256x4xf32>
    %c1_134 = arith.constant 1 : index
    %c2_135 = arith.constant 2 : index
    %c0_136 = arith.constant 0 : index
    %107 = vector.load %arg21[%c1_134, %c2_135, %c0_136] : memref<18x18x4xf32, #tpu.memory_space<vmem>>, vector<16x16x4xf32>
    %108 = vector.shape_cast %107 : vector<16x16x4xf32> to vector<256x4xf32>
    %c2_137 = arith.constant 2 : index
    %c0_138 = arith.constant 0 : index
    %c0_139 = arith.constant 0 : index
    %109 = vector.load %arg21[%c2_137, %c0_138, %c0_139] : memref<18x18x4xf32, #tpu.memory_space<vmem>>, vector<16x16x4xf32>
    %110 = vector.shape_cast %109 : vector<16x16x4xf32> to vector<256x4xf32>
    %c2_140 = arith.constant 2 : index
    %c1_141 = arith.constant 1 : index
    %c0_142 = arith.constant 0 : index
    %111 = vector.load %arg21[%c2_140, %c1_141, %c0_142] : memref<18x18x4xf32, #tpu.memory_space<vmem>>, vector<16x16x4xf32>
    %112 = vector.shape_cast %111 : vector<16x16x4xf32> to vector<256x4xf32>
    %c2_143 = arith.constant 2 : index
    %c2_144 = arith.constant 2 : index
    %c0_145 = arith.constant 0 : index
    %113 = vector.load %arg21[%c2_143, %c2_144, %c0_145] : memref<18x18x4xf32, #tpu.memory_space<vmem>>, vector<16x16x4xf32>
    %114 = vector.shape_cast %113 : vector<16x16x4xf32> to vector<256x4xf32>
    %115 = tpu.concatenate %98, %100, %102, %104, %106, %108, %110, %112, %114 in 1 : vector<256x4xf32>, vector<256x4xf32>, vector<256x4xf32>, vector<256x4xf32>, vector<256x4xf32>, vector<256x4xf32>, vector<256x4xf32>, vector<256x4xf32>, vector<256x4xf32> -> vector<256x36xf32>
    %116 = arith.truncf %115 : vector<256x36xf32> to vector<256x36xbf16>
    %c0_146 = arith.constant 0 : index
    %c0_147 = arith.constant 0 : index
    %117 = vector.load %arg8[%c0_146, %c0_147] : memref<36x4xbf16, #tpu.memory_space<vmem>>, vector<36x4xbf16>
    %cst_148 = arith.constant dense<0.000000e+00> : vector<256x4xf32>
    %118 = tpu.matmul %116, %117, %cst_148 {dimension_numbers = #tpu.dot_dimension_numbers<[1], [0], [0], [1], [0, 0, 1, 1], [], []>} : vector<256x36xbf16>, vector<36x4xbf16>, vector<256x4xf32> -> vector<256x4xf32>
    %c0_149 = arith.constant 0 : index
    %c0_150 = arith.constant 0 : index
    %119 = vector.load %arg9[%c0_149, %c0_150] : memref<1x4xf32, #tpu.memory_space<vmem>>, vector<1x4xf32>
    %120 = vector.broadcast %119 : vector<1x4xf32> to vector<256x4xf32>
    %121 = arith.addf %118, %120 : vector<256x4xf32>
    %122 = arith.addf %121, %65 : vector<256x4xf32>
    %cst_151 = arith.constant 0.000000e+00 : f32
    %123 = vector.broadcast %cst_151 : f32 to vector<256x4xf32>
    %124 = arith.maximumf %122, %123 : vector<256x4xf32>
    %125 = vector.shape_cast %124 : vector<256x4xf32> to vector<16x16x4xf32>
    %c1_152 = arith.constant 1 : index
    %c1_153 = arith.constant 1 : index
    %c0_154 = arith.constant 0 : index
    %126 = vector.load %arg21[%c1_152, %c1_153, %c0_154] : memref<18x18x4xf32, #tpu.memory_space<vmem>>, vector<16x16x4xf32>
    tpu.vector_store %arg21[%c1_152, %c1_153, %c0_154], %125 {strides = array<i32>} : memref<18x18x4xf32, #tpu.memory_space<vmem>>, vector<16x16x4xf32>,
    %c0_155 = arith.constant 0 : index
    %c0_156 = arith.constant 0 : index
    %c0_157 = arith.constant 0 : index
    %127 = tpu.strided_load %arg21[%c0_155, %c0_156, %c0_157] {strides = array<i32: 2, 2, 1>} : memref<18x18x4xf32, #tpu.memory_space<vmem>>, vector<8x8x4xf32>
    %128 = vector.shape_cast %127 : vector<8x8x4xf32> to vector<64x4xf32>
    %c0_158 = arith.constant 0 : index
    %c1_159 = arith.constant 1 : index
    %c0_160 = arith.constant 0 : index
    %129 = tpu.strided_load %arg21[%c0_158, %c1_159, %c0_160] {strides = array<i32: 2, 2, 1>} : memref<18x18x4xf32, #tpu.memory_space<vmem>>, vector<8x8x4xf32>
    %130 = vector.shape_cast %129 : vector<8x8x4xf32> to vector<64x4xf32>
    %c0_161 = arith.constant 0 : index
    %c2_162 = arith.constant 2 : index
    %c0_163 = arith.constant 0 : index
    %131 = tpu.strided_load %arg21[%c0_161, %c2_162, %c0_163] {strides = array<i32: 2, 2, 1>} : memref<18x18x4xf32, #tpu.memory_space<vmem>>, vector<8x8x4xf32>
    %132 = vector.shape_cast %131 : vector<8x8x4xf32> to vector<64x4xf32>
    %c1_164 = arith.constant 1 : index
    %c0_165 = arith.constant 0 : index
    %c0_166 = arith.constant 0 : index
    %133 = tpu.strided_load %arg21[%c1_164, %c0_165, %c0_166] {strides = array<i32: 2, 2, 1>} : memref<18x18x4xf32, #tpu.memory_space<vmem>>, vector<8x8x4xf32>
    %134 = vector.shape_cast %133 : vector<8x8x4xf32> to vector<64x4xf32>
    %c1_167 = arith.constant 1 : index
    %c1_168 = arith.constant 1 : index
    %c0_169 = arith.constant 0 : index
    %135 = tpu.strided_load %arg21[%c1_167, %c1_168, %c0_169] {strides = array<i32: 2, 2, 1>} : memref<18x18x4xf32, #tpu.memory_space<vmem>>, vector<8x8x4xf32>
    %136 = vector.shape_cast %135 : vector<8x8x4xf32> to vector<64x4xf32>
    %c1_170 = arith.constant 1 : index
    %c2_171 = arith.constant 2 : index
    %c0_172 = arith.constant 0 : index
    %137 = tpu.strided_load %arg21[%c1_170, %c2_171, %c0_172] {strides = array<i32: 2, 2, 1>} : memref<18x18x4xf32, #tpu.memory_space<vmem>>, vector<8x8x4xf32>
    %138 = vector.shape_cast %137 : vector<8x8x4xf32> to vector<64x4xf32>
    %c2_173 = arith.constant 2 : index
    %c0_174 = arith.constant 0 : index
    %c0_175 = arith.constant 0 : index
    %139 = tpu.strided_load %arg21[%c2_173, %c0_174, %c0_175] {strides = array<i32: 2, 2, 1>} : memref<18x18x4xf32, #tpu.memory_space<vmem>>, vector<8x8x4xf32>
    %140 = vector.shape_cast %139 : vector<8x8x4xf32> to vector<64x4xf32>
    %c2_176 = arith.constant 2 : index
    %c1_177 = arith.constant 1 : index
    %c0_178 = arith.constant 0 : index
    %141 = tpu.strided_load %arg21[%c2_176, %c1_177, %c0_178] {strides = array<i32: 2, 2, 1>} : memref<18x18x4xf32, #tpu.memory_space<vmem>>, vector<8x8x4xf32>
    %142 = vector.shape_cast %141 : vector<8x8x4xf32> to vector<64x4xf32>
    %c2_179 = arith.constant 2 : index
    %c2_180 = arith.constant 2 : index
    %c0_181 = arith.constant 0 : index
    %143 = tpu.strided_load %arg21[%c2_179, %c2_180, %c0_181] {strides = array<i32: 2, 2, 1>} : memref<18x18x4xf32, #tpu.memory_space<vmem>>, vector<8x8x4xf32>
    %144 = vector.shape_cast %143 : vector<8x8x4xf32> to vector<64x4xf32>
    %145 = tpu.concatenate %128, %130, %132, %134, %136, %138, %140, %142, %144 in 1 : vector<64x4xf32>, vector<64x4xf32>, vector<64x4xf32>, vector<64x4xf32>, vector<64x4xf32>, vector<64x4xf32>, vector<64x4xf32>, vector<64x4xf32>, vector<64x4xf32> -> vector<64x36xf32>
    %146 = arith.truncf %145 : vector<64x36xf32> to vector<64x36xbf16>
    %c0_182 = arith.constant 0 : index
    %c0_183 = arith.constant 0 : index
    %147 = vector.load %arg10[%c0_182, %c0_183] : memref<36x8xbf16, #tpu.memory_space<vmem>>, vector<36x8xbf16>
    %cst_184 = arith.constant dense<0.000000e+00> : vector<64x8xf32>
    %148 = tpu.matmul %146, %147, %cst_184 {dimension_numbers = #tpu.dot_dimension_numbers<[1], [0], [0], [1], [0, 0, 1, 1], [], []>} : vector<64x36xbf16>, vector<36x8xbf16>, vector<64x8xf32> -> vector<64x8xf32>
    %c0_185 = arith.constant 0 : index
    %c0_186 = arith.constant 0 : index
    %149 = vector.load %arg11[%c0_185, %c0_186] : memref<1x8xf32, #tpu.memory_space<vmem>>, vector<1x8xf32>
    %150 = vector.broadcast %149 : vector<1x8xf32> to vector<64x8xf32>
    %151 = arith.addf %148, %150 : vector<64x8xf32>
    %cst_187 = arith.constant 0.000000e+00 : f32
    %152 = vector.broadcast %cst_187 : f32 to vector<64x8xf32>
    %153 = arith.maximumf %151, %152 : vector<64x8xf32>
    %c1_188 = arith.constant 1 : index
    %c1_189 = arith.constant 1 : index
    %c0_190 = arith.constant 0 : index
    %154 = tpu.strided_load %arg21[%c1_188, %c1_189, %c0_190] {strides = array<i32: 2, 2, 1>} : memref<18x18x4xf32, #tpu.memory_space<vmem>>, vector<8x8x4xf32>
    %155 = vector.shape_cast %154 : vector<8x8x4xf32> to vector<64x4xf32>
    %156 = arith.truncf %155 : vector<64x4xf32> to vector<64x4xbf16>
    %c0_191 = arith.constant 0 : index
    %c0_192 = arith.constant 0 : index
    %157 = vector.load %arg12[%c0_191, %c0_192] : memref<4x8xbf16, #tpu.memory_space<vmem>>, vector<4x8xbf16>
    %cst_193 = arith.constant dense<0.000000e+00> : vector<64x8xf32>
    %158 = tpu.matmul %156, %157, %cst_193 {dimension_numbers = #tpu.dot_dimension_numbers<[1], [0], [0], [1], [0, 0, 1, 1], [], []>} : vector<64x4xbf16>, vector<4x8xbf16>, vector<64x8xf32> -> vector<64x8xf32>
    %c0_194 = arith.constant 0 : index
    %c0_195 = arith.constant 0 : index
    %159 = vector.load %arg13[%c0_194, %c0_195] : memref<1x8xf32, #tpu.memory_space<vmem>>, vector<1x8xf32>
    %160 = vector.broadcast %159 : vector<1x8xf32> to vector<64x8xf32>
    %161 = arith.addf %158, %160 : vector<64x8xf32>
    %162 = vector.shape_cast %153 : vector<64x8xf32> to vector<8x8x8xf32>
    %c1_196 = arith.constant 1 : index
    %c1_197 = arith.constant 1 : index
    %c0_198 = arith.constant 0 : index
    %163 = vector.load %arg22[%c1_196, %c1_197, %c0_198] : memref<10x10x8xf32, #tpu.memory_space<vmem>>, vector<8x8x8xf32>
    tpu.vector_store %arg22[%c1_196, %c1_197, %c0_198], %162 {strides = array<i32>} : memref<10x10x8xf32, #tpu.memory_space<vmem>>, vector<8x8x8xf32>,
    %c0_199 = arith.constant 0 : index
    %c0_200 = arith.constant 0 : index
    %c0_201 = arith.constant 0 : index
    %164 = vector.load %arg22[%c0_199, %c0_200, %c0_201] : memref<10x10x8xf32, #tpu.memory_space<vmem>>, vector<8x8x8xf32>
    %165 = vector.shape_cast %164 : vector<8x8x8xf32> to vector<64x8xf32>
    %c0_202 = arith.constant 0 : index
    %c1_203 = arith.constant 1 : index
    %c0_204 = arith.constant 0 : index
    %166 = vector.load %arg22[%c0_202, %c1_203, %c0_204] : memref<10x10x8xf32, #tpu.memory_space<vmem>>, vector<8x8x8xf32>
    %167 = vector.shape_cast %166 : vector<8x8x8xf32> to vector<64x8xf32>
    %c0_205 = arith.constant 0 : index
    %c2_206 = arith.constant 2 : index
    %c0_207 = arith.constant 0 : index
    %168 = vector.load %arg22[%c0_205, %c2_206, %c0_207] : memref<10x10x8xf32, #tpu.memory_space<vmem>>, vector<8x8x8xf32>
    %169 = vector.shape_cast %168 : vector<8x8x8xf32> to vector<64x8xf32>
    %c1_208 = arith.constant 1 : index
    %c0_209 = arith.constant 0 : index
    %c0_210 = arith.constant 0 : index
    %170 = vector.load %arg22[%c1_208, %c0_209, %c0_210] : memref<10x10x8xf32, #tpu.memory_space<vmem>>, vector<8x8x8xf32>
    %171 = vector.shape_cast %170 : vector<8x8x8xf32> to vector<64x8xf32>
    %c1_211 = arith.constant 1 : index
    %c1_212 = arith.constant 1 : index
    %c0_213 = arith.constant 0 : index
    %172 = vector.load %arg22[%c1_211, %c1_212, %c0_213] : memref<10x10x8xf32, #tpu.memory_space<vmem>>, vector<8x8x8xf32>
    %173 = vector.shape_cast %172 : vector<8x8x8xf32> to vector<64x8xf32>
    %c1_214 = arith.constant 1 : index
    %c2_215 = arith.constant 2 : index
    %c0_216 = arith.constant 0 : index
    %174 = vector.load %arg22[%c1_214, %c2_215, %c0_216] : memref<10x10x8xf32, #tpu.memory_space<vmem>>, vector<8x8x8xf32>
    %175 = vector.shape_cast %174 : vector<8x8x8xf32> to vector<64x8xf32>
    %c2_217 = arith.constant 2 : index
    %c0_218 = arith.constant 0 : index
    %c0_219 = arith.constant 0 : index
    %176 = vector.load %arg22[%c2_217, %c0_218, %c0_219] : memref<10x10x8xf32, #tpu.memory_space<vmem>>, vector<8x8x8xf32>
    %177 = vector.shape_cast %176 : vector<8x8x8xf32> to vector<64x8xf32>
    %c2_220 = arith.constant 2 : index
    %c1_221 = arith.constant 1 : index
    %c0_222 = arith.constant 0 : index
    %178 = vector.load %arg22[%c2_220, %c1_221, %c0_222] : memref<10x10x8xf32, #tpu.memory_space<vmem>>, vector<8x8x8xf32>
    %179 = vector.shape_cast %178 : vector<8x8x8xf32> to vector<64x8xf32>
    %c2_223 = arith.constant 2 : index
    %c2_224 = arith.constant 2 : index
    %c0_225 = arith.constant 0 : index
    %180 = vector.load %arg22[%c2_223, %c2_224, %c0_225] : memref<10x10x8xf32, #tpu.memory_space<vmem>>, vector<8x8x8xf32>
    %181 = vector.shape_cast %180 : vector<8x8x8xf32> to vector<64x8xf32>
    %182 = tpu.concatenate %165, %167, %169, %171, %173, %175, %177, %179, %181 in 1 : vector<64x8xf32>, vector<64x8xf32>, vector<64x8xf32>, vector<64x8xf32>, vector<64x8xf32>, vector<64x8xf32>, vector<64x8xf32>, vector<64x8xf32>, vector<64x8xf32> -> vector<64x72xf32>
    %183 = arith.truncf %182 : vector<64x72xf32> to vector<64x72xbf16>
    %c0_226 = arith.constant 0 : index
    %c0_227 = arith.constant 0 : index
    %184 = vector.load %arg14[%c0_226, %c0_227] : memref<72x8xbf16, #tpu.memory_space<vmem>>, vector<72x8xbf16>
    %cst_228 = arith.constant dense<0.000000e+00> : vector<64x8xf32>
    %185 = tpu.matmul %183, %184, %cst_228 {dimension_numbers = #tpu.dot_dimension_numbers<[1], [0], [0], [1], [0, 0, 1, 1], [], []>} : vector<64x72xbf16>, vector<72x8xbf16>, vector<64x8xf32> -> vector<64x8xf32>
    %c0_229 = arith.constant 0 : index
    %c0_230 = arith.constant 0 : index
    %186 = vector.load %arg15[%c0_229, %c0_230] : memref<1x8xf32, #tpu.memory_space<vmem>>, vector<1x8xf32>
    %187 = vector.broadcast %186 : vector<1x8xf32> to vector<64x8xf32>
    %188 = arith.addf %185, %187 : vector<64x8xf32>
    %189 = arith.addf %188, %161 : vector<64x8xf32>
    %cst_231 = arith.constant 0.000000e+00 : f32
    %190 = vector.broadcast %cst_231 : f32 to vector<64x8xf32>
    %191 = arith.maximumf %189, %190 : vector<64x8xf32>
    %192 = vector.shape_cast %191 : vector<64x8xf32> to vector<8x8x8xf32>
    %c1_232 = arith.constant 1 : index
    %c1_233 = arith.constant 1 : index
    %c0_234 = arith.constant 0 : index
    %193 = vector.load %arg22[%c1_232, %c1_233, %c0_234] : memref<10x10x8xf32, #tpu.memory_space<vmem>>, vector<8x8x8xf32>
    tpu.vector_store %arg22[%c1_232, %c1_233, %c0_234], %192 {strides = array<i32>} : memref<10x10x8xf32, #tpu.memory_space<vmem>>, vector<8x8x8xf32>,
    %c0_235 = arith.constant 0 : index
    %c0_236 = arith.constant 0 : index
    %c0_237 = arith.constant 0 : index
    %194 = vector.load %arg22[%c0_235, %c0_236, %c0_237] : memref<10x10x8xf32, #tpu.memory_space<vmem>>, vector<8x8x8xf32>
    %195 = vector.shape_cast %194 : vector<8x8x8xf32> to vector<64x8xf32>
    %c0_238 = arith.constant 0 : index
    %c1_239 = arith.constant 1 : index
    %c0_240 = arith.constant 0 : index
    %196 = vector.load %arg22[%c0_238, %c1_239, %c0_240] : memref<10x10x8xf32, #tpu.memory_space<vmem>>, vector<8x8x8xf32>
    %197 = vector.shape_cast %196 : vector<8x8x8xf32> to vector<64x8xf32>
    %c0_241 = arith.constant 0 : index
    %c2_242 = arith.constant 2 : index
    %c0_243 = arith.constant 0 : index
    %198 = vector.load %arg22[%c0_241, %c2_242, %c0_243] : memref<10x10x8xf32, #tpu.memory_space<vmem>>, vector<8x8x8xf32>
    %199 = vector.shape_cast %198 : vector<8x8x8xf32> to vector<64x8xf32>
    %c1_244 = arith.constant 1 : index
    %c0_245 = arith.constant 0 : index
    %c0_246 = arith.constant 0 : index
    %200 = vector.load %arg22[%c1_244, %c0_245, %c0_246] : memref<10x10x8xf32, #tpu.memory_space<vmem>>, vector<8x8x8xf32>
    %201 = vector.shape_cast %200 : vector<8x8x8xf32> to vector<64x8xf32>
    %c1_247 = arith.constant 1 : index
    %c1_248 = arith.constant 1 : index
    %c0_249 = arith.constant 0 : index
    %202 = vector.load %arg22[%c1_247, %c1_248, %c0_249] : memref<10x10x8xf32, #tpu.memory_space<vmem>>, vector<8x8x8xf32>
    %203 = vector.shape_cast %202 : vector<8x8x8xf32> to vector<64x8xf32>
    %c1_250 = arith.constant 1 : index
    %c2_251 = arith.constant 2 : index
    %c0_252 = arith.constant 0 : index
    %204 = vector.load %arg22[%c1_250, %c2_251, %c0_252] : memref<10x10x8xf32, #tpu.memory_space<vmem>>, vector<8x8x8xf32>
    %205 = vector.shape_cast %204 : vector<8x8x8xf32> to vector<64x8xf32>
    %c2_253 = arith.constant 2 : index
    %c0_254 = arith.constant 0 : index
    %c0_255 = arith.constant 0 : index
    %206 = vector.load %arg22[%c2_253, %c0_254, %c0_255] : memref<10x10x8xf32, #tpu.memory_space<vmem>>, vector<8x8x8xf32>
    %207 = vector.shape_cast %206 : vector<8x8x8xf32> to vector<64x8xf32>
    %c2_256 = arith.constant 2 : index
    %c1_257 = arith.constant 1 : index
    %c0_258 = arith.constant 0 : index
    %208 = vector.load %arg22[%c2_256, %c1_257, %c0_258] : memref<10x10x8xf32, #tpu.memory_space<vmem>>, vector<8x8x8xf32>
    %209 = vector.shape_cast %208 : vector<8x8x8xf32> to vector<64x8xf32>
    %c2_259 = arith.constant 2 : index
    %c2_260 = arith.constant 2 : index
    %c0_261 = arith.constant 0 : index
    %210 = vector.load %arg22[%c2_259, %c2_260, %c0_261] : memref<10x10x8xf32, #tpu.memory_space<vmem>>, vector<8x8x8xf32>
    %211 = vector.shape_cast %210 : vector<8x8x8xf32> to vector<64x8xf32>
    %212 = tpu.concatenate %195, %197, %199, %201, %203, %205, %207, %209, %211 in 1 : vector<64x8xf32>, vector<64x8xf32>, vector<64x8xf32>, vector<64x8xf32>, vector<64x8xf32>, vector<64x8xf32>, vector<64x8xf32>, vector<64x8xf32>, vector<64x8xf32> -> vector<64x72xf32>
    %213 = arith.truncf %212 : vector<64x72xf32> to vector<64x72xbf16>
    %c0_262 = arith.constant 0 : index
    %c0_263 = arith.constant 0 : index
    %214 = vector.load %arg16[%c0_262, %c0_263] : memref<72x8xbf16, #tpu.memory_space<vmem>>, vector<72x8xbf16>
    %cst_264 = arith.constant dense<0.000000e+00> : vector<64x8xf32>
    %215 = tpu.matmul %213, %214, %cst_264 {dimension_numbers = #tpu.dot_dimension_numbers<[1], [0], [0], [1], [0, 0, 1, 1], [], []>} : vector<64x72xbf16>, vector<72x8xbf16>, vector<64x8xf32> -> vector<64x8xf32>
    %c0_265 = arith.constant 0 : index
    %c0_266 = arith.constant 0 : index
    %216 = vector.load %arg17[%c0_265, %c0_266] : memref<1x8xf32, #tpu.memory_space<vmem>>, vector<1x8xf32>
    %217 = vector.broadcast %216 : vector<1x8xf32> to vector<64x8xf32>
    %218 = arith.addf %215, %217 : vector<64x8xf32>
    %cst_267 = arith.constant 0.000000e+00 : f32
    %219 = vector.broadcast %cst_267 : f32 to vector<64x8xf32>
    %220 = arith.maximumf %218, %219 : vector<64x8xf32>
    %221 = vector.shape_cast %220 : vector<64x8xf32> to vector<8x8x8xf32>
    %c1_268 = arith.constant 1 : index
    %c1_269 = arith.constant 1 : index
    %c0_270 = arith.constant 0 : index
    %222 = vector.load %arg22[%c1_268, %c1_269, %c0_270] : memref<10x10x8xf32, #tpu.memory_space<vmem>>, vector<8x8x8xf32>
    tpu.vector_store %arg22[%c1_268, %c1_269, %c0_270], %221 {strides = array<i32>} : memref<10x10x8xf32, #tpu.memory_space<vmem>>, vector<8x8x8xf32>,
    %c0_271 = arith.constant 0 : index
    %c0_272 = arith.constant 0 : index
    %c0_273 = arith.constant 0 : index
    %223 = vector.load %arg22[%c0_271, %c0_272, %c0_273] : memref<10x10x8xf32, #tpu.memory_space<vmem>>, vector<8x8x8xf32>
    %224 = vector.shape_cast %223 : vector<8x8x8xf32> to vector<64x8xf32>
    %c0_274 = arith.constant 0 : index
    %c1_275 = arith.constant 1 : index
    %c0_276 = arith.constant 0 : index
    %225 = vector.load %arg22[%c0_274, %c1_275, %c0_276] : memref<10x10x8xf32, #tpu.memory_space<vmem>>, vector<8x8x8xf32>
    %226 = vector.shape_cast %225 : vector<8x8x8xf32> to vector<64x8xf32>
    %c0_277 = arith.constant 0 : index
    %c2_278 = arith.constant 2 : index
    %c0_279 = arith.constant 0 : index
    %227 = vector.load %arg22[%c0_277, %c2_278, %c0_279] : memref<10x10x8xf32, #tpu.memory_space<vmem>>, vector<8x8x8xf32>
    %228 = vector.shape_cast %227 : vector<8x8x8xf32> to vector<64x8xf32>
    %c1_280 = arith.constant 1 : index
    %c0_281 = arith.constant 0 : index
    %c0_282 = arith.constant 0 : index
    %229 = vector.load %arg22[%c1_280, %c0_281, %c0_282] : memref<10x10x8xf32, #tpu.memory_space<vmem>>, vector<8x8x8xf32>
    %230 = vector.shape_cast %229 : vector<8x8x8xf32> to vector<64x8xf32>
    %c1_283 = arith.constant 1 : index
    %c1_284 = arith.constant 1 : index
    %c0_285 = arith.constant 0 : index
    %231 = vector.load %arg22[%c1_283, %c1_284, %c0_285] : memref<10x10x8xf32, #tpu.memory_space<vmem>>, vector<8x8x8xf32>
    %232 = vector.shape_cast %231 : vector<8x8x8xf32> to vector<64x8xf32>
    %c1_286 = arith.constant 1 : index
    %c2_287 = arith.constant 2 : index
    %c0_288 = arith.constant 0 : index
    %233 = vector.load %arg22[%c1_286, %c2_287, %c0_288] : memref<10x10x8xf32, #tpu.memory_space<vmem>>, vector<8x8x8xf32>
    %234 = vector.shape_cast %233 : vector<8x8x8xf32> to vector<64x8xf32>
    %c2_289 = arith.constant 2 : index
    %c0_290 = arith.constant 0 : index
    %c0_291 = arith.constant 0 : index
    %235 = vector.load %arg22[%c2_289, %c0_290, %c0_291] : memref<10x10x8xf32, #tpu.memory_space<vmem>>, vector<8x8x8xf32>
    %236 = vector.shape_cast %235 : vector<8x8x8xf32> to vector<64x8xf32>
    %c2_292 = arith.constant 2 : index
    %c1_293 = arith.constant 1 : index
    %c0_294 = arith.constant 0 : index
    %237 = vector.load %arg22[%c2_292, %c1_293, %c0_294] : memref<10x10x8xf32, #tpu.memory_space<vmem>>, vector<8x8x8xf32>
    %238 = vector.shape_cast %237 : vector<8x8x8xf32> to vector<64x8xf32>
    %c2_295 = arith.constant 2 : index
    %c2_296 = arith.constant 2 : index
    %c0_297 = arith.constant 0 : index
    %239 = vector.load %arg22[%c2_295, %c2_296, %c0_297] : memref<10x10x8xf32, #tpu.memory_space<vmem>>, vector<8x8x8xf32>
    %240 = vector.shape_cast %239 : vector<8x8x8xf32> to vector<64x8xf32>
    %241 = tpu.concatenate %224, %226, %228, %230, %232, %234, %236, %238, %240 in 1 : vector<64x8xf32>, vector<64x8xf32>, vector<64x8xf32>, vector<64x8xf32>, vector<64x8xf32>, vector<64x8xf32>, vector<64x8xf32>, vector<64x8xf32>, vector<64x8xf32> -> vector<64x72xf32>
    %242 = arith.truncf %241 : vector<64x72xf32> to vector<64x72xbf16>
    %c0_298 = arith.constant 0 : index
    %c0_299 = arith.constant 0 : index
    %243 = vector.load %arg18[%c0_298, %c0_299] : memref<72x8xbf16, #tpu.memory_space<vmem>>, vector<72x8xbf16>
    %cst_300 = arith.constant dense<0.000000e+00> : vector<64x8xf32>
    %244 = tpu.matmul %242, %243, %cst_300 {dimension_numbers = #tpu.dot_dimension_numbers<[1], [0], [0], [1], [0, 0, 1, 1], [], []>} : vector<64x72xbf16>, vector<72x8xbf16>, vector<64x8xf32> -> vector<64x8xf32>
    %c0_301 = arith.constant 0 : index
    %c0_302 = arith.constant 0 : index
    %245 = vector.load %arg19[%c0_301, %c0_302] : memref<1x8xf32, #tpu.memory_space<vmem>>, vector<1x8xf32>
    %246 = vector.broadcast %245 : vector<1x8xf32> to vector<64x8xf32>
    %247 = arith.addf %244, %246 : vector<64x8xf32>
    %248 = arith.addf %247, %191 : vector<64x8xf32>
    %cst_303 = arith.constant 0.000000e+00 : f32
    %249 = vector.broadcast %cst_303 : f32 to vector<64x8xf32>
    %250 = arith.maximumf %248, %249 : vector<64x8xf32>
    %251 = tpu.transpose %250, [1, 0] : vector<64x8xf32> -> vector<8x64xf32>
    %c0_304 = arith.constant 0 : index
    %c0_305 = arith.constant 0 : index
    %c0_306 = arith.constant 0 : index
    %252 = vector.load %arg20[%c0_304, %c0_305, %c0_306] : memref<1x8x64xf32, #tpu.memory_space<vmem>>, vector<1x8x64xf32>
    %253 = vector.shape_cast %252 : vector<1x8x64xf32> to vector<8x64xf32>
    %254 = vector.shape_cast %251 : vector<8x64xf32> to vector<1x8x64xf32>
    tpu.vector_store %arg20[%c0_304, %c0_305, %c0_306], %254 {strides = array<i32>} : memref<1x8x64xf32, #tpu.memory_space<vmem>>, vector<1x8x64xf32>,
    return
  }
  func.func @transform_0(%arg0: i32) -> (i32, i32, i32, i32) {
    %c0_i32 = arith.constant 0 : i32
    %c0_i32_0 = arith.constant 0 : i32
    %c0_i32_1 = arith.constant 0 : i32
    %c0_i32_2 = arith.constant 0 : i32
    return %arg0, %c0_i32, %c0_i32_0, %c0_i32_1 : i32, i32, i32, i32
  }
  func.func @transform_1(%arg0: i32) -> (i32, i32) {
    %c0_i32 = arith.constant 0 : i32
    %c0_i32_0 = arith.constant 0 : i32
    %c0_i32_1 = arith.constant 0 : i32
    return %c0_i32, %c0_i32_0 : i32, i32
  }
  func.func @transform_2(%arg0: i32) -> (i32, i32) {
    %c0_i32 = arith.constant 0 : i32
    %c0_i32_0 = arith.constant 0 : i32
    %c0_i32_1 = arith.constant 0 : i32
    return %c0_i32, %c0_i32_0 : i32, i32
  }
  func.func @transform_3(%arg0: i32) -> (i32, i32) {
    %c0_i32 = arith.constant 0 : i32
    %c0_i32_0 = arith.constant 0 : i32
    %c0_i32_1 = arith.constant 0 : i32
    return %c0_i32, %c0_i32_0 : i32, i32
  }
  func.func @transform_4(%arg0: i32) -> (i32, i32) {
    %c0_i32 = arith.constant 0 : i32
    %c0_i32_0 = arith.constant 0 : i32
    %c0_i32_1 = arith.constant 0 : i32
    return %c0_i32, %c0_i32_0 : i32, i32
  }
  func.func @transform_5(%arg0: i32) -> (i32, i32) {
    %c0_i32 = arith.constant 0 : i32
    %c0_i32_0 = arith.constant 0 : i32
    %c0_i32_1 = arith.constant 0 : i32
    return %c0_i32, %c0_i32_0 : i32, i32
  }
  func.func @transform_6(%arg0: i32) -> (i32, i32) {
    %c0_i32 = arith.constant 0 : i32
    %c0_i32_0 = arith.constant 0 : i32
    %c0_i32_1 = arith.constant 0 : i32
    return %c0_i32, %c0_i32_0 : i32, i32
  }
  func.func @transform_7(%arg0: i32) -> (i32, i32) {
    %c0_i32 = arith.constant 0 : i32
    %c0_i32_0 = arith.constant 0 : i32
    %c0_i32_1 = arith.constant 0 : i32
    return %c0_i32, %c0_i32_0 : i32, i32
  }
  func.func @transform_8(%arg0: i32) -> (i32, i32) {
    %c0_i32 = arith.constant 0 : i32
    %c0_i32_0 = arith.constant 0 : i32
    %c0_i32_1 = arith.constant 0 : i32
    return %c0_i32, %c0_i32_0 : i32, i32
  }
  func.func @transform_9(%arg0: i32) -> (i32, i32) {
    %c0_i32 = arith.constant 0 : i32
    %c0_i32_0 = arith.constant 0 : i32
    %c0_i32_1 = arith.constant 0 : i32
    return %c0_i32, %c0_i32_0 : i32, i32
  }
  func.func @transform_10(%arg0: i32) -> (i32, i32) {
    %c0_i32 = arith.constant 0 : i32
    %c0_i32_0 = arith.constant 0 : i32
    %c0_i32_1 = arith.constant 0 : i32
    return %c0_i32, %c0_i32_0 : i32, i32
  }
  func.func @transform_11(%arg0: i32) -> (i32, i32) {
    %c0_i32 = arith.constant 0 : i32
    %c0_i32_0 = arith.constant 0 : i32
    %c0_i32_1 = arith.constant 0 : i32
    return %c0_i32, %c0_i32_0 : i32, i32
  }
  func.func @transform_12(%arg0: i32) -> (i32, i32) {
    %c0_i32 = arith.constant 0 : i32
    %c0_i32_0 = arith.constant 0 : i32
    %c0_i32_1 = arith.constant 0 : i32
    return %c0_i32, %c0_i32_0 : i32, i32
  }
  func.func @transform_13(%arg0: i32) -> (i32, i32) {
    %c0_i32 = arith.constant 0 : i32
    %c0_i32_0 = arith.constant 0 : i32
    %c0_i32_1 = arith.constant 0 : i32
    return %c0_i32, %c0_i32_0 : i32, i32
  }
  func.func @transform_14(%arg0: i32) -> (i32, i32) {
    %c0_i32 = arith.constant 0 : i32
    %c0_i32_0 = arith.constant 0 : i32
    %c0_i32_1 = arith.constant 0 : i32
    return %c0_i32, %c0_i32_0 : i32, i32
  }
  func.func @transform_15(%arg0: i32) -> (i32, i32) {
    %c0_i32 = arith.constant 0 : i32
    %c0_i32_0 = arith.constant 0 : i32
    %c0_i32_1 = arith.constant 0 : i32
    return %c0_i32, %c0_i32_0 : i32, i32
  }
  func.func @transform_16(%arg0: i32) -> (i32, i32) {
    %c0_i32 = arith.constant 0 : i32
    %c0_i32_0 = arith.constant 0 : i32
    %c0_i32_1 = arith.constant 0 : i32
    return %c0_i32, %c0_i32_0 : i32, i32
  }
  func.func @transform_17(%arg0: i32) -> (i32, i32) {
    %c0_i32 = arith.constant 0 : i32
    %c0_i32_0 = arith.constant 0 : i32
    %c0_i32_1 = arith.constant 0 : i32
    return %c0_i32, %c0_i32_0 : i32, i32
  }
  func.func @transform_18(%arg0: i32) -> (i32, i32) {
    %c0_i32 = arith.constant 0 : i32
    %c0_i32_0 = arith.constant 0 : i32
    %c0_i32_1 = arith.constant 0 : i32
    return %c0_i32, %c0_i32_0 : i32, i32
  }
  func.func @transform_19(%arg0: i32) -> (i32, i32, i32) {
    %c0_i32 = arith.constant 0 : i32
    %c0_i32_0 = arith.constant 0 : i32
    %c0_i32_1 = arith.constant 0 : i32
    return %arg0, %c0_i32, %c0_i32_0 : i32, i32, i32
  }
}

</mosaic_0001>

<llo_original>
// kernel: layer2_forward.1
$region0: #{layer2_forward.1}
  #allocation0 [shape = 'u32[]', space=smem, size = 0x4, offset = 0x4, fixed_abs, tag = 'smem constant byte address 0x4 - core index']
  #allocation1 [shape = 'u32[144,128]{1,0:T(1,128)}', space=vmem, size = 0x12000, scoped, tag = 'internal scratch']
  #allocation2 [shape = 'f32[18,18,4]{2,1,0:T(8,128)}', space=vmem, size = 0x36000, scoped, tag = 'scratch operand']
  #allocation3 [shape = 'f32[10,10,8]{2,1,0:T(8,128)}', space=vmem, size = 0x14000, scoped, tag = 'scratch operand']
  %s0 = inlined_call_operand.vmem [shape: f32[2,16,16,4], index: 0, kind: input, shape index: {}]
  %s1 = inlined_call_operand.vmem [shape: bf16[36,4], index: 1, kind: input, shape index: {}]
  %s2 = inlined_call_operand.vmem [shape: f32[1,4], index: 2, kind: input, shape index: {}]
  %s3 = inlined_call_operand.vmem [shape: bf16[36,4], index: 3, kind: input, shape index: {}]
  %s4 = inlined_call_operand.vmem [shape: f32[1,4], index: 4, kind: input, shape index: {}]
  %s5 = inlined_call_operand.vmem [shape: bf16[36,4], index: 5, kind: input, shape index: {}]
  %s6 = inlined_call_operand.vmem [shape: f32[1,4], index: 6, kind: input, shape index: {}]
  %s7 = inlined_call_operand.vmem [shape: bf16[36,4], index: 7, kind: input, shape index: {}]
  %s8 = inlined_call_operand.vmem [shape: f32[1,4], index: 8, kind: input, shape index: {}]
  %s9 = inlined_call_operand.vmem [shape: bf16[36,8], index: 9, kind: input, shape index: {}]
  %s10 = inlined_call_operand.vmem [shape: f32[1,8], index: 10, kind: input, shape index: {}]
  %s11 = inlined_call_operand.vmem [shape: bf16[4,8], index: 11, kind: input, shape index: {}]
  %s12 = inlined_call_operand.vmem [shape: f32[1,8], index: 12, kind: input, shape index: {}]
  %s13 = inlined_call_operand.vmem [shape: bf16[72,8], index: 13, kind: input, shape index: {}]
  %s14 = inlined_call_operand.vmem [shape: f32[1,8], index: 14, kind: input, shape index: {}]
  %s15 = inlined_call_operand.vmem [shape: bf16[72,8], index: 15, kind: input, shape index: {}]
  %s16 = inlined_call_operand.vmem [shape: f32[1,8], index: 16, kind: input, shape index: {}]
  %s17 = inlined_call_operand.vmem [shape: bf16[72,8], index: 17, kind: input, shape index: {}]
  %s18 = inlined_call_operand.vmem [shape: f32[1,8], index: 18, kind: input, shape index: {}]
  %s19 = inlined_call_operand.vmem [shape: f32[2,8,64], index: 19, kind: output, shape index: {}]
  %s20 = sld [smem:[#allocation0]]
  $region109: #{layer2_forward.1} parent=0
    _
  %s22 = ssub.s32 1, %s20
  %s23 = scalar_select 0, %s22, %s20
  loop: start=0, step=1, limit=4
  $region2: #{layer2_forward.1} parent=0 // loop_pre_header
    _
  $region3: #{layer2_forward.1} parent=0 // loop_header
    %s25 = sphi 0, %s29
    %p26 = scmp.ge.s32.totalorder %s25, 4
    %s35 = sphi 0, %s37
    %s38 = sphi 0, %s35
    %s39 = sphi 0, %s38
    %s55 = sphi 0, %s39
    %s59 = sphi 0, %s59
    %s61 = sphi 0, %s59
    %s62 = sphi 0, %s61
    %s76 = sphi 0, %s62
    %s80 = sphi 0, %s80
    %s82 = sphi 0, %s80
    %s83 = sphi 0, %s82
    %s97 = sphi 0, %s83
    %s101 = sphi 0, %s101
    %s103 = sphi 0, %s101
    %s104 = sphi 0, %s103
    %s118 = sphi 0, %s104
    %s122 = sphi 0, %s122
    %s124 = sphi 0, %s122
    %s125 = sphi 0, %s124
    %s139 = sphi 0, %s125
    %s143 = sphi 0, %s143
    %s145 = sphi 0, %s143
    %s146 = sphi 0, %s145
    %s160 = sphi 0, %s146
    %s164 = sphi 0, %s164
    %s166 = sphi 0, %s164
    %s167 = sphi 0, %s166
    %s181 = sphi 0, %s167
    %s185 = sphi 0, %s185
    %s187 = sphi 0, %s185
    %s188 = sphi 0, %s187
    %s202 = sphi 0, %s188
    %s206 = sphi 0, %s206
    %s208 = sphi 0, %s206
    %s209 = sphi 0, %s208
    %s223 = sphi 0, %s209
    %s227 = sphi 0, %s227
    %s229 = sphi 0, %s227
    %s230 = sphi 0, %s229
    %s244 = sphi 0, %s230
    %s248 = sphi 0, %s248
    %s250 = sphi 0, %s248
    %s251 = sphi 0, %s250
    %s265 = sphi 0, %s251
    %s269 = sphi 0, %s269
    %s271 = sphi 0, %s269
    %s272 = sphi 0, %s271
    %s286 = sphi 0, %s272
    %s290 = sphi 0, %s290
    %s292 = sphi 0, %s290
    %s293 = sphi 0, %s292
    %s307 = sphi 0, %s293
    %s311 = sphi 0, %s311
    %s313 = sphi 0, %s311
    %s314 = sphi 0, %s313
    %s328 = sphi 0, %s314
    %s332 = sphi 0, %s332
    %s334 = sphi 0, %s332
    %s335 = sphi 0, %s334
    %s349 = sphi 0, %s335
    %s353 = sphi 0, %s353
    %s355 = sphi 0, %s353
    %s356 = sphi 0, %s355
    %s370 = sphi 0, %s356
    %s374 = sphi 0, %s374
    %s376 = sphi 0, %s374
    %s377 = sphi 0, %s376
    %s391 = sphi 0, %s377
    %s395 = sphi 0, %s395
    %s397 = sphi 0, %s395
    %s398 = sphi 0, %s397
    %s412 = sphi 0, %s398
    %s416 = sphi 0, %s416
    %s418 = sphi 0, %s416
    %s419 = sphi 0, %s418
    %s433 = sphi 0, %s419
    %s439 = sphi 0, %s441
    %s442 = sphi 0, %s439
    %s443 = sphi 0, %s442
    %s459 = sphi 0, %s443
  $region4: #{layer2_forward.1} parent=0 // loop_header_branch
    %28 = sbr.rel (%p26) target = $region8
  $region5: #{layer2_forward.1} parent=0 // loop_body
    %s30 = ssub.s32 %s25, 1
    %s31 = ssub.s32 %s25, 2
    %s32 = sadd.s32 %s25, 1
    %s33 = ssub.s32 %s25, %s32
    %p34 = scmp.eq.s32.totalorder %s33, 0
    %s36 = sadd.s32 %s35, 1
    %s37 = scalar_select %p34, %s35, %s36
    %p40 = pneg %p34
    %p41 = scmp.eq.s32.totalorder %s25, 1
    %p42 = por %p40, %p41
    %p43 = scmp.ne.s32.totalorder %s35, %s38
    %p44 = scmp.eq.s32.totalorder %s25, 0
    %p45 = por %p43, %p44
    %p46 = scmp.ne.s32.totalorder %s35, %s38
    %p47 = scmp.eq.s32.totalorder %s30, 1
    %p48 = por %p46, %p47
    %p49 = scmp.ne.s32.totalorder %s38, %s39
    %p50 = scmp.eq.s32.totalorder %s30, 0
    %p51 = por %p49, %p50
    %p52 = scmp.ne.s32.totalorder %s38, %s39
    %p53 = scmp.eq.s32.totalorder %s31, 1
    %p54 = por %p52, %p53
    %p56 = scmp.ne.s32.totalorder %s39, %s55
    %p57 = scmp.eq.s32.totalorder %s31, 0
    %p58 = por %p56, %p57
    %s60 = sadd.s32 %s59, 1
    %p63 = scmp.eq.s32.totalorder %s25, 1
    %p64 = scmp.ne.s32.totalorder %s59, %s61
    %p65 = scmp.eq.s32.totalorder %s25, 0
    %p66 = por %p64, %p65
    %p67 = scmp.ne.s32.totalorder %s59, %s61
    %p68 = scmp.eq.s32.totalorder %s30, 1
    %p69 = por %p67, %p68
    %p70 = scmp.ne.s32.totalorder %s61, %s62
    %p71 = scmp.eq.s32.totalorder %s30, 0
    %p72 = por %p70, %p71
    %p73 = scmp.ne.s32.totalorder %s61, %s62
    %p74 = scmp.eq.s32.totalorder %s31, 1
    %p75 = por %p73, %p74
    %p77 = scmp.ne.s32.totalorder %s62, %s76
    %p78 = scmp.eq.s32.totalorder %s31, 0
    %p79 = por %p77, %p78
    %s81 = sadd.s32 %s80, 1
    %p84 = scmp.eq.s32.totalorder %s25, 1
    %p85 = scmp.ne.s32.totalorder %s80, %s82
    %p86 = scmp.eq.s32.totalorder %s25, 0
    %p87 = por %p85, %p86
    %p88 = scmp.ne.s32.totalorder %s80, %s82
    %p89 = scmp.eq.s32.totalorder %s30, 1
    %p90 = por %p88, %p89
    %p91 = scmp.ne.s32.totalorder %s82, %s83
    %p92 = scmp.eq.s32.totalorder %s30, 0
    %p93 = por %p91, %p92
    %p94 = scmp.ne.s32.totalorder %s82, %s83
    %p95 = scmp.eq.s32.totalorder %s31, 1
    %p96 = por %p94, %p95
    %p98 = scmp.ne.s32.totalorder %s83, %s97
    %p99 = scmp.eq.s32.totalorder %s31, 0
    %p100 = por %p98, %p99
    %s102 = sadd.s32 %s101, 1
    %p105 = scmp.eq.s32.totalorder %s25, 1
    %p106 = scmp.ne.s32.totalorder %s101, %s103
    %p107 = scmp.eq.s32.totalorder %s25, 0
    %p108 = por %p106, %p107
    %p109 = scmp.ne.s32.totalorder %s101, %s103
    %p110 = scmp.eq.s32.totalorder %s30, 1
    %p111 = por %p109, %p110
    %p112 = scmp.ne.s32.totalorder %s103, %s104
    %p113 = scmp.eq.s32.totalorder %s30, 0
    %p114 = por %p112, %p113
    %p115 = scmp.ne.s32.totalorder %s103, %s104
    %p116 = scmp.eq.s32.totalorder %s31, 1
    %p117 = por %p115, %p116
    %p119 = scmp.ne.s32.totalorder %s104, %s118
    %p120 = scmp.eq.s32.totalorder %s31, 0
    %p121 = por %p119, %p120
    %s123 = sadd.s32 %s122, 1
    %p126 = scmp.eq.s32.totalorder %s25, 1
    %p127 = scmp.ne.s32.totalorder %s122, %s124
    %p128 = scmp.eq.s32.totalorder %s25, 0
    %p129 = por %p127, %p128
    %p130 = scmp.ne.s32.totalorder %s122, %s124
    %p131 = scmp.eq.s32.totalorder %s30, 1
    %p132 = por %p130, %p131
    %p133 = scmp.ne.s32.totalorder %s124, %s125
    %p134 = scmp.eq.s32.totalorder %s30, 0
    %p135 = por %p133, %p134
    %p136 = scmp.ne.s32.totalorder %s124, %s125
    %p137 = scmp.eq.s32.totalorder %s31, 1
    %p138 = por %p136, %p137
    %p140 = scmp.ne.s32.totalorder %s125, %s139
    %p141 = scmp.eq.s32.totalorder %s31, 0
    %p142 = por %p140, %p141
    %s144 = sadd.s32 %s143, 1
    %p147 = scmp.eq.s32.totalorder %s25, 1
    %p148 = scmp.ne.s32.totalorder %s143, %s145
    %p149 = scmp.eq.s32.totalorder %s25, 0
    %p150 = por %p148, %p149
    %p151 = scmp.ne.s32.totalorder %s143, %s145
    %p152 = scmp.eq.s32.totalorder %s30, 1
    %p153 = por %p151, %p152
    %p154 = scmp.ne.s32.totalorder %s145, %s146
    %p155 = scmp.eq.s32.totalorder %s30, 0
    %p156 = por %p154, %p155
    %p157 = scmp.ne.s32.totalorder %s145, %s146
    %p158 = scmp.eq.s32.totalorder %s31, 1
    %p159 = por %p157, %p158
    %p161 = scmp.ne.s32.totalorder %s146, %s160
    %p162 = scmp.eq.s32.totalorder %s31, 0
    %p163 = por %p161, %p162
    %s165 = sadd.s32 %s164, 1
    %p168 = scmp.eq.s32.totalorder %s25, 1
    %p169 = scmp.ne.s32.totalorder %s164, %s166
    %p170 = scmp.eq.s32.totalorder %s25, 0
    %p171 = por %p169, %p170
    %p172 = scmp.ne.s32.totalorder %s164, %s166
    %p173 = scmp.eq.s32.totalorder %s30, 1
    %p174 = por %p172, %p173
    %p175 = scmp.ne.s32.totalorder %s166, %s167
    %p176 = scmp.eq.s32.totalorder %s30, 0
    %p177 = por %p175, %p176
    %p178 = scmp.ne.s32.totalorder %s166, %s167
    %p179 = scmp.eq.s32.totalorder %s31, 1
    %p180 = por %p178, %p179
    %p182 = scmp.ne.s32.totalorder %s167, %s181
    %p183 = scmp.eq.s32.totalorder %s31, 0
    %p184 = por %p182, %p183
    %s186 = sadd.s32 %s185, 1
    %p189 = scmp.eq.s32.totalorder %s25, 1
    %p190 = scmp.ne.s32.totalorder %s185, %s187
    %p191 = scmp.eq.s32.totalorder %s25, 0
    %p192 = por %p190, %p191
    %p193 = scmp.ne.s32.totalorder %s185, %s187
    %p194 = scmp.eq.s32.totalorder %s30, 1
    %p195 = por %p193, %p194
    %p196 = scmp.ne.s32.totalorder %s187, %s188
    %p197 = scmp.eq.s32.totalorder %s30, 0
    %p198 = por %p196, %p197
    %p199 = scmp.ne.s32.totalorder %s187, %s188
    %p200 = scmp.eq.s32.totalorder %s31, 1
    %p201 = por %p199, %p200
    %p203 = scmp.ne.s32.totalorder %s188, %s202
    %p204 = scmp.eq.s32.totalorder %s31, 0
    %p205 = por %p203, %p204
    %s207 = sadd.s32 %s206, 1
    %p210 = scmp.eq.s32.totalorder %s25, 1
    %p211 = scmp.ne.s32.totalorder %s206, %s208
    %p212 = scmp.eq.s32.totalorder %s25, 0
    %p213 = por %p211, %p212
    %p214 = scmp.ne.s32.totalorder %s206, %s208
    %p215 = scmp.eq.s32.totalorder %s30, 1
    %p216 = por %p214, %p215
    %p217 = scmp.ne.s32.totalorder %s208, %s209
    %p218 = scmp.eq.s32.totalorder %s30, 0
    %p219 = por %p217, %p218
    %p220 = scmp.ne.s32.totalorder %s208, %s209
    %p221 = scmp.eq.s32.totalorder %s31, 1
    %p222 = por %p220, %p221
    %p224 = scmp.ne.s32.totalorder %s209, %s223
    %p225 = scmp.eq.s32.totalorder %s31, 0
    %p226 = por %p224, %p225
    %s228 = sadd.s32 %s227, 1
    %p231 = scmp.eq.s32.totalorder %s25, 1
    %p232 = scmp.ne.s32.totalorder %s227, %s229
    %p233 = scmp.eq.s32.totalorder %s25, 0
    %p234 = por %p232, %p233
    %p235 = scmp.ne.s32.totalorder %s227, %s229
    %p236 = scmp.eq.s32.totalorder %s30, 1
    %p237 = por %p235, %p236
    %p238 = scmp.ne.s32.totalorder %s229, %s230
    %p239 = scmp.eq.s32.totalorder %s30, 0
    %p240 = por %p238, %p239
    %p241 = scmp.ne.s32.totalorder %s229, %s230
    %p242 = scmp.eq.s32.totalorder %s31, 1
    %p243 = por %p241, %p242
    %p245 = scmp.ne.s32.totalorder %s230, %s244
    %p246 = scmp.eq.s32.totalorder %s31, 0
    %p247 = por %p245, %p246
    %s249 = sadd.s32 %s248, 1
    %p252 = scmp.eq.s32.totalorder %s25, 1
    %p253 = scmp.ne.s32.totalorder %s248, %s250
    %p254 = scmp.eq.s32.totalorder %s25, 0
    %p255 = por %p253, %p254
    %p256 = scmp.ne.s32.totalorder %s248, %s250
    %p257 = scmp.eq.s32.totalorder %s30, 1
    %p258 = por %p256, %p257
    %p259 = scmp.ne.s32.totalorder %s250, %s251
    %p260 = scmp.eq.s32.totalorder %s30, 0
    %p261 = por %p259, %p260
    %p262 = scmp.ne.s32.totalorder %s250, %s251
    %p263 = scmp.eq.s32.totalorder %s31, 1
    %p264 = por %p262, %p263
    %p266 = scmp.ne.s32.totalorder %s251, %s265
    %p267 = scmp.eq.s32.totalorder %s31, 0
    %p268 = por %p266, %p267
    %s270 = sadd.s32 %s269, 1
    %p273 = scmp.eq.s32.totalorder %s25, 1
    %p274 = scmp.ne.s32.totalorder %s269, %s271
    %p275 = scmp.eq.s32.totalorder %s25, 0
    %p276 = por %p274, %p275
    %p277 = scmp.ne.s32.totalorder %s269, %s271
    %p278 = scmp.eq.s32.totalorder %s30, 1
    %p279 = por %p277, %p278
    %p280 = scmp.ne.s32.totalorder %s271, %s272
    %p281 = scmp.eq.s32.totalorder %s30, 0
    %p282 = por %p280, %p281
    %p283 = scmp.ne.s32.totalorder %s271, %s272
    %p284 = scmp.eq.s32.totalorder %s31, 1
    %p285 = por %p283, %p284
    %p287 = scmp.ne.s32.totalorder %s272, %s286
    %p288 = scmp.eq.s32.totalorder %s31, 0
    %p289 = por %p287, %p288
    %s291 = sadd.s32 %s290, 1
    %p294 = scmp.eq.s32.totalorder %s25, 1
    %p295 = scmp.ne.s32.totalorder %s290, %s292
    %p296 = scmp.eq.s32.totalorder %s25, 0
    %p297 = por %p295, %p296
    %p298 = scmp.ne.s32.totalorder %s290, %s292
    %p299 = scmp.eq.s32.totalorder %s30, 1
    %p300 = por %p298, %p299
    %p301 = scmp.ne.s32.totalorder %s292, %s293
    %p302 = scmp.eq.s32.totalorder %s30, 0
    %p303 = por %p301, %p302
    %p304 = scmp.ne.s32.totalorder %s292, %s293
    %p305 = scmp.eq.s32.totalorder %s31, 1
    %p306 = por %p304, %p305
    %p308 = scmp.ne.s32.totalorder %s293, %s307
    %p309 = scmp.eq.s32.totalorder %s31, 0
    %p310 = por %p308, %p309
    %s312 = sadd.s32 %s311, 1
    %p315 = scmp.eq.s32.totalorder %s25, 1
    %p316 = scmp.ne.s32.totalorder %s311, %s313
    %p317 = scmp.eq.s32.totalorder %s25, 0
    %p318 = por %p316, %p317
    %p319 = scmp.ne.s32.totalorder %s311, %s313
    %p320 = scmp.eq.s32.totalorder %s30, 1
    %p321 = por %p319, %p320
    %p322 = scmp.ne.s32.totalorder %s313, %s314
    %p323 = scmp.eq.s32.totalorder %s30, 0
    %p324 = por %p322, %p323
    %p325 = scmp.ne.s32.totalorder %s313, %s314
    %p326 = scmp.eq.s32.totalorder %s31, 1
    %p327 = por %p325, %p326
    %p329 = scmp.ne.s32.totalorder %s314, %s328
    %p330 = scmp.eq.s32.totalorder %s31, 0
    %p331 = por %p329, %p330
    %s333 = sadd.s32 %s332, 1
    %p336 = scmp.eq.s32.totalorder %s25, 1
    %p337 = scmp.ne.s32.totalorder %s332, %s334
    %p338 = scmp.eq.s32.totalorder %s25, 0
    %p339 = por %p337, %p338
    %p340 = scmp.ne.s32.totalorder %s332, %s334
    %p341 = scmp.eq.s32.totalorder %s30, 1
    %p342 = por %p340, %p341
    %p343 = scmp.ne.s32.totalorder %s334, %s335
    %p344 = scmp.eq.s32.totalorder %s30, 0
    %p345 = por %p343, %p344
    %p346 = scmp.ne.s32.totalorder %s334, %s335
    %p347 = scmp.eq.s32.totalorder %s31, 1
    %p348 = por %p346, %p347
    %p350 = scmp.ne.s32.totalorder %s335, %s349
    %p351 = scmp.eq.s32.totalorder %s31, 0
    %p352 = por %p350, %p351
    %s354 = sadd.s32 %s353, 1
    %p357 = scmp.eq.s32.totalorder %s25, 1
    %p358 = scmp.ne.s32.totalorder %s353, %s355
    %p359 = scmp.eq.s32.totalorder %s25, 0
    %p360 = por %p358, %p359
    %p361 = scmp.ne.s32.totalorder %s353, %s355
    %p362 = scmp.eq.s32.totalorder %s30, 1
    %p363 = por %p361, %p362
    %p364 = scmp.ne.s32.totalorder %s355, %s356
    %p365 = scmp.eq.s32.totalorder %s30, 0
    %p366 = por %p364, %p365
    %p367 = scmp.ne.s32.totalorder %s355, %s356
    %p368 = scmp.eq.s32.totalorder %s31, 1
    %p369 = por %p367, %p368
    %p371 = scmp.ne.s32.totalorder %s356, %s370
    %p372 = scmp.eq.s32.totalorder %s31, 0
    %p373 = por %p371, %p372
    %s375 = sadd.s32 %s374, 1
    %p378 = scmp.eq.s32.totalorder %s25, 1
    %p379 = scmp.ne.s32.totalorder %s374, %s376
    %p380 = scmp.eq.s32.totalorder %s25, 0
    %p381 = por %p379, %p380
    %p382 = scmp.ne.s32.totalorder %s374, %s376
    %p383 = scmp.eq.s32.totalorder %s30, 1
    %p384 = por %p382, %p383
    %p385 = scmp.ne.s32.totalorder %s376, %s377
    %p386 = scmp.eq.s32.totalorder %s30, 0
    %p387 = por %p385, %p386
    %p388 = scmp.ne.s32.totalorder %s376, %s377
    %p389 = scmp.eq.s32.totalorder %s31, 1
    %p390 = por %p388, %p389
    %p392 = scmp.ne.s32.totalorder %s377, %s391
    %p393 = scmp.eq.s32.totalorder %s31, 0
    %p394 = por %p392, %p393
    %s396 = sadd.s32 %s395, 1
    %p399 = scmp.eq.s32.totalorder %s25, 1
    %p400 = scmp.ne.s32.totalorder %s395, %s397
    %p401 = scmp.eq.s32.totalorder %s25, 0
    %p402 = por %p400, %p401
    %p403 = scmp.ne.s32.totalorder %s395, %s397
    %p404 = scmp.eq.s32.totalorder %s30, 1
    %p405 = por %p403, %p404
    %p406 = scmp.ne.s32.totalorder %s397, %s398
    %p407 = scmp.eq.s32.totalorder %s30, 0
    %p408 = por %p406, %p407
    %p409 = scmp.ne.s32.totalorder %s397, %s398
    %p410 = scmp.eq.s32.totalorder %s31, 1
    %p411 = por %p409, %p410
    %p413 = scmp.ne.s32.totalorder %s398, %s412
    %p414 = scmp.eq.s32.totalorder %s31, 0
    %p415 = por %p413, %p414
    %s417 = sadd.s32 %s416, 1
    %p420 = scmp.eq.s32.totalorder %s25, 1
    %p421 = scmp.ne.s32.totalorder %s416, %s418
    %p422 = scmp.eq.s32.totalorder %s25, 0
    %p423 = por %p421, %p422
    %p424 = scmp.ne.s32.totalorder %s416, %s418
    %p425 = scmp.eq.s32.totalorder %s30, 1
    %p426 = por %p424, %p425
    %p427 = scmp.ne.s32.totalorder %s418, %s419
    %p428 = scmp.eq.s32.totalorder %s30, 0
    %p429 = por %p427, %p428
    %p430 = scmp.ne.s32.totalorder %s418, %s419
    %p431 = scmp.eq.s32.totalorder %s31, 1
    %p432 = por %p430, %p431
    %p434 = scmp.ne.s32.totalorder %s419, %s433
    %p435 = scmp.eq.s32.totalorder %s31, 0
    %p436 = por %p434, %p435
    %s437 = ssub.s32 %s25, %s32
    %p438 = scmp.eq.s32.totalorder %s437, 0
    %s440 = sadd.s32 %s439, 1
    %s441 = scalar_select %p438, %s439, %s440
    %p444 = pneg %p438
    %p445 = scmp.eq.s32.totalorder %s25, 1
    %p446 = por %p444, %p445
    %p447 = scmp.ne.s32.totalorder %s439, %s442
    %p448 = scmp.eq.s32.totalorder %s25, 0
    %p449 = por %p447, %p448
    %p450 = scmp.ne.s32.totalorder %s439, %s442
    %p451 = scmp.eq.s32.totalorder %s30, 1
    %p452 = por %p450, %p451
    %p453 = scmp.ne.s32.totalorder %s442, %s443
    %p454 = scmp.eq.s32.totalorder %s30, 0
    %p455 = por %p453, %p454
    %p456 = scmp.ne.s32.totalorder %s442, %s443
    %p457 = scmp.eq.s32.totalorder %s31, 1
    %p458 = por %p456, %p457
    %p460 = scmp.ne.s32.totalorder %s443, %s459
    %p461 = scmp.eq.s32.totalorder %s31, 0
    %p462 = por %p460, %p461
    %p463 = scmp.le.s32.totalorder 1, %s25
    %p464 = scmp.lt.s32.totalorder %s25, 3
    %p465 = pnand %p463, %p464
    %p466 = pneg %p465
    // Predicated region
    $region9: #{layer2_forward.1} parent=5 // pred_check
      _
    $region10: #{layer2_forward.1} parent=5 // pred_check_branch
      %468 = sbr.rel (%p465) target = $region12
    $region11: #{layer2_forward.1} parent=5 // pred_region
      %s469 = ssub.s32 %s25, 1
      // Predicated region
      $region13: #{layer2_forward.1} parent=11 // pred_check
        %p470 = pneg %p72
      $region14: #{layer2_forward.1} parent=11 // pred_check_branch
        %472 = sbr.rel (%p470) target = $region16
      $region15: #{layer2_forward.1} parent=11 // pred_region
        _
      $region16: #{layer2_forward.1} parent=11 // pred_fallthru
        _
      // Predicated region
      $region17: #{layer2_forward.1} parent=11 // pred_check
        %p473 = pneg %p93
      $region18: #{layer2_forward.1} parent=11 // pred_check_branch
        %475 = sbr.rel (%p473) target = $region20
      $region19: #{layer2_forward.1} parent=11 // pred_region
        _
      $region20: #{layer2_forward.1} parent=11 // pred_fallthru
        _
      // Predicated region
      $region21: #{layer2_forward.1} parent=11 // pred_check
        %p476 = pneg %p114
      $region22: #{layer2_forward.1} parent=11 // pred_check_branch
        %478 = sbr.rel (%p476) target = $region24
      $region23: #{layer2_forward.1} parent=11 // pred_region
        _
      $region24: #{layer2_forward.1} parent=11 // pred_fallthru
        _
      // Predicated region
      $region25: #{layer2_forward.1} parent=11 // pred_check
        %p479 = pneg %p135
      $region26: #{layer2_forward.1} parent=11 // pred_check_branch
        %481 = sbr.rel (%p479) target = $region28
      $region27: #{layer2_forward.1} parent=11 // pred_region
        _
      $region28: #{layer2_forward.1} parent=11 // pred_fallthru
        _
      // Predicated region
      $region29: #{layer2_forward.1} parent=11 // pred_check
        %p482 = pneg %p156
      $region30: #{layer2_forward.1} parent=11 // pred_check_branch
        %484 = sbr.rel (%p482) target = $region32
      $region31: #{layer2_forward.1} parent=11 // pred_region
        _
      $region32: #{layer2_forward.1} parent=11 // pred_fallthru
        _
      // Predicated region
      $region33: #{layer2_forward.1} parent=11 // pred_check
        %p485 = pneg %p177
      $region34: #{layer2_forward.1} parent=11 // pred_check_branch
        %487 = sbr.rel (%p485) target = $region36
      $region35: #{layer2_forward.1} parent=11 // pred_region
        _
      $region36: #{layer2_forward.1} parent=11 // pred_fallthru
        _
      // Predicated region
      $region37: #{layer2_forward.1} parent=11 // pred_check
        %p488 = pneg %p198
      $region38: #{layer2_forward.1} parent=11 // pred_check_branch
        %490 = sbr.rel (%p488) target = $region40
      $region39: #{layer2_forward.1} parent=11 // pred_region
        _
      $region40: #{layer2_forward.1} parent=11 // pred_fallthru
        _
      // Predicated region
      $region41: #{layer2_forward.1} parent=11 // pred_check
        %p491 = pneg %p219
      $region42: #{layer2_forward.1} parent=11 // pred_check_branch
        %493 = sbr.rel (%p491) target = $region44
      $region43: #{layer2_forward.1} parent=11 // pred_region
        _
      $region44: #{layer2_forward.1} parent=11 // pred_fallthru
        _
      // Predicated region
      $region45: #{layer2_forward.1} parent=11 // pred_check
        %p494 = pneg %p240
      $region46: #{layer2_forward.1} parent=11 // pred_check_branch
        %496 = sbr.rel (%p494) target = $region48
      $region47: #{layer2_forward.1} parent=11 // pred_region
        _
      $region48: #{layer2_forward.1} parent=11 // pred_fallthru
        _
      // Predicated region
      $region49: #{layer2_forward.1} parent=11 // pred_check
        %p497 = pneg %p261
      $region50: #{layer2_forward.1} parent=11 // pred_check_branch
        %499 = sbr.rel (%p497) target = $region52
      $region51: #{layer2_forward.1} parent=11 // pred_region
        _
      $region52: #{layer2_forward.1} parent=11 // pred_fallthru
        _
      // Predicated region
      $region53: #{layer2_forward.1} parent=11 // pred_check
        %p500 = pneg %p282
      $region54: #{layer2_forward.1} parent=11 // pred_check_branch
        %502 = sbr.rel (%p500) target = $region56
      $region55: #{layer2_forward.1} parent=11 // pred_region
        _
      $region56: #{layer2_forward.1} parent=11 // pred_fallthru
        _
      // Predicated region
      $region57: #{layer2_forward.1} parent=11 // pred_check
        %p503 = pneg %p303
      $region58: #{layer2_forward.1} parent=11 // pred_check_branch
        %505 = sbr.rel (%p503) target = $region60
      $region59: #{layer2_forward.1} parent=11 // pred_region
        _
      $region60: #{layer2_forward.1} parent=11 // pred_fallthru
        _
      // Predicated region
      $region61: #{layer2_forward.1} parent=11 // pred_check
        %p506 = pneg %p324
      $region62: #{layer2_forward.1} parent=11 // pred_check_branch
        %508 = sbr.rel (%p506) target = $region64
      $region63: #{layer2_forward.1} parent=11 // pred_region
        _
      $region64: #{layer2_forward.1} parent=11 // pred_fallthru
        _
      // Predicated region
      $region65: #{layer2_forward.1} parent=11 // pred_check
        %p509 = pneg %p345
      $region66: #{layer2_forward.1} parent=11 // pred_check_branch
        %511 = sbr.rel (%p509) target = $region68
      $region67: #{layer2_forward.1} parent=11 // pred_region
        _
      $region68: #{layer2_forward.1} parent=11 // pred_fallthru
        _
      // Predicated region
      $region69: #{layer2_forward.1} parent=11 // pred_check
        %p512 = pneg %p366
      $region70: #{layer2_forward.1} parent=11 // pred_check_branch
        %514 = sbr.rel (%p512) target = $region72
      $region71: #{layer2_forward.1} parent=11 // pred_region
        _
      $region72: #{layer2_forward.1} parent=11 // pred_fallthru
        _
      // Predicated region
      $region73: #{layer2_forward.1} parent=11 // pred_check
        %p515 = pneg %p387
      $region74: #{layer2_forward.1} parent=11 // pred_check_branch
        %517 = sbr.rel (%p515) target = $region76
      $region75: #{layer2_forward.1} parent=11 // pred_region
        _
      $region76: #{layer2_forward.1} parent=11 // pred_fallthru
        _
      // Predicated region
      $region77: #{layer2_forward.1} parent=11 // pred_check
        %p518 = pneg %p408
      $region78: #{layer2_forward.1} parent=11 // pred_check_branch
        %520 = sbr.rel (%p518) target = $region80
      $region79: #{layer2_forward.1} parent=11 // pred_region
        _
      $region80: #{layer2_forward.1} parent=11 // pred_fallthru
        _
      // Predicated region
      $region81: #{layer2_forward.1} parent=11 // pred_check
        %p521 = pneg %p429
      $region82: #{layer2_forward.1} parent=11 // pred_check_branch
        %523 = sbr.rel (%p521) target = $region84
      $region83: #{layer2_forward.1} parent=11 // pred_region
        _
      $region84: #{layer2_forward.1} parent=11 // pred_fallthru
        _
    $region12: #{layer2_forward.1} parent=5 // pred_fallthru
      _
    %p524 = scmp.lt.s32.totalorder %s25, 2
    // Predicated region
    $region85: #{layer2_forward.1} parent=5 // pred_check
      %p525 = pneg %p524
    $region86: #{layer2_forward.1} parent=5 // pred_check_branch
      %527 = sbr.rel (%p525) target = $region88
    $region87: #{layer2_forward.1} parent=5 // pred_region
      // Predicated region
      $region89: #{layer2_forward.1} parent=87 // pred_check
        %p528 = pneg %p45
      $region90: #{layer2_forward.1} parent=87 // pred_check_branch
        %530 = sbr.rel (%p528) target = $region92
      $region91: #{layer2_forward.1} parent=87 // pred_region
        %p531 = scmp.lt.s32.totalorder %s25, 1
        %s532 = scalar_select %p531, %s25, 1
        %s533 = smul.addr %s532, 32
        %s534 = smul.addr %s533, 8
        %s535 = scalar_lea.vmem %s0, %s534
      $region92: #{layer2_forward.1} parent=87 // pred_fallthru
        _
    $region88: #{layer2_forward.1} parent=5 // pred_fallthru
      _
    %p536 = scmp.le.s32.totalorder 1, %s25
    %p537 = scmp.lt.s32.totalorder %s25, 3
    %p538 = pnand %p536, %p537
    %p539 = pneg %p538
    // Predicated region
    $region93: #{layer2_forward.1} parent=5 // pred_check
      _
    $region94: #{layer2_forward.1} parent=5 // pred_check_branch
      %541 = sbr.rel (%p538) target = $region96
    $region95: #{layer2_forward.1} parent=5 // pred_region
      %s542 = ssub.s32 %s25, 1
      %p543 = scmp.lt.s32.totalorder %s30, 1
      %s544 = scalar_select %p543, %s30, 1
      %s545 = smul.addr %s544, 32
      %s546 = smul.addr %s545, 8
      %s547 = scalar_lea.vmem %s0, %s546
      %p548 = pneg %p51
      %p549 = pneg %p48
      %p550 = pneg %p72
      %p551 = pneg %p69
      %p552 = pneg %p93
      %p553 = pneg %p90
      %p554 = pneg %p114
      %p555 = pneg %p111
      %p556 = pneg %p135
      %p557 = pneg %p132
      %p558 = pneg %p156
      %p559 = pneg %p153
      %p560 = pneg %p177
      %p561 = pneg %p174
      %p562 = pneg %p198
      %p563 = pneg %p195
      %p564 = pneg %p219
      %p565 = pneg %p216
      %p566 = pneg %p240
      %p567 = pneg %p237
      %p568 = pneg %p261
      %p569 = pneg %p258
      %p570 = pneg %p282
      %p571 = pneg %p279
      %p572 = pneg %p303
      %p573 = pneg %p300
      %p574 = pneg %p324
      %p575 = pneg %p321
      %p576 = pneg %p345
      %p577 = pneg %p342
      %p578 = pneg %p366
      %p579 = pneg %p363
      %p580 = pneg %p387
      %p581 = pneg %p384
      %p582 = pneg %p408
      %p583 = pneg %p405
      %p584 = pneg %p429
      %p585 = pneg %p426
      %p586 = pneg %p455
      %p587 = pneg %p452
      %p588 = scmp.lt.s32.totalorder %s30, 1
      %s589 = scalar_select %p588, %s30, 1
      %s590 = smul.addr %s589, 8
      %s591 = scalar_lea.vmem %s19, %s590
      %p592 = scmp.lt.s32.totalorder %s30, 1
      %s593 = scalar_select %p592, %s30, 1
      %s594 = smul.addr %s593, 32
      %s595 = smul.addr %s594, 8
      %s596 = scalar_lea.vmem %s0, %s595
      %p597 = scmp.lt.s32.totalorder %s30, 1
      %s598 = scalar_select %p597, %s30, 1
      %s599 = smul.addr %s598, 8
      %s600 = scalar_lea.vmem %s19, %s599
      %vm602 = vcmask 31744
      %603 = vst.msk [vmem:[#allocation2] sm:$0xff] %vm602, 0.0
      %604 = vst.msk [vmem:[#allocation2 + $0x8] sm:$0xff] %vm602, 0.0
      %vm605 = vcmask 25600
      %606 = vst.msk [vmem:[#allocation2 + $0x10] sm:$0x3] %vm605, 0.0
      %607 = vst.msk [vmem:[#allocation2 + $0x18] sm:$0xff] %vm602, 0.0
      %608 = vst.msk [vmem:[#allocation2 + $0x20] sm:$0xff] %vm602, 0.0
      %609 = vst.msk [vmem:[#allocation2 + $0x28] sm:$0x3] %vm605, 0.0
      %610 = vst.msk [vmem:[#allocation2 + $0x30] sm:$0xff] %vm602, 0.0
      %611 = vst.msk [vmem:[#allocation2 + $0x38] sm:$0xff] %vm602, 0.0
      %612 = vst.msk [vmem:[#allocation2 + $0x40] sm:$0x3] %vm605, 0.0
      %613 = vst.msk [vmem:[#allocation2 + $0x48] sm:$0xff] %vm602, 0.0
      %614 = vst.msk [vmem:[#allocation2 + $0x50] sm:$0xff] %vm602, 0.0
      %615 = vst.msk [vmem:[#allocation2 + $0x58] sm:$0x3] %vm605, 0.0
      %616 = vst.msk [vmem:[#allocation2 + $0x60] sm:$0xff] %vm602, 0.0
      %617 = vst.msk [vmem:[#allocation2 + $0x68] sm:$0xff] %vm602, 0.0
      %618 = vst.msk [vmem:[#allocation2 + $0x70] sm:$0x3] %vm605, 0.0
      %619 = vst.msk [vmem:[#allocation2 + $0x78] sm:$0xff] %vm602, 0.0
      %620 = vst.msk [vmem:[#allocation2 + $0x80] sm:$0xff] %vm602, 0.0
      %621 = vst.msk [vmem:[#allocation2 + $0x88] sm:$0x3] %vm605, 0.0
      %622 = vst.msk [vmem:[#allocation2 + $0x90] sm:$0xff] %vm602, 0.0
      %623 = vst.msk [vmem:[#allocation2 + $0x98] sm:$0xff] %vm602, 0.0
      %624 = vst.msk [vmem:[#allocation2 + $0xa0] sm:$0x3] %vm605, 0.0
      %625 = vst.msk [vmem:[#allocation2 + $0xa8] sm:$0xff] %vm602, 0.0
      %626 = vst.msk [vmem:[#allocation2 + $0xb0] sm:$0xff] %vm602, 0.0
      %627 = vst.msk [vmem:[#allocation2 + $0xb8] sm:$0x3] %vm605, 0.0
      %628 = vst.msk [vmem:[#allocation2 + $0xc0] sm:$0xff] %vm602, 0.0
      %629 = vst.msk [vmem:[#allocation2 + $0xc8] sm:$0xff] %vm602, 0.0
      %630 = vst.msk [vmem:[#allocation2 + $0xd0] sm:$0x3] %vm605, 0.0
      %631 = vst.msk [vmem:[#allocation2 + $0xd8] sm:$0xff] %vm602, 0.0
      %632 = vst.msk [vmem:[#allocation2 + $0xe0] sm:$0xff] %vm602, 0.0
      %633 = vst.msk [vmem:[#allocation2 + $0xe8] sm:$0x3] %vm605, 0.0
      %634 = vst.msk [vmem:[#allocation2 + $0xf0] sm:$0xff] %vm602, 0.0
      %635 = vst.msk [vmem:[#allocation2 + $0xf8] sm:$0xff] %vm602, 0.0
      %636 = vst.msk [vmem:[#allocation2 + $0x100] sm:$0x3] %vm605, 0.0
      %637 = vst.msk [vmem:[#allocation2 + $0x108] sm:$0xff] %vm602, 0.0
      %638 = vst.msk [vmem:[#allocation2 + $0x110] sm:$0xff] %vm602, 0.0
      %639 = vst.msk [vmem:[#allocation2 + $0x118] sm:$0x3] %vm605, 0.0
      %640 = vst.msk [vmem:[#allocation2 + $0x120] sm:$0xff] %vm602, 0.0
      %641 = vst.msk [vmem:[#allocation2 + $0x128] sm:$0xff] %vm602, 0.0
      %642 = vst.msk [vmem:[#allocation2 + $0x130] sm:$0x3] %vm605, 0.0
      %643 = vst.msk [vmem:[#allocation2 + $0x138] sm:$0xff] %vm602, 0.0
      %644 = vst.msk [vmem:[#allocation2 + $0x140] sm:$0xff] %vm602, 0.0
      %645 = vst.msk [vmem:[#allocation2 + $0x148] sm:$0x3] %vm605, 0.0
      %646 = vst.msk [vmem:[#allocation2 + $0x150] sm:$0xff] %vm602, 0.0
      %647 = vst.msk [vmem:[#allocation2 + $0x158] sm:$0xff] %vm602, 0.0
      %648 = vst.msk [vmem:[#allocation2 + $0x160] sm:$0x3] %vm605, 0.0
      %649 = vst.msk [vmem:[#allocation2 + $0x168] sm:$0xff] %vm602, 0.0
      %650 = vst.msk [vmem:[#allocation2 + $0x170] sm:$0xff] %vm602, 0.0
      %651 = vst.msk [vmem:[#allocation2 + $0x178] sm:$0x3] %vm605, 0.0
      %652 = vst.msk [vmem:[#allocation2 + $0x180] sm:$0xff] %vm602, 0.0
      %653 = vst.msk [vmem:[#allocation2 + $0x188] sm:$0xff] %vm602, 0.0
      %654 = vst.msk [vmem:[#allocation2 + $0x190] sm:$0x3] %vm605, 0.0
      %655 = vst.msk [vmem:[#allocation2 + $0x198] sm:$0xff] %vm602, 0.0
      %656 = vst.msk [vmem:[#allocation2 + $0x1a0] sm:$0xff] %vm602, 0.0
      %657 = vst.msk [vmem:[#allocation2 + $0x1a8] sm:$0x3] %vm605, 0.0
      %vm658 = vcmask 64512
      %659 = vst.msk [vmem:[#allocation3] sm:$0xff] %vm658, 0.0
      %vm660 = vcmask 58368
      %661 = vst.msk [vmem:[#allocation3 + $0x8] sm:$0x3] %vm660, 0.0
      %662 = vst.msk [vmem:[#allocation3 + $0x10] sm:$0xff] %vm658, 0.0
      %663 = vst.msk [vmem:[#allocation3 + $0x18] sm:$0x3] %vm660, 0.0
      %664 = vst.msk [vmem:[#allocation3 + $0x20] sm:$0xff] %vm658, 0.0
      %665 = vst.msk [vmem:[#allocation3 + $0x28] sm:$0x3] %vm660, 0.0
      %666 = vst.msk [vmem:[#allocation3 + $0x30] sm:$0xff] %vm658, 0.0
      %667 = vst.msk [vmem:[#allocation3 + $0x38] sm:$0x3] %vm660, 0.0
      %668 = vst.msk [vmem:[#allocation3 + $0x40] sm:$0xff] %vm658, 0.0
      %669 = vst.msk [vmem:[#allocation3 + $0x48] sm:$0x3] %vm660, 0.0
      %670 = vst.msk [vmem:[#allocation3 + $0x50] sm:$0xff] %vm658, 0.0
      %671 = vst.msk [vmem:[#allocation3 + $0x58] sm:$0x3] %vm660, 0.0
      %672 = vst.msk [vmem:[#allocation3 + $0x60] sm:$0xff] %vm658, 0.0
      %673 = vst.msk [vmem:[#allocation3 + $0x68] sm:$0x3] %vm660, 0.0
      %674 = vst.msk [vmem:[#allocation3 + $0x70] sm:$0xff] %vm658, 0.0
      %675 = vst.msk [vmem:[#allocation3 + $0x78] sm:$0x3] %vm660, 0.0
      %676 = vst.msk [vmem:[#allocation3 + $0x80] sm:$0xff] %vm658, 0.0
      %677 = vst.msk [vmem:[#allocation3 + $0x88] sm:$0x3] %vm660, 0.0
      %678 = vst.msk [vmem:[#allocation3 + $0x90] sm:$0xff] %vm658, 0.0
      %679 = vst.msk [vmem:[#allocation3 + $0x98] sm:$0x3] %vm660, 0.0
      %v680 = vld [vmem:[%s596] sm:$0xff]
      %v681 = vld [vmem:[%s596 + $0x8] sm:$0xff]
      %v682 = vld [vmem:[%s596 + $0x10] sm:$0xff]
      %v683 = vld [vmem:[%s596 + $0x18] sm:$0xff]
      %v684 = vld [vmem:[%s596 + $0x20] sm:$0xff]
      %v685 = vld [vmem:[%s596 + $0x28] sm:$0xff]
      %v686 = vld [vmem:[%s596 + $0x30] sm:$0xff]
      %v687 = vld [vmem:[%s596 + $0x38] sm:$0xff]
      %v688 = vld [vmem:[%s596 + $0x40] sm:$0xff]
      %v689 = vld [vmem:[%s596 + $0x48] sm:$0xff]
      %v690 = vld [vmem:[%s596 + $0x50] sm:$0xff]
      %v691 = vld [vmem:[%s596 + $0x58] sm:$0xff]
      %v692 = vld [vmem:[%s596 + $0x60] sm:$0xff]
      %v693 = vld [vmem:[%s596 + $0x68] sm:$0xff]
      %v694 = vld [vmem:[%s596 + $0x70] sm:$0xff]
      %v695 = vld [vmem:[%s596 + $0x78] sm:$0xff]
      %v696 = vld [vmem:[%s596 + $0x80] sm:$0xff]
      %v697 = vld [vmem:[%s596 + $0x88] sm:$0xff]
      %v698 = vld [vmem:[%s596 + $0x90] sm:$0xff]
      %v699 = vld [vmem:[%s596 + $0x98] sm:$0xff]
      %v700 = vld [vmem:[%s596 + $0xa0] sm:$0xff]
      %v701 = vld [vmem:[%s596 + $0xa8] sm:$0xff]
      %v702 = vld [vmem:[%s596 + $0xb0] sm:$0xff]
      %v703 = vld [vmem:[%s596 + $0xb8] sm:$0xff]
      %v704 = vld [vmem:[%s596 + $0xc0] sm:$0xff]
      %v705 = vld [vmem:[%s596 + $0xc8] sm:$0xff]
      %v706 = vld [vmem:[%s596 + $0xd0] sm:$0xff]
      %v707 = vld [vmem:[%s596 + $0xd8] sm:$0xff]
      %v708 = vld [vmem:[%s596 + $0xe0] sm:$0xff]
      %v709 = vld [vmem:[%s596 + $0xe8] sm:$0xff]
      %v710 = vld [vmem:[%s596 + $0xf0] sm:$0xff]
      %v711 = vld [vmem:[%s596 + $0xf8] sm:$0xff]
      %s712 = scalar_lea.vmem [#allocation2], 24
      %713 = vst.msk [vmem:[%s712 + $0x1] sm:$0xff] %vm602, %v680
      %714 = vst.msk [vmem:[%s712 + $0x9] sm:$0xff] %vm602, %v681
      %715 = vst.msk [vmem:[%s712 + $0x19] sm:$0xff] %vm602, %v682
      %716 = vst.msk [vmem:[%s712 + $0x21] sm:$0xff] %vm602, %v683
      %717 = vst.msk [vmem:[%s712 + $0x31] sm:$0xff] %vm602, %v684
      %718 = vst.msk [vmem:[%s712 + $0x39] sm:$0xff] %vm602, %v685
      %719 = vst.msk [vmem:[%s712 + $0x49] sm:$0xff] %vm602, %v686
      %720 = vst.msk [vmem:[%s712 + $0x51] sm:$0xff] %vm602, %v687
      %721 = vst.msk [vmem:[%s712 + $0x61] sm:$0xff] %vm602, %v688
      %722 = vst.msk [vmem:[%s712 + $0x69] sm:$0xff] %vm602, %v689
      %723 = vst.msk [vmem:[%s712 + $0x79] sm:$0xff] %vm602, %v690
      %724 = vst.msk [vmem:[%s712 + $0x81] sm:$0xff] %vm602, %v691
      %725 = vst.msk [vmem:[%s712 + $0x91] sm:$0xff] %vm602, %v692
      %726 = vst.msk [vmem:[%s712 + $0x99] sm:$0xff] %vm602, %v693
      %727 = vst.msk [vmem:[%s712 + $0xa9] sm:$0xff] %vm602, %v694
      %728 = vst.msk [vmem:[%s712 + $0xb1] sm:$0xff] %vm602, %v695
      %729 = vst.msk [vmem:[%s712 + $0xc1] sm:$0xff] %vm602, %v696
      %730 = vst.msk [vmem:[%s712 + $0xc9] sm:$0xff] %vm602, %v697
      %731 = vst.msk [vmem:[%s712 + $0xd9] sm:$0xff] %vm602, %v698
      %732 = vst.msk [vmem:[%s712 + $0xe1] sm:$0xff] %vm602, %v699
      %733 = vst.msk [vmem:[%s712 + $0xf1] sm:$0xff] %vm602, %v700
      %734 = vst.msk [vmem:[%s712 + $0xf9] sm:$0xff] %vm602, %v701
      %735 = vst.msk [vmem:[%s712 + $0x109] sm:$0xff] %vm602, %v702
      %736 = vst.msk [vmem:[%s712 + $0x111] sm:$0xff] %vm602, %v703
      %737 = vst.msk [vmem:[%s712 + $0x121] sm:$0xff] %vm602, %v704
      %738 = vst.msk [vmem:[%s712 + $0x129] sm:$0xff] %vm602, %v705
      %739 = vst.msk [vmem:[%s712 + $0x139] sm:$0xff] %vm602, %v706
      %740 = vst.msk [vmem:[%s712 + $0x141] sm:$0xff] %vm602, %v707
      %741 = vst.msk [vmem:[%s712 + $0x151] sm:$0xff] %vm602, %v708
      %742 = vst.msk [vmem:[%s712 + $0x159] sm:$0xff] %vm602, %v709
      %743 = vst.msk [vmem:[%s712 + $0x169] sm:$0xff] %vm602, %v710
      %744 = vst.msk [vmem:[%s712 + $0x171] sm:$0xff] %vm602, %v711
      %v745 = vld [vmem:[#allocation2] sm:$0xff]
      %v746 = vld [vmem:[#allocation2 + $0x8] sm:$0xff]
      %v747 = vld [vmem:[#allocation2 + $0x18] sm:$0xff]
      %v748 = vld [vmem:[#allocation2 + $0x20] sm:$0xff]
      %v749 = vld [vmem:[#allocation2 + $0x30] sm:$0xff]
      %v750 = vld [vmem:[#allocation2 + $0x38] sm:$0xff]
      %v751 = vld [vmem:[#allocation2 + $0x48] sm:$0xff]
      %v752 = vld [vmem:[#allocation2 + $0x50] sm:$0xff]
      %v753 = vld [vmem:[#allocation2 + $0x60] sm:$0xff]
      %v754 = vld [vmem:[#allocation2 + $0x68] sm:$0xff]
      %v755 = vld [vmem:[#allocation2 + $0x78] sm:$0xff]
      %v756 = vld [vmem:[#allocation2 + $0x80] sm:$0xff]
      %v757 = vld [vmem:[#allocation2 + $0x90] sm:$0xff]
      %v758 = vld [vmem:[#allocation2 + $0x98] sm:$0xff]
      %v759 = vld [vmem:[#allocation2 + $0xa8] sm:$0xff]
      %v760 = vld [vmem:[#allocation2 + $0xb0] sm:$0xff]
      %v761 = vld [vmem:[#allocation2 + $0xc0] sm:$0xff]
      %v762 = vld [vmem:[#allocation2 + $0xc8] sm:$0xff]
      %v763 = vld [vmem:[#allocation2 + $0xd8] sm:$0xff]
      %v764 = vld [vmem:[#allocation2 + $0xe0] sm:$0xff]
      %v765 = vld [vmem:[#allocation2 + $0xf0] sm:$0xff]
      %v766 = vld [vmem:[#allocation2 + $0xf8] sm:$0xff]
      %v767 = vld [vmem:[#allocation2 + $0x108] sm:$0xff]
      %v768 = vld [vmem:[#allocation2 + $0x110] sm:$0xff]
      %v769 = vld [vmem:[#allocation2 + $0x120] sm:$0xff]
      %v770 = vld [vmem:[#allocation2 + $0x128] sm:$0xff]
      %v771 = vld [vmem:[#allocation2 + $0x138] sm:$0xff]
      %v772 = vld [vmem:[#allocation2 + $0x140] sm:$0xff]
      %v773 = vld [vmem:[#allocation2 + $0x150] sm:$0xff]
      %v774 = vld [vmem:[#allocation2 + $0x158] sm:$0xff]
      %v775 = vld [vmem:[#allocation2 + $0x168] sm:$0xff]
      %v776 = vld [vmem:[#allocation2 + $0x170] sm:$0xff]
      %v777 = vld [vmem:[#allocation2 + $0x1] sm:$0xff]
      %v778 = vld [vmem:[#allocation2 + $0x9] sm:$0xff]
      %v779 = vld [vmem:[#allocation2 + $0x19] sm:$0xff]
      %v780 = vld [vmem:[#allocation2 + $0x21] sm:$0xff]
      %v781 = vld [vmem:[#allocation2 + $0x31] sm:$0xff]
      %v782 = vld [vmem:[#allocation2 + $0x39] sm:$0xff]
      %v783 = vld [vmem:[#allocation2 + $0x49] sm:$0xff]
      %v784 = vld [vmem:[#allocation2 + $0x51] sm:$0xff]
      %v785 = vld [vmem:[#allocation2 + $0x61] sm:$0xff]
      %v786 = vld [vmem:[#allocation2 + $0x69] sm:$0xff]
      %v787 = vld [vmem:[#allocation2 + $0x79] sm:$0xff]
      %v788 = vld [vmem:[#allocation2 + $0x81] sm:$0xff]
      %v789 = vld [vmem:[#allocation2 + $0x91] sm:$0xff]
      %v790 = vld [vmem:[#allocation2 + $0x99] sm:$0xff]
      %v791 = vld [vmem:[#allocation2 + $0xa9] sm:$0xff]
      %v792 = vld [vmem:[#allocation2 + $0xb1] sm:$0xff]
      %v793 = vld [vmem:[#allocation2 + $0xc1] sm:$0xff]
      %v794 = vld [vmem:[#allocation2 + $0xc9] sm:$0xff]
      %v795 = vld [vmem:[#allocation2 + $0xd9] sm:$0xff]
      %v796 = vld [vmem:[#allocation2 + $0xe1] sm:$0xff]
      %v797 = vld [vmem:[#allocation2 + $0xf1] sm:$0xff]
      %v798 = vld [vmem:[#allocation2 + $0xf9] sm:$0xff]
      %v799 = vld [vmem:[#allocation2 + $0x109] sm:$0xff]
      %v800 = vld [vmem:[#allocation2 + $0x111] sm:$0xff]
      %v801 = vld [vmem:[#allocation2 + $0x121] sm:$0xff]
      %v802 = vld [vmem:[#allocation2 + $0x129] sm:$0xff]
      %v803 = vld [vmem:[#allocation2 + $0x139] sm:$0xff]
      %v804 = vld [vmem:[#allocation2 + $0x141] sm:$0xff]
      %v805 = vld [vmem:[#allocation2 + $0x151] sm:$0xff]
      %v806 = vld [vmem:[#allocation2 + $0x159] sm:$0xff]
      %v807 = vld [vmem:[#allocation2 + $0x169] sm:$0xff]
      %v808 = vld [vmem:[#allocation2 + $0x171] sm:$0xff]
      %v809 = vld [vmem:[#allocation2 + $0x2] sm:$0xff]
      %v810 = vld [vmem:[#allocation2 + $0xa] sm:$0xff]
      %v811 = vld [vmem:[#allocation2 + $0x1a] sm:$0xff]
      %v812 = vld [vmem:[#allocation2 + $0x22] sm:$0xff]
      %v813 = vld [vmem:[#allocation2 + $0x32] sm:$0xff]
      %v814 = vld [vmem:[#allocation2 + $0x3a] sm:$0xff]
      %v815 = vld [vmem:[#allocation2 + $0x4a] sm:$0xff]
      %v816 = vld [vmem:[#allocation2 + $0x52] sm:$0xff]
      %v817 = vld [vmem:[#allocation2 + $0x62] sm:$0xff]
      %v818 = vld [vmem:[#allocation2 + $0x6a] sm:$0xff]
      %v819 = vld [vmem:[#allocation2 + $0x7a] sm:$0xff]
      %v820 = vld [vmem:[#allocation2 + $0x82] sm:$0xff]
      %v821 = vld [vmem:[#allocation2 + $0x92] sm:$0xff]
      %v822 = vld [vmem:[#allocation2 + $0x9a] sm:$0xff]
      %v823 = vld [vmem:[#allocation2 + $0xaa] sm:$0xff]
      %v824 = vld [vmem:[#allocation2 + $0xb2] sm:$0xff]
      %v825 = vld [vmem:[#allocation2 + $0xc2] sm:$0xff]
      %v826 = vld [vmem:[#allocation2 + $0xca] sm:$0xff]
      %v827 = vld [vmem:[#allocation2 + $0xda] sm:$0xff]
      %v828 = vld [vmem:[#allocation2 + $0xe2] sm:$0xff]
      %v829 = vld [vmem:[#allocation2 + $0xf2] sm:$0xff]
      %v830 = vld [vmem:[#allocation2 + $0xfa] sm:$0xff]
      %v831 = vld [vmem:[#allocation2 + $0x10a] sm:$0xff]
      %v832 = vld [vmem:[#allocation2 + $0x112] sm:$0xff]
      %v833 = vld [vmem:[#allocation2 + $0x122] sm:$0xff]
      %v834 = vld [vmem:[#allocation2 + $0x12a] sm:$0xff]
      %v835 = vld [vmem:[#allocation2 + $0x13a] sm:$0xff]
      %v836 = vld [vmem:[#allocation2 + $0x142] sm:$0xff]
      %v837 = vld [vmem:[#allocation2 + $0x152] sm:$0xff]
      %v838 = vld [vmem:[#allocation2 + $0x15a] sm:$0xff]
      %v839 = vld [vmem:[#allocation2 + $0x16a] sm:$0xff]
      %v840 = vld [vmem:[#allocation2 + $0x172] sm:$0xff]
      %v841 = vld [vmem:[%s712] sm:$0xff]
      %v842 = vld [vmem:[%s712 + $0x8] sm:$0xff]
      %v843 = vld [vmem:[%s712 + $0x18] sm:$0xff]
      %v844 = vld [vmem:[%s712 + $0x20] sm:$0xff]
      %v845 = vld [vmem:[%s712 + $0x30] sm:$0xff]
      %v846 = vld [vmem:[%s712 + $0x38] sm:$0xff]
      %v847 = vld [vmem:[%s712 + $0x48] sm:$0xff]
      %v848 = vld [vmem:[%s712 + $0x50] sm:$0xff]
      %v849 = vld [vmem:[%s712 + $0x60] sm:$0xff]
      %v850 = vld [vmem:[%s712 + $0x68] sm:$0xff]
      %v851 = vld [vmem:[%s712 + $0x78] sm:$0xff]
      %v852 = vld [vmem:[%s712 + $0x80] sm:$0xff]
      %v853 = vld [vmem:[%s712 + $0x90] sm:$0xff]
      %v854 = vld [vmem:[%s712 + $0x98] sm:$0xff]
      %v855 = vld [vmem:[%s712 + $0xa8] sm:$0xff]
      %v856 = vld [vmem:[%s712 + $0xb0] sm:$0xff]
      %v857 = vld [vmem:[%s712 + $0xc0] sm:$0xff]
      %v858 = vld [vmem:[%s712 + $0xc8] sm:$0xff]
      %v859 = vld [vmem:[%s712 + $0xd8] sm:$0xff]
      %v860 = vld [vmem:[%s712 + $0xe0] sm:$0xff]
      %v861 = vld [vmem:[%s712 + $0xf0] sm:$0xff]
      %v862 = vld [vmem:[%s712 + $0xf8] sm:$0xff]
      %v863 = vld [vmem:[%s712 + $0x108] sm:$0xff]
      %v864 = vld [vmem:[%s712 + $0x110] sm:$0xff]
      %v865 = vld [vmem:[%s712 + $0x120] sm:$0xff]
      %v866 = vld [vmem:[%s712 + $0x128] sm:$0xff]
      %v867 = vld [vmem:[%s712 + $0x138] sm:$0xff]
      %v868 = vld [vmem:[%s712 + $0x140] sm:$0xff]
      %v869 = vld [vmem:[%s712 + $0x150] sm:$0xff]
      %v870 = vld [vmem:[%s712 + $0x158] sm:$0xff]
      %v871 = vld [vmem:[%s712 + $0x168] sm:$0xff]
      %v872 = vld [vmem:[%s712 + $0x170] sm:$0xff]
      %v873 = vld [vmem:[%s712 + $0x1] sm:$0xff]
      %v874 = vld [vmem:[%s712 + $0x9] sm:$0xff]
      %v875 = vld [vmem:[%s712 + $0x19] sm:$0xff]
      %v876 = vld [vmem:[%s712 + $0x21] sm:$0xff]
      %v877 = vld [vmem:[%s712 + $0x31] sm:$0xff]
      %v878 = vld [vmem:[%s712 + $0x39] sm:$0xff]
      %v879 = vld [vmem:[%s712 + $0x49] sm:$0xff]
      %v880 = vld [vmem:[%s712 + $0x51] sm:$0xff]
      %v881 = vld [vmem:[%s712 + $0x61] sm:$0xff]
      %v882 = vld [vmem:[%s712 + $0x69] sm:$0xff]
      %v883 = vld [vmem:[%s712 + $0x79] sm:$0xff]
      %v884 = vld [vmem:[%s712 + $0x81] sm:$0xff]
      %v885 = vld [vmem:[%s712 + $0x91] sm:$0xff]
      %v886 = vld [vmem:[%s712 + $0x99] sm:$0xff]
      %v887 = vld [vmem:[%s712 + $0xa9] sm:$0xff]
      %v888 = vld [vmem:[%s712 + $0xb1] sm:$0xff]
      %v889 = vld [vmem:[%s712 + $0xc1] sm:$0xff]
      %v890 = vld [vmem:[%s712 + $0xc9] sm:$0xff]
      %v891 = vld [vmem:[%s712 + $0xd9] sm:$0xff]
      %v892 = vld [vmem:[%s712 + $0xe1] sm:$0xff]
      %v893 = vld [vmem:[%s712 + $0xf1] sm:$0xff]
      %v894 = vld [vmem:[%s712 + $0xf9] sm:$0xff]
      %v895 = vld [vmem:[%s712 + $0x109] sm:$0xff]
      %v896 = vld [vmem:[%s712 + $0x111] sm:$0xff]
      %v897 = vld [vmem:[%s712 + $0x121] sm:$0xff]
      %v898 = vld [vmem:[%s712 + $0x129] sm:$0xff]
      %v899 = vld [vmem:[%s712 + $0x139] sm:$0xff]
      %v900 = vld [vmem:[%s712 + $0x141] sm:$0xff]
      %v901 = vld [vmem:[%s712 + $0x151] sm:$0xff]
      %v902 = vld [vmem:[%s712 + $0x159] sm:$0xff]
      %v903 = vld [vmem:[%s712 + $0x169] sm:$0xff]
      %v904 = vld [vmem:[%s712 + $0x171] sm:$0xff]
      %v905 = vld [vmem:[%s712 + $0x2] sm:$0xff]
      %v906 = vld [vmem:[%s712 + $0xa] sm:$0xff]
      %v907 = vld [vmem:[%s712 + $0x1a] sm:$0xff]
      %v908 = vld [vmem:[%s712 + $0x22] sm:$0xff]
      %v909 = vld [vmem:[%s712 + $0x32] sm:$0xff]
      %v910 = vld [vmem:[%s712 + $0x3a] sm:$0xff]
      %v911 = vld [vmem:[%s712 + $0x4a] sm:$0xff]
      %v912 = vld [vmem:[%s712 + $0x52] sm:$0xff]
      %v913 = vld [vmem:[%s712 + $0x62] sm:$0xff]
      %v914 = vld [vmem:[%s712 + $0x6a] sm:$0xff]
      %v915 = vld [vmem:[%s712 + $0x7a] sm:$0xff]
      %v916 = vld [vmem:[%s712 + $0x82] sm:$0xff]
      %v917 = vld [vmem:[%s712 + $0x92] sm:$0xff]
      %v918 = vld [vmem:[%s712 + $0x9a] sm:$0xff]
      %v919 = vld [vmem:[%s712 + $0xaa] sm:$0xff]
      %v920 = vld [vmem:[%s712 + $0xb2] sm:$0xff]
      %v921 = vld [vmem:[%s712 + $0xc2] sm:$0xff]
      %v922 = vld [vmem:[%s712 + $0xca] sm:$0xff]
      %v923 = vld [vmem:[%s712 + $0xda] sm:$0xff]
      %v924 = vld [vmem:[%s712 + $0xe2] sm:$0xff]
      %v925 = vld [vmem:[%s712 + $0xf2] sm:$0xff]
      %v926 = vld [vmem:[%s712 + $0xfa] sm:$0xff]
      %v927 = vld [vmem:[%s712 + $0x10a] sm:$0xff]
      %v928 = vld [vmem:[%s712 + $0x112] sm:$0xff]
      %v929 = vld [vmem:[%s712 + $0x122] sm:$0xff]
      %v930 = vld [vmem:[%s712 + $0x12a] sm:$0xff]
      %v931 = vld [vmem:[%s712 + $0x13a] sm:$0xff]
      %v932 = vld [vmem:[%s712 + $0x142] sm:$0xff]
      %v933 = vld [vmem:[%s712 + $0x152] sm:$0xff]
      %v934 = vld [vmem:[%s712 + $0x15a] sm:$0xff]
      %v935 = vld [vmem:[%s712 + $0x16a] sm:$0xff]
      %v936 = vld [vmem:[%s712 + $0x172] sm:$0xff]
      %s937 = scalar_lea.vmem [#allocation2], 48
      %v938 = vld [vmem:[%s937] sm:$0xff]
      %v939 = vld [vmem:[%s937 + $0x8] sm:$0xff]
      %v940 = vld [vmem:[%s937 + $0x18] sm:$0xff]
      %v941 = vld [vmem:[%s937 + $0x20] sm:$0xff]
      %v942 = vld [vmem:[%s937 + $0x30] sm:$0xff]
      %v943 = vld [vmem:[%s937 + $0x38] sm:$0xff]
      %v944 = vld [vmem:[%s937 + $0x48] sm:$0xff]
      %v945 = vld [vmem:[%s937 + $0x50] sm:$0xff]
      %v946 = vld [vmem:[%s937 + $0x60] sm:$0xff]
      %v947 = vld [vmem:[%s937 + $0x68] sm:$0xff]
      %v948 = vld [vmem:[%s937 + $0x78] sm:$0xff]
      %v949 = vld [vmem:[%s937 + $0x80] sm:$0xff]
      %v950 = vld [vmem:[%s937 + $0x90] sm:$0xff]
      %v951 = vld [vmem:[%s937 + $0x98] sm:$0xff]
      %v952 = vld [vmem:[%s937 + $0xa8] sm:$0xff]
      %v953 = vld [vmem:[%s937 + $0xb0] sm:$0xff]
      %v954 = vld [vmem:[%s937 + $0xc0] sm:$0xff]
      %v955 = vld [vmem:[%s937 + $0xc8] sm:$0xff]
      %v956 = vld [vmem:[%s937 + $0xd8] sm:$0xff]
      %v957 = vld [vmem:[%s937 + $0xe0] sm:$0xff]
      %v958 = vld [vmem:[%s937 + $0xf0] sm:$0xff]
      %v959 = vld [vmem:[%s937 + $0xf8] sm:$0xff]
      %v960 = vld [vmem:[%s937 + $0x108] sm:$0xff]
      %v961 = vld [vmem:[%s937 + $0x110] sm:$0xff]
      %v962 = vld [vmem:[%s937 + $0x120] sm:$0xff]
      %v963 = vld [vmem:[%s937 + $0x128] sm:$0xff]
      %v964 = vld [vmem:[%s937 + $0x138] sm:$0xff]
      %v965 = vld [vmem:[%s937 + $0x140] sm:$0xff]
      %v966 = vld [vmem:[%s937 + $0x150] sm:$0xff]
      %v967 = vld [vmem:[%s937 + $0x158] sm:$0xff]
      %v968 = vld [vmem:[%s937 + $0x168] sm:$0xff]
      %v969 = vld [vmem:[%s937 + $0x170] sm:$0xff]
      %v970 = vld [vmem:[%s937 + $0x1] sm:$0xff]
      %v971 = vld [vmem:[%s937 + $0x9] sm:$0xff]
      %v972 = vld [vmem:[%s937 + $0x19] sm:$0xff]
      %v973 = vld [vmem:[%s937 + $0x21] sm:$0xff]
      %v974 = vld [vmem:[%s937 + $0x31] sm:$0xff]
      %v975 = vld [vmem:[%s937 + $0x39] sm:$0xff]
      %v976 = vld [vmem:[%s937 + $0x49] sm:$0xff]
      %v977 = vld [vmem:[%s937 + $0x51] sm:$0xff]
      %v978 = vld [vmem:[%s937 + $0x61] sm:$0xff]
      %v979 = vld [vmem:[%s937 + $0x69] sm:$0xff]
      %v980 = vld [vmem:[%s937 + $0x79] sm:$0xff]
      %v981 = vld [vmem:[%s937 + $0x81] sm:$0xff]
      %v982 = vld [vmem:[%s937 + $0x91] sm:$0xff]
      %v983 = vld [vmem:[%s937 + $0x99] sm:$0xff]
      %v984 = vld [vmem:[%s937 + $0xa9] sm:$0xff]
      %v985 = vld [vmem:[%s937 + $0xb1] sm:$0xff]
      %v986 = vld [vmem:[%s937 + $0xc1] sm:$0xff]
      %v987 = vld [vmem:[%s937 + $0xc9] sm:$0xff]
      %v988 = vld [vmem:[%s937 + $0xd9] sm:$0xff]
      %v989 = vld [vmem:[%s937 + $0xe1] sm:$0xff]
      %v990 = vld [vmem:[%s937 + $0xf1] sm:$0xff]
      %v991 = vld [vmem:[%s937 + $0xf9] sm:$0xff]
      %v992 = vld [vmem:[%s937 + $0x109] sm:$0xff]
      %v993 = vld [vmem:[%s937 + $0x111] sm:$0xff]
      %v994 = vld [vmem:[%s937 + $0x121] sm:$0xff]
      %v995 = vld [vmem:[%s937 + $0x129] sm:$0xff]
      %v996 = vld [vmem:[%s937 + $0x139] sm:$0xff]
      %v997 = vld [vmem:[%s937 + $0x141] sm:$0xff]
      %v998 = vld [vmem:[%s937 + $0x151] sm:$0xff]
      %v999 = vld [vmem:[%s937 + $0x159] sm:$0xff]
      %v1000 = vld [vmem:[%s937 + $0x169] sm:$0xff]
      %v1001 = vld [vmem:[%s937 + $0x171] sm:$0xff]
      %v1002 = vld [vmem:[%s937 + $0x2] sm:$0xff]
      %v1003 = vld [vmem:[%s937 + $0xa] sm:$0xff]
      %v1004 = vld [vmem:[%s937 + $0x1a] sm:$0xff]
      %v1005 = vld [vmem:[%s937 + $0x22] sm:$0xff]
      %v1006 = vld [vmem:[%s937 + $0x32] sm:$0xff]
      %v1007 = vld [vmem:[%s937 + $0x3a] sm:$0xff]
      %v1008 = vld [vmem:[%s937 + $0x4a] sm:$0xff]
      %v1009 = vld [vmem:[%s937 + $0x52] sm:$0xff]
      %v1010 = vld [vmem:[%s937 + $0x62] sm:$0xff]
      %v1011 = vld [vmem:[%s937 + $0x6a] sm:$0xff]
      %v1012 = vld [vmem:[%s937 + $0x7a] sm:$0xff]
      %v1013 = vld [vmem:[%s937 + $0x82] sm:$0xff]
      %v1014 = vld [vmem:[%s937 + $0x92] sm:$0xff]
      %v1015 = vld [vmem:[%s937 + $0x9a] sm:$0xff]
      %v1016 = vld [vmem:[%s937 + $0xaa] sm:$0xff]
      %v1017 = vld [vmem:[%s937 + $0xb2] sm:$0xff]
      %v1018 = vld [vmem:[%s937 + $0xc2] sm:$0xff]
      %v1019 = vld [vmem:[%s937 + $0xca] sm:$0xff]
      %v1020 = vld [vmem:[%s937 + $0xda] sm:$0xff]
      %v1021 = vld [vmem:[%s937 + $0xe2] sm:$0xff]
      %v1022 = vld [vmem:[%s937 + $0xf2] sm:$0xff]
      %v1023 = vld [vmem:[%s937 + $0xfa] sm:$0xff]
      %v1024 = vld [vmem:[%s937 + $0x10a] sm:$0xff]
      %v1025 = vld [vmem:[%s937 + $0x112] sm:$0xff]
      %v1026 = vld [vmem:[%s937 + $0x122] sm:$0xff]
      %v1027 = vld [vmem:[%s937 + $0x12a] sm:$0xff]
      %v1028 = vld [vmem:[%s937 + $0x13a] sm:$0xff]
      %v1029 = vld [vmem:[%s937 + $0x142] sm:$0xff]
      %v1030 = vld [vmem:[%s937 + $0x152] sm:$0xff]
      %v1031 = vld [vmem:[%s937 + $0x15a] sm:$0xff]
      %v1032 = vld [vmem:[%s937 + $0x16a] sm:$0xff]
      %v1033 = vld [vmem:[%s937 + $0x172] sm:$0xff]
      %1066 = vrot.lane.b32.xlu0 %v777, 4
      %v1067 = vpop.permute.xlu0 %1066
      %1068 = vrot.lane.b32.xlu0 %v778, 4
      %v1069 = vpop.permute.xlu0 %1068
      %1070 = vrot.lane.b32.xlu0 %v779, 4
      %v1071 = vpop.permute.xlu0 %1070
      %1072 = vrot.lane.b32.xlu0 %v780, 4
      %v1073 = vpop.permute.xlu0 %1072
      %1074 = vrot.lane.b32.xlu0 %v781, 4
      %v1075 = vpop.permute.xlu0 %1074
      %1076 = vrot.lane.b32.xlu0 %v782, 4
      %v1077 = vpop.permute.xlu0 %1076
      %1078 = vrot.lane.b32.xlu0 %v783, 4
      %v1079 = vpop.permute.xlu0 %1078
      %1080 = vrot.lane.b32.xlu0 %v784, 4
      %v1081 = vpop.permute.xlu0 %1080
      %1082 = vrot.lane.b32.xlu0 %v785, 4
      %v1083 = vpop.permute.xlu0 %1082
      %1084 = vrot.lane.b32.xlu0 %v786, 4
      %v1085 = vpop.permute.xlu0 %1084
      %1086 = vrot.lane.b32.xlu0 %v787, 4
      %v1087 = vpop.permute.xlu0 %1086
      %1088 = vrot.lane.b32.xlu0 %v788, 4
      %v1089 = vpop.permute.xlu0 %1088
      %1090 = vrot.lane.b32.xlu0 %v789, 4
      %v1091 = vpop.permute.xlu0 %1090
      %1092 = vrot.lane.b32.xlu0 %v790, 4
      %v1093 = vpop.permute.xlu0 %1092
      %1094 = vrot.lane.b32.xlu0 %v791, 4
      %v1095 = vpop.permute.xlu0 %1094
      %1096 = vrot.lane.b32.xlu0 %v792, 4
      %v1097 = vpop.permute.xlu0 %1096
      %1098 = vrot.lane.b32.xlu0 %v793, 4
      %v1099 = vpop.permute.xlu0 %1098
      %1100 = vrot.lane.b32.xlu0 %v794, 4
      %v1101 = vpop.permute.xlu0 %1100
      %1102 = vrot.lane.b32.xlu0 %v795, 4
      %v1103 = vpop.permute.xlu0 %1102
      %1104 = vrot.lane.b32.xlu0 %v796, 4
      %v1105 = vpop.permute.xlu0 %1104
      %1106 = vrot.lane.b32.xlu0 %v797, 4
      %v1107 = vpop.permute.xlu0 %1106
      %1108 = vrot.lane.b32.xlu0 %v798, 4
      %v1109 = vpop.permute.xlu0 %1108
      %1110 = vrot.lane.b32.xlu0 %v799, 4
      %v1111 = vpop.permute.xlu0 %1110
      %1112 = vrot.lane.b32.xlu0 %v800, 4
      %v1113 = vpop.permute.xlu0 %1112
      %1114 = vrot.lane.b32.xlu0 %v801, 4
      %v1115 = vpop.permute.xlu0 %1114
      %1116 = vrot.lane.b32.xlu0 %v802, 4
      %v1117 = vpop.permute.xlu0 %1116
      %1118 = vrot.lane.b32.xlu0 %v803, 4
      %v1119 = vpop.permute.xlu0 %1118
      %1120 = vrot.lane.b32.xlu0 %v804, 4
      %v1121 = vpop.permute.xlu0 %1120
      %1122 = vrot.lane.b32.xlu0 %v805, 4
      %v1123 = vpop.permute.xlu0 %1122
      %1124 = vrot.lane.b32.xlu0 %v806, 4
      %v1125 = vpop.permute.xlu0 %1124
      %1126 = vrot.lane.b32.xlu0 %v807, 4
      %v1127 = vpop.permute.xlu0 %1126
      %1128 = vrot.lane.b32.xlu0 %v808, 4
      %v1129 = vpop.permute.xlu0 %1128
      %1194 = vrot.lane.b32.xlu0 %v809, 8
      %v1195 = vpop.permute.xlu0 %1194
      %1196 = vrot.lane.b32.xlu0 %v810, 8
      %v1197 = vpop.permute.xlu0 %1196
      %1198 = vrot.lane.b32.xlu0 %v811, 8
      %v1199 = vpop.permute.xlu0 %1198
      %1200 = vrot.lane.b32.xlu0 %v812, 8
      %v1201 = vpop.permute.xlu0 %1200
      %1202 = vrot.lane.b32.xlu0 %v813, 8
      %v1203 = vpop.permute.xlu0 %1202
      %1204 = vrot.lane.b32.xlu0 %v814, 8
      %v1205 = vpop.permute.xlu0 %1204
      %1206 = vrot.lane.b32.xlu0 %v815, 8
      %v1207 = vpop.permute.xlu0 %1206
      %1208 = vrot.lane.b32.xlu0 %v816, 8
      %v1209 = vpop.permute.xlu0 %1208
      %1210 = vrot.lane.b32.xlu0 %v817, 8
      %v1211 = vpop.permute.xlu0 %1210
      %1212 = vrot.lane.b32.xlu0 %v818, 8
      %v1213 = vpop.permute.xlu0 %1212
      %1214 = vrot.lane.b32.xlu0 %v819, 8
      %v1215 = vpop.permute.xlu0 %1214
      %1216 = vrot.lane.b32.xlu0 %v820, 8
      %v1217 = vpop.permute.xlu0 %1216
      %1218 = vrot.lane.b32.xlu0 %v821, 8
      %v1219 = vpop.permute.xlu0 %1218
      %1220 = vrot.lane.b32.xlu0 %v822, 8
      %v1221 = vpop.permute.xlu0 %1220
      %1222 = vrot.lane.b32.xlu0 %v823, 8
      %v1223 = vpop.permute.xlu0 %1222
      %1224 = vrot.lane.b32.xlu0 %v824, 8
      %v1225 = vpop.permute.xlu0 %1224
      %1226 = vrot.lane.b32.xlu0 %v825, 8
      %v1227 = vpop.permute.xlu0 %1226
      %1228 = vrot.lane.b32.xlu0 %v826, 8
      %v1229 = vpop.permute.xlu0 %1228
      %1230 = vrot.lane.b32.xlu0 %v827, 8
      %v1231 = vpop.permute.xlu0 %1230
      %1232 = vrot.lane.b32.xlu0 %v828, 8
      %v1233 = vpop.permute.xlu0 %1232
      %1234 = vrot.lane.b32.xlu0 %v829, 8
      %v1235 = vpop.permute.xlu0 %1234
      %1236 = vrot.lane.b32.xlu0 %v830, 8
      %v1237 = vpop.permute.xlu0 %1236
      %1238 = vrot.lane.b32.xlu0 %v831, 8
      %v1239 = vpop.permute.xlu0 %1238
      %1240 = vrot.lane.b32.xlu0 %v832, 8
      %v1241 = vpop.permute.xlu0 %1240
      %1242 = vrot.lane.b32.xlu0 %v833, 8
      %v1243 = vpop.permute.xlu0 %1242
      %1244 = vrot.lane.b32.xlu0 %v834, 8
      %v1245 = vpop.permute.xlu0 %1244
      %1246 = vrot.lane.b32.xlu0 %v835, 8
      %v1247 = vpop.permute.xlu0 %1246
      %1248 = vrot.lane.b32.xlu0 %v836, 8
      %v1249 = vpop.permute.xlu0 %1248
      %1250 = vrot.lane.b32.xlu0 %v837, 8
      %v1251 = vpop.permute.xlu0 %1250
      %1252 = vrot.lane.b32.xlu0 %v838, 8
      %v1253 = vpop.permute.xlu0 %1252
      %1254 = vrot.lane.b32.xlu0 %v839, 8
      %v1255 = vpop.permute.xlu0 %1254
      %1256 = vrot.lane.b32.xlu0 %v840, 8
      %v1257 = vpop.permute.xlu0 %1256
      %1322 = vrot.lane.b32.xlu0 %v841, 12
      %v1323 = vpop.permute.xlu0 %1322
      %1324 = vrot.lane.b32.xlu0 %v842, 12
      %v1325 = vpop.permute.xlu0 %1324
      %1326 = vrot.lane.b32.xlu0 %v843, 12
      %v1327 = vpop.permute.xlu0 %1326
      %1328 = vrot.lane.b32.xlu0 %v844, 12
      %v1329 = vpop.permute.xlu0 %1328
      %1330 = vrot.lane.b32.xlu0 %v845, 12
      %v1331 = vpop.permute.xlu0 %1330
      %1332 = vrot.lane.b32.xlu0 %v846, 12
      %v1333 = vpop.permute.xlu0 %1332
      %1334 = vrot.lane.b32.xlu0 %v847, 12
      %v1335 = vpop.permute.xlu0 %1334
      %1336 = vrot.lane.b32.xlu0 %v848, 12
      %v1337 = vpop.permute.xlu0 %1336
      %1338 = vrot.lane.b32.xlu0 %v849, 12
      %v1339 = vpop.permute.xlu0 %1338
      %1340 = vrot.lane.b32.xlu0 %v850, 12
      %v1341 = vpop.permute.xlu0 %1340
      %1342 = vrot.lane.b32.xlu0 %v851, 12
      %v1343 = vpop.permute.xlu0 %1342
      %1344 = vrot.lane.b32.xlu0 %v852, 12
      %v1345 = vpop.permute.xlu0 %1344
      %1346 = vrot.lane.b32.xlu0 %v853, 12
      %v1347 = vpop.permute.xlu0 %1346
      %1348 = vrot.lane.b32.xlu0 %v854, 12
      %v1349 = vpop.permute.xlu0 %1348
      %1350 = vrot.lane.b32.xlu0 %v855, 12
      %v1351 = vpop.permute.xlu0 %1350
      %1352 = vrot.lane.b32.xlu0 %v856, 12
      %v1353 = vpop.permute.xlu0 %1352
      %1354 = vrot.lane.b32.xlu0 %v857, 12
      %v1355 = vpop.permute.xlu0 %1354
      %1356 = vrot.lane.b32.xlu0 %v858, 12
      %v1357 = vpop.permute.xlu0 %1356
      %1358 = vrot.lane.b32.xlu0 %v859, 12
      %v1359 = vpop.permute.xlu0 %1358
      %1360 = vrot.lane.b32.xlu0 %v860, 12
      %v1361 = vpop.permute.xlu0 %1360
      %1362 = vrot.lane.b32.xlu0 %v861, 12
      %v1363 = vpop.permute.xlu0 %1362
      %1364 = vrot.lane.b32.xlu0 %v862, 12
      %v1365 = vpop.permute.xlu0 %1364
      %1366 = vrot.lane.b32.xlu0 %v863, 12
      %v1367 = vpop.permute.xlu0 %1366
      %1368 = vrot.lane.b32.xlu0 %v864, 12
      %v1369 = vpop.permute.xlu0 %1368
      %1370 = vrot.lane.b32.xlu0 %v865, 12
      %v1371 = vpop.permute.xlu0 %1370
      %1372 = vrot.lane.b32.xlu0 %v866, 12
      %v1373 = vpop.permute.xlu0 %1372
      %1374 = vrot.lane.b32.xlu0 %v867, 12
      %v1375 = vpop.permute.xlu0 %1374
      %1376 = vrot.lane.b32.xlu0 %v868, 12
      %v1377 = vpop.permute.xlu0 %1376
      %1378 = vrot.lane.b32.xlu0 %v869, 12
      %v1379 = vpop.permute.xlu0 %1378
      %1380 = vrot.lane.b32.xlu0 %v870, 12
      %v1381 = vpop.permute.xlu0 %1380
      %1382 = vrot.lane.b32.xlu0 %v871, 12
      %v1383 = vpop.permute.xlu0 %1382
      %1384 = vrot.lane.b32.xlu0 %v872, 12
      %v1385 = vpop.permute.xlu0 %1384
      %1450 = vrot.lane.b32.xlu0 %v873, 16
      %v1451 = vpop.permute.xlu0 %1450
      %1452 = vrot.lane.b32.xlu0 %v874, 16
      %v1453 = vpop.permute.xlu0 %1452
      %1454 = vrot.lane.b32.xlu0 %v875, 16
      %v1455 = vpop.permute.xlu0 %1454
      %1456 = vrot.lane.b32.xlu0 %v876, 16
      %v1457 = vpop.permute.xlu0 %1456
      %1458 = vrot.lane.b32.xlu0 %v877, 16
      %v1459 = vpop.permute.xlu0 %1458
      %1460 = vrot.lane.b32.xlu0 %v878, 16
      %v1461 = vpop.permute.xlu0 %1460
      %1462 = vrot.lane.b32.xlu0 %v879, 16
      %v1463 = vpop.permute.xlu0 %1462
      %1464 = vrot.lane.b32.xlu0 %v880, 16
      %v1465 = vpop.permute.xlu0 %1464
      %1466 = vrot.lane.b32.xlu0 %v881, 16
      %v1467 = vpop.permute.xlu0 %1466
      %1468 = vrot.lane.b32.xlu0 %v882, 16
      %v1469 = vpop.permute.xlu0 %1468
      %1470 = vrot.lane.b32.xlu0 %v883, 16
      %v1471 = vpop.permute.xlu0 %1470
      %1472 = vrot.lane.b32.xlu0 %v884, 16
      %v1473 = vpop.permute.xlu0 %1472
      %1474 = vrot.lane.b32.xlu0 %v885, 16
      %v1475 = vpop.permute.xlu0 %1474
      %1476 = vrot.lane.b32.xlu0 %v886, 16
      %v1477 = vpop.permute.xlu0 %1476
      %1478 = vrot.lane.b32.xlu0 %v887, 16
      %v1479 = vpop.permute.xlu0 %1478
      %1480 = vrot.lane.b32.xlu0 %v888, 16
      %v1481 = vpop.permute.xlu0 %1480
      %1482 = vrot.lane.b32.xlu0 %v889, 16
      %v1483 = vpop.permute.xlu0 %1482
      %1484 = vrot.lane.b32.xlu0 %v890, 16
      %v1485 = vpop.permute.xlu0 %1484
      %1486 = vrot.lane.b32.xlu0 %v891, 16
      %v1487 = vpop.permute.xlu0 %1486
      %1488 = vrot.lane.b32.xlu0 %v892, 16
      %v1489 = vpop.permute.xlu0 %1488
      %1490 = vrot.lane.b32.xlu0 %v893, 16
      %v1491 = vpop.permute.xlu0 %1490
      %1492 = vrot.lane.b32.xlu0 %v894, 16
      %v1493 = vpop.permute.xlu0 %1492
      %1494 = vrot.lane.b32.xlu0 %v895, 16
      %v1495 = vpop.permute.xlu0 %1494
      %1496 = vrot.lane.b32.xlu0 %v896, 16
      %v1497 = vpop.permute.xlu0 %1496
      %1498 = vrot.lane.b32.xlu0 %v897, 16
      %v1499 = vpop.permute.xlu0 %1498
      %1500 = vrot.lane.b32.xlu0 %v898, 16
      %v1501 = vpop.permute.xlu0 %1500
      %1502 = vrot.lane.b32.xlu0 %v899, 16
      %v1503 = vpop.permute.xlu0 %1502
      %1504 = vrot.lane.b32.xlu0 %v900, 16
      %v1505 = vpop.permute.xlu0 %1504
      %1506 = vrot.lane.b32.xlu0 %v901, 16
      %v1507 = vpop.permute.xlu0 %1506
      %1508 = vrot.lane.b32.xlu0 %v902, 16
      %v1509 = vpop.permute.xlu0 %1508
      %1510 = vrot.lane.b32.xlu0 %v903, 16
      %v1511 = vpop.permute.xlu0 %1510
      %1512 = vrot.lane.b32.xlu0 %v904, 16
      %v1513 = vpop.permute.xlu0 %1512
      %1578 = vrot.lane.b32.xlu0 %v905, 20
      %v1579 = vpop.permute.xlu0 %1578
      %1580 = vrot.lane.b32.xlu0 %v906, 20
      %v1581 = vpop.permute.xlu0 %1580
      %1582 = vrot.lane.b32.xlu0 %v907, 20
      %v1583 = vpop.permute.xlu0 %1582
      %1584 = vrot.lane.b32.xlu0 %v908, 20
      %v1585 = vpop.permute.xlu0 %1584
      %1586 = vrot.lane.b32.xlu0 %v909, 20
      %v1587 = vpop.permute.xlu0 %1586
      %1588 = vrot.lane.b32.xlu0 %v910, 20
      %v1589 = vpop.permute.xlu0 %1588
      %1590 = vrot.lane.b32.xlu0 %v911, 20
      %v1591 = vpop.permute.xlu0 %1590
      %1592 = vrot.lane.b32.xlu0 %v912, 20
      %v1593 = vpop.permute.xlu0 %1592
      %1594 = vrot.lane.b32.xlu0 %v913, 20
      %v1595 = vpop.permute.xlu0 %1594
      %1596 = vrot.lane.b32.xlu0 %v914, 20
      %v1597 = vpop.permute.xlu0 %1596
      %1598 = vrot.lane.b32.xlu0 %v915, 20
      %v1599 = vpop.permute.xlu0 %1598
      %1600 = vrot.lane.b32.xlu0 %v916, 20
      %v1601 = vpop.permute.xlu0 %1600
      %1602 = vrot.lane.b32.xlu0 %v917, 20
      %v1603 = vpop.permute.xlu0 %1602
      %1604 = vrot.lane.b32.xlu0 %v918, 20
      %v1605 = vpop.permute.xlu0 %1604
      %1606 = vrot.lane.b32.xlu0 %v919, 20
      %v1607 = vpop.permute.xlu0 %1606
      %1608 = vrot.lane.b32.xlu0 %v920, 20
      %v1609 = vpop.permute.xlu0 %1608
      %1610 = vrot.lane.b32.xlu0 %v921, 20
      %v1611 = vpop.permute.xlu0 %1610
      %1612 = vrot.lane.b32.xlu0 %v922, 20
      %v1613 = vpop.permute.xlu0 %1612
      %1614 = vrot.lane.b32.xlu0 %v923, 20
      %v1615 = vpop.permute.xlu0 %1614
      %1616 = vrot.lane.b32.xlu0 %v924, 20
      %v1617 = vpop.permute.xlu0 %1616
      %1618 = vrot.lane.b32.xlu0 %v925, 20
      %v1619 = vpop.permute.xlu0 %1618
      %1620 = vrot.lane.b32.xlu0 %v926, 20
      %v1621 = vpop.permute.xlu0 %1620
      %1622 = vrot.lane.b32.xlu0 %v927, 20
      %v1623 = vpop.permute.xlu0 %1622
      %1624 = vrot.lane.b32.xlu0 %v928, 20
      %v1625 = vpop.permute.xlu0 %1624
      %1626 = vrot.lane.b32.xlu0 %v929, 20
      %v1627 = vpop.permute.xlu0 %1626
      %1628 = vrot.lane.b32.xlu0 %v930, 20
      %v1629 = vpop.permute.xlu0 %1628
      %1630 = vrot.lane.b32.xlu0 %v931, 20
      %v1631 = vpop.permute.xlu0 %1630
      %1632 = vrot.lane.b32.xlu0 %v932, 20
      %v1633 = vpop.permute.xlu0 %1632
      %1634 = vrot.lane.b32.xlu0 %v933, 20
      %v1635 = vpop.permute.xlu0 %1634
      %1636 = vrot.lane.b32.xlu0 %v934, 20
      %v1637 = vpop.permute.xlu0 %1636
      %1638 = vrot.lane.b32.xlu0 %v935, 20
      %v1639 = vpop.permute.xlu0 %1638
      %1640 = vrot.lane.b32.xlu0 %v936, 20
      %v1641 = vpop.permute.xlu0 %1640
      %1706 = vrot.lane.b32.xlu0 %v938, 24
      %v1707 = vpop.permute.xlu0 %1706
      %1708 = vrot.lane.b32.xlu0 %v939, 24
      %v1709 = vpop.permute.xlu0 %1708
      %1710 = vrot.lane.b32.xlu0 %v940, 24
      %v1711 = vpop.permute.xlu0 %1710
      %1712 = vrot.lane.b32.xlu0 %v941, 24
      %v1713 = vpop.permute.xlu0 %1712
      %1714 = vrot.lane.b32.xlu0 %v942, 24
      %v1715 = vpop.permute.xlu0 %1714
      %1716 = vrot.lane.b32.xlu0 %v943, 24
      %v1717 = vpop.permute.xlu0 %1716
      %1718 = vrot.lane.b32.xlu0 %v944, 24
      %v1719 = vpop.permute.xlu0 %1718
      %1720 = vrot.lane.b32.xlu0 %v945, 24
      %v1721 = vpop.permute.xlu0 %1720
      %1722 = vrot.lane.b32.xlu0 %v946, 24
      %v1723 = vpop.permute.xlu0 %1722
      %1724 = vrot.lane.b32.xlu0 %v947, 24
      %v1725 = vpop.permute.xlu0 %1724
      %1726 = vrot.lane.b32.xlu0 %v948, 24
      %v1727 = vpop.permute.xlu0 %1726
      %1728 = vrot.lane.b32.xlu0 %v949, 24
      %v1729 = vpop.permute.xlu0 %1728
      %1730 = vrot.lane.b32.xlu0 %v950, 24
      %v1731 = vpop.permute.xlu0 %1730
      %1732 = vrot.lane.b32.xlu0 %v951, 24
      %v1733 = vpop.permute.xlu0 %1732
      %1734 = vrot.lane.b32.xlu0 %v952, 24
      %v1735 = vpop.permute.xlu0 %1734
      %1736 = vrot.lane.b32.xlu0 %v953, 24
      %v1737 = vpop.permute.xlu0 %1736
      %1738 = vrot.lane.b32.xlu0 %v954, 24
      %v1739 = vpop.permute.xlu0 %1738
      %1740 = vrot.lane.b32.xlu0 %v955, 24
      %v1741 = vpop.permute.xlu0 %1740
      %1742 = vrot.lane.b32.xlu0 %v956, 24
      %v1743 = vpop.permute.xlu0 %1742
      %1744 = vrot.lane.b32.xlu0 %v957, 24
      %v1745 = vpop.permute.xlu0 %1744
      %1746 = vrot.lane.b32.xlu0 %v958, 24
      %v1747 = vpop.permute.xlu0 %1746
      %1748 = vrot.lane.b32.xlu0 %v959, 24
      %v1749 = vpop.permute.xlu0 %1748
      %1750 = vrot.lane.b32.xlu0 %v960, 24
      %v1751 = vpop.permute.xlu0 %1750
      %1752 = vrot.lane.b32.xlu0 %v961, 24
      %v1753 = vpop.permute.xlu0 %1752
      %1754 = vrot.lane.b32.xlu0 %v962, 24
      %v1755 = vpop.permute.xlu0 %1754
      %1756 = vrot.lane.b32.xlu0 %v963, 24
      %v1757 = vpop.permute.xlu0 %1756
      %1758 = vrot.lane.b32.xlu0 %v964, 24
      %v1759 = vpop.permute.xlu0 %1758
      %1760 = vrot.lane.b32.xlu0 %v965, 24
      %v1761 = vpop.permute.xlu0 %1760
      %1762 = vrot.lane.b32.xlu0 %v966, 24
      %v1763 = vpop.permute.xlu0 %1762
      %1764 = vrot.lane.b32.xlu0 %v967, 24
      %v1765 = vpop.permute.xlu0 %1764
      %1766 = vrot.lane.b32.xlu0 %v968, 24
      %v1767 = vpop.permute.xlu0 %1766
      %1768 = vrot.lane.b32.xlu0 %v969, 24
      %v1769 = vpop.permute.xlu0 %1768
      %1834 = vrot.lane.b32.xlu0 %v970, 28
      %v1835 = vpop.permute.xlu0 %1834
      %1836 = vrot.lane.b32.xlu0 %v971, 28
      %v1837 = vpop.permute.xlu0 %1836
      %1838 = vrot.lane.b32.xlu0 %v972, 28
      %v1839 = vpop.permute.xlu0 %1838
      %1840 = vrot.lane.b32.xlu0 %v973, 28
      %v1841 = vpop.permute.xlu0 %1840
      %1842 = vrot.lane.b32.xlu0 %v974, 28
      %v1843 = vpop.permute.xlu0 %1842
      %1844 = vrot.lane.b32.xlu0 %v975, 28
      %v1845 = vpop.permute.xlu0 %1844
      %1846 = vrot.lane.b32.xlu0 %v976, 28
      %v1847 = vpop.permute.xlu0 %1846
      %1848 = vrot.lane.b32.xlu0 %v977, 28
      %v1849 = vpop.permute.xlu0 %1848
      %1850 = vrot.lane.b32.xlu0 %v978, 28
      %v1851 = vpop.permute.xlu0 %1850
      %1852 = vrot.lane.b32.xlu0 %v979, 28
      %v1853 = vpop.permute.xlu0 %1852
      %1854 = vrot.lane.b32.xlu0 %v980, 28
      %v1855 = vpop.permute.xlu0 %1854
      %1856 = vrot.lane.b32.xlu0 %v981, 28
      %v1857 = vpop.permute.xlu0 %1856
      %1858 = vrot.lane.b32.xlu0 %v982, 28
      %v1859 = vpop.permute.xlu0 %1858
      %1860 = vrot.lane.b32.xlu0 %v983, 28
      %v1861 = vpop.permute.xlu0 %1860
      %1862 = vrot.lane.b32.xlu0 %v984, 28
      %v1863 = vpop.permute.xlu0 %1862
      %1864 = vrot.lane.b32.xlu0 %v985, 28
      %v1865 = vpop.permute.xlu0 %1864
      %1866 = vrot.lane.b32.xlu0 %v986, 28
      %v1867 = vpop.permute.xlu0 %1866
      %1868 = vrot.lane.b32.xlu0 %v987, 28
      %v1869 = vpop.permute.xlu0 %1868
      %1870 = vrot.lane.b32.xlu0 %v988, 28
      %v1871 = vpop.permute.xlu0 %1870
      %1872 = vrot.lane.b32.xlu0 %v989, 28
      %v1873 = vpop.permute.xlu0 %1872
      %1874 = vrot.lane.b32.xlu0 %v990, 28
      %v1875 = vpop.permute.xlu0 %1874
      %1876 = vrot.lane.b32.xlu0 %v991, 28
      %v1877 = vpop.permute.xlu0 %1876
      %1878 = vrot.lane.b32.xlu0 %v992, 28
      %v1879 = vpop.permute.xlu0 %1878
      %1880 = vrot.lane.b32.xlu0 %v993, 28
      %v1881 = vpop.permute.xlu0 %1880
      %1882 = vrot.lane.b32.xlu0 %v994, 28
      %v1883 = vpop.permute.xlu0 %1882
      %1884 = vrot.lane.b32.xlu0 %v995, 28
      %v1885 = vpop.permute.xlu0 %1884
      %1886 = vrot.lane.b32.xlu0 %v996, 28
      %v1887 = vpop.permute.xlu0 %1886
      %1888 = vrot.lane.b32.xlu0 %v997, 28
      %v1889 = vpop.permute.xlu0 %1888
      %1890 = vrot.lane.b32.xlu0 %v998, 28
      %v1891 = vpop.permute.xlu0 %1890
      %1892 = vrot.lane.b32.xlu0 %v999, 28
      %v1893 = vpop.permute.xlu0 %1892
      %1894 = vrot.lane.b32.xlu0 %v1000, 28
      %v1895 = vpop.permute.xlu0 %1894
      %1896 = vrot.lane.b32.xlu0 %v1001, 28
      %v1897 = vpop.permute.xlu0 %1896
      %1962 = vrot.lane.b32.xlu0 %v1002, 32
      %v1963 = vpop.permute.xlu0 %1962
      %1964 = vrot.lane.b32.xlu0 %v1003, 32
      %v1965 = vpop.permute.xlu0 %1964
      %1966 = vrot.lane.b32.xlu0 %v1004, 32
      %v1967 = vpop.permute.xlu0 %1966
      %1968 = vrot.lane.b32.xlu0 %v1005, 32
      %v1969 = vpop.permute.xlu0 %1968
      %1970 = vrot.lane.b32.xlu0 %v1006, 32
      %v1971 = vpop.permute.xlu0 %1970
      %1972 = vrot.lane.b32.xlu0 %v1007, 32
      %v1973 = vpop.permute.xlu0 %1972
      %1974 = vrot.lane.b32.xlu0 %v1008, 32
      %v1975 = vpop.permute.xlu0 %1974
      %1976 = vrot.lane.b32.xlu0 %v1009, 32
      %v1977 = vpop.permute.xlu0 %1976
      %1978 = vrot.lane.b32.xlu0 %v1010, 32
      %v1979 = vpop.permute.xlu0 %1978
      %1980 = vrot.lane.b32.xlu0 %v1011, 32
      %v1981 = vpop.permute.xlu0 %1980
      %1982 = vrot.lane.b32.xlu0 %v1012, 32
      %v1983 = vpop.permute.xlu0 %1982
      %1984 = vrot.lane.b32.xlu0 %v1013, 32
      %v1985 = vpop.permute.xlu0 %1984
      %1986 = vrot.lane.b32.xlu0 %v1014, 32
      %v1987 = vpop.permute.xlu0 %1986
      %1988 = vrot.lane.b32.xlu0 %v1015, 32
      %v1989 = vpop.permute.xlu0 %1988
      %1990 = vrot.lane.b32.xlu0 %v1016, 32
      %v1991 = vpop.permute.xlu0 %1990
      %1992 = vrot.lane.b32.xlu0 %v1017, 32
      %v1993 = vpop.permute.xlu0 %1992
      %1994 = vrot.lane.b32.xlu0 %v1018, 32
      %v1995 = vpop.permute.xlu0 %1994
      %1996 = vrot.lane.b32.xlu0 %v1019, 32
      %v1997 = vpop.permute.xlu0 %1996
      %1998 = vrot.lane.b32.xlu0 %v1020, 32
      %v1999 = vpop.permute.xlu0 %1998
      %2000 = vrot.lane.b32.xlu0 %v1021, 32
      %v2001 = vpop.permute.xlu0 %2000
      %2002 = vrot.lane.b32.xlu0 %v1022, 32
      %v2003 = vpop.permute.xlu0 %2002
      %2004 = vrot.lane.b32.xlu0 %v1023, 32
      %v2005 = vpop.permute.xlu0 %2004
      %2006 = vrot.lane.b32.xlu0 %v1024, 32
      %v2007 = vpop.permute.xlu0 %2006
      %2008 = vrot.lane.b32.xlu0 %v1025, 32
      %v2009 = vpop.permute.xlu0 %2008
      %2010 = vrot.lane.b32.xlu0 %v1026, 32
      %v2011 = vpop.permute.xlu0 %2010
      %2012 = vrot.lane.b32.xlu0 %v1027, 32
      %v2013 = vpop.permute.xlu0 %2012
      %2014 = vrot.lane.b32.xlu0 %v1028, 32
      %v2015 = vpop.permute.xlu0 %2014
      %2016 = vrot.lane.b32.xlu0 %v1029, 32
      %v2017 = vpop.permute.xlu0 %2016
      %2018 = vrot.lane.b32.xlu0 %v1030, 32
      %v2019 = vpop.permute.xlu0 %2018
      %2020 = vrot.lane.b32.xlu0 %v1031, 32
      %v2021 = vpop.permute.xlu0 %2020
      %2022 = vrot.lane.b32.xlu0 %v1032, 32
      %v2023 = vpop.permute.xlu0 %2022
      %2024 = vrot.lane.b32.xlu0 %v1033, 32
      %v2025 = vpop.permute.xlu0 %2024
      %v2058 = vsel %vm602, %v745, %v1067
      %v2059 = vsel %vm602, %v746, %v1069
      %v2060 = vsel %vm602, %v747, %v1071
      %v2061 = vsel %vm602, %v748, %v1073
      %v2062 = vsel %vm602, %v749, %v1075
      %v2063 = vsel %vm602, %v750, %v1077
      %v2064 = vsel %vm602, %v751, %v1079
      %v2065 = vsel %vm602, %v752, %v1081
      %v2066 = vsel %vm602, %v753, %v1083
      %v2067 = vsel %vm602, %v754, %v1085
      %v2068 = vsel %vm602, %v755, %v1087
      %v2069 = vsel %vm602, %v756, %v1089
      %v2070 = vsel %vm602, %v757, %v1091
      %v2071 = vsel %vm602, %v758, %v1093
      %v2072 = vsel %vm602, %v759, %v1095
      %v2073 = vsel %vm602, %v760, %v1097
      %v2074 = vsel %vm602, %v761, %v1099
      %v2075 = vsel %vm602, %v762, %v1101
      %v2076 = vsel %vm602, %v763, %v1103
      %v2077 = vsel %vm602, %v764, %v1105
      %v2078 = vsel %vm602, %v765, %v1107
      %v2079 = vsel %vm602, %v766, %v1109
      %v2080 = vsel %vm602, %v767, %v1111
      %v2081 = vsel %vm602, %v768, %v1113
      %v2082 = vsel %vm602, %v769, %v1115
      %v2083 = vsel %vm602, %v770, %v1117
      %v2084 = vsel %vm602, %v771, %v1119
      %v2085 = vsel %vm602, %v772, %v1121
      %v2086 = vsel %vm602, %v773, %v1123
      %v2087 = vsel %vm602, %v774, %v1125
      %v2088 = vsel %vm602, %v775, %v1127
      %v2089 = vsel %vm602, %v776, %v1129
      %v2090 = vsel %vm658, %v2058, %v1195
      %v2091 = vsel %vm658, %v2059, %v1197
      %v2092 = vsel %vm658, %v2060, %v1199
      %v2093 = vsel %vm658, %v2061, %v1201
      %v2094 = vsel %vm658, %v2062, %v1203
      %v2095 = vsel %vm658, %v2063, %v1205
      %v2096 = vsel %vm658, %v2064, %v1207
      %v2097 = vsel %vm658, %v2065, %v1209
      %v2098 = vsel %vm658, %v2066, %v1211
      %v2099 = vsel %vm658, %v2067, %v1213
      %v2100 = vsel %vm658, %v2068, %v1215
      %v2101 = vsel %vm658, %v2069, %v1217
      %v2102 = vsel %vm658, %v2070, %v1219
      %v2103 = vsel %vm658, %v2071, %v1221
      %v2104 = vsel %vm658, %v2072, %v1223
      %v2105 = vsel %vm658, %v2073, %v1225
      %v2106 = vsel %vm658, %v2074, %v1227
      %v2107 = vsel %vm658, %v2075, %v1229
      %v2108 = vsel %vm658, %v2076, %v1231
      %v2109 = vsel %vm658, %v2077, %v1233
      %v2110 = vsel %vm658, %v2078, %v1235
      %v2111 = vsel %vm658, %v2079, %v1237
      %v2112 = vsel %vm658, %v2080, %v1239
      %v2113 = vsel %vm658, %v2081, %v1241
      %v2114 = vsel %vm658, %v2082, %v1243
      %v2115 = vsel %vm658, %v2083, %v1245
      %v2116 = vsel %vm658, %v2084, %v1247
      %v2117 = vsel %vm658, %v2085, %v1249
      %v2118 = vsel %vm658, %v2086, %v1251
      %v2119 = vsel %vm658, %v2087, %v1253
      %v2120 = vsel %vm658, %v2088, %v1255
      %v2121 = vsel %vm658, %v2089, %v1257
      %vm2122 = vcmask 97280
      %v2123 = vsel %vm2122, %v2090, %v1323
      %v2124 = vsel %vm2122, %v2091, %v1325
      %v2125 = vsel %vm2122, %v2092, %v1327
      %v2126 = vsel %vm2122, %v2093, %v1329
      %v2127 = vsel %vm2122, %v2094, %v1331
      %v2128 = vsel %vm2122, %v2095, %v1333
      %v2129 = vsel %vm2122, %v2096, %v1335
      %v2130 = vsel %vm2122, %v2097, %v1337
      %v2131 = vsel %vm2122, %v2098, %v1339
      %v2132 = vsel %vm2122, %v2099, %v1341
      %v2133 = vsel %vm2122, %v2100, %v1343
      %v2134 = vsel %vm2122, %v2101, %v1345
      %v2135 = vsel %vm2122, %v2102, %v1347
      %v2136 = vsel %vm2122, %v2103, %v1349
      %v2137 = vsel %vm2122, %v2104, %v1351
      %v2138 = vsel %vm2122, %v2105, %v1353
      %v2139 = vsel %vm2122, %v2106, %v1355
      %v2140 = vsel %vm2122, %v2107, %v1357
      %v2141 = vsel %vm2122, %v2108, %v1359
      %v2142 = vsel %vm2122, %v2109, %v1361
      %v2143 = vsel %vm2122, %v2110, %v1363
      %v2144 = vsel %vm2122, %v2111, %v1365
      %v2145 = vsel %vm2122, %v2112, %v1367
      %v2146 = vsel %vm2122, %v2113, %v1369
      %v2147 = vsel %vm2122, %v2114, %v1371
      %v2148 = vsel %vm2122, %v2115, %v1373
      %v2149 = vsel %vm2122, %v2116, %v1375
      %v2150 = vsel %vm2122, %v2117, %v1377
      %v2151 = vsel %vm2122, %v2118, %v1379
      %v2152 = vsel %vm2122, %v2119, %v1381
      %v2153 = vsel %vm2122, %v2120, %v1383
      %v2154 = vsel %vm2122, %v2121, %v1385
      %vm2155 = vcmask 130048
      %v2156 = vsel %vm2155, %v2123, %v1451
      %v2157 = vsel %vm2155, %v2124, %v1453
      %v2158 = vsel %vm2155, %v2125, %v1455
      %v2159 = vsel %vm2155, %v2126, %v1457
      %v2160 = vsel %vm2155, %v2127, %v1459
      %v2161 = vsel %vm2155, %v2128, %v1461
      %v2162 = vsel %vm2155, %v2129, %v1463
      %v2163 = vsel %vm2155, %v2130, %v1465
      %v2164 = vsel %vm2155, %v2131, %v1467
      %v2165 = vsel %vm2155, %v2132, %v1469
      %v2166 = vsel %vm2155, %v2133, %v1471
      %v2167 = vsel %vm2155, %v2134, %v1473
      %v2168 = vsel %vm2155, %v2135, %v1475
      %v2169 = vsel %vm2155, %v2136, %v1477
      %v2170 = vsel %vm2155, %v2137, %v1479
      %v2171 = vsel %vm2155, %v2138, %v1481
      %v2172 = vsel %vm2155, %v2139, %v1483
      %v2173 = vsel %vm2155, %v2140, %v1485
      %v2174 = vsel %vm2155, %v2141, %v1487
      %v2175 = vsel %vm2155, %v2142, %v1489
      %v2176 = vsel %vm2155, %v2143, %v1491
      %v2177 = vsel %vm2155, %v2144, %v1493
      %v2178 = vsel %vm2155, %v2145, %v1495
      %v2179 = vsel %vm2155, %v2146, %v1497
      %v2180 = vsel %vm2155, %v2147, %v1499
      %v2181 = vsel %vm2155, %v2148, %v1501
      %v2182 = vsel %vm2155, %v2149, %v1503
      %v2183 = vsel %vm2155, %v2150, %v1505
      %v2184 = vsel %vm2155, %v2151, %v1507
      %v2185 = vsel %vm2155, %v2152, %v1509
      %v2186 = vsel %vm2155, %v2153, %v1511
      %v2187 = vsel %vm2155, %v2154, %v1513
      %vm2188 = vcmask 162816
      %v2189 = vsel %vm2188, %v2156, %v1579
      %v2190 = vsel %vm2188, %v2157, %v1581
      %v2191 = vsel %vm2188, %v2158, %v1583
      %v2192 = vsel %vm2188, %v2159, %v1585
      %v2193 = vsel %vm2188, %v2160, %v1587
      %v2194 = vsel %vm2188, %v2161, %v1589
      %v2195 = vsel %vm2188, %v2162, %v1591
      %v2196 = vsel %vm2188, %v2163, %v1593
      %v2197 = vsel %vm2188, %v2164, %v1595
      %v2198 = vsel %vm2188, %v2165, %v1597
      %v2199 = vsel %vm2188, %v2166, %v1599
      %v2200 = vsel %vm2188, %v2167, %v1601
      %v2201 = vsel %vm2188, %v2168, %v1603
      %v2202 = vsel %vm2188, %v2169, %v1605
      %v2203 = vsel %vm2188, %v2170, %v1607
      %v2204 = vsel %vm2188, %v2171, %v1609
      %v2205 = vsel %vm2188, %v2172, %v1611
      %v2206 = vsel %vm2188, %v2173, %v1613
      %v2207 = vsel %vm2188, %v2174, %v1615
      %v2208 = vsel %vm2188, %v2175, %v1617
      %v2209 = vsel %vm2188, %v2176, %v1619
      %v2210 = vsel %vm2188, %v2177, %v1621
      %v2211 = vsel %vm2188, %v2178, %v1623
      %v2212 = vsel %vm2188, %v2179, %v1625
      %v2213 = vsel %vm2188, %v2180, %v1627
      %v2214 = vsel %vm2188, %v2181, %v1629
      %v2215 = vsel %vm2188, %v2182, %v1631
      %v2216 = vsel %vm2188, %v2183, %v1633
      %v2217 = vsel %vm2188, %v2184, %v1635
      %v2218 = vsel %vm2188, %v2185, %v1637
      %v2219 = vsel %vm2188, %v2186, %v1639
      %v2220 = vsel %vm2188, %v2187, %v1641
      %vm2221 = vcmask 195584
      %v2222 = vsel %vm2221, %v2189, %v1707
      %v2223 = vsel %vm2221, %v2190, %v1709
      %v2224 = vsel %vm2221, %v2191, %v1711
      %v2225 = vsel %vm2221, %v2192, %v1713
      %v2226 = vsel %vm2221, %v2193, %v1715
      %v2227 = vsel %vm2221, %v2194, %v1717
      %v2228 = vsel %vm2221, %v2195, %v1719
      %v2229 = vsel %vm2221, %v2196, %v1721
      %v2230 = vsel %vm2221, %v2197, %v1723
      %v2231 = vsel %vm2221, %v2198, %v1725
      %v2232 = vsel %vm2221, %v2199, %v1727
      %v2233 = vsel %vm2221, %v2200, %v1729
      %v2234 = vsel %vm2221, %v2201, %v1731
      %v2235 = vsel %vm2221, %v2202, %v1733
      %v2236 = vsel %vm2221, %v2203, %v1735
      %v2237 = vsel %vm2221, %v2204, %v1737
      %v2238 = vsel %vm2221, %v2205, %v1739
      %v2239 = vsel %vm2221, %v2206, %v1741
      %v2240 = vsel %vm2221, %v2207, %v1743
      %v2241 = vsel %vm2221, %v2208, %v1745
      %v2242 = vsel %vm2221, %v2209, %v1747
      %v2243 = vsel %vm2221, %v2210, %v1749
      %v2244 = vsel %vm2221, %v2211, %v1751
      %v2245 = vsel %vm2221, %v2212, %v1753
      %v2246 = vsel %vm2221, %v2213, %v1755
      %v2247 = vsel %vm2221, %v2214, %v1757
      %v2248 = vsel %vm2221, %v2215, %v1759
      %v2249 = vsel %vm2221, %v2216, %v1761
      %v2250 = vsel %vm2221, %v2217, %v1763
      %v2251 = vsel %vm2221, %v2218, %v1765
      %v2252 = vsel %vm2221, %v2219, %v1767
      %v2253 = vsel %vm2221, %v2220, %v1769
      %vm2254 = vcmask 228352
      %v2255 = vsel %vm2254, %v2222, %v1835
      %v2256 = vsel %vm2254, %v2223, %v1837
      %v2257 = vsel %vm2254, %v2224, %v1839
      %v2258 = vsel %vm2254, %v2225, %v1841
      %v2259 = vsel %vm2254, %v2226, %v1843
      %v2260 = vsel %vm2254, %v2227, %v1845
      %v2261 = vsel %vm2254, %v2228, %v1847
      %v2262 = vsel %vm2254, %v2229, %v1849
      %v2263 = vsel %vm2254, %v2230, %v1851
      %v2264 = vsel %vm2254, %v2231, %v1853
      %v2265 = vsel %vm2254, %v2232, %v1855
      %v2266 = vsel %vm2254, %v2233, %v1857
      %v2267 = vsel %vm2254, %v2234, %v1859
      %v2268 = vsel %vm2254, %v2235, %v1861
      %v2269 = vsel %vm2254, %v2236, %v1863
      %v2270 = vsel %vm2254, %v2237, %v1865
      %v2271 = vsel %vm2254, %v2238, %v1867
      %v2272 = vsel %vm2254, %v2239, %v1869
      %v2273 = vsel %vm2254, %v2240, %v1871
      %v2274 = vsel %vm2254, %v2241, %v1873
      %v2275 = vsel %vm2254, %v2242, %v1875
      %v2276 = vsel %vm2254, %v2243, %v1877
      %v2277 = vsel %vm2254, %v2244, %v1879
      %v2278 = vsel %vm2254, %v2245, %v1881
      %v2279 = vsel %vm2254, %v2246, %v1883
      %v2280 = vsel %vm2254, %v2247, %v1885
      %v2281 = vsel %vm2254, %v2248, %v1887
      %v2282 = vsel %vm2254, %v2249, %v1889
      %v2283 = vsel %vm2254, %v2250, %v1891
      %v2284 = vsel %vm2254, %v2251, %v1893
      %v2285 = vsel %vm2254, %v2252, %v1895
      %v2286 = vsel %vm2254, %v2253, %v1897
      %vm2287 = vcmask 261120
      %v2288 = vsel %vm2287, %v2255, %v1963
      %v2289 = vsel %vm2287, %v2256, %v1965
      %v2290 = vsel %vm2287, %v2257, %v1967
      %v2291 = vsel %vm2287, %v2258, %v1969
      %v2292 = vsel %vm2287, %v2259, %v1971
      %v2293 = vsel %vm2287, %v2260, %v1973
      %v2294 = vsel %vm2287, %v2261, %v1975
      %v2295 = vsel %vm2287, %v2262, %v1977
      %v2296 = vsel %vm2287, %v2263, %v1979
      %v2297 = vsel %vm2287, %v2264, %v1981
      %v2298 = vsel %vm2287, %v2265, %v1983
      %v2299 = vsel %vm2287, %v2266, %v1985
      %v2300 = vsel %vm2287, %v2267, %v1987
      %v2301 = vsel %vm2287, %v2268, %v1989
      %v2302 = vsel %vm2287, %v2269, %v1991
      %v2303 = vsel %vm2287, %v2270, %v1993
      %v2304 = vsel %vm2287, %v2271, %v1995
      %v2305 = vsel %vm2287, %v2272, %v1997
      %v2306 = vsel %vm2287, %v2273, %v1999
      %v2307 = vsel %vm2287, %v2274, %v2001
      %v2308 = vsel %vm2287, %v2275, %v2003
      %v2309 = vsel %vm2287, %v2276, %v2005
      %v2310 = vsel %vm2287, %v2277, %v2007
      %v2311 = vsel %vm2287, %v2278, %v2009
      %v2312 = vsel %vm2287, %v2279, %v2011
      %v2313 = vsel %vm2287, %v2280, %v2013
      %v2314 = vsel %vm2287, %v2281, %v2015
      %v2315 = vsel %vm2287, %v2282, %v2017
      %v2316 = vsel %vm2287, %v2283, %v2019
      %v2317 = vsel %vm2287, %v2284, %v2021
      %v2318 = vsel %vm2287, %v2285, %v2023
      %v2319 = vsel %vm2287, %v2286, %v2025
      %v2320 = vpack.c.bf16 %v2289, %v2288
      %v2321 = vpack.c.bf16 %v2291, %v2290
      %v2322 = vpack.c.bf16 %v2293, %v2292
      %v2323 = vpack.c.bf16 %v2295, %v2294
      %v2324 = vpack.c.bf16 %v2297, %v2296
      %v2325 = vpack.c.bf16 %v2299, %v2298
      %v2326 = vpack.c.bf16 %v2301, %v2300
      %v2327 = vpack.c.bf16 %v2303, %v2302
      %v2328 = vpack.c.bf16 %v2305, %v2304
      %v2329 = vpack.c.bf16 %v2307, %v2306
      %v2330 = vpack.c.bf16 %v2309, %v2308
      %v2331 = vpack.c.bf16 %v2311, %v2310
      %v2332 = vpack.c.bf16 %v2313, %v2312
      %v2333 = vpack.c.bf16 %v2315, %v2314
      %v2334 = vpack.c.bf16 %v2317, %v2316
      %v2335 = vpack.c.bf16 %v2319, %v2318
      %v2336 = vld [vmem:[%s1] sm:$0xf]
      %v2337 = vld [vmem:[%s1 + $0x4] sm:$0xf]
      %v2338 = vld [vmem:[%s1 + $0x8] sm:$0xf]
      %v2339 = vld [vmem:[%s1 + $0xc] sm:$0xf]
      %v2340 = vld [vmem:[%s1 + $0x10] sm:$0x3]
      %v2341 = vld [vmem:[%s2] sm:$0x1]
      %v2343 = vlaneseq
      %v2344 = vshrl.u32 %v2343, 7
      %v2345 = vsub.s32 0, %v2344
      %v2346 = vrot.slane %v2341, %v2345
      %v2353 = vunpack.c.l.b16 %v2336
      %v2354 = vunpack.c.l.b16 %v2337
      %v2355 = vunpack.c.l.b16 %v2338
      %v2356 = vunpack.c.l.b16 %v2339
      %v2357 = vunpack.c.l.b16 %v2340
      %v2358 = vpack.c.b16 %v2354, %v2353
      %v2359 = vpack.c.b16 %v2356, %v2355
      %v2360 = vpack.c.b16 %v2357, %v2357
      %vm2363 = vcmask 293888
      %v2365 = vsel %vm2363, %v2320, 0
      %v2368 = vsel %vm2363, %v2321, 0
      %v2371 = vsel %vm2363, %v2322, 0
      %v2374 = vsel %vm2363, %v2323, 0
      %v2377 = vsel %vm2363, %v2324, 0
      %v2380 = vsel %vm2363, %v2325, 0
      %v2383 = vsel %vm2363, %v2326, 0
      %v2386 = vsel %vm2363, %v2327, 0
      %v2389 = vsel %vm2363, %v2328, 0
      %v2392 = vsel %vm2363, %v2329, 0
      %v2395 = vsel %vm2363, %v2330, 0
      %v2398 = vsel %vm2363, %v2331, 0
      %v2401 = vsel %vm2363, %v2332, 0
      %v2404 = vsel %vm2363, %v2333, 0
      %v2407 = vsel %vm2363, %v2334, 0
      %v2410 = vsel %vm2363, %v2335, 0
      %vm2412 = vcmask 1041408
      %v2414 = vsel %vm2412, %v2360, 0
      %2416 = vmatprep.subr.bf16.mxu0 0
      %2417 = vmatpush1.bf16.msra.mxu0 0
      %2418 = vmatprep.subr.bf16.mxu0 0
      %2419 = vmatpush1.bf16.msra.mxu0 0
      %2420 = vmatprep.subr.bf16.mxu0 0
      %2421 = vmatpush1.bf16.msra.mxu0 0
      %2422 = vmatprep.subr.bf16.mxu0 0
      %2423 = vmatpush1.bf16.msra.mxu0 0
      %2424 = vmatprep.subr.bf16.mxu0 0
      %2425 = vmatpush1.bf16.msra.mxu0 0
      %2426 = vmatprep.subr.bf16.mxu0 0
      %2427 = vmatpush1.bf16.msra.mxu0 %v2414
      %2428 = vmatprep.subr.bf16.mxu0 0
      %2429 = vmatpush1.bf16.msra.mxu0 %v2359
      %2430 = vmatprep.subr.bf16.mxu0 0
      %2431 = vmatpush1.bf16.msra.mxu0 %v2358
      %2432 = vmatprep.subr.bf16.mxu0 0
      %2433 = vmatpush2.bf16.msra.mxu0 0
      %2434 = vmatprep.subr.bf16.mxu0 0
      %2435 = vmatpush2.bf16.msra.mxu0 0
      %2436 = vmatprep.subr.bf16.mxu0 0
      %2437 = vmatpush2.bf16.msra.mxu0 0
      %2438 = vmatprep.subr.bf16.mxu0 0
      %2439 = vmatpush2.bf16.msra.mxu0 0
      %2440 = vmatprep.subr.bf16.mxu0 0
      %2441 = vmatpush2.bf16.msra.mxu0 0
      %2442 = vmatprep.subr.bf16.mxu0 0
      %2443 = vmatpush2.bf16.msra.mxu0 0
      %2444 = vmatprep.subr.bf16.mxu0 0
      %2445 = vmatpush2.bf16.msra.mxu0 0
      %2446 = vmatprep.subr.bf16.mxu0 0
      %2447 = vmatpush2.bf16.msra.mxu0 0
      %2448 = vmatprep.mubr.bf16.mxu0 0
      %2449 = vmatmul.mubr.bf16.gmra.mxu0 %v2365
      %v2450 = vpop.f32.mrf.mxu0
      %v2451 = vadd.f32 %v2346, %v2450
      %v2452 = vpop.f32.mrf.mxu0
      %v2453 = vpop.f32.mrf.mxu0
      %v2454 = vadd.f32 %v2346, %v2453
      %v2455 = vpop.f32.mrf.mxu0
      %2456 = vmatprep.mubr.bf16.mxu0 0
      %2457 = vmatmul.mubr.bf16.gmra.mxu0 %v2368
      %v2458 = vpop.f32.mrf.mxu0
      %v2459 = vadd.f32 %v2346, %v2458
      %v2460 = vpop.f32.mrf.mxu0
      %v2461 = vpop.f32.mrf.mxu0
      %v2462 = vadd.f32 %v2346, %v2461
      %v2463 = vpop.f32.mrf.mxu0
      %2464 = vmatprep.mubr.bf16.mxu0 0
      %2465 = vmatmul.mubr.bf16.gmra.mxu0 %v2371
      %v2466 = vpop.f32.mrf.mxu0
      %v2467 = vadd.f32 %v2346, %v2466
      %v2468 = vpop.f32.mrf.mxu0
      %v2469 = vpop.f32.mrf.mxu0
      %v2470 = vadd.f32 %v2346, %v2469
      %v2471 = vpop.f32.mrf.mxu0
      %2472 = vmatprep.mubr.bf16.mxu0 0
      %2473 = vmatmul.mubr.bf16.gmra.mxu0 %v2374
      %v2474 = vpop.f32.mrf.mxu0
      %v2475 = vadd.f32 %v2346, %v2474
      %v2476 = vpop.f32.mrf.mxu0
      %v2477 = vpop.f32.mrf.mxu0
      %v2478 = vadd.f32 %v2346, %v2477
      %v2479 = vpop.f32.mrf.mxu0
      %2480 = vmatprep.mubr.bf16.mxu0 0
      %2481 = vmatmul.mubr.bf16.gmra.mxu0 %v2377
      %v2482 = vpop.f32.mrf.mxu0
      %v2483 = vadd.f32 %v2346, %v2482
      %v2484 = vpop.f32.mrf.mxu0
      %v2485 = vpop.f32.mrf.mxu0
      %v2486 = vadd.f32 %v2346, %v2485
      %v2487 = vpop.f32.mrf.mxu0
      %2488 = vmatprep.mubr.bf16.mxu0 0
      %2489 = vmatmul.mubr.bf16.gmra.mxu0 %v2380
      %v2490 = vpop.f32.mrf.mxu0
      %v2491 = vadd.f32 %v2346, %v2490
      %v2492 = vpop.f32.mrf.mxu0
      %v2493 = vpop.f32.mrf.mxu0
      %v2494 = vadd.f32 %v2346, %v2493
      %v2495 = vpop.f32.mrf.mxu0
      %2496 = vmatprep.mubr.bf16.mxu0 0
      %2497 = vmatmul.mubr.bf16.gmra.mxu0 %v2383
      %v2498 = vpop.f32.mrf.mxu0
      %v2499 = vadd.f32 %v2346, %v2498
      %v2500 = vpop.f32.mrf.mxu0
      %v2501 = vpop.f32.mrf.mxu0
      %v2502 = vadd.f32 %v2346, %v2501
      %v2503 = vpop.f32.mrf.mxu0
      %2504 = vmatprep.mubr.bf16.mxu0 0
      %2505 = vmatmul.mubr.bf16.gmra.mxu0 %v2386
      %v2506 = vpop.f32.mrf.mxu0
      %v2507 = vadd.f32 %v2346, %v2506
      %v2508 = vpop.f32.mrf.mxu0
      %v2509 = vpop.f32.mrf.mxu0
      %v2510 = vadd.f32 %v2346, %v2509
      %v2511 = vpop.f32.mrf.mxu0
      %2512 = vmatprep.mubr.bf16.mxu0 0
      %2513 = vmatmul.mubr.bf16.gmra.mxu0 %v2389
      %v2514 = vpop.f32.mrf.mxu0
      %v2515 = vadd.f32 %v2346, %v2514
      %v2516 = vpop.f32.mrf.mxu0
      %v2517 = vpop.f32.mrf.mxu0
      %v2518 = vadd.f32 %v2346, %v2517
      %v2519 = vpop.f32.mrf.mxu0
      %2520 = vmatprep.mubr.bf16.mxu0 0
      %2521 = vmatmul.mubr.bf16.gmra.mxu0 %v2392
      %v2522 = vpop.f32.mrf.mxu0
      %v2523 = vadd.f32 %v2346, %v2522
      %v2524 = vpop.f32.mrf.mxu0
      %v2525 = vpop.f32.mrf.mxu0
      %v2526 = vadd.f32 %v2346, %v2525
      %v2527 = vpop.f32.mrf.mxu0
      %2528 = vmatprep.mubr.bf16.mxu0 0
      %2529 = vmatmul.mubr.bf16.gmra.mxu0 %v2395
      %v2530 = vpop.f32.mrf.mxu0
      %v2531 = vadd.f32 %v2346, %v2530
      %v2532 = vpop.f32.mrf.mxu0
      %v2533 = vpop.f32.mrf.mxu0
      %v2534 = vadd.f32 %v2346, %v2533
      %v2535 = vpop.f32.mrf.mxu0
      %2536 = vmatprep.mubr.bf16.mxu0 0
      %2537 = vmatmul.mubr.bf16.gmra.mxu0 %v2398
      %v2538 = vpop.f32.mrf.mxu0
      %v2539 = vadd.f32 %v2346, %v2538
      %v2540 = vpop.f32.mrf.mxu0
      %v2541 = vpop.f32.mrf.mxu0
      %v2542 = vadd.f32 %v2346, %v2541
      %v2543 = vpop.f32.mrf.mxu0
      %2544 = vmatprep.mubr.bf16.mxu0 0
      %2545 = vmatmul.mubr.bf16.gmra.mxu0 %v2401
      %v2546 = vpop.f32.mrf.mxu0
      %v2547 = vadd.f32 %v2346, %v2546
      %v2548 = vpop.f32.mrf.mxu0
      %v2549 = vpop.f32.mrf.mxu0
      %v2550 = vadd.f32 %v2346, %v2549
      %v2551 = vpop.f32.mrf.mxu0
      %2552 = vmatprep.mubr.bf16.mxu0 0
      %2553 = vmatmul.mubr.bf16.gmra.mxu0 %v2404
      %v2554 = vpop.f32.mrf.mxu0
      %v2555 = vadd.f32 %v2346, %v2554
      %v2556 = vpop.f32.mrf.mxu0
      %v2557 = vpop.f32.mrf.mxu0
      %v2558 = vadd.f32 %v2346, %v2557
      %v2559 = vpop.f32.mrf.mxu0
      %2560 = vmatprep.mubr.bf16.mxu0 0
      %2561 = vmatmul.mubr.bf16.gmra.mxu0 %v2407
      %v2562 = vpop.f32.mrf.mxu0
      %v2563 = vadd.f32 %v2346, %v2562
      %v2564 = vpop.f32.mrf.mxu0
      %v2565 = vpop.f32.mrf.mxu0
      %v2566 = vadd.f32 %v2346, %v2565
      %v2567 = vpop.f32.mrf.mxu0
      %2568 = vmatprep.mubr.bf16.mxu0 0
      %2569 = vmatmul.mubr.bf16.gmra.mxu0 %v2410
      %v2570 = vpop.f32.mrf.mxu0
      %v2571 = vadd.f32 %v2346, %v2570
      %v2572 = vpop.f32.mrf.mxu0
      %v2573 = vpop.f32.mrf.mxu0
      %v2574 = vadd.f32 %v2346, %v2573
      %v2575 = vpop.f32.mrf.mxu0
      %2576 = vdwg.mxu0
      %v2577 = vmax.f32 %v2451, 0.0
      %v2578 = vmax.f32 %v2454, 0.0
      %v2579 = vmax.f32 %v2459, 0.0
      %v2580 = vmax.f32 %v2462, 0.0
      %v2581 = vmax.f32 %v2467, 0.0
      %v2582 = vmax.f32 %v2470, 0.0
      %v2583 = vmax.f32 %v2475, 0.0
      %v2584 = vmax.f32 %v2478, 0.0
      %v2585 = vmax.f32 %v2483, 0.0
      %v2586 = vmax.f32 %v2486, 0.0
      %v2587 = vmax.f32 %v2491, 0.0
      %v2588 = vmax.f32 %v2494, 0.0
      %v2589 = vmax.f32 %v2499, 0.0
      %v2590 = vmax.f32 %v2502, 0.0
      %v2591 = vmax.f32 %v2507, 0.0
      %v2592 = vmax.f32 %v2510, 0.0
      %v2593 = vmax.f32 %v2515, 0.0
      %v2594 = vmax.f32 %v2518, 0.0
      %v2595 = vmax.f32 %v2523, 0.0
      %v2596 = vmax.f32 %v2526, 0.0
      %v2597 = vmax.f32 %v2531, 0.0
      %v2598 = vmax.f32 %v2534, 0.0
      %v2599 = vmax.f32 %v2539, 0.0
      %v2600 = vmax.f32 %v2542, 0.0
      %v2601 = vmax.f32 %v2547, 0.0
      %v2602 = vmax.f32 %v2550, 0.0
      %v2603 = vmax.f32 %v2555, 0.0
      %v2604 = vmax.f32 %v2558, 0.0
      %v2605 = vmax.f32 %v2563, 0.0
      %v2606 = vmax.f32 %v2566, 0.0
      %v2607 = vmax.f32 %v2571, 0.0
      %v2608 = vmax.f32 %v2574, 0.0
      %2609 = vst.msk [vmem:[%s712 + $0x1] sm:$0xff] %vm602, %v2577
      %2610 = vst.msk [vmem:[%s712 + $0x9] sm:$0xff] %vm602, %v2578
      %2611 = vst.msk [vmem:[%s712 + $0x19] sm:$0xff] %vm602, %v2579
      %2612 = vst.msk [vmem:[%s712 + $0x21] sm:$0xff] %vm602, %v2580
      %2613 = vst.msk [vmem:[%s712 + $0x31] sm:$0xff] %vm602, %v2581
      %2614 = vst.msk [vmem:[%s712 + $0x39] sm:$0xff] %vm602, %v2582
      %2615 = vst.msk [vmem:[%s712 + $0x49] sm:$0xff] %vm602, %v2583
      %2616 = vst.msk [vmem:[%s712 + $0x51] sm:$0xff] %vm602, %v2584
      %2617 = vst.msk [vmem:[%s712 + $0x61] sm:$0xff] %vm602, %v2585
      %2618 = vst.msk [vmem:[%s712 + $0x69] sm:$0xff] %vm602, %v2586
      %2619 = vst.msk [vmem:[%s712 + $0x79] sm:$0xff] %vm602, %v2587
      %2620 = vst.msk [vmem:[%s712 + $0x81] sm:$0xff] %vm602, %v2588
      %2621 = vst.msk [vmem:[%s712 + $0x91] sm:$0xff] %vm602, %v2589
      %2622 = vst.msk [vmem:[%s712 + $0x99] sm:$0xff] %vm602, %v2590
      %2623 = vst.msk [vmem:[%s712 + $0xa9] sm:$0xff] %vm602, %v2591
      %2624 = vst.msk [vmem:[%s712 + $0xb1] sm:$0xff] %vm602, %v2592
      %2625 = vst.msk [vmem:[%s712 + $0xc1] sm:$0xff] %vm602, %v2593
      %2626 = vst.msk [vmem:[%s712 + $0xc9] sm:$0xff] %vm602, %v2594
      %2627 = vst.msk [vmem:[%s712 + $0xd9] sm:$0xff] %vm602, %v2595
      %2628 = vst.msk [vmem:[%s712 + $0xe1] sm:$0xff] %vm602, %v2596
      %2629 = vst.msk [vmem:[%s712 + $0xf1] sm:$0xff] %vm602, %v2597
      %2630 = vst.msk [vmem:[%s712 + $0xf9] sm:$0xff] %vm602, %v2598
      %2631 = vst.msk [vmem:[%s712 + $0x109] sm:$0xff] %vm602, %v2599
      %2632 = vst.msk [vmem:[%s712 + $0x111] sm:$0xff] %vm602, %v2600
      %2633 = vst.msk [vmem:[%s712 + $0x121] sm:$0xff] %vm602, %v2601
      %2634 = vst.msk [vmem:[%s712 + $0x129] sm:$0xff] %vm602, %v2602
      %2635 = vst.msk [vmem:[%s712 + $0x139] sm:$0xff] %vm602, %v2603
      %2636 = vst.msk [vmem:[%s712 + $0x141] sm:$0xff] %vm602, %v2604
      %2637 = vst.msk [vmem:[%s712 + $0x151] sm:$0xff] %vm602, %v2605
      %2638 = vst.msk [vmem:[%s712 + $0x159] sm:$0xff] %vm602, %v2606
      %2639 = vst.msk [vmem:[%s712 + $0x169] sm:$0xff] %vm602, %v2607
      %2640 = vst.msk [vmem:[%s712 + $0x171] sm:$0xff] %vm602, %v2608
      %v2641 = vld [vmem:[#allocation2] sm:$0xff]
      %v2642 = vld [vmem:[#allocation2 + $0x8] sm:$0xff]
      %v2643 = vld [vmem:[#allocation2 + $0x18] sm:$0xff]
      %v2644 = vld [vmem:[#allocation2 + $0x20] sm:$0xff]
      %v2645 = vld [vmem:[#allocation2 + $0x30] sm:$0xff]
      %v2646 = vld [vmem:[#allocation2 + $0x38] sm:$0xff]
      %v2647 = vld [vmem:[#allocation2 + $0x48] sm:$0xff]
      %v2648 = vld [vmem:[#allocation2 + $0x50] sm:$0xff]
      %v2649 = vld [vmem:[#allocation2 + $0x60] sm:$0xff]
      %v2650 = vld [vmem:[#allocation2 + $0x68] sm:$0xff]
      %v2651 = vld [vmem:[#allocation2 + $0x78] sm:$0xff]
      %v2652 = vld [vmem:[#allocation2 + $0x80] sm:$0xff]
      %v2653 = vld [vmem:[#allocation2 + $0x90] sm:$0xff]
      %v2654 = vld [vmem:[#allocation2 + $0x98] sm:$0xff]
      %v2655 = vld [vmem:[#allocation2 + $0xa8] sm:$0xff]
      %v2656 = vld [vmem:[#allocation2 + $0xb0] sm:$0xff]
      %v2657 = vld [vmem:[#allocation2 + $0xc0] sm:$0xff]
      %v2658 = vld [vmem:[#allocation2 + $0xc8] sm:$0xff]
      %v2659 = vld [vmem:[#allocation2 + $0xd8] sm:$0xff]
      %v2660 = vld [vmem:[#allocation2 + $0xe0] sm:$0xff]
      %v2661 = vld [vmem:[#allocation2 + $0xf0] sm:$0xff]
      %v2662 = vld [vmem:[#allocation2 + $0xf8] sm:$0xff]
      %v2663 = vld [vmem:[#allocation2 + $0x108] sm:$0xff]
      %v2664 = vld [vmem:[#allocation2 + $0x110] sm:$0xff]
      %v2665 = vld [vmem:[#allocation2 + $0x120] sm:$0xff]
      %v2666 = vld [vmem:[#allocation2 + $0x128] sm:$0xff]
      %v2667 = vld [vmem:[#allocation2 + $0x138] sm:$0xff]
      %v2668 = vld [vmem:[#allocation2 + $0x140] sm:$0xff]
      %v2669 = vld [vmem:[#allocation2 + $0x150] sm:$0xff]
      %v2670 = vld [vmem:[#allocation2 + $0x158] sm:$0xff]
      %v2671 = vld [vmem:[#allocation2 + $0x168] sm:$0xff]
      %v2672 = vld [vmem:[#allocation2 + $0x170] sm:$0xff]
      %v2673 = vld [vmem:[#allocation2 + $0x1] sm:$0xff]
      %v2674 = vld [vmem:[#allocation2 + $0x9] sm:$0xff]
      %v2675 = vld [vmem:[#allocation2 + $0x19] sm:$0xff]
      %v2676 = vld [vmem:[#allocation2 + $0x21] sm:$0xff]
      %v2677 = vld [vmem:[#allocation2 + $0x31] sm:$0xff]
      %v2678 = vld [vmem:[#allocation2 + $0x39] sm:$0xff]
      %v2679 = vld [vmem:[#allocation2 + $0x49] sm:$0xff]
      %v2680 = vld [vmem:[#allocation2 + $0x51] sm:$0xff]
      %v2681 = vld [vmem:[#allocation2 + $0x61] sm:$0xff]
      %v2682 = vld [vmem:[#allocation2 + $0x69] sm:$0xff]
      %v2683 = vld [vmem:[#allocation2 + $0x79] sm:$0xff]
      %v2684 = vld [vmem:[#allocation2 + $0x81] sm:$0xff]
      %v2685 = vld [vmem:[#allocation2 + $0x91] sm:$0xff]
      %v2686 = vld [vmem:[#allocation2 + $0x99] sm:$0xff]
      %v2687 = vld [vmem:[#allocation2 + $0xa9] sm:$0xff]
      %v2688 = vld [vmem:[#allocation2 + $0xb1] sm:$0xff]
      %v2689 = vld [vmem:[#allocation2 + $0xc1] sm:$0xff]
      %v2690 = vld [vmem:[#allocation2 + $0xc9] sm:$0xff]
      %v2691 = vld [vmem:[#allocation2 + $0xd9] sm:$0xff]
      %v2692 = vld [vmem:[#allocation2 + $0xe1] sm:$0xff]
      %v2693 = vld [vmem:[#allocation2 + $0xf1] sm:$0xff]
      %v2694 = vld [vmem:[#allocation2 + $0xf9] sm:$0xff]
      %v2695 = vld [vmem:[#allocation2 + $0x109] sm:$0xff]
      %v2696 = vld [vmem:[#allocation2 + $0x111] sm:$0xff]
      %v2697 = vld [vmem:[#allocation2 + $0x121] sm:$0xff]
      %v2698 = vld [vmem:[#allocation2 + $0x129] sm:$0xff]
      %v2699 = vld [vmem:[#allocation2 + $0x139] sm:$0xff]
      %v2700 = vld [vmem:[#allocation2 + $0x141] sm:$0xff]
      %v2701 = vld [vmem:[#allocation2 + $0x151] sm:$0xff]
      %v2702 = vld [vmem:[#allocation2 + $0x159] sm:$0xff]
      %v2703 = vld [vmem:[#allocation2 + $0x169] sm:$0xff]
      %v2704 = vld [vmem:[#allocation2 + $0x171] sm:$0xff]
      %v2705 = vld [vmem:[#allocation2 + $0x2] sm:$0xff]
      %v2706 = vld [vmem:[#allocation2 + $0xa] sm:$0xff]
      %v2707 = vld [vmem:[#allocation2 + $0x1a] sm:$0xff]
      %v2708 = vld [vmem:[#allocation2 + $0x22] sm:$0xff]
      %v2709 = vld [vmem:[#allocation2 + $0x32] sm:$0xff]
      %v2710 = vld [vmem:[#allocation2 + $0x3a] sm:$0xff]
      %v2711 = vld [vmem:[#allocation2 + $0x4a] sm:$0xff]
      %v2712 = vld [vmem:[#allocation2 + $0x52] sm:$0xff]
      %v2713 = vld [vmem:[#allocation2 + $0x62] sm:$0xff]
      %v2714 = vld [vmem:[#allocation2 + $0x6a] sm:$0xff]
      %v2715 = vld [vmem:[#allocation2 + $0x7a] sm:$0xff]
      %v2716 = vld [vmem:[#allocation2 + $0x82] sm:$0xff]
      %v2717 = vld [vmem:[#allocation2 + $0x92] sm:$0xff]
      %v2718 = vld [vmem:[#allocation2 + $0x9a] sm:$0xff]
      %v2719 = vld [vmem:[#allocation2 + $0xaa] sm:$0xff]
      %v2720 = vld [vmem:[#allocation2 + $0xb2] sm:$0xff]
      %v2721 = vld [vmem:[#allocation2 + $0xc2] sm:$0xff]
      %v2722 = vld [vmem:[#allocation2 + $0xca] sm:$0xff]
      %v2723 = vld [vmem:[#allocation2 + $0xda] sm:$0xff]
      %v2724 = vld [vmem:[#allocation2 + $0xe2] sm:$0xff]
      %v2725 = vld [vmem:[#allocation2 + $0xf2] sm:$0xff]
      %v2726 = vld [vmem:[#allocation2 + $0xfa] sm:$0xff]
      %v2727 = vld [vmem:[#allocation2 + $0x10a] sm:$0xff]
      %v2728 = vld [vmem:[#allocation2 + $0x112] sm:$0xff]
      %v2729 = vld [vmem:[#allocation2 + $0x122] sm:$0xff]
      %v2730 = vld [vmem:[#allocation2 + $0x12a] sm:$0xff]
      %v2731 = vld [vmem:[#allocation2 + $0x13a] sm:$0xff]
      %v2732 = vld [vmem:[#allocation2 + $0x142] sm:$0xff]
      %v2733 = vld [vmem:[#allocation2 + $0x152] sm:$0xff]
      %v2734 = vld [vmem:[#allocation2 + $0x15a] sm:$0xff]
      %v2735 = vld [vmem:[#allocation2 + $0x16a] sm:$0xff]
      %v2736 = vld [vmem:[#allocation2 + $0x172] sm:$0xff]
      %v2737 = vld [vmem:[%s712] sm:$0xff]
      %v2738 = vld [vmem:[%s712 + $0x8] sm:$0xff]
      %v2739 = vld [vmem:[%s712 + $0x18] sm:$0xff]
      %v2740 = vld [vmem:[%s712 + $0x20] sm:$0xff]
      %v2741 = vld [vmem:[%s712 + $0x30] sm:$0xff]
      %v2742 = vld [vmem:[%s712 + $0x38] sm:$0xff]
      %v2743 = vld [vmem:[%s712 + $0x48] sm:$0xff]
      %v2744 = vld [vmem:[%s712 + $0x50] sm:$0xff]
      %v2745 = vld [vmem:[%s712 + $0x60] sm:$0xff]
      %v2746 = vld [vmem:[%s712 + $0x68] sm:$0xff]
      %v2747 = vld [vmem:[%s712 + $0x78] sm:$0xff]
      %v2748 = vld [vmem:[%s712 + $0x80] sm:$0xff]
      %v2749 = vld [vmem:[%s712 + $0x90] sm:$0xff]
      %v2750 = vld [vmem:[%s712 + $0x98] sm:$0xff]
      %v2751 = vld [vmem:[%s712 + $0xa8] sm:$0xff]
      %v2752 = vld [vmem:[%s712 + $0xb0] sm:$0xff]
      %v2753 = vld [vmem:[%s712 + $0xc0] sm:$0xff]
      %v2754 = vld [vmem:[%s712 + $0xc8] sm:$0xff]
      %v2755 = vld [vmem:[%s712 + $0xd8] sm:$0xff]
      %v2756 = vld [vmem:[%s712 + $0xe0] sm:$0xff]
      %v2757 = vld [vmem:[%s712 + $0xf0] sm:$0xff]
      %v2758 = vld [vmem:[%s712 + $0xf8] sm:$0xff]
      %v2759 = vld [vmem:[%s712 + $0x108] sm:$0xff]
      %v2760 = vld [vmem:[%s712 + $0x110] sm:$0xff]
      %v2761 = vld [vmem:[%s712 + $0x120] sm:$0xff]
      %v2762 = vld [vmem:[%s712 + $0x128] sm:$0xff]
      %v2763 = vld [vmem:[%s712 + $0x138] sm:$0xff]
      %v2764 = vld [vmem:[%s712 + $0x140] sm:$0xff]
      %v2765 = vld [vmem:[%s712 + $0x150] sm:$0xff]
      %v2766 = vld [vmem:[%s712 + $0x158] sm:$0xff]
      %v2767 = vld [vmem:[%s712 + $0x168] sm:$0xff]
      %v2768 = vld [vmem:[%s712 + $0x170] sm:$0xff]
      %v2769 = vld [vmem:[%s712 + $0x1] sm:$0xff]
      %v2770 = vld [vmem:[%s712 + $0x9] sm:$0xff]
      %v2771 = vld [vmem:[%s712 + $0x19] sm:$0xff]
      %v2772 = vld [vmem:[%s712 + $0x21] sm:$0xff]
      %v2773 = vld [vmem:[%s712 + $0x31] sm:$0xff]
      %v2774 = vld [vmem:[%s712 + $0x39] sm:$0xff]
      %v2775 = vld [vmem:[%s712 + $0x49] sm:$0xff]
      %v2776 = vld [vmem:[%s712 + $0x51] sm:$0xff]
      %v2777 = vld [vmem:[%s712 + $0x61] sm:$0xff]
      %v2778 = vld [vmem:[%s712 + $0x69] sm:$0xff]
      %v2779 = vld [vmem:[%s712 + $0x79] sm:$0xff]
      %v2780 = vld [vmem:[%s712 + $0x81] sm:$0xff]
      %v2781 = vld [vmem:[%s712 + $0x91] sm:$0xff]
      %v2782 = vld [vmem:[%s712 + $0x99] sm:$0xff]
      %v2783 = vld [vmem:[%s712 + $0xa9] sm:$0xff]
      %v2784 = vld [vmem:[%s712 + $0xb1] sm:$0xff]
      %v2785 = vld [vmem:[%s712 + $0xc1] sm:$0xff]
      %v2786 = vld [vmem:[%s712 + $0xc9] sm:$0xff]
      %v2787 = vld [vmem:[%s712 + $0xd9] sm:$0xff]
      %v2788 = vld [vmem:[%s712 + $0xe1] sm:$0xff]
      %v2789 = vld [vmem:[%s712 + $0xf1] sm:$0xff]
      %v2790 = vld [vmem:[%s712 + $0xf9] sm:$0xff]
      %v2791 = vld [vmem:[%s712 + $0x109] sm:$0xff]
      %v2792 = vld [vmem:[%s712 + $0x111] sm:$0xff]
      %v2793 = vld [vmem:[%s712 + $0x121] sm:$0xff]
      %v2794 = vld [vmem:[%s712 + $0x129] sm:$0xff]
      %v2795 = vld [vmem:[%s712 + $0x139] sm:$0xff]
      %v2796 = vld [vmem:[%s712 + $0x141] sm:$0xff]
      %v2797 = vld [vmem:[%s712 + $0x151] sm:$0xff]
      %v2798 = vld [vmem:[%s712 + $0x159] sm:$0xff]
      %v2799 = vld [vmem:[%s712 + $0x169] sm:$0xff]
      %v2800 = vld [vmem:[%s712 + $0x171] sm:$0xff]
      %v2801 = vld [vmem:[%s712 + $0x2] sm:$0xff]
      %v2802 = vld [vmem:[%s712 + $0xa] sm:$0xff]
      %v2803 = vld [vmem:[%s712 + $0x1a] sm:$0xff]
      %v2804 = vld [vmem:[%s712 + $0x22] sm:$0xff]
      %v2805 = vld [vmem:[%s712 + $0x32] sm:$0xff]
      %v2806 = vld [vmem:[%s712 + $0x3a] sm:$0xff]
      %v2807 = vld [vmem:[%s712 + $0x4a] sm:$0xff]
      %v2808 = vld [vmem:[%s712 + $0x52] sm:$0xff]
      %v2809 = vld [vmem:[%s712 + $0x62] sm:$0xff]
      %v2810 = vld [vmem:[%s712 + $0x6a] sm:$0xff]
      %v2811 = vld [vmem:[%s712 + $0x7a] sm:$0xff]
      %v2812 = vld [vmem:[%s712 + $0x82] sm:$0xff]
      %v2813 = vld [vmem:[%s712 + $0x92] sm:$0xff]
      %v2814 = vld [vmem:[%s712 + $0x9a] sm:$0xff]
      %v2815 = vld [vmem:[%s712 + $0xaa] sm:$0xff]
      %v2816 = vld [vmem:[%s712 + $0xb2] sm:$0xff]
      %v2817 = vld [vmem:[%s712 + $0xc2] sm:$0xff]
      %v2818 = vld [vmem:[%s712 + $0xca] sm:$0xff]
      %v2819 = vld [vmem:[%s712 + $0xda] sm:$0xff]
      %v2820 = vld [vmem:[%s712 + $0xe2] sm:$0xff]
      %v2821 = vld [vmem:[%s712 + $0xf2] sm:$0xff]
      %v2822 = vld [vmem:[%s712 + $0xfa] sm:$0xff]
      %v2823 = vld [vmem:[%s712 + $0x10a] sm:$0xff]
      %v2824 = vld [vmem:[%s712 + $0x112] sm:$0xff]
      %v2825 = vld [vmem:[%s712 + $0x122] sm:$0xff]
      %v2826 = vld [vmem:[%s712 + $0x12a] sm:$0xff]
      %v2827 = vld [vmem:[%s712 + $0x13a] sm:$0xff]
      %v2828 = vld [vmem:[%s712 + $0x142] sm:$0xff]
      %v2829 = vld [vmem:[%s712 + $0x152] sm:$0xff]
      %v2830 = vld [vmem:[%s712 + $0x15a] sm:$0xff]
      %v2831 = vld [vmem:[%s712 + $0x16a] sm:$0xff]
      %v2832 = vld [vmem:[%s712 + $0x172] sm:$0xff]
      %v2833 = vld [vmem:[%s937] sm:$0xff]
      %v2834 = vld [vmem:[%s937 + $0x8] sm:$0xff]
      %v2835 = vld [vmem:[%s937 + $0x18] sm:$0xff]
      %v2836 = vld [vmem:[%s937 + $0x20] sm:$0xff]
      %v2837 = vld [vmem:[%s937 + $0x30] sm:$0xff]
      %v2838 = vld [vmem:[%s937 + $0x38] sm:$0xff]
      %v2839 = vld [vmem:[%s937 + $0x48] sm:$0xff]
      %v2840 = vld [vmem:[%s937 + $0x50] sm:$0xff]
      %v2841 = vld [vmem:[%s937 + $0x60] sm:$0xff]
      %v2842 = vld [vmem:[%s937 + $0x68] sm:$0xff]
      %v2843 = vld [vmem:[%s937 + $0x78] sm:$0xff]
      %v2844 = vld [vmem:[%s937 + $0x80] sm:$0xff]
      %v2845 = vld [vmem:[%s937 + $0x90] sm:$0xff]
      %v2846 = vld [vmem:[%s937 + $0x98] sm:$0xff]
      %v2847 = vld [vmem:[%s937 + $0xa8] sm:$0xff]
      %v2848 = vld [vmem:[%s937 + $0xb0] sm:$0xff]
      %v2849 = vld [vmem:[%s937 + $0xc0] sm:$0xff]
      %v2850 = vld [vmem:[%s937 + $0xc8] sm:$0xff]
      %v2851 = vld [vmem:[%s937 + $0xd8] sm:$0xff]
      %v2852 = vld [vmem:[%s937 + $0xe0] sm:$0xff]
      %v2853 = vld [vmem:[%s937 + $0xf0] sm:$0xff]
      %v2854 = vld [vmem:[%s937 + $0xf8] sm:$0xff]
      %v2855 = vld [vmem:[%s937 + $0x108] sm:$0xff]
      %v2856 = vld [vmem:[%s937 + $0x110] sm:$0xff]
      %v2857 = vld [vmem:[%s937 + $0x120] sm:$0xff]
      %v2858 = vld [vmem:[%s937 + $0x128] sm:$0xff]
      %v2859 = vld [vmem:[%s937 + $0x138] sm:$0xff]
      %v2860 = vld [vmem:[%s937 + $0x140] sm:$0xff]
      %v2861 = vld [vmem:[%s937 + $0x150] sm:$0xff]
      %v2862 = vld [vmem:[%s937 + $0x158] sm:$0xff]
      %v2863 = vld [vmem:[%s937 + $0x168] sm:$0xff]
      %v2864 = vld [vmem:[%s937 + $0x170] sm:$0xff]
      %v2865 = vld [vmem:[%s937 + $0x1] sm:$0xff]
      %v2866 = vld [vmem:[%s937 + $0x9] sm:$0xff]
      %v2867 = vld [vmem:[%s937 + $0x19] sm:$0xff]
      %v2868 = vld [vmem:[%s937 + $0x21] sm:$0xff]
      %v2869 = vld [vmem:[%s937 + $0x31] sm:$0xff]
      %v2870 = vld [vmem:[%s937 + $0x39] sm:$0xff]
      %v2871 = vld [vmem:[%s937 + $0x49] sm:$0xff]
      %v2872 = vld [vmem:[%s937 + $0x51] sm:$0xff]
      %v2873 = vld [vmem:[%s937 + $0x61] sm:$0xff]
      %v2874 = vld [vmem:[%s937 + $0x69] sm:$0xff]
      %v2875 = vld [vmem:[%s937 + $0x79] sm:$0xff]
      %v2876 = vld [vmem:[%s937 + $0x81] sm:$0xff]
      %v2877 = vld [vmem:[%s937 + $0x91] sm:$0xff]
      %v2878 = vld [vmem:[%s937 + $0x99] sm:$0xff]
      %v2879 = vld [vmem:[%s937 + $0xa9] sm:$0xff]
      %v2880 = vld [vmem:[%s937 + $0xb1] sm:$0xff]
      %v2881 = vld [vmem:[%s937 + $0xc1] sm:$0xff]
      %v2882 = vld [vmem:[%s937 + $0xc9] sm:$0xff]
      %v2883 = vld [vmem:[%s937 + $0xd9] sm:$0xff]
      %v2884 = vld [vmem:[%s937 + $0xe1] sm:$0xff]
      %v2885 = vld [vmem:[%s937 + $0xf1] sm:$0xff]
      %v2886 = vld [vmem:[%s937 + $0xf9] sm:$0xff]
      %v2887 = vld [vmem:[%s937 + $0x109] sm:$0xff]
      %v2888 = vld [vmem:[%s937 + $0x111] sm:$0xff]
      %v2889 = vld [vmem:[%s937 + $0x121] sm:$0xff]
      %v2890 = vld [vmem:[%s937 + $0x129] sm:$0xff]
      %v2891 = vld [vmem:[%s937 + $0x139] sm:$0xff]
      %v2892 = vld [vmem:[%s937 + $0x141] sm:$0xff]
      %v2893 = vld [vmem:[%s937 + $0x151] sm:$0xff]
      %v2894 = vld [vmem:[%s937 + $0x159] sm:$0xff]
      %v2895 = vld [vmem:[%s937 + $0x169] sm:$0xff]
      %v2896 = vld [vmem:[%s937 + $0x171] sm:$0xff]
      %v2897 = vld [vmem:[%s937 + $0x2] sm:$0xff]
      %v2898 = vld [vmem:[%s937 + $0xa] sm:$0xff]
      %v2899 = vld [vmem:[%s937 + $0x1a] sm:$0xff]
      %v2900 = vld [vmem:[%s937 + $0x22] sm:$0xff]
      %v2901 = vld [vmem:[%s937 + $0x32] sm:$0xff]
      %v2902 = vld [vmem:[%s937 + $0x3a] sm:$0xff]
      %v2903 = vld [vmem:[%s937 + $0x4a] sm:$0xff]
      %v2904 = vld [vmem:[%s937 + $0x52] sm:$0xff]
      %v2905 = vld [vmem:[%s937 + $0x62] sm:$0xff]
      %v2906 = vld [vmem:[%s937 + $0x6a] sm:$0xff]
      %v2907 = vld [vmem:[%s937 + $0x7a] sm:$0xff]
      %v2908 = vld [vmem:[%s937 + $0x82] sm:$0xff]
      %v2909 = vld [vmem:[%s937 + $0x92] sm:$0xff]
      %v2910 = vld [vmem:[%s937 + $0x9a] sm:$0xff]
      %v2911 = vld [vmem:[%s937 + $0xaa] sm:$0xff]
      %v2912 = vld [vmem:[%s937 + $0xb2] sm:$0xff]
      %v2913 = vld [vmem:[%s937 + $0xc2] sm:$0xff]
      %v2914 = vld [vmem:[%s937 + $0xca] sm:$0xff]
      %v2915 = vld [vmem:[%s937 + $0xda] sm:$0xff]
      %v2916 = vld [vmem:[%s937 + $0xe2] sm:$0xff]
      %v2917 = vld [vmem:[%s937 + $0xf2] sm:$0xff]
      %v2918 = vld [vmem:[%s937 + $0xfa] sm:$0xff]
      %v2919 = vld [vmem:[%s937 + $0x10a] sm:$0xff]
      %v2920 = vld [vmem:[%s937 + $0x112] sm:$0xff]
      %v2921 = vld [vmem:[%s937 + $0x122] sm:$0xff]
      %v2922 = vld [vmem:[%s937 + $0x12a] sm:$0xff]
      %v2923 = vld [vmem:[%s937 + $0x13a] sm:$0xff]
      %v2924 = vld [vmem:[%s937 + $0x142] sm:$0xff]
      %v2925 = vld [vmem:[%s937 + $0x152] sm:$0xff]
      %v2926 = vld [vmem:[%s937 + $0x15a] sm:$0xff]
      %v2927 = vld [vmem:[%s937 + $0x16a] sm:$0xff]
      %v2928 = vld [vmem:[%s937 + $0x172] sm:$0xff]
      %2961 = vrot.lane.b32.xlu0 %v2673, 4
      %v2962 = vpop.permute.xlu0 %2961
      %2963 = vrot.lane.b32.xlu0 %v2674, 4
      %v2964 = vpop.permute.xlu0 %2963
      %2965 = vrot.lane.b32.xlu0 %v2675, 4
      %v2966 = vpop.permute.xlu0 %2965
      %2967 = vrot.lane.b32.xlu0 %v2676, 4
      %v2968 = vpop.permute.xlu0 %2967
      %2969 = vrot.lane.b32.xlu0 %v2677, 4
      %v2970 = vpop.permute.xlu0 %2969
      %2971 = vrot.lane.b32.xlu0 %v2678, 4
      %v2972 = vpop.permute.xlu0 %2971
      %2973 = vrot.lane.b32.xlu0 %v2679, 4
      %v2974 = vpop.permute.xlu0 %2973
      %2975 = vrot.lane.b32.xlu0 %v2680, 4
      %v2976 = vpop.permute.xlu0 %2975
      %2977 = vrot.lane.b32.xlu0 %v2681, 4
      %v2978 = vpop.permute.xlu0 %2977
      %2979 = vrot.lane.b32.xlu0 %v2682, 4
      %v2980 = vpop.permute.xlu0 %2979
      %2981 = vrot.lane.b32.xlu0 %v2683, 4
      %v2982 = vpop.permute.xlu0 %2981
      %2983 = vrot.lane.b32.xlu0 %v2684, 4
      %v2984 = vpop.permute.xlu0 %2983
      %2985 = vrot.lane.b32.xlu0 %v2685, 4
      %v2986 = vpop.permute.xlu0 %2985
      %2987 = vrot.lane.b32.xlu0 %v2686, 4
      %v2988 = vpop.permute.xlu0 %2987
      %2989 = vrot.lane.b32.xlu0 %v2687, 4
      %v2990 = vpop.permute.xlu0 %2989
      %2991 = vrot.lane.b32.xlu0 %v2688, 4
      %v2992 = vpop.permute.xlu0 %2991
      %2993 = vrot.lane.b32.xlu0 %v2689, 4
      %v2994 = vpop.permute.xlu0 %2993
      %2995 = vrot.lane.b32.xlu0 %v2690, 4
      %v2996 = vpop.permute.xlu0 %2995
      %2997 = vrot.lane.b32.xlu0 %v2691, 4
      %v2998 = vpop.permute.xlu0 %2997
      %2999 = vrot.lane.b32.xlu0 %v2692, 4
      %v3000 = vpop.permute.xlu0 %2999
      %3001 = vrot.lane.b32.xlu0 %v2693, 4
      %v3002 = vpop.permute.xlu0 %3001
      %3003 = vrot.lane.b32.xlu0 %v2694, 4
      %v3004 = vpop.permute.xlu0 %3003
      %3005 = vrot.lane.b32.xlu0 %v2695, 4
      %v3006 = vpop.permute.xlu0 %3005
      %3007 = vrot.lane.b32.xlu0 %v2696, 4
      %v3008 = vpop.permute.xlu0 %3007
      %3009 = vrot.lane.b32.xlu0 %v2697, 4
      %v3010 = vpop.permute.xlu0 %3009
      %3011 = vrot.lane.b32.xlu0 %v2698, 4
      %v3012 = vpop.permute.xlu0 %3011
      %3013 = vrot.lane.b32.xlu0 %v2699, 4
      %v3014 = vpop.permute.xlu0 %3013
      %3015 = vrot.lane.b32.xlu0 %v2700, 4
      %v3016 = vpop.permute.xlu0 %3015
      %3017 = vrot.lane.b32.xlu0 %v2701, 4
      %v3018 = vpop.permute.xlu0 %3017
      %3019 = vrot.lane.b32.xlu0 %v2702, 4
      %v3020 = vpop.permute.xlu0 %3019
      %3021 = vrot.lane.b32.xlu0 %v2703, 4
      %v3022 = vpop.permute.xlu0 %3021
      %3023 = vrot.lane.b32.xlu0 %v2704, 4
      %v3024 = vpop.permute.xlu0 %3023
      %3089 = vrot.lane.b32.xlu0 %v2705, 8
      %v3090 = vpop.permute.xlu0 %3089
      %3091 = vrot.lane.b32.xlu0 %v2706, 8
      %v3092 = vpop.permute.xlu0 %3091
      %3093 = vrot.lane.b32.xlu0 %v2707, 8
      %v3094 = vpop.permute.xlu0 %3093
      %3095 = vrot.lane.b32.xlu0 %v2708, 8
      %v3096 = vpop.permute.xlu0 %3095
      %3097 = vrot.lane.b32.xlu0 %v2709, 8
      %v3098 = vpop.permute.xlu0 %3097
      %3099 = vrot.lane.b32.xlu0 %v2710, 8
      %v3100 = vpop.permute.xlu0 %3099
      %3101 = vrot.lane.b32.xlu0 %v2711, 8
      %v3102 = vpop.permute.xlu0 %3101
      %3103 = vrot.lane.b32.xlu0 %v2712, 8
      %v3104 = vpop.permute.xlu0 %3103
      %3105 = vrot.lane.b32.xlu0 %v2713, 8
      %v3106 = vpop.permute.xlu0 %3105
      %3107 = vrot.lane.b32.xlu0 %v2714, 8
      %v3108 = vpop.permute.xlu0 %3107
      %3109 = vrot.lane.b32.xlu0 %v2715, 8
      %v3110 = vpop.permute.xlu0 %3109
      %3111 = vrot.lane.b32.xlu0 %v2716, 8
      %v3112 = vpop.permute.xlu0 %3111
      %3113 = vrot.lane.b32.xlu0 %v2717, 8
      %v3114 = vpop.permute.xlu0 %3113
      %3115 = vrot.lane.b32.xlu0 %v2718, 8
      %v3116 = vpop.permute.xlu0 %3115
      %3117 = vrot.lane.b32.xlu0 %v2719, 8
      %v3118 = vpop.permute.xlu0 %3117
      %3119 = vrot.lane.b32.xlu0 %v2720, 8
      %v3120 = vpop.permute.xlu0 %3119
      %3121 = vrot.lane.b32.xlu0 %v2721, 8
      %v3122 = vpop.permute.xlu0 %3121
      %3123 = vrot.lane.b32.xlu0 %v2722, 8
      %v3124 = vpop.permute.xlu0 %3123
      %3125 = vrot.lane.b32.xlu0 %v2723, 8
      %v3126 = vpop.permute.xlu0 %3125
      %3127 = vrot.lane.b32.xlu0 %v2724, 8
      %v3128 = vpop.permute.xlu0 %3127
      %3129 = vrot.lane.b32.xlu0 %v2725, 8
      %v3130 = vpop.permute.xlu0 %3129
      %3131 = vrot.lane.b32.xlu0 %v2726, 8
      %v3132 = vpop.permute.xlu0 %3131
      %3133 = vrot.lane.b32.xlu0 %v2727, 8
      %v3134 = vpop.permute.xlu0 %3133
      %3135 = vrot.lane.b32.xlu0 %v2728, 8
      %v3136 = vpop.permute.xlu0 %3135
      %3137 = vrot.lane.b32.xlu0 %v2729, 8
      %v3138 = vpop.permute.xlu0 %3137
      %3139 = vrot.lane.b32.xlu0 %v2730, 8
      %v3140 = vpop.permute.xlu0 %3139
      %3141 = vrot.lane.b32.xlu0 %v2731, 8
      %v3142 = vpop.permute.xlu0 %3141
      %3143 = vrot.lane.b32.xlu0 %v2732, 8
      %v3144 = vpop.permute.xlu0 %3143
      %3145 = vrot.lane.b32.xlu0 %v2733, 8
      %v3146 = vpop.permute.xlu0 %3145
      %3147 = vrot.lane.b32.xlu0 %v2734, 8
      %v3148 = vpop.permute.xlu0 %3147
      %3149 = vrot.lane.b32.xlu0 %v2735, 8
      %v3150 = vpop.permute.xlu0 %3149
      %3151 = vrot.lane.b32.xlu0 %v2736, 8
      %v3152 = vpop.permute.xlu0 %3151
      %3217 = vrot.lane.b32.xlu0 %v2737, 12
      %v3218 = vpop.permute.xlu0 %3217
      %3219 = vrot.lane.b32.xlu0 %v2738, 12
      %v3220 = vpop.permute.xlu0 %3219
      %3221 = vrot.lane.b32.xlu0 %v2739, 12
      %v3222 = vpop.permute.xlu0 %3221
      %3223 = vrot.lane.b32.xlu0 %v2740, 12
      %v3224 = vpop.permute.xlu0 %3223
      %3225 = vrot.lane.b32.xlu0 %v2741, 12
      %v3226 = vpop.permute.xlu0 %3225
      %3227 = vrot.lane.b32.xlu0 %v2742, 12
      %v3228 = vpop.permute.xlu0 %3227
      %3229 = vrot.lane.b32.xlu0 %v2743, 12
      %v3230 = vpop.permute.xlu0 %3229
      %3231 = vrot.lane.b32.xlu0 %v2744, 12
      %v3232 = vpop.permute.xlu0 %3231
      %3233 = vrot.lane.b32.xlu0 %v2745, 12
      %v3234 = vpop.permute.xlu0 %3233
      %3235 = vrot.lane.b32.xlu0 %v2746, 12
      %v3236 = vpop.permute.xlu0 %3235
      %3237 = vrot.lane.b32.xlu0 %v2747, 12
      %v3238 = vpop.permute.xlu0 %3237
      %3239 = vrot.lane.b32.xlu0 %v2748, 12
      %v3240 = vpop.permute.xlu0 %3239
      %3241 = vrot.lane.b32.xlu0 %v2749, 12
      %v3242 = vpop.permute.xlu0 %3241
      %3243 = vrot.lane.b32.xlu0 %v2750, 12
      %v3244 = vpop.permute.xlu0 %3243
      %3245 = vrot.lane.b32.xlu0 %v2751, 12
      %v3246 = vpop.permute.xlu0 %3245
      %3247 = vrot.lane.b32.xlu0 %v2752, 12
      %v3248 = vpop.permute.xlu0 %3247
      %3249 = vrot.lane.b32.xlu0 %v2753, 12
      %v3250 = vpop.permute.xlu0 %3249
      %3251 = vrot.lane.b32.xlu0 %v2754, 12
      %v3252 = vpop.permute.xlu0 %3251
      %3253 = vrot.lane.b32.xlu0 %v2755, 12
      %v3254 = vpop.permute.xlu0 %3253
      %3255 = vrot.lane.b32.xlu0 %v2756, 12
      %v3256 = vpop.permute.xlu0 %3255
      %3257 = vrot.lane.b32.xlu0 %v2757, 12
      %v3258 = vpop.permute.xlu0 %3257
      %3259 = vrot.lane.b32.xlu0 %v2758, 12
      %v3260 = vpop.permute.xlu0 %3259
      %3261 = vrot.lane.b32.xlu0 %v2759, 12
      %v3262 = vpop.permute.xlu0 %3261
      %3263 = vrot.lane.b32.xlu0 %v2760, 12
      %v3264 = vpop.permute.xlu0 %3263
      %3265 = vrot.lane.b32.xlu0 %v2761, 12
      %v3266 = vpop.permute.xlu0 %3265
      %3267 = vrot.lane.b32.xlu0 %v2762, 12
      %v3268 = vpop.permute.xlu0 %3267
      %3269 = vrot.lane.b32.xlu0 %v2763, 12
      %v3270 = vpop.permute.xlu0 %3269
      %3271 = vrot.lane.b32.xlu0 %v2764, 12
      %v3272 = vpop.permute.xlu0 %3271
      %3273 = vrot.lane.b32.xlu0 %v2765, 12
      %v3274 = vpop.permute.xlu0 %3273
      %3275 = vrot.lane.b32.xlu0 %v2766, 12
      %v3276 = vpop.permute.xlu0 %3275
      %3277 = vrot.lane.b32.xlu0 %v2767, 12
      %v3278 = vpop.permute.xlu0 %3277
      %3279 = vrot.lane.b32.xlu0 %v2768, 12
      %v3280 = vpop.permute.xlu0 %3279
      %3345 = vrot.lane.b32.xlu0 %v2769, 16
      %v3346 = vpop.permute.xlu0 %3345
      %3347 = vrot.lane.b32.xlu0 %v2770, 16
      %v3348 = vpop.permute.xlu0 %3347
      %3349 = vrot.lane.b32.xlu0 %v2771, 16
      %v3350 = vpop.permute.xlu0 %3349
      %3351 = vrot.lane.b32.xlu0 %v2772, 16
      %v3352 = vpop.permute.xlu0 %3351
      %3353 = vrot.lane.b32.xlu0 %v2773, 16
      %v3354 = vpop.permute.xlu0 %3353
      %3355 = vrot.lane.b32.xlu0 %v2774, 16
      %v3356 = vpop.permute.xlu0 %3355
      %3357 = vrot.lane.b32.xlu0 %v2775, 16
      %v3358 = vpop.permute.xlu0 %3357
      %3359 = vrot.lane.b32.xlu0 %v2776, 16
      %v3360 = vpop.permute.xlu0 %3359
      %3361 = vrot.lane.b32.xlu0 %v2777, 16
      %v3362 = vpop.permute.xlu0 %3361
      %3363 = vrot.lane.b32.xlu0 %v2778, 16
      %v3364 = vpop.permute.xlu0 %3363
      %3365 = vrot.lane.b32.xlu0 %v2779, 16
      %v3366 = vpop.permute.xlu0 %3365
      %3367 = vrot.lane.b32.xlu0 %v2780, 16
      %v3368 = vpop.permute.xlu0 %3367
      %3369 = vrot.lane.b32.xlu0 %v2781, 16
      %v3370 = vpop.permute.xlu0 %3369
      %3371 = vrot.lane.b32.xlu0 %v2782, 16
      %v3372 = vpop.permute.xlu0 %3371
      %3373 = vrot.lane.b32.xlu0 %v2783, 16
      %v3374 = vpop.permute.xlu0 %3373
      %3375 = vrot.lane.b32.xlu0 %v2784, 16
      %v3376 = vpop.permute.xlu0 %3375
      %3377 = vrot.lane.b32.xlu0 %v2785, 16
      %v3378 = vpop.permute.xlu0 %3377
      %3379 = vrot.lane.b32.xlu0 %v2786, 16
      %v3380 = vpop.permute.xlu0 %3379
      %3381 = vrot.lane.b32.xlu0 %v2787, 16
      %v3382 = vpop.permute.xlu0 %3381
      %3383 = vrot.lane.b32.xlu0 %v2788, 16
      %v3384 = vpop.permute.xlu0 %3383
      %3385 = vrot.lane.b32.xlu0 %v2789, 16
      %v3386 = vpop.permute.xlu0 %3385
      %3387 = vrot.lane.b32.xlu0 %v2790, 16
      %v3388 = vpop.permute.xlu0 %3387
      %3389 = vrot.lane.b32.xlu0 %v2791, 16
      %v3390 = vpop.permute.xlu0 %3389
      %3391 = vrot.lane.b32.xlu0 %v2792, 16
      %v3392 = vpop.permute.xlu0 %3391
      %3393 = vrot.lane.b32.xlu0 %v2793, 16
      %v3394 = vpop.permute.xlu0 %3393
      %3395 = vrot.lane.b32.xlu0 %v2794, 16
      %v3396 = vpop.permute.xlu0 %3395
      %3397 = vrot.lane.b32.xlu0 %v2795, 16
      %v3398 = vpop.permute.xlu0 %3397
      %3399 = vrot.lane.b32.xlu0 %v2796, 16
      %v3400 = vpop.permute.xlu0 %3399
      %3401 = vrot.lane.b32.xlu0 %v2797, 16
      %v3402 = vpop.permute.xlu0 %3401
      %3403 = vrot.lane.b32.xlu0 %v2798, 16
      %v3404 = vpop.permute.xlu0 %3403
      %3405 = vrot.lane.b32.xlu0 %v2799, 16
      %v3406 = vpop.permute.xlu0 %3405
      %3407 = vrot.lane.b32.xlu0 %v2800, 16
      %v3408 = vpop.permute.xlu0 %3407
      %3473 = vrot.lane.b32.xlu0 %v2801, 20
      %v3474 = vpop.permute.xlu0 %3473
      %3475 = vrot.lane.b32.xlu0 %v2802, 20
      %v3476 = vpop.permute.xlu0 %3475
      %3477 = vrot.lane.b32.xlu0 %v2803, 20
      %v3478 = vpop.permute.xlu0 %3477
      %3479 = vrot.lane.b32.xlu0 %v2804, 20
      %v3480 = vpop.permute.xlu0 %3479
      %3481 = vrot.lane.b32.xlu0 %v2805, 20
      %v3482 = vpop.permute.xlu0 %3481
      %3483 = vrot.lane.b32.xlu0 %v2806, 20
      %v3484 = vpop.permute.xlu0 %3483
      %3485 = vrot.lane.b32.xlu0 %v2807, 20
      %v3486 = vpop.permute.xlu0 %3485
      %3487 = vrot.lane.b32.xlu0 %v2808, 20
      %v3488 = vpop.permute.xlu0 %3487
      %3489 = vrot.lane.b32.xlu0 %v2809, 20
      %v3490 = vpop.permute.xlu0 %3489
      %3491 = vrot.lane.b32.xlu0 %v2810, 20
      %v3492 = vpop.permute.xlu0 %3491
      %3493 = vrot.lane.b32.xlu0 %v2811, 20
      %v3494 = vpop.permute.xlu0 %3493
      %3495 = vrot.lane.b32.xlu0 %v2812, 20
      %v3496 = vpop.permute.xlu0 %3495
      %3497 = vrot.lane.b32.xlu0 %v2813, 20
      %v3498 = vpop.permute.xlu0 %3497
      %3499 = vrot.lane.b32.xlu0 %v2814, 20
      %v3500 = vpop.permute.xlu0 %3499
      %3501 = vrot.lane.b32.xlu0 %v2815, 20
      %v3502 = vpop.permute.xlu0 %3501
      %3503 = vrot.lane.b32.xlu0 %v2816, 20
      %v3504 = vpop.permute.xlu0 %3503
      %3505 = vrot.lane.b32.xlu0 %v2817, 20
      %v3506 = vpop.permute.xlu0 %3505
      %3507 = vrot.lane.b32.xlu0 %v2818, 20
      %v3508 = vpop.permute.xlu0 %3507
      %3509 = vrot.lane.b32.xlu0 %v2819, 20
      %v3510 = vpop.permute.xlu0 %3509
      %3511 = vrot.lane.b32.xlu0 %v2820, 20
      %v3512 = vpop.permute.xlu0 %3511
      %3513 = vrot.lane.b32.xlu0 %v2821, 20
      %v3514 = vpop.permute.xlu0 %3513
      %3515 = vrot.lane.b32.xlu0 %v2822, 20
      %v3516 = vpop.permute.xlu0 %3515
      %3517 = vrot.lane.b32.xlu0 %v2823, 20
      %v3518 = vpop.permute.xlu0 %3517
      %3519 = vrot.lane.b32.xlu0 %v2824, 20
      %v3520 = vpop.permute.xlu0 %3519
      %3521 = vrot.lane.b32.xlu0 %v2825, 20
      %v3522 = vpop.permute.xlu0 %3521
      %3523 = vrot.lane.b32.xlu0 %v2826, 20
      %v3524 = vpop.permute.xlu0 %3523
      %3525 = vrot.lane.b32.xlu0 %v2827, 20
      %v3526 = vpop.permute.xlu0 %3525
      %3527 = vrot.lane.b32.xlu0 %v2828, 20
      %v3528 = vpop.permute.xlu0 %3527
      %3529 = vrot.lane.b32.xlu0 %v2829, 20
      %v3530 = vpop.permute.xlu0 %3529
      %3531 = vrot.lane.b32.xlu0 %v2830, 20
      %v3532 = vpop.permute.xlu0 %3531
      %3533 = vrot.lane.b32.xlu0 %v2831, 20
      %v3534 = vpop.permute.xlu0 %3533
      %3535 = vrot.lane.b32.xlu0 %v2832, 20
      %v3536 = vpop.permute.xlu0 %3535
      %3601 = vrot.lane.b32.xlu0 %v2833, 24
      %v3602 = vpop.permute.xlu0 %3601
      %3603 = vrot.lane.b32.xlu0 %v2834, 24
      %v3604 = vpop.permute.xlu0 %3603
      %3605 = vrot.lane.b32.xlu0 %v2835, 24
      %v3606 = vpop.permute.xlu0 %3605
      %3607 = vrot.lane.b32.xlu0 %v2836, 24
      %v3608 = vpop.permute.xlu0 %3607
      %3609 = vrot.lane.b32.xlu0 %v2837, 24
      %v3610 = vpop.permute.xlu0 %3609
      %3611 = vrot.lane.b32.xlu0 %v2838, 24
      %v3612 = vpop.permute.xlu0 %3611
      %3613 = vrot.lane.b32.xlu0 %v2839, 24
      %v3614 = vpop.permute.xlu0 %3613
      %3615 = vrot.lane.b32.xlu0 %v2840, 24
      %v3616 = vpop.permute.xlu0 %3615
      %3617 = vrot.lane.b32.xlu0 %v2841, 24
      %v3618 = vpop.permute.xlu0 %3617
      %3619 = vrot.lane.b32.xlu0 %v2842, 24
      %v3620 = vpop.permute.xlu0 %3619
      %3621 = vrot.lane.b32.xlu0 %v2843, 24
      %v3622 = vpop.permute.xlu0 %3621
      %3623 = vrot.lane.b32.xlu0 %v2844, 24
      %v3624 = vpop.permute.xlu0 %3623
      %3625 = vrot.lane.b32.xlu0 %v2845, 24
      %v3626 = vpop.permute.xlu0 %3625
      %3627 = vrot.lane.b32.xlu0 %v2846, 24
      %v3628 = vpop.permute.xlu0 %3627
      %3629 = vrot.lane.b32.xlu0 %v2847, 24
      %v3630 = vpop.permute.xlu0 %3629
      %3631 = vrot.lane.b32.xlu0 %v2848, 24
      %v3632 = vpop.permute.xlu0 %3631
      %3633 = vrot.lane.b32.xlu0 %v2849, 24
      %v3634 = vpop.permute.xlu0 %3633
      %3635 = vrot.lane.b32.xlu0 %v2850, 24
      %v3636 = vpop.permute.xlu0 %3635
      %3637 = vrot.lane.b32.xlu0 %v2851, 24
      %v3638 = vpop.permute.xlu0 %3637
      %3639 = vrot.lane.b32.xlu0 %v2852, 24
      %v3640 = vpop.permute.xlu0 %3639
      %3641 = vrot.lane.b32.xlu0 %v2853, 24
      %v3642 = vpop.permute.xlu0 %3641
      %3643 = vrot.lane.b32.xlu0 %v2854, 24
      %v3644 = vpop.permute.xlu0 %3643
      %3645 = vrot.lane.b32.xlu0 %v2855, 24
      %v3646 = vpop.permute.xlu0 %3645
      %3647 = vrot.lane.b32.xlu0 %v2856, 24
      %v3648 = vpop.permute.xlu0 %3647
      %3649 = vrot.lane.b32.xlu0 %v2857, 24
      %v3650 = vpop.permute.xlu0 %3649
      %3651 = vrot.lane.b32.xlu0 %v2858, 24
      %v3652 = vpop.permute.xlu0 %3651
      %3653 = vrot.lane.b32.xlu0 %v2859, 24
      %v3654 = vpop.permute.xlu0 %3653
      %3655 = vrot.lane.b32.xlu0 %v2860, 24
      %v3656 = vpop.permute.xlu0 %3655
      %3657 = vrot.lane.b32.xlu0 %v2861, 24
      %v3658 = vpop.permute.xlu0 %3657
      %3659 = vrot.lane.b32.xlu0 %v2862, 24
      %v3660 = vpop.permute.xlu0 %3659
      %3661 = vrot.lane.b32.xlu0 %v2863, 24
      %v3662 = vpop.permute.xlu0 %3661
      %3663 = vrot.lane.b32.xlu0 %v2864, 24
      %v3664 = vpop.permute.xlu0 %3663
      %3729 = vrot.lane.b32.xlu0 %v2865, 28
      %v3730 = vpop.permute.xlu0 %3729
      %3731 = vrot.lane.b32.xlu0 %v2866, 28
      %v3732 = vpop.permute.xlu0 %3731
      %3733 = vrot.lane.b32.xlu0 %v2867, 28
      %v3734 = vpop.permute.xlu0 %3733
      %3735 = vrot.lane.b32.xlu0 %v2868, 28
      %v3736 = vpop.permute.xlu0 %3735
      %3737 = vrot.lane.b32.xlu0 %v2869, 28
      %v3738 = vpop.permute.xlu0 %3737
      %3739 = vrot.lane.b32.xlu0 %v2870, 28
      %v3740 = vpop.permute.xlu0 %3739
      %3741 = vrot.lane.b32.xlu0 %v2871, 28
      %v3742 = vpop.permute.xlu0 %3741
      %3743 = vrot.lane.b32.xlu0 %v2872, 28
      %v3744 = vpop.permute.xlu0 %3743
      %3745 = vrot.lane.b32.xlu0 %v2873, 28
      %v3746 = vpop.permute.xlu0 %3745
      %3747 = vrot.lane.b32.xlu0 %v2874, 28
      %v3748 = vpop.permute.xlu0 %3747
      %3749 = vrot.lane.b32.xlu0 %v2875, 28
      %v3750 = vpop.permute.xlu0 %3749
      %3751 = vrot.lane.b32.xlu0 %v2876, 28
      %v3752 = vpop.permute.xlu0 %3751
      %3753 = vrot.lane.b32.xlu0 %v2877, 28
      %v3754 = vpop.permute.xlu0 %3753
      %3755 = vrot.lane.b32.xlu0 %v2878, 28
      %v3756 = vpop.permute.xlu0 %3755
      %3757 = vrot.lane.b32.xlu0 %v2879, 28
      %v3758 = vpop.permute.xlu0 %3757
      %3759 = vrot.lane.b32.xlu0 %v2880, 28
      %v3760 = vpop.permute.xlu0 %3759
      %3761 = vrot.lane.b32.xlu0 %v2881, 28
      %v3762 = vpop.permute.xlu0 %3761
      %3763 = vrot.lane.b32.xlu0 %v2882, 28
      %v3764 = vpop.permute.xlu0 %3763
      %3765 = vrot.lane.b32.xlu0 %v2883, 28
      %v3766 = vpop.permute.xlu0 %3765
      %3767 = vrot.lane.b32.xlu0 %v2884, 28
      %v3768 = vpop.permute.xlu0 %3767
      %3769 = vrot.lane.b32.xlu0 %v2885, 28
      %v3770 = vpop.permute.xlu0 %3769
      %3771 = vrot.lane.b32.xlu0 %v2886, 28
      %v3772 = vpop.permute.xlu0 %3771
      %3773 = vrot.lane.b32.xlu0 %v2887, 28
      %v3774 = vpop.permute.xlu0 %3773
      %3775 = vrot.lane.b32.xlu0 %v2888, 28
      %v3776 = vpop.permute.xlu0 %3775
      %3777 = vrot.lane.b32.xlu0 %v2889, 28
      %v3778 = vpop.permute.xlu0 %3777
      %3779 = vrot.lane.b32.xlu0 %v2890, 28
      %v3780 = vpop.permute.xlu0 %3779
      %3781 = vrot.lane.b32.xlu0 %v2891, 28
      %v3782 = vpop.permute.xlu0 %3781
      %3783 = vrot.lane.b32.xlu0 %v2892, 28
      %v3784 = vpop.permute.xlu0 %3783
      %3785 = vrot.lane.b32.xlu0 %v2893, 28
      %v3786 = vpop.permute.xlu0 %3785
      %3787 = vrot.lane.b32.xlu0 %v2894, 28
      %v3788 = vpop.permute.xlu0 %3787
      %3789 = vrot.lane.b32.xlu0 %v2895, 28
      %v3790 = vpop.permute.xlu0 %3789
      %3791 = vrot.lane.b32.xlu0 %v2896, 28
      %v3792 = vpop.permute.xlu0 %3791
      %3857 = vrot.lane.b32.xlu0 %v2897, 32
      %v3858 = vpop.permute.xlu0 %3857
      %3859 = vrot.lane.b32.xlu0 %v2898, 32
      %v3860 = vpop.permute.xlu0 %3859
      %3861 = vrot.lane.b32.xlu0 %v2899, 32
      %v3862 = vpop.permute.xlu0 %3861
      %3863 = vrot.lane.b32.xlu0 %v2900, 32
      %v3864 = vpop.permute.xlu0 %3863
      %3865 = vrot.lane.b32.xlu0 %v2901, 32
      %v3866 = vpop.permute.xlu0 %3865
      %3867 = vrot.lane.b32.xlu0 %v2902, 32
      %v3868 = vpop.permute.xlu0 %3867
      %3869 = vrot.lane.b32.xlu0 %v2903, 32
      %v3870 = vpop.permute.xlu0 %3869
      %3871 = vrot.lane.b32.xlu0 %v2904, 32
      %v3872 = vpop.permute.xlu0 %3871
      %3873 = vrot.lane.b32.xlu0 %v2905, 32
      %v3874 = vpop.permute.xlu0 %3873
      %3875 = vrot.lane.b32.xlu0 %v2906, 32
      %v3876 = vpop.permute.xlu0 %3875
      %3877 = vrot.lane.b32.xlu0 %v2907, 32
      %v3878 = vpop.permute.xlu0 %3877
      %3879 = vrot.lane.b32.xlu0 %v2908, 32
      %v3880 = vpop.permute.xlu0 %3879
      %3881 = vrot.lane.b32.xlu0 %v2909, 32
      %v3882 = vpop.permute.xlu0 %3881
      %3883 = vrot.lane.b32.xlu0 %v2910, 32
      %v3884 = vpop.permute.xlu0 %3883
      %3885 = vrot.lane.b32.xlu0 %v2911, 32
      %v3886 = vpop.permute.xlu0 %3885
      %3887 = vrot.lane.b32.xlu0 %v2912, 32
      %v3888 = vpop.permute.xlu0 %3887
      %3889 = vrot.lane.b32.xlu0 %v2913, 32
      %v3890 = vpop.permute.xlu0 %3889
      %3891 = vrot.lane.b32.xlu0 %v2914, 32
      %v3892 = vpop.permute.xlu0 %3891
      %3893 = vrot.lane.b32.xlu0 %v2915, 32
      %v3894 = vpop.permute.xlu0 %3893
      %3895 = vrot.lane.b32.xlu0 %v2916, 32
      %v3896 = vpop.permute.xlu0 %3895
      %3897 = vrot.lane.b32.xlu0 %v2917, 32
      %v3898 = vpop.permute.xlu0 %3897
      %3899 = vrot.lane.b32.xlu0 %v2918, 32
      %v3900 = vpop.permute.xlu0 %3899
      %3901 = vrot.lane.b32.xlu0 %v2919, 32
      %v3902 = vpop.permute.xlu0 %3901
      %3903 = vrot.lane.b32.xlu0 %v2920, 32
      %v3904 = vpop.permute.xlu0 %3903
      %3905 = vrot.lane.b32.xlu0 %v2921, 32
      %v3906 = vpop.permute.xlu0 %3905
      %3907 = vrot.lane.b32.xlu0 %v2922, 32
      %v3908 = vpop.permute.xlu0 %3907
      %3909 = vrot.lane.b32.xlu0 %v2923, 32
      %v3910 = vpop.permute.xlu0 %3909
      %3911 = vrot.lane.b32.xlu0 %v2924, 32
      %v3912 = vpop.permute.xlu0 %3911
      %3913 = vrot.lane.b32.xlu0 %v2925, 32
      %v3914 = vpop.permute.xlu0 %3913
      %3915 = vrot.lane.b32.xlu0 %v2926, 32
      %v3916 = vpop.permute.xlu0 %3915
      %3917 = vrot.lane.b32.xlu0 %v2927, 32
      %v3918 = vpop.permute.xlu0 %3917
      %3919 = vrot.lane.b32.xlu0 %v2928, 32
      %v3920 = vpop.permute.xlu0 %3919
      %v3953 = vsel %vm602, %v2641, %v2962
      %v3954 = vsel %vm602, %v2642, %v2964
      %v3955 = vsel %vm602, %v2643, %v2966
      %v3956 = vsel %vm602, %v2644, %v2968
      %v3957 = vsel %vm602, %v2645, %v2970
      %v3958 = vsel %vm602, %v2646, %v2972
      %v3959 = vsel %vm602, %v2647, %v2974
      %v3960 = vsel %vm602, %v2648, %v2976
      %v3961 = vsel %vm602, %v2649, %v2978
      %v3962 = vsel %vm602, %v2650, %v2980
      %v3963 = vsel %vm602, %v2651, %v2982
      %v3964 = vsel %vm602, %v2652, %v2984
      %v3965 = vsel %vm602, %v2653, %v2986
      %v3966 = vsel %vm602, %v2654, %v2988
      %v3967 = vsel %vm602, %v2655, %v2990
      %v3968 = vsel %vm602, %v2656, %v2992
      %v3969 = vsel %vm602, %v2657, %v2994
      %v3970 = vsel %vm602, %v2658, %v2996
      %v3971 = vsel %vm602, %v2659, %v2998
      %v3972 = vsel %vm602, %v2660, %v3000
      %v3973 = vsel %vm602, %v2661, %v3002
      %v3974 = vsel %vm602, %v2662, %v3004
      %v3975 = vsel %vm602, %v2663, %v3006
      %v3976 = vsel %vm602, %v2664, %v3008
      %v3977 = vsel %vm602, %v2665, %v3010
      %v3978 = vsel %vm602, %v2666, %v3012
      %v3979 = vsel %vm602, %v2667, %v3014
      %v3980 = vsel %vm602, %v2668, %v3016
      %v3981 = vsel %vm602, %v2669, %v3018
      %v3982 = vsel %vm602, %v2670, %v3020
      %v3983 = vsel %vm602, %v2671, %v3022
      %v3984 = vsel %vm602, %v2672, %v3024
      %v3985 = vsel %vm658, %v3953, %v3090
      %v3986 = vsel %vm658, %v3954, %v3092
      %v3987 = vsel %vm658, %v3955, %v3094
      %v3988 = vsel %vm658, %v3956, %v3096
      %v3989 = vsel %vm658, %v3957, %v3098
      %v3990 = vsel %vm658, %v3958, %v3100
      %v3991 = vsel %vm658, %v3959, %v3102
      %v3992 = vsel %vm658, %v3960, %v3104
      %v3993 = vsel %vm658, %v3961, %v3106
      %v3994 = vsel %vm658, %v3962, %v3108
      %v3995 = vsel %vm658, %v3963, %v3110
      %v3996 = vsel %vm658, %v3964, %v3112
      %v3997 = vsel %vm658, %v3965, %v3114
      %v3998 = vsel %vm658, %v3966, %v3116
      %v3999 = vsel %vm658, %v3967, %v3118
      %v4000 = vsel %vm658, %v3968, %v3120
      %v4001 = vsel %vm658, %v3969, %v3122
      %v4002 = vsel %vm658, %v3970, %v3124
      %v4003 = vsel %vm658, %v3971, %v3126
      %v4004 = vsel %vm658, %v3972, %v3128
      %v4005 = vsel %vm658, %v3973, %v3130
      %v4006 = vsel %vm658, %v3974, %v3132
      %v4007 = vsel %vm658, %v3975, %v3134
      %v4008 = vsel %vm658, %v3976, %v3136
      %v4009 = vsel %vm658, %v3977, %v3138
      %v4010 = vsel %vm658, %v3978, %v3140
      %v4011 = vsel %vm658, %v3979, %v3142
      %v4012 = vsel %vm658, %v3980, %v3144
      %v4013 = vsel %vm658, %v3981, %v3146
      %v4014 = vsel %vm658, %v3982, %v3148
      %v4015 = vsel %vm658, %v3983, %v3150
      %v4016 = vsel %vm658, %v3984, %v3152
      %v4017 = vsel %vm2122, %v3985, %v3218
      %v4018 = vsel %vm2122, %v3986, %v3220
      %v4019 = vsel %vm2122, %v3987, %v3222
      %v4020 = vsel %vm2122, %v3988, %v3224
      %v4021 = vsel %vm2122, %v3989, %v3226
      %v4022 = vsel %vm2122, %v3990, %v3228
      %v4023 = vsel %vm2122, %v3991, %v3230
      %v4024 = vsel %vm2122, %v3992, %v3232
      %v4025 = vsel %vm2122, %v3993, %v3234
      %v4026 = vsel %vm2122, %v3994, %v3236
      %v4027 = vsel %vm2122, %v3995, %v3238
      %v4028 = vsel %vm2122, %v3996, %v3240
      %v4029 = vsel %vm2122, %v3997, %v3242
      %v4030 = vsel %vm2122, %v3998, %v3244
      %v4031 = vsel %vm2122, %v3999, %v3246
      %v4032 = vsel %vm2122, %v4000, %v3248
      %v4033 = vsel %vm2122, %v4001, %v3250
      %v4034 = vsel %vm2122, %v4002, %v3252
      %v4035 = vsel %vm2122, %v4003, %v3254
      %v4036 = vsel %vm2122, %v4004, %v3256
      %v4037 = vsel %vm2122, %v4005, %v3258
      %v4038 = vsel %vm2122, %v4006, %v3260
      %v4039 = vsel %vm2122, %v4007, %v3262
      %v4040 = vsel %vm2122, %v4008, %v3264
      %v4041 = vsel %vm2122, %v4009, %v3266
      %v4042 = vsel %vm2122, %v4010, %v3268
      %v4043 = vsel %vm2122, %v4011, %v3270
      %v4044 = vsel %vm2122, %v4012, %v3272
      %v4045 = vsel %vm2122, %v4013, %v3274
      %v4046 = vsel %vm2122, %v4014, %v3276
      %v4047 = vsel %vm2122, %v4015, %v3278
      %v4048 = vsel %vm2122, %v4016, %v3280
      %v4049 = vsel %vm2155, %v4017, %v3346
      %v4050 = vsel %vm2155, %v4018, %v3348
      %v4051 = vsel %vm2155, %v4019, %v3350
      %v4052 = vsel %vm2155, %v4020, %v3352
      %v4053 = vsel %vm2155, %v4021, %v3354
      %v4054 = vsel %vm2155, %v4022, %v3356
      %v4055 = vsel %vm2155, %v4023, %v3358
      %v4056 = vsel %vm2155, %v4024, %v3360
      %v4057 = vsel %vm2155, %v4025, %v3362
      %v4058 = vsel %vm2155, %v4026, %v3364
      %v4059 = vsel %vm2155, %v4027, %v3366
      %v4060 = vsel %vm2155, %v4028, %v3368
      %v4061 = vsel %vm2155, %v4029, %v3370
      %v4062 = vsel %vm2155, %v4030, %v3372
      %v4063 = vsel %vm2155, %v4031, %v3374
      %v4064 = vsel %vm2155, %v4032, %v3376
      %v4065 = vsel %vm2155, %v4033, %v3378
      %v4066 = vsel %vm2155, %v4034, %v3380
      %v4067 = vsel %vm2155, %v4035, %v3382
      %v4068 = vsel %vm2155, %v4036, %v3384
      %v4069 = vsel %vm2155, %v4037, %v3386
      %v4070 = vsel %vm2155, %v4038, %v3388
      %v4071 = vsel %vm2155, %v4039, %v3390
      %v4072 = vsel %vm2155, %v4040, %v3392
      %v4073 = vsel %vm2155, %v4041, %v3394
      %v4074 = vsel %vm2155, %v4042, %v3396
      %v4075 = vsel %vm2155, %v4043, %v3398
      %v4076 = vsel %vm2155, %v4044, %v3400
      %v4077 = vsel %vm2155, %v4045, %v3402
      %v4078 = vsel %vm2155, %v4046, %v3404
      %v4079 = vsel %vm2155, %v4047, %v3406
      %v4080 = vsel %vm2155, %v4048, %v3408
      %v4081 = vsel %vm2188, %v4049, %v3474
      %v4082 = vsel %vm2188, %v4050, %v3476
      %v4083 = vsel %vm2188, %v4051, %v3478
      %v4084 = vsel %vm2188, %v4052, %v3480
      %v4085 = vsel %vm2188, %v4053, %v3482
      %v4086 = vsel %vm2188, %v4054, %v3484
      %v4087 = vsel %vm2188, %v4055, %v3486
      %v4088 = vsel %vm2188, %v4056, %v3488
      %v4089 = vsel %vm2188, %v4057, %v3490
      %v4090 = vsel %vm2188, %v4058, %v3492
      %v4091 = vsel %vm2188, %v4059, %v3494
      %v4092 = vsel %vm2188, %v4060, %v3496
      %v4093 = vsel %vm2188, %v4061, %v3498
      %v4094 = vsel %vm2188, %v4062, %v3500
      %v4095 = vsel %vm2188, %v4063, %v3502
      %v4096 = vsel %vm2188, %v4064, %v3504
      %v4097 = vsel %vm2188, %v4065, %v3506
      %v4098 = vsel %vm2188, %v4066, %v3508
      %v4099 = vsel %vm2188, %v4067, %v3510
      %v4100 = vsel %vm2188, %v4068, %v3512
      %v4101 = vsel %vm2188, %v4069, %v3514
      %v4102 = vsel %vm2188, %v4070, %v3516
      %v4103 = vsel %vm2188, %v4071, %v3518
      %v4104 = vsel %vm2188, %v4072, %v3520
      %v4105 = vsel %vm2188, %v4073, %v3522
      %v4106 = vsel %vm2188, %v4074, %v3524
      %v4107 = vsel %vm2188, %v4075, %v3526
      %v4108 = vsel %vm2188, %v4076, %v3528
      %v4109 = vsel %vm2188, %v4077, %v3530
      %v4110 = vsel %vm2188, %v4078, %v3532
      %v4111 = vsel %vm2188, %v4079, %v3534
      %v4112 = vsel %vm2188, %v4080, %v3536
      %v4113 = vsel %vm2221, %v4081, %v3602
      %v4114 = vsel %vm2221, %v4082, %v3604
      %v4115 = vsel %vm2221, %v4083, %v3606
      %v4116 = vsel %vm2221, %v4084, %v3608
      %v4117 = vsel %vm2221, %v4085, %v3610
      %v4118 = vsel %vm2221, %v4086, %v3612
      %v4119 = vsel %vm2221, %v4087, %v3614
      %v4120 = vsel %vm2221, %v4088, %v3616
      %v4121 = vsel %vm2221, %v4089, %v3618
      %v4122 = vsel %vm2221, %v4090, %v3620
      %v4123 = vsel %vm2221, %v4091, %v3622
      %v4124 = vsel %vm2221, %v4092, %v3624
      %v4125 = vsel %vm2221, %v4093, %v3626
      %v4126 = vsel %vm2221, %v4094, %v3628
      %v4127 = vsel %vm2221, %v4095, %v3630
      %v4128 = vsel %vm2221, %v4096, %v3632
      %v4129 = vsel %vm2221, %v4097, %v3634
      %v4130 = vsel %vm2221, %v4098, %v3636
      %v4131 = vsel %vm2221, %v4099, %v3638
      %v4132 = vsel %vm2221, %v4100, %v3640
      %v4133 = vsel %vm2221, %v4101, %v3642
      %v4134 = vsel %vm2221, %v4102, %v3644
      %v4135 = vsel %vm2221, %v4103, %v3646
      %v4136 = vsel %vm2221, %v4104, %v3648
      %v4137 = vsel %vm2221, %v4105, %v3650
      %v4138 = vsel %vm2221, %v4106, %v3652
      %v4139 = vsel %vm2221, %v4107, %v3654
      %v4140 = vsel %vm2221, %v4108, %v3656
      %v4141 = vsel %vm2221, %v4109, %v3658
      %v4142 = vsel %vm2221, %v4110, %v3660
      %v4143 = vsel %vm2221, %v4111, %v3662
      %v4144 = vsel %vm2221, %v4112, %v3664
      %v4145 = vsel %vm2254, %v4113, %v3730
      %v4146 = vsel %vm2254, %v4114, %v3732
      %v4147 = vsel %vm2254, %v4115, %v3734
      %v4148 = vsel %vm2254, %v4116, %v3736
      %v4149 = vsel %vm2254, %v4117, %v3738
      %v4150 = vsel %vm2254, %v4118, %v3740
      %v4151 = vsel %vm2254, %v4119, %v3742
      %v4152 = vsel %vm2254, %v4120, %v3744
      %v4153 = vsel %vm2254, %v4121, %v3746
      %v4154 = vsel %vm2254, %v4122, %v3748
      %v4155 = vsel %vm2254, %v4123, %v3750
      %v4156 = vsel %vm2254, %v4124, %v3752
      %v4157 = vsel %vm2254, %v4125, %v3754
      %v4158 = vsel %vm2254, %v4126, %v3756
      %v4159 = vsel %vm2254, %v4127, %v3758
      %v4160 = vsel %vm2254, %v4128, %v3760
      %v4161 = vsel %vm2254, %v4129, %v3762
      %v4162 = vsel %vm2254, %v4130, %v3764
      %v4163 = vsel %vm2254, %v4131, %v3766
      %v4164 = vsel %vm2254, %v4132, %v3768
      %v4165 = vsel %vm2254, %v4133, %v3770
      %v4166 = vsel %vm2254, %v4134, %v3772
      %v4167 = vsel %vm2254, %v4135, %v3774
      %v4168 = vsel %vm2254, %v4136, %v3776
      %v4169 = vsel %vm2254, %v4137, %v3778
      %v4170 = vsel %vm2254, %v4138, %v3780
      %v4171 = vsel %vm2254, %v4139, %v3782
      %v4172 = vsel %vm2254, %v4140, %v3784
      %v4173 = vsel %vm2254, %v4141, %v3786
      %v4174 = vsel %vm2254, %v4142, %v3788
      %v4175 = vsel %vm2254, %v4143, %v3790
      %v4176 = vsel %vm2254, %v4144, %v3792
      %v4177 = vsel %vm2287, %v4145, %v3858
      %v4178 = vsel %vm2287, %v4146, %v3860
      %v4179 = vsel %vm2287, %v4147, %v3862
      %v4180 = vsel %vm2287, %v4148, %v3864
      %v4181 = vsel %vm2287, %v4149, %v3866
      %v4182 = vsel %vm2287, %v4150, %v3868
      %v4183 = vsel %vm2287, %v4151, %v3870
      %v4184 = vsel %vm2287, %v4152, %v3872
      %v4185 = vsel %vm2287, %v4153, %v3874
      %v4186 = vsel %vm2287, %v4154, %v3876
      %v4187 = vsel %vm2287, %v4155, %v3878
      %v4188 = vsel %vm2287, %v4156, %v3880
      %v4189 = vsel %vm2287, %v4157, %v3882
      %v4190 = vsel %vm2287, %v4158, %v3884
      %v4191 = vsel %vm2287, %v4159, %v3886
      %v4192 = vsel %vm2287, %v4160, %v3888
      %v4193 = vsel %vm2287, %v4161, %v3890
      %v4194 = vsel %vm2287, %v4162, %v3892
      %v4195 = vsel %vm2287, %v4163, %v3894
      %v4196 = vsel %vm2287, %v4164, %v3896
      %v4197 = vsel %vm2287, %v4165, %v3898
      %v4198 = vsel %vm2287, %v4166, %v3900
      %v4199 = vsel %vm2287, %v4167, %v3902
      %v4200 = vsel %vm2287, %v4168, %v3904
      %v4201 = vsel %vm2287, %v4169, %v3906
      %v4202 = vsel %vm2287, %v4170, %v3908
      %v4203 = vsel %vm2287, %v4171, %v3910
      %v4204 = vsel %vm2287, %v4172, %v3912
      %v4205 = vsel %vm2287, %v4173, %v3914
      %v4206 = vsel %vm2287, %v4174, %v3916
      %v4207 = vsel %vm2287, %v4175, %v3918
      %v4208 = vsel %vm2287, %v4176, %v3920
      %v4209 = vpack.c.bf16 %v4178, %v4177
      %v4210 = vpack.c.bf16 %v4180, %v4179
      %v4211 = vpack.c.bf16 %v4182, %v4181
      %v4212 = vpack.c.bf16 %v4184, %v4183
      %v4213 = vpack.c.bf16 %v4186, %v4185
      %v4214 = vpack.c.bf16 %v4188, %v4187
      %v4215 = vpack.c.bf16 %v4190, %v4189
      %v4216 = vpack.c.bf16 %v4192, %v4191
      %v4217 = vpack.c.bf16 %v4194, %v4193
      %v4218 = vpack.c.bf16 %v4196, %v4195
      %v4219 = vpack.c.bf16 %v4198, %v4197
      %v4220 = vpack.c.bf16 %v4200, %v4199
      %v4221 = vpack.c.bf16 %v4202, %v4201
      %v4222 = vpack.c.bf16 %v4204, %v4203
      %v4223 = vpack.c.bf16 %v4206, %v4205
      %v4224 = vpack.c.bf16 %v4208, %v4207
      %v4225 = vld [vmem:[%s3] sm:$0xf]
      %v4226 = vld [vmem:[%s3 + $0x4] sm:$0xf]
      %v4227 = vld [vmem:[%s3 + $0x8] sm:$0xf]
      %v4228 = vld [vmem:[%s3 + $0xc] sm:$0xf]
      %v4229 = vld [vmem:[%s3 + $0x10] sm:$0x3]
      %v4230 = vld [vmem:[%s4] sm:$0x1]
      %v4232 = vlaneseq
      %v4233 = vshrl.u32 %v4232, 7
      %v4234 = vsub.s32 0, %v4233
      %v4235 = vrot.slane %v4230, %v4234
      %v4242 = vunpack.c.l.b16 %v4225
      %v4243 = vunpack.c.l.b16 %v4226
      %v4244 = vunpack.c.l.b16 %v4227
      %v4245 = vunpack.c.l.b16 %v4228
      %v4246 = vunpack.c.l.b16 %v4229
      %v4247 = vpack.c.b16 %v4243, %v4242
      %v4248 = vpack.c.b16 %v4245, %v4244
      %v4249 = vpack.c.b16 %v4246, %v4246
      %v4253 = vsel %vm2363, %v4209, 0
      %v4256 = vsel %vm2363, %v4210, 0
      %v4259 = vsel %vm2363, %v4211, 0
      %v4262 = vsel %vm2363, %v4212, 0
      %v4265 = vsel %vm2363, %v4213, 0
      %v4268 = vsel %vm2363, %v4214, 0
      %v4271 = vsel %vm2363, %v4215, 0
      %v4274 = vsel %vm2363, %v4216, 0
      %v4277 = vsel %vm2363, %v4217, 0
      %v4280 = vsel %vm2363, %v4218, 0
      %v4283 = vsel %vm2363, %v4219, 0
      %v4286 = vsel %vm2363, %v4220, 0
      %v4289 = vsel %vm2363, %v4221, 0
      %v4292 = vsel %vm2363, %v4222, 0
      %v4295 = vsel %vm2363, %v4223, 0
      %v4298 = vsel %vm2363, %v4224, 0
      %v4301 = vsel %vm2412, %v4249, 0
      %4303 = vmatprep.subr.bf16.mxu0 0
      %4304 = vmatpush1.bf16.msra.mxu0 0
      %4305 = vmatprep.subr.bf16.mxu0 0
      %4306 = vmatpush1.bf16.msra.mxu0 0
      %4307 = vmatprep.subr.bf16.mxu0 0
      %4308 = vmatpush1.bf16.msra.mxu0 0
      %4309 = vmatprep.subr.bf16.mxu0 0
      %4310 = vmatpush1.bf16.msra.mxu0 0
      %4311 = vmatprep.subr.bf16.mxu0 0
      %4312 = vmatpush1.bf16.msra.mxu0 0
      %4313 = vmatprep.subr.bf16.mxu0 0
      %4314 = vmatpush1.bf16.msra.mxu0 %v4301
      %4315 = vmatprep.subr.bf16.mxu0 0
      %4316 = vmatpush1.bf16.msra.mxu0 %v4248
      %4317 = vmatprep.subr.bf16.mxu0 0
      %4318 = vmatpush1.bf16.msra.mxu0 %v4247
      %4319 = vmatprep.subr.bf16.mxu0 0
      %4320 = vmatpush2.bf16.msra.mxu0 0
      %4321 = vmatprep.subr.bf16.mxu0 0
      %4322 = vmatpush2.bf16.msra.mxu0 0
      %4323 = vmatprep.subr.bf16.mxu0 0
      %4324 = vmatpush2.bf16.msra.mxu0 0
      %4325 = vmatprep.subr.bf16.mxu0 0
      %4326 = vmatpush2.bf16.msra.mxu0 0
      %4327 = vmatprep.subr.bf16.mxu0 0
      %4328 = vmatpush2.bf16.msra.mxu0 0
      %4329 = vmatprep.subr.bf16.mxu0 0
      %4330 = vmatpush2.bf16.msra.mxu0 0
      %4331 = vmatprep.subr.bf16.mxu0 0
      %4332 = vmatpush2.bf16.msra.mxu0 0
      %4333 = vmatprep.subr.bf16.mxu0 0
      %4334 = vmatpush2.bf16.msra.mxu0 0
      %4335 = vmatprep.mubr.bf16.mxu0 0
      %4336 = vmatmul.mubr.bf16.gmra.mxu0 %v4253
      %v4337 = vpop.f32.mrf.mxu0
      %v4338 = vadd.f32 %v4235, %v4337
      %v4339 = vpop.f32.mrf.mxu0
      %v4340 = vpop.f32.mrf.mxu0
      %v4341 = vadd.f32 %v4235, %v4340
      %v4342 = vpop.f32.mrf.mxu0
      %4343 = vmatprep.mubr.bf16.mxu0 0
      %4344 = vmatmul.mubr.bf16.gmra.mxu0 %v4256
      %v4345 = vpop.f32.mrf.mxu0
      %v4346 = vadd.f32 %v4235, %v4345
      %v4347 = vpop.f32.mrf.mxu0
      %v4348 = vpop.f32.mrf.mxu0
      %v4349 = vadd.f32 %v4235, %v4348
      %v4350 = vpop.f32.mrf.mxu0
      %4351 = vmatprep.mubr.bf16.mxu0 0
      %4352 = vmatmul.mubr.bf16.gmra.mxu0 %v4259
      %v4353 = vpop.f32.mrf.mxu0
      %v4354 = vadd.f32 %v4235, %v4353
      %v4355 = vpop.f32.mrf.mxu0
      %v4356 = vpop.f32.mrf.mxu0
      %v4357 = vadd.f32 %v4235, %v4356
      %v4358 = vpop.f32.mrf.mxu0
      %4359 = vmatprep.mubr.bf16.mxu0 0
      %4360 = vmatmul.mubr.bf16.gmra.mxu0 %v4262
      %v4361 = vpop.f32.mrf.mxu0
      %v4362 = vadd.f32 %v4235, %v4361
      %v4363 = vpop.f32.mrf.mxu0
      %v4364 = vpop.f32.mrf.mxu0
      %v4365 = vadd.f32 %v4235, %v4364
      %v4366 = vpop.f32.mrf.mxu0
      %4367 = vmatprep.mubr.bf16.mxu0 0
      %4368 = vmatmul.mubr.bf16.gmra.mxu0 %v4265
      %v4369 = vpop.f32.mrf.mxu0
      %v4370 = vadd.f32 %v4235, %v4369
      %v4371 = vpop.f32.mrf.mxu0
      %v4372 = vpop.f32.mrf.mxu0
      %v4373 = vadd.f32 %v4235, %v4372
      %v4374 = vpop.f32.mrf.mxu0
      %4375 = vmatprep.mubr.bf16.mxu0 0
      %4376 = vmatmul.mubr.bf16.gmra.mxu0 %v4268
      %v4377 = vpop.f32.mrf.mxu0
      %v4378 = vadd.f32 %v4235, %v4377
      %v4379 = vpop.f32.mrf.mxu0
      %v4380 = vpop.f32.mrf.mxu0
      %v4381 = vadd.f32 %v4235, %v4380
      %v4382 = vpop.f32.mrf.mxu0
      %4383 = vmatprep.mubr.bf16.mxu0 0
      %4384 = vmatmul.mubr.bf16.gmra.mxu0 %v4271
      %v4385 = vpop.f32.mrf.mxu0
      %v4386 = vadd.f32 %v4235, %v4385
      %v4387 = vpop.f32.mrf.mxu0
      %v4388 = vpop.f32.mrf.mxu0
      %v4389 = vadd.f32 %v4235, %v4388
      %v4390 = vpop.f32.mrf.mxu0
      %4391 = vmatprep.mubr.bf16.mxu0 0
      %4392 = vmatmul.mubr.bf16.gmra.mxu0 %v4274
      %v4393 = vpop.f32.mrf.mxu0
      %v4394 = vadd.f32 %v4235, %v4393
      %v4395 = vpop.f32.mrf.mxu0
      %v4396 = vpop.f32.mrf.mxu0
      %v4397 = vadd.f32 %v4235, %v4396
      %v4398 = vpop.f32.mrf.mxu0
      %4399 = vmatprep.mubr.bf16.mxu0 0
      %4400 = vmatmul.mubr.bf16.gmra.mxu0 %v4277
      %v4401 = vpop.f32.mrf.mxu0
      %v4402 = vadd.f32 %v4235, %v4401
      %v4403 = vpop.f32.mrf.mxu0
      %v4404 = vpop.f32.mrf.mxu0
      %v4405 = vadd.f32 %v4235, %v4404
      %v4406 = vpop.f32.mrf.mxu0
      %4407 = vmatprep.mubr.bf16.mxu0 0
      %4408 = vmatmul.mubr.bf16.gmra.mxu0 %v4280
      %v4409 = vpop.f32.mrf.mxu0
      %v4410 = vadd.f32 %v4235, %v4409
      %v4411 = vpop.f32.mrf.mxu0
      %v4412 = vpop.f32.mrf.mxu0
      %v4413 = vadd.f32 %v4235, %v4412
      %v4414 = vpop.f32.mrf.mxu0
      %4415 = vmatprep.mubr.bf16.mxu0 0
      %4416 = vmatmul.mubr.bf16.gmra.mxu0 %v4283
      %v4417 = vpop.f32.mrf.mxu0
      %v4418 = vadd.f32 %v4235, %v4417
      %v4419 = vpop.f32.mrf.mxu0
      %v4420 = vpop.f32.mrf.mxu0
      %v4421 = vadd.f32 %v4235, %v4420
      %v4422 = vpop.f32.mrf.mxu0
      %4423 = vmatprep.mubr.bf16.mxu0 0
      %4424 = vmatmul.mubr.bf16.gmra.mxu0 %v4286
      %v4425 = vpop.f32.mrf.mxu0
      %v4426 = vadd.f32 %v4235, %v4425
      %v4427 = vpop.f32.mrf.mxu0
      %v4428 = vpop.f32.mrf.mxu0
      %v4429 = vadd.f32 %v4235, %v4428
      %v4430 = vpop.f32.mrf.mxu0
      %4431 = vmatprep.mubr.bf16.mxu0 0
      %4432 = vmatmul.mubr.bf16.gmra.mxu0 %v4289
      %v4433 = vpop.f32.mrf.mxu0
      %v4434 = vadd.f32 %v4235, %v4433
      %v4435 = vpop.f32.mrf.mxu0
      %v4436 = vpop.f32.mrf.mxu0
      %v4437 = vadd.f32 %v4235, %v4436
      %v4438 = vpop.f32.mrf.mxu0
      %4439 = vmatprep.mubr.bf16.mxu0 0
      %4440 = vmatmul.mubr.bf16.gmra.mxu0 %v4292
      %v4441 = vpop.f32.mrf.mxu0
      %v4442 = vadd.f32 %v4235, %v4441
      %v4443 = vpop.f32.mrf.mxu0
      %v4444 = vpop.f32.mrf.mxu0
      %v4445 = vadd.f32 %v4235, %v4444
      %v4446 = vpop.f32.mrf.mxu0
      %4447 = vmatprep.mubr.bf16.mxu0 0
      %4448 = vmatmul.mubr.bf16.gmra.mxu0 %v4295
      %v4449 = vpop.f32.mrf.mxu0
      %v4450 = vadd.f32 %v4235, %v4449
      %v4451 = vpop.f32.mrf.mxu0
      %v4452 = vpop.f32.mrf.mxu0
      %v4453 = vadd.f32 %v4235, %v4452
      %v4454 = vpop.f32.mrf.mxu0
      %4455 = vmatprep.mubr.bf16.mxu0 0
      %4456 = vmatmul.mubr.bf16.gmra.mxu0 %v4298
      %v4457 = vpop.f32.mrf.mxu0
      %v4458 = vadd.f32 %v4235, %v4457
      %v4459 = vpop.f32.mrf.mxu0
      %v4460 = vpop.f32.mrf.mxu0
      %v4461 = vadd.f32 %v4235, %v4460
      %v4462 = vpop.f32.mrf.mxu0
      %4463 = vdwg.mxu0
      %v4464 = vadd.f32 %v4338, %v680
      %v4465 = vadd.f32 %v4341, %v681
      %v4466 = vadd.f32 %v4346, %v682
      %v4467 = vadd.f32 %v4349, %v683
      %v4468 = vadd.f32 %v4354, %v684
      %v4469 = vadd.f32 %v4357, %v685
      %v4470 = vadd.f32 %v4362, %v686
      %v4471 = vadd.f32 %v4365, %v687
      %v4472 = vadd.f32 %v4370, %v688
      %v4473 = vadd.f32 %v4373, %v689
      %v4474 = vadd.f32 %v4378, %v690
      %v4475 = vadd.f32 %v4381, %v691
      %v4476 = vadd.f32 %v4386, %v692
      %v4477 = vadd.f32 %v4389, %v693
      %v4478 = vadd.f32 %v4394, %v694
      %v4479 = vadd.f32 %v4397, %v695
      %v4480 = vadd.f32 %v4402, %v696
      %v4481 = vadd.f32 %v4405, %v697
      %v4482 = vadd.f32 %v4410, %v698
      %v4483 = vadd.f32 %v4413, %v699
      %v4484 = vadd.f32 %v4418, %v700
      %v4485 = vadd.f32 %v4421, %v701
      %v4486 = vadd.f32 %v4426, %v702
      %v4487 = vadd.f32 %v4429, %v703
      %v4488 = vadd.f32 %v4434, %v704
      %v4489 = vadd.f32 %v4437, %v705
      %v4490 = vadd.f32 %v4442, %v706
      %v4491 = vadd.f32 %v4445, %v707
      %v4492 = vadd.f32 %v4450, %v708
      %v4493 = vadd.f32 %v4453, %v709
      %v4494 = vadd.f32 %v4458, %v710
      %v4495 = vadd.f32 %v4461, %v711
      %v4496 = vmax.f32 %v4464, 0.0
      %v4497 = vmax.f32 %v4465, 0.0
      %v4498 = vmax.f32 %v4466, 0.0
      %v4499 = vmax.f32 %v4467, 0.0
      %v4500 = vmax.f32 %v4468, 0.0
      %v4501 = vmax.f32 %v4469, 0.0
      %v4502 = vmax.f32 %v4470, 0.0
      %v4503 = vmax.f32 %v4471, 0.0
      %v4504 = vmax.f32 %v4472, 0.0
      %v4505 = vmax.f32 %v4473, 0.0
      %v4506 = vmax.f32 %v4474, 0.0
      %v4507 = vmax.f32 %v4475, 0.0
      %v4508 = vmax.f32 %v4476, 0.0
      %v4509 = vmax.f32 %v4477, 0.0
      %v4510 = vmax.f32 %v4478, 0.0
      %v4511 = vmax.f32 %v4479, 0.0
      %v4512 = vmax.f32 %v4480, 0.0
      %v4513 = vmax.f32 %v4481, 0.0
      %v4514 = vmax.f32 %v4482, 0.0
      %v4515 = vmax.f32 %v4483, 0.0
      %v4516 = vmax.f32 %v4484, 0.0
      %v4517 = vmax.f32 %v4485, 0.0
      %v4518 = vmax.f32 %v4486, 0.0
      %v4519 = vmax.f32 %v4487, 0.0
      %v4520 = vmax.f32 %v4488, 0.0
      %v4521 = vmax.f32 %v4489, 0.0
      %v4522 = vmax.f32 %v4490, 0.0
      %v4523 = vmax.f32 %v4491, 0.0
      %v4524 = vmax.f32 %v4492, 0.0
      %v4525 = vmax.f32 %v4493, 0.0
      %v4526 = vmax.f32 %v4494, 0.0
      %v4527 = vmax.f32 %v4495, 0.0
      %4528 = vst.msk [vmem:[%s712 + $0x1] sm:$0xff] %vm602, %v4496
      %4529 = vst.msk [vmem:[%s712 + $0x9] sm:$0xff] %vm602, %v4497
      %4530 = vst.msk [vmem:[%s712 + $0x19] sm:$0xff] %vm602, %v4498
      %4531 = vst.msk [vmem:[%s712 + $0x21] sm:$0xff] %vm602, %v4499
      %4532 = vst.msk [vmem:[%s712 + $0x31] sm:$0xff] %vm602, %v4500
      %4533 = vst.msk [vmem:[%s712 + $0x39] sm:$0xff] %vm602, %v4501
      %4534 = vst.msk [vmem:[%s712 + $0x49] sm:$0xff] %vm602, %v4502
      %4535 = vst.msk [vmem:[%s712 + $0x51] sm:$0xff] %vm602, %v4503
      %4536 = vst.msk [vmem:[%s712 + $0x61] sm:$0xff] %vm602, %v4504
      %4537 = vst.msk [vmem:[%s712 + $0x69] sm:$0xff] %vm602, %v4505
      %4538 = vst.msk [vmem:[%s712 + $0x79] sm:$0xff] %vm602, %v4506
      %4539 = vst.msk [vmem:[%s712 + $0x81] sm:$0xff] %vm602, %v4507
      %4540 = vst.msk [vmem:[%s712 + $0x91] sm:$0xff] %vm602, %v4508
      %4541 = vst.msk [vmem:[%s712 + $0x99] sm:$0xff] %vm602, %v4509
      %4542 = vst.msk [vmem:[%s712 + $0xa9] sm:$0xff] %vm602, %v4510
      %4543 = vst.msk [vmem:[%s712 + $0xb1] sm:$0xff] %vm602, %v4511
      %4544 = vst.msk [vmem:[%s712 + $0xc1] sm:$0xff] %vm602, %v4512
      %4545 = vst.msk [vmem:[%s712 + $0xc9] sm:$0xff] %vm602, %v4513
      %4546 = vst.msk [vmem:[%s712 + $0xd9] sm:$0xff] %vm602, %v4514
      %4547 = vst.msk [vmem:[%s712 + $0xe1] sm:$0xff] %vm602, %v4515
      %4548 = vst.msk [vmem:[%s712 + $0xf1] sm:$0xff] %vm602, %v4516
      %4549 = vst.msk [vmem:[%s712 + $0xf9] sm:$0xff] %vm602, %v4517
      %4550 = vst.msk [vmem:[%s712 + $0x109] sm:$0xff] %vm602, %v4518
      %4551 = vst.msk [vmem:[%s712 + $0x111] sm:$0xff] %vm602, %v4519
      %4552 = vst.msk [vmem:[%s712 + $0x121] sm:$0xff] %vm602, %v4520
      %4553 = vst.msk [vmem:[%s712 + $0x129] sm:$0xff] %vm602, %v4521
      %4554 = vst.msk [vmem:[%s712 + $0x139] sm:$0xff] %vm602, %v4522
      %4555 = vst.msk [vmem:[%s712 + $0x141] sm:$0xff] %vm602, %v4523
      %4556 = vst.msk [vmem:[%s712 + $0x151] sm:$0xff] %vm602, %v4524
      %4557 = vst.msk [vmem:[%s712 + $0x159] sm:$0xff] %vm602, %v4525
      %4558 = vst.msk [vmem:[%s712 + $0x169] sm:$0xff] %vm602, %v4526
      %4559 = vst.msk [vmem:[%s712 + $0x171] sm:$0xff] %vm602, %v4527
      %v4560 = vld [vmem:[#allocation2] sm:$0xff]
      %v4561 = vld [vmem:[#allocation2 + $0x8] sm:$0xff]
      %v4562 = vld [vmem:[#allocation2 + $0x18] sm:$0xff]
      %v4563 = vld [vmem:[#allocation2 + $0x20] sm:$0xff]
      %v4564 = vld [vmem:[#allocation2 + $0x30] sm:$0xff]
      %v4565 = vld [vmem:[#allocation2 + $0x38] sm:$0xff]
      %v4566 = vld [vmem:[#allocation2 + $0x48] sm:$0xff]
      %v4567 = vld [vmem:[#allocation2 + $0x50] sm:$0xff]
      %v4568 = vld [vmem:[#allocation2 + $0x60] sm:$0xff]
      %v4569 = vld [vmem:[#allocation2 + $0x68] sm:$0xff]
      %v4570 = vld [vmem:[#allocation2 + $0x78] sm:$0xff]
      %v4571 = vld [vmem:[#allocation2 + $0x80] sm:$0xff]
      %v4572 = vld [vmem:[#allocation2 + $0x90] sm:$0xff]
      %v4573 = vld [vmem:[#allocation2 + $0x98] sm:$0xff]
      %v4574 = vld [vmem:[#allocation2 + $0xa8] sm:$0xff]
      %v4575 = vld [vmem:[#allocation2 + $0xb0] sm:$0xff]
      %v4576 = vld [vmem:[#allocation2 + $0xc0] sm:$0xff]
      %v4577 = vld [vmem:[#allocation2 + $0xc8] sm:$0xff]
      %v4578 = vld [vmem:[#allocation2 + $0xd8] sm:$0xff]
      %v4579 = vld [vmem:[#allocation2 + $0xe0] sm:$0xff]
      %v4580 = vld [vmem:[#allocation2 + $0xf0] sm:$0xff]
      %v4581 = vld [vmem:[#allocation2 + $0xf8] sm:$0xff]
      %v4582 = vld [vmem:[#allocation2 + $0x108] sm:$0xff]
      %v4583 = vld [vmem:[#allocation2 + $0x110] sm:$0xff]
      %v4584 = vld [vmem:[#allocation2 + $0x120] sm:$0xff]
      %v4585 = vld [vmem:[#allocation2 + $0x128] sm:$0xff]
      %v4586 = vld [vmem:[#allocation2 + $0x138] sm:$0xff]
      %v4587 = vld [vmem:[#allocation2 + $0x140] sm:$0xff]
      %v4588 = vld [vmem:[#allocation2 + $0x150] sm:$0xff]
      %v4589 = vld [vmem:[#allocation2 + $0x158] sm:$0xff]
      %v4590 = vld [vmem:[#allocation2 + $0x168] sm:$0xff]
      %v4591 = vld [vmem:[#allocation2 + $0x170] sm:$0xff]
      %v4592 = vld [vmem:[#allocation2 + $0x1] sm:$0xff]
      %v4593 = vld [vmem:[#allocation2 + $0x9] sm:$0xff]
      %v4594 = vld [vmem:[#allocation2 + $0x19] sm:$0xff]
      %v4595 = vld [vmem:[#allocation2 + $0x21] sm:$0xff]
      %v4596 = vld [vmem:[#allocation2 + $0x31] sm:$0xff]
      %v4597 = vld [vmem:[#allocation2 + $0x39] sm:$0xff]
      %v4598 = vld [vmem:[#allocation2 + $0x49] sm:$0xff]
      %v4599 = vld [vmem:[#allocation2 + $0x51] sm:$0xff]
      %v4600 = vld [vmem:[#allocation2 + $0x61] sm:$0xff]
      %v4601 = vld [vmem:[#allocation2 + $0x69] sm:$0xff]
      %v4602 = vld [vmem:[#allocation2 + $0x79] sm:$0xff]
      %v4603 = vld [vmem:[#allocation2 + $0x81] sm:$0xff]
      %v4604 = vld [vmem:[#allocation2 + $0x91] sm:$0xff]
      %v4605 = vld [vmem:[#allocation2 + $0x99] sm:$0xff]
      %v4606 = vld [vmem:[#allocation2 + $0xa9] sm:$0xff]
      %v4607 = vld [vmem:[#allocation2 + $0xb1] sm:$0xff]
      %v4608 = vld [vmem:[#allocation2 + $0xc1] sm:$0xff]
      %v4609 = vld [vmem:[#allocation2 + $0xc9] sm:$0xff]
      %v4610 = vld [vmem:[#allocation2 + $0xd9] sm:$0xff]
      %v4611 = vld [vmem:[#allocation2 + $0xe1] sm:$0xff]
      %v4612 = vld [vmem:[#allocation2 + $0xf1] sm:$0xff]
      %v4613 = vld [vmem:[#allocation2 + $0xf9] sm:$0xff]
      %v4614 = vld [vmem:[#allocation2 + $0x109] sm:$0xff]
      %v4615 = vld [vmem:[#allocation2 + $0x111] sm:$0xff]
      %v4616 = vld [vmem:[#allocation2 + $0x121] sm:$0xff]
      %v4617 = vld [vmem:[#allocation2 + $0x129] sm:$0xff]
      %v4618 = vld [vmem:[#allocation2 + $0x139] sm:$0xff]
      %v4619 = vld [vmem:[#allocation2 + $0x141] sm:$0xff]
      %v4620 = vld [vmem:[#allocation2 + $0x151] sm:$0xff]
      %v4621 = vld [vmem:[#allocation2 + $0x159] sm:$0xff]
      %v4622 = vld [vmem:[#allocation2 + $0x169] sm:$0xff]
      %v4623 = vld [vmem:[#allocation2 + $0x171] sm:$0xff]
      %v4624 = vld [vmem:[#allocation2 + $0x2] sm:$0xff]
      %v4625 = vld [vmem:[#allocation2 + $0xa] sm:$0xff]
      %v4626 = vld [vmem:[#allocation2 + $0x1a] sm:$0xff]
      %v4627 = vld [vmem:[#allocation2 + $0x22] sm:$0xff]
      %v4628 = vld [vmem:[#allocation2 + $0x32] sm:$0xff]
      %v4629 = vld [vmem:[#allocation2 + $0x3a] sm:$0xff]
      %v4630 = vld [vmem:[#allocation2 + $0x4a] sm:$0xff]
      %v4631 = vld [vmem:[#allocation2 + $0x52] sm:$0xff]
      %v4632 = vld [vmem:[#allocation2 + $0x62] sm:$0xff]
      %v4633 = vld [vmem:[#allocation2 + $0x6a] sm:$0xff]
      %v4634 = vld [vmem:[#allocation2 + $0x7a] sm:$0xff]
      %v4635 = vld [vmem:[#allocation2 + $0x82] sm:$0xff]
      %v4636 = vld [vmem:[#allocation2 + $0x92] sm:$0xff]
      %v4637 = vld [vmem:[#allocation2 + $0x9a] sm:$0xff]
      %v4638 = vld [vmem:[#allocation2 + $0xaa] sm:$0xff]
      %v4639 = vld [vmem:[#allocation2 + $0xb2] sm:$0xff]
      %v4640 = vld [vmem:[#allocation2 + $0xc2] sm:$0xff]
      %v4641 = vld [vmem:[#allocation2 + $0xca] sm:$0xff]
      %v4642 = vld [vmem:[#allocation2 + $0xda] sm:$0xff]
      %v4643 = vld [vmem:[#allocation2 + $0xe2] sm:$0xff]
      %v4644 = vld [vmem:[#allocation2 + $0xf2] sm:$0xff]
      %v4645 = vld [vmem:[#allocation2 + $0xfa] sm:$0xff]
      %v4646 = vld [vmem:[#allocation2 + $0x10a] sm:$0xff]
      %v4647 = vld [vmem:[#allocation2 + $0x112] sm:$0xff]
      %v4648 = vld [vmem:[#allocation2 + $0x122] sm:$0xff]
      %v4649 = vld [vmem:[#allocation2 + $0x12a] sm:$0xff]
      %v4650 = vld [vmem:[#allocation2 + $0x13a] sm:$0xff]
      %v4651 = vld [vmem:[#allocation2 + $0x142] sm:$0xff]
      %v4652 = vld [vmem:[#allocation2 + $0x152] sm:$0xff]
      %v4653 = vld [vmem:[#allocation2 + $0x15a] sm:$0xff]
      %v4654 = vld [vmem:[#allocation2 + $0x16a] sm:$0xff]
      %v4655 = vld [vmem:[#allocation2 + $0x172] sm:$0xff]
      %v4656 = vld [vmem:[%s712] sm:$0xff]
      %v4657 = vld [vmem:[%s712 + $0x8] sm:$0xff]
      %v4658 = vld [vmem:[%s712 + $0x18] sm:$0xff]
      %v4659 = vld [vmem:[%s712 + $0x20] sm:$0xff]
      %v4660 = vld [vmem:[%s712 + $0x30] sm:$0xff]
      %v4661 = vld [vmem:[%s712 + $0x38] sm:$0xff]
      %v4662 = vld [vmem:[%s712 + $0x48] sm:$0xff]
      %v4663 = vld [vmem:[%s712 + $0x50] sm:$0xff]
      %v4664 = vld [vmem:[%s712 + $0x60] sm:$0xff]
      %v4665 = vld [vmem:[%s712 + $0x68] sm:$0xff]
      %v4666 = vld [vmem:[%s712 + $0x78] sm:$0xff]
      %v4667 = vld [vmem:[%s712 + $0x80] sm:$0xff]
      %v4668 = vld [vmem:[%s712 + $0x90] sm:$0xff]
      %v4669 = vld [vmem:[%s712 + $0x98] sm:$0xff]
      %v4670 = vld [vmem:[%s712 + $0xa8] sm:$0xff]
      %v4671 = vld [vmem:[%s712 + $0xb0] sm:$0xff]
      %v4672 = vld [vmem:[%s712 + $0xc0] sm:$0xff]
      %v4673 = vld [vmem:[%s712 + $0xc8] sm:$0xff]
      %v4674 = vld [vmem:[%s712 + $0xd8] sm:$0xff]
      %v4675 = vld [vmem:[%s712 + $0xe0] sm:$0xff]
      %v4676 = vld [vmem:[%s712 + $0xf0] sm:$0xff]
      %v4677 = vld [vmem:[%s712 + $0xf8] sm:$0xff]
      %v4678 = vld [vmem:[%s712 + $0x108] sm:$0xff]
      %v4679 = vld [vmem:[%s712 + $0x110] sm:$0xff]
      %v4680 = vld [vmem:[%s712 + $0x120] sm:$0xff]
      %v4681 = vld [vmem:[%s712 + $0x128] sm:$0xff]
      %v4682 = vld [vmem:[%s712 + $0x138] sm:$0xff]
      %v4683 = vld [vmem:[%s712 + $0x140] sm:$0xff]
      %v4684 = vld [vmem:[%s712 + $0x150] sm:$0xff]
      %v4685 = vld [vmem:[%s712 + $0x158] sm:$0xff]
      %v4686 = vld [vmem:[%s712 + $0x168] sm:$0xff]
      %v4687 = vld [vmem:[%s712 + $0x170] sm:$0xff]
      %v4688 = vld [vmem:[%s712 + $0x1] sm:$0xff]
      %v4689 = vld [vmem:[%s712 + $0x9] sm:$0xff]
      %v4690 = vld [vmem:[%s712 + $0x19] sm:$0xff]
      %v4691 = vld [vmem:[%s712 + $0x21] sm:$0xff]
      %v4692 = vld [vmem:[%s712 + $0x31] sm:$0xff]
      %v4693 = vld [vmem:[%s712 + $0x39] sm:$0xff]
      %v4694 = vld [vmem:[%s712 + $0x49] sm:$0xff]
      %v4695 = vld [vmem:[%s712 + $0x51] sm:$0xff]
      %v4696 = vld [vmem:[%s712 + $0x61] sm:$0xff]
      %v4697 = vld [vmem:[%s712 + $0x69] sm:$0xff]
      %v4698 = vld [vmem:[%s712 + $0x79] sm:$0xff]
      %v4699 = vld [vmem:[%s712 + $0x81] sm:$0xff]
      %v4700 = vld [vmem:[%s712 + $0x91] sm:$0xff]
      %v4701 = vld [vmem:[%s712 + $0x99] sm:$0xff]
      %v4702 = vld [vmem:[%s712 + $0xa9] sm:$0xff]
      %v4703 = vld [vmem:[%s712 + $0xb1] sm:$0xff]
      %v4704 = vld [vmem:[%s712 + $0xc1] sm:$0xff]
      %v4705 = vld [vmem:[%s712 + $0xc9] sm:$0xff]
      %v4706 = vld [vmem:[%s712 + $0xd9] sm:$0xff]
      %v4707 = vld [vmem:[%s712 + $0xe1] sm:$0xff]
      %v4708 = vld [vmem:[%s712 + $0xf1] sm:$0xff]
      %v4709 = vld [vmem:[%s712 + $0xf9] sm:$0xff]
      %v4710 = vld [vmem:[%s712 + $0x109] sm:$0xff]
      %v4711 = vld [vmem:[%s712 + $0x111] sm:$0xff]
      %v4712 = vld [vmem:[%s712 + $0x121] sm:$0xff]
      %v4713 = vld [vmem:[%s712 + $0x129] sm:$0xff]
      %v4714 = vld [vmem:[%s712 + $0x139] sm:$0xff]
      %v4715 = vld [vmem:[%s712 + $0x141] sm:$0xff]
      %v4716 = vld [vmem:[%s712 + $0x151] sm:$0xff]
      %v4717 = vld [vmem:[%s712 + $0x159] sm:$0xff]
      %v4718 = vld [vmem:[%s712 + $0x169] sm:$0xff]
      %v4719 = vld [vmem:[%s712 + $0x171] sm:$0xff]
      %v4720 = vld [vmem:[%s712 + $0x2] sm:$0xff]
      %v4721 = vld [vmem:[%s712 + $0xa] sm:$0xff]
      %v4722 = vld [vmem:[%s712 + $0x1a] sm:$0xff]
      %v4723 = vld [vmem:[%s712 + $0x22] sm:$0xff]
      %v4724 = vld [vmem:[%s712 + $0x32] sm:$0xff]
      %v4725 = vld [vmem:[%s712 + $0x3a] sm:$0xff]
      %v4726 = vld [vmem:[%s712 + $0x4a] sm:$0xff]
      %v4727 = vld [vmem:[%s712 + $0x52] sm:$0xff]
      %v4728 = vld [vmem:[%s712 + $0x62] sm:$0xff]
      %v4729 = vld [vmem:[%s712 + $0x6a] sm:$0xff]
      %v4730 = vld [vmem:[%s712 + $0x7a] sm:$0xff]
      %v4731 = vld [vmem:[%s712 + $0x82] sm:$0xff]
      %v4732 = vld [vmem:[%s712 + $0x92] sm:$0xff]
      %v4733 = vld [vmem:[%s712 + $0x9a] sm:$0xff]
      %v4734 = vld [vmem:[%s712 + $0xaa] sm:$0xff]
      %v4735 = vld [vmem:[%s712 + $0xb2] sm:$0xff]
      %v4736 = vld [vmem:[%s712 + $0xc2] sm:$0xff]
      %v4737 = vld [vmem:[%s712 + $0xca] sm:$0xff]
      %v4738 = vld [vmem:[%s712 + $0xda] sm:$0xff]
      %v4739 = vld [vmem:[%s712 + $0xe2] sm:$0xff]
      %v4740 = vld [vmem:[%s712 + $0xf2] sm:$0xff]
      %v4741 = vld [vmem:[%s712 + $0xfa] sm:$0xff]
      %v4742 = vld [vmem:[%s712 + $0x10a] sm:$0xff]
      %v4743 = vld [vmem:[%s712 + $0x112] sm:$0xff]
      %v4744 = vld [vmem:[%s712 + $0x122] sm:$0xff]
      %v4745 = vld [vmem:[%s712 + $0x12a] sm:$0xff]
      %v4746 = vld [vmem:[%s712 + $0x13a] sm:$0xff]
      %v4747 = vld [vmem:[%s712 + $0x142] sm:$0xff]
      %v4748 = vld [vmem:[%s712 + $0x152] sm:$0xff]
      %v4749 = vld [vmem:[%s712 + $0x15a] sm:$0xff]
      %v4750 = vld [vmem:[%s712 + $0x16a] sm:$0xff]
      %v4751 = vld [vmem:[%s712 + $0x172] sm:$0xff]
      %v4752 = vld [vmem:[%s937] sm:$0xff]
      %v4753 = vld [vmem:[%s937 + $0x8] sm:$0xff]
      %v4754 = vld [vmem:[%s937 + $0x18] sm:$0xff]
      %v4755 = vld [vmem:[%s937 + $0x20] sm:$0xff]
      %v4756 = vld [vmem:[%s937 + $0x30] sm:$0xff]
      %v4757 = vld [vmem:[%s937 + $0x38] sm:$0xff]
      %v4758 = vld [vmem:[%s937 + $0x48] sm:$0xff]
      %v4759 = vld [vmem:[%s937 + $0x50] sm:$0xff]
      %v4760 = vld [vmem:[%s937 + $0x60] sm:$0xff]
      %v4761 = vld [vmem:[%s937 + $0x68] sm:$0xff]
      %v4762 = vld [vmem:[%s937 + $0x78] sm:$0xff]
      %v4763 = vld [vmem:[%s937 + $0x80] sm:$0xff]
      %v4764 = vld [vmem:[%s937 + $0x90] sm:$0xff]
      %v4765 = vld [vmem:[%s937 + $0x98] sm:$0xff]
      %v4766 = vld [vmem:[%s937 + $0xa8] sm:$0xff]
      %v4767 = vld [vmem:[%s937 + $0xb0] sm:$0xff]
      %v4768 = vld [vmem:[%s937 + $0xc0] sm:$0xff]
      %v4769 = vld [vmem:[%s937 + $0xc8] sm:$0xff]
      %v4770 = vld [vmem:[%s937 + $0xd8] sm:$0xff]
      %v4771 = vld [vmem:[%s937 + $0xe0] sm:$0xff]
      %v4772 = vld [vmem:[%s937 + $0xf0] sm:$0xff]
      %v4773 = vld [vmem:[%s937 + $0xf8] sm:$0xff]
      %v4774 = vld [vmem:[%s937 + $0x108] sm:$0xff]
      %v4775 = vld [vmem:[%s937 + $0x110] sm:$0xff]
      %v4776 = vld [vmem:[%s937 + $0x120] sm:$0xff]
      %v4777 = vld [vmem:[%s937 + $0x128] sm:$0xff]
      %v4778 = vld [vmem:[%s937 + $0x138] sm:$0xff]
      %v4779 = vld [vmem:[%s937 + $0x140] sm:$0xff]
      %v4780 = vld [vmem:[%s937 + $0x150] sm:$0xff]
      %v4781 = vld [vmem:[%s937 + $0x158] sm:$0xff]
      %v4782 = vld [vmem:[%s937 + $0x168] sm:$0xff]
      %v4783 = vld [vmem:[%s937 + $0x170] sm:$0xff]
      %v4784 = vld [vmem:[%s937 + $0x1] sm:$0xff]
      %v4785 = vld [vmem:[%s937 + $0x9] sm:$0xff]
      %v4786 = vld [vmem:[%s937 + $0x19] sm:$0xff]
      %v4787 = vld [vmem:[%s937 + $0x21] sm:$0xff]
      %v4788 = vld [vmem:[%s937 + $0x31] sm:$0xff]
      %v4789 = vld [vmem:[%s937 + $0x39] sm:$0xff]
      %v4790 = vld [vmem:[%s937 + $0x49] sm:$0xff]
      %v4791 = vld [vmem:[%s937 + $0x51] sm:$0xff]
      %v4792 = vld [vmem:[%s937 + $0x61] sm:$0xff]
      %v4793 = vld [vmem:[%s937 + $0x69] sm:$0xff]
      %v4794 = vld [vmem:[%s937 + $0x79] sm:$0xff]
      %v4795 = vld [vmem:[%s937 + $0x81] sm:$0xff]
      %v4796 = vld [vmem:[%s937 + $0x91] sm:$0xff]
      %v4797 = vld [vmem:[%s937 + $0x99] sm:$0xff]
      %v4798 = vld [vmem:[%s937 + $0xa9] sm:$0xff]
      %v4799 = vld [vmem:[%s937 + $0xb1] sm:$0xff]
      %v4800 = vld [vmem:[%s937 + $0xc1] sm:$0xff]
      %v4801 = vld [vmem:[%s937 + $0xc9] sm:$0xff]
      %v4802 = vld [vmem:[%s937 + $0xd9] sm:$0xff]
      %v4803 = vld [vmem:[%s937 + $0xe1] sm:$0xff]
      %v4804 = vld [vmem:[%s937 + $0xf1] sm:$0xff]
      %v4805 = vld [vmem:[%s937 + $0xf9] sm:$0xff]
      %v4806 = vld [vmem:[%s937 + $0x109] sm:$0xff]
      %v4807 = vld [vmem:[%s937 + $0x111] sm:$0xff]
      %v4808 = vld [vmem:[%s937 + $0x121] sm:$0xff]
      %v4809 = vld [vmem:[%s937 + $0x129] sm:$0xff]
      %v4810 = vld [vmem:[%s937 + $0x139] sm:$0xff]
      %v4811 = vld [vmem:[%s937 + $0x141] sm:$0xff]
      %v4812 = vld [vmem:[%s937 + $0x151] sm:$0xff]
      %v4813 = vld [vmem:[%s937 + $0x159] sm:$0xff]
      %v4814 = vld [vmem:[%s937 + $0x169] sm:$0xff]
      %v4815 = vld [vmem:[%s937 + $0x171] sm:$0xff]
      %v4816 = vld [vmem:[%s937 + $0x2] sm:$0xff]
      %v4817 = vld [vmem:[%s937 + $0xa] sm:$0xff]
      %v4818 = vld [vmem:[%s937 + $0x1a] sm:$0xff]
      %v4819 = vld [vmem:[%s937 + $0x22] sm:$0xff]
      %v4820 = vld [vmem:[%s937 + $0x32] sm:$0xff]
      %v4821 = vld [vmem:[%s937 + $0x3a] sm:$0xff]
      %v4822 = vld [vmem:[%s937 + $0x4a] sm:$0xff]
      %v4823 = vld [vmem:[%s937 + $0x52] sm:$0xff]
      %v4824 = vld [vmem:[%s937 + $0x62] sm:$0xff]
      %v4825 = vld [vmem:[%s937 + $0x6a] sm:$0xff]
      %v4826 = vld [vmem:[%s937 + $0x7a] sm:$0xff]
      %v4827 = vld [vmem:[%s937 + $0x82] sm:$0xff]
      %v4828 = vld [vmem:[%s937 + $0x92] sm:$0xff]
      %v4829 = vld [vmem:[%s937 + $0x9a] sm:$0xff]
      %v4830 = vld [vmem:[%s937 + $0xaa] sm:$0xff]
      %v4831 = vld [vmem:[%s937 + $0xb2] sm:$0xff]
      %v4832 = vld [vmem:[%s937 + $0xc2] sm:$0xff]
      %v4833 = vld [vmem:[%s937 + $0xca] sm:$0xff]
      %v4834 = vld [vmem:[%s937 + $0xda] sm:$0xff]
      %v4835 = vld [vmem:[%s937 + $0xe2] sm:$0xff]
      %v4836 = vld [vmem:[%s937 + $0xf2] sm:$0xff]
      %v4837 = vld [vmem:[%s937 + $0xfa] sm:$0xff]
      %v4838 = vld [vmem:[%s937 + $0x10a] sm:$0xff]
      %v4839 = vld [vmem:[%s937 + $0x112] sm:$0xff]
      %v4840 = vld [vmem:[%s937 + $0x122] sm:$0xff]
      %v4841 = vld [vmem:[%s937 + $0x12a] sm:$0xff]
      %v4842 = vld [vmem:[%s937 + $0x13a] sm:$0xff]
      %v4843 = vld [vmem:[%s937 + $0x142] sm:$0xff]
      %v4844 = vld [vmem:[%s937 + $0x152] sm:$0xff]
      %v4845 = vld [vmem:[%s937 + $0x15a] sm:$0xff]
      %v4846 = vld [vmem:[%s937 + $0x16a] sm:$0xff]
      %v4847 = vld [vmem:[%s937 + $0x172] sm:$0xff]
      %4880 = vrot.lane.b32.xlu0 %v4592, 4
      %v4881 = vpop.permute.xlu0 %4880
      %4882 = vrot.lane.b32.xlu0 %v4593, 4
      %v4883 = vpop.permute.xlu0 %4882
      %4884 = vrot.lane.b32.xlu0 %v4594, 4
      %v4885 = vpop.permute.xlu0 %4884
      %4886 = vrot.lane.b32.xlu0 %v4595, 4
      %v4887 = vpop.permute.xlu0 %4886
      %4888 = vrot.lane.b32.xlu0 %v4596, 4
      %v4889 = vpop.permute.xlu0 %4888
      %4890 = vrot.lane.b32.xlu0 %v4597, 4
      %v4891 = vpop.permute.xlu0 %4890
      %4892 = vrot.lane.b32.xlu0 %v4598, 4
      %v4893 = vpop.permute.xlu0 %4892
      %4894 = vrot.lane.b32.xlu0 %v4599, 4
      %v4895 = vpop.permute.xlu0 %4894
      %4896 = vrot.lane.b32.xlu0 %v4600, 4
      %v4897 = vpop.permute.xlu0 %4896
      %4898 = vrot.lane.b32.xlu0 %v4601, 4
      %v4899 = vpop.permute.xlu0 %4898
      %4900 = vrot.lane.b32.xlu0 %v4602, 4
      %v4901 = vpop.permute.xlu0 %4900
      %4902 = vrot.lane.b32.xlu0 %v4603, 4
      %v4903 = vpop.permute.xlu0 %4902
      %4904 = vrot.lane.b32.xlu0 %v4604, 4
      %v4905 = vpop.permute.xlu0 %4904
      %4906 = vrot.lane.b32.xlu0 %v4605, 4
      %v4907 = vpop.permute.xlu0 %4906
      %4908 = vrot.lane.b32.xlu0 %v4606, 4
      %v4909 = vpop.permute.xlu0 %4908
      %4910 = vrot.lane.b32.xlu0 %v4607, 4
      %v4911 = vpop.permute.xlu0 %4910
      %4912 = vrot.lane.b32.xlu0 %v4608, 4
      %v4913 = vpop.permute.xlu0 %4912
      %4914 = vrot.lane.b32.xlu0 %v4609, 4
      %v4915 = vpop.permute.xlu0 %4914
      %4916 = vrot.lane.b32.xlu0 %v4610, 4
      %v4917 = vpop.permute.xlu0 %4916
      %4918 = vrot.lane.b32.xlu0 %v4611, 4
      %v4919 = vpop.permute.xlu0 %4918
      %4920 = vrot.lane.b32.xlu0 %v4612, 4
      %v4921 = vpop.permute.xlu0 %4920
      %4922 = vrot.lane.b32.xlu0 %v4613, 4
      %v4923 = vpop.permute.xlu0 %4922
      %4924 = vrot.lane.b32.xlu0 %v4614, 4
      %v4925 = vpop.permute.xlu0 %4924
      %4926 = vrot.lane.b32.xlu0 %v4615, 4
      %v4927 = vpop.permute.xlu0 %4926
      %4928 = vrot.lane.b32.xlu0 %v4616, 4
      %v4929 = vpop.permute.xlu0 %4928
      %4930 = vrot.lane.b32.xlu0 %v4617, 4
      %v4931 = vpop.permute.xlu0 %4930
      %4932 = vrot.lane.b32.xlu0 %v4618, 4
      %v4933 = vpop.permute.xlu0 %4932
      %4934 = vrot.lane.b32.xlu0 %v4619, 4
      %v4935 = vpop.permute.xlu0 %4934
      %4936 = vrot.lane.b32.xlu0 %v4620, 4
      %v4937 = vpop.permute.xlu0 %4936
      %4938 = vrot.lane.b32.xlu0 %v4621, 4
      %v4939 = vpop.permute.xlu0 %4938
      %4940 = vrot.lane.b32.xlu0 %v4622, 4
      %v4941 = vpop.permute.xlu0 %4940
      %4942 = vrot.lane.b32.xlu0 %v4623, 4
      %v4943 = vpop.permute.xlu0 %4942
      %5008 = vrot.lane.b32.xlu0 %v4624, 8
      %v5009 = vpop.permute.xlu0 %5008
      %5010 = vrot.lane.b32.xlu0 %v4625, 8
      %v5011 = vpop.permute.xlu0 %5010
      %5012 = vrot.lane.b32.xlu0 %v4626, 8
      %v5013 = vpop.permute.xlu0 %5012
      %5014 = vrot.lane.b32.xlu0 %v4627, 8
      %v5015 = vpop.permute.xlu0 %5014
      %5016 = vrot.lane.b32.xlu0 %v4628, 8
      %v5017 = vpop.permute.xlu0 %5016
      %5018 = vrot.lane.b32.xlu0 %v4629, 8
      %v5019 = vpop.permute.xlu0 %5018
      %5020 = vrot.lane.b32.xlu0 %v4630, 8
      %v5021 = vpop.permute.xlu0 %5020
      %5022 = vrot.lane.b32.xlu0 %v4631, 8
      %v5023 = vpop.permute.xlu0 %5022
      %5024 = vrot.lane.b32.xlu0 %v4632, 8
      %v5025 = vpop.permute.xlu0 %5024
      %5026 = vrot.lane.b32.xlu0 %v4633, 8
      %v5027 = vpop.permute.xlu0 %5026
      %5028 = vrot.lane.b32.xlu0 %v4634, 8
      %v5029 = vpop.permute.xlu0 %5028
      %5030 = vrot.lane.b32.xlu0 %v4635, 8
      %v5031 = vpop.permute.xlu0 %5030
      %5032 = vrot.lane.b32.xlu0 %v4636, 8
      %v5033 = vpop.permute.xlu0 %5032
      %5034 = vrot.lane.b32.xlu0 %v4637, 8
      %v5035 = vpop.permute.xlu0 %5034
      %5036 = vrot.lane.b32.xlu0 %v4638, 8
      %v5037 = vpop.permute.xlu0 %5036
      %5038 = vrot.lane.b32.xlu0 %v4639, 8
      %v5039 = vpop.permute.xlu0 %5038
      %5040 = vrot.lane.b32.xlu0 %v4640, 8
      %v5041 = vpop.permute.xlu0 %5040
      %5042 = vrot.lane.b32.xlu0 %v4641, 8
      %v5043 = vpop.permute.xlu0 %5042
      %5044 = vrot.lane.b32.xlu0 %v4642, 8
      %v5045 = vpop.permute.xlu0 %5044
      %5046 = vrot.lane.b32.xlu0 %v4643, 8
      %v5047 = vpop.permute.xlu0 %5046
      %5048 = vrot.lane.b32.xlu0 %v4644, 8
      %v5049 = vpop.permute.xlu0 %5048
      %5050 = vrot.lane.b32.xlu0 %v4645, 8
      %v5051 = vpop.permute.xlu0 %5050
      %5052 = vrot.lane.b32.xlu0 %v4646, 8
      %v5053 = vpop.permute.xlu0 %5052
      %5054 = vrot.lane.b32.xlu0 %v4647, 8
      %v5055 = vpop.permute.xlu0 %5054
      %5056 = vrot.lane.b32.xlu0 %v4648, 8
      %v5057 = vpop.permute.xlu0 %5056
      %5058 = vrot.lane.b32.xlu0 %v4649, 8
      %v5059 = vpop.permute.xlu0 %5058
      %5060 = vrot.lane.b32.xlu0 %v4650, 8
      %v5061 = vpop.permute.xlu0 %5060
      %5062 = vrot.lane.b32.xlu0 %v4651, 8
      %v5063 = vpop.permute.xlu0 %5062
      %5064 = vrot.lane.b32.xlu0 %v4652, 8
      %v5065 = vpop.permute.xlu0 %5064
      %5066 = vrot.lane.b32.xlu0 %v4653, 8
      %v5067 = vpop.permute.xlu0 %5066
      %5068 = vrot.lane.b32.xlu0 %v4654, 8
      %v5069 = vpop.permute.xlu0 %5068
      %5070 = vrot.lane.b32.xlu0 %v4655, 8
      %v5071 = vpop.permute.xlu0 %5070
      %5136 = vrot.lane.b32.xlu0 %v4656, 12
      %v5137 = vpop.permute.xlu0 %5136
      %5138 = vrot.lane.b32.xlu0 %v4657, 12
      %v5139 = vpop.permute.xlu0 %5138
      %5140 = vrot.lane.b32.xlu0 %v4658, 12
      %v5141 = vpop.permute.xlu0 %5140
      %5142 = vrot.lane.b32.xlu0 %v4659, 12
      %v5143 = vpop.permute.xlu0 %5142
      %5144 = vrot.lane.b32.xlu0 %v4660, 12
      %v5145 = vpop.permute.xlu0 %5144
      %5146 = vrot.lane.b32.xlu0 %v4661, 12
      %v5147 = vpop.permute.xlu0 %5146
      %5148 = vrot.lane.b32.xlu0 %v4662, 12
      %v5149 = vpop.permute.xlu0 %5148
      %5150 = vrot.lane.b32.xlu0 %v4663, 12
      %v5151 = vpop.permute.xlu0 %5150
      %5152 = vrot.lane.b32.xlu0 %v4664, 12
      %v5153 = vpop.permute.xlu0 %5152
      %5154 = vrot.lane.b32.xlu0 %v4665, 12
      %v5155 = vpop.permute.xlu0 %5154
      %5156 = vrot.lane.b32.xlu0 %v4666, 12
      %v5157 = vpop.permute.xlu0 %5156
      %5158 = vrot.lane.b32.xlu0 %v4667, 12
      %v5159 = vpop.permute.xlu0 %5158
      %5160 = vrot.lane.b32.xlu0 %v4668, 12
      %v5161 = vpop.permute.xlu0 %5160
      %5162 = vrot.lane.b32.xlu0 %v4669, 12
      %v5163 = vpop.permute.xlu0 %5162
      %5164 = vrot.lane.b32.xlu0 %v4670, 12
      %v5165 = vpop.permute.xlu0 %5164
      %5166 = vrot.lane.b32.xlu0 %v4671, 12
      %v5167 = vpop.permute.xlu0 %5166
      %5168 = vrot.lane.b32.xlu0 %v4672, 12
      %v5169 = vpop.permute.xlu0 %5168
      %5170 = vrot.lane.b32.xlu0 %v4673, 12
      %v5171 = vpop.permute.xlu0 %5170
      %5172 = vrot.lane.b32.xlu0 %v4674, 12
      %v5173 = vpop.permute.xlu0 %5172
      %5174 = vrot.lane.b32.xlu0 %v4675, 12
      %v5175 = vpop.permute.xlu0 %5174
      %5176 = vrot.lane.b32.xlu0 %v4676, 12
      %v5177 = vpop.permute.xlu0 %5176
      %5178 = vrot.lane.b32.xlu0 %v4677, 12
      %v5179 = vpop.permute.xlu0 %5178
      %5180 = vrot.lane.b32.xlu0 %v4678, 12
      %v5181 = vpop.permute.xlu0 %5180
      %5182 = vrot.lane.b32.xlu0 %v4679, 12
      %v5183 = vpop.permute.xlu0 %5182
      %5184 = vrot.lane.b32.xlu0 %v4680, 12
      %v5185 = vpop.permute.xlu0 %5184
      %5186 = vrot.lane.b32.xlu0 %v4681, 12
      %v5187 = vpop.permute.xlu0 %5186
      %5188 = vrot.lane.b32.xlu0 %v4682, 12
      %v5189 = vpop.permute.xlu0 %5188
      %5190 = vrot.lane.b32.xlu0 %v4683, 12
      %v5191 = vpop.permute.xlu0 %5190
      %5192 = vrot.lane.b32.xlu0 %v4684, 12
      %v5193 = vpop.permute.xlu0 %5192
      %5194 = vrot.lane.b32.xlu0 %v4685, 12
      %v5195 = vpop.permute.xlu0 %5194
      %5196 = vrot.lane.b32.xlu0 %v4686, 12
      %v5197 = vpop.permute.xlu0 %5196
      %5198 = vrot.lane.b32.xlu0 %v4687, 12
      %v5199 = vpop.permute.xlu0 %5198
      %5264 = vrot.lane.b32.xlu0 %v4688, 16
      %v5265 = vpop.permute.xlu0 %5264
      %5266 = vrot.lane.b32.xlu0 %v4689, 16
      %v5267 = vpop.permute.xlu0 %5266
      %5268 = vrot.lane.b32.xlu0 %v4690, 16
      %v5269 = vpop.permute.xlu0 %5268
      %5270 = vrot.lane.b32.xlu0 %v4691, 16
      %v5271 = vpop.permute.xlu0 %5270
      %5272 = vrot.lane.b32.xlu0 %v4692, 16
      %v5273 = vpop.permute.xlu0 %5272
      %5274 = vrot.lane.b32.xlu0 %v4693, 16
      %v5275 = vpop.permute.xlu0 %5274
      %5276 = vrot.lane.b32.xlu0 %v4694, 16
      %v5277 = vpop.permute.xlu0 %5276
      %5278 = vrot.lane.b32.xlu0 %v4695, 16
      %v5279 = vpop.permute.xlu0 %5278
      %5280 = vrot.lane.b32.xlu0 %v4696, 16
      %v5281 = vpop.permute.xlu0 %5280
      %5282 = vrot.lane.b32.xlu0 %v4697, 16
      %v5283 = vpop.permute.xlu0 %5282
      %5284 = vrot.lane.b32.xlu0 %v4698, 16
      %v5285 = vpop.permute.xlu0 %5284
      %5286 = vrot.lane.b32.xlu0 %v4699, 16
      %v5287 = vpop.permute.xlu0 %5286
      %5288 = vrot.lane.b32.xlu0 %v4700, 16
      %v5289 = vpop.permute.xlu0 %5288
      %5290 = vrot.lane.b32.xlu0 %v4701, 16
      %v5291 = vpop.permute.xlu0 %5290
      %5292 = vrot.lane.b32.xlu0 %v4702, 16
      %v5293 = vpop.permute.xlu0 %5292
      %5294 = vrot.lane.b32.xlu0 %v4703, 16
      %v5295 = vpop.permute.xlu0 %5294
      %5296 = vrot.lane.b32.xlu0 %v4704, 16
      %v5297 = vpop.permute.xlu0 %5296
      %5298 = vrot.lane.b32.xlu0 %v4705, 16
      %v5299 = vpop.permute.xlu0 %5298
      %5300 = vrot.lane.b32.xlu0 %v4706, 16
      %v5301 = vpop.permute.xlu0 %5300
      %5302 = vrot.lane.b32.xlu0 %v4707, 16
      %v5303 = vpop.permute.xlu0 %5302
      %5304 = vrot.lane.b32.xlu0 %v4708, 16
      %v5305 = vpop.permute.xlu0 %5304
      %5306 = vrot.lane.b32.xlu0 %v4709, 16
      %v5307 = vpop.permute.xlu0 %5306
      %5308 = vrot.lane.b32.xlu0 %v4710, 16
      %v5309 = vpop.permute.xlu0 %5308
      %5310 = vrot.lane.b32.xlu0 %v4711, 16
      %v5311 = vpop.permute.xlu0 %5310
      %5312 = vrot.lane.b32.xlu0 %v4712, 16
      %v5313 = vpop.permute.xlu0 %5312
      %5314 = vrot.lane.b32.xlu0 %v4713, 16
      %v5315 = vpop.permute.xlu0 %5314
      %5316 = vrot.lane.b32.xlu0 %v4714, 16
      %v5317 = vpop.permute.xlu0 %5316
      %5318 = vrot.lane.b32.xlu0 %v4715, 16
      %v5319 = vpop.permute.xlu0 %5318
      %5320 = vrot.lane.b32.xlu0 %v4716, 16
      %v5321 = vpop.permute.xlu0 %5320
      %5322 = vrot.lane.b32.xlu0 %v4717, 16
      %v5323 = vpop.permute.xlu0 %5322
      %5324 = vrot.lane.b32.xlu0 %v4718, 16
      %v5325 = vpop.permute.xlu0 %5324
      %5326 = vrot.lane.b32.xlu0 %v4719, 16
      %v5327 = vpop.permute.xlu0 %5326
      %5392 = vrot.lane.b32.xlu0 %v4720, 20
      %v5393 = vpop.permute.xlu0 %5392
      %5394 = vrot.lane.b32.xlu0 %v4721, 20
      %v5395 = vpop.permute.xlu0 %5394
      %5396 = vrot.lane.b32.xlu0 %v4722, 20
      %v5397 = vpop.permute.xlu0 %5396
      %5398 = vrot.lane.b32.xlu0 %v4723, 20
      %v5399 = vpop.permute.xlu0 %5398
      %5400 = vrot.lane.b32.xlu0 %v4724, 20
      %v5401 = vpop.permute.xlu0 %5400
      %5402 = vrot.lane.b32.xlu0 %v4725, 20
      %v5403 = vpop.permute.xlu0 %5402
      %5404 = vrot.lane.b32.xlu0 %v4726, 20
      %v5405 = vpop.permute.xlu0 %5404
      %5406 = vrot.lane.b32.xlu0 %v4727, 20
      %v5407 = vpop.permute.xlu0 %5406
      %5408 = vrot.lane.b32.xlu0 %v4728, 20
      %v5409 = vpop.permute.xlu0 %5408
      %5410 = vrot.lane.b32.xlu0 %v4729, 20
      %v5411 = vpop.permute.xlu0 %5410
      %5412 = vrot.lane.b32.xlu0 %v4730, 20
      %v5413 = vpop.permute.xlu0 %5412
      %5414 = vrot.lane.b32.xlu0 %v4731, 20
      %v5415 = vpop.permute.xlu0 %5414
      %5416 = vrot.lane.b32.xlu0 %v4732, 20
      %v5417 = vpop.permute.xlu0 %5416
      %5418 = vrot.lane.b32.xlu0 %v4733, 20
      %v5419 = vpop.permute.xlu0 %5418
      %5420 = vrot.lane.b32.xlu0 %v4734, 20
      %v5421 = vpop.permute.xlu0 %5420
      %5422 = vrot.lane.b32.xlu0 %v4735, 20
      %v5423 = vpop.permute.xlu0 %5422
      %5424 = vrot.lane.b32.xlu0 %v4736, 20
      %v5425 = vpop.permute.xlu0 %5424
      %5426 = vrot.lane.b32.xlu0 %v4737, 20
      %v5427 = vpop.permute.xlu0 %5426
      %5428 = vrot.lane.b32.xlu0 %v4738, 20
      %v5429 = vpop.permute.xlu0 %5428
      %5430 = vrot.lane.b32.xlu0 %v4739, 20
      %v5431 = vpop.permute.xlu0 %5430
      %5432 = vrot.lane.b32.xlu0 %v4740, 20
      %v5433 = vpop.permute.xlu0 %5432
      %5434 = vrot.lane.b32.xlu0 %v4741, 20
      %v5435 = vpop.permute.xlu0 %5434
      %5436 = vrot.lane.b32.xlu0 %v4742, 20
      %v5437 = vpop.permute.xlu0 %5436
      %5438 = vrot.lane.b32.xlu0 %v4743, 20
      %v5439 = vpop.permute.xlu0 %5438
      %5440 = vrot.lane.b32.xlu0 %v4744, 20
      %v5441 = vpop.permute.xlu0 %5440
      %5442 = vrot.lane.b32.xlu0 %v4745, 20
      %v5443 = vpop.permute.xlu0 %5442
      %5444 = vrot.lane.b32.xlu0 %v4746, 20
      %v5445 = vpop.permute.xlu0 %5444
      %5446 = vrot.lane.b32.xlu0 %v4747, 20
      %v5447 = vpop.permute.xlu0 %5446
      %5448 = vrot.lane.b32.xlu0 %v4748, 20
      %v5449 = vpop.permute.xlu0 %5448
      %5450 = vrot.lane.b32.xlu0 %v4749, 20
      %v5451 = vpop.permute.xlu0 %5450
      %5452 = vrot.lane.b32.xlu0 %v4750, 20
      %v5453 = vpop.permute.xlu0 %5452
      %5454 = vrot.lane.b32.xlu0 %v4751, 20
      %v5455 = vpop.permute.xlu0 %5454
      %5520 = vrot.lane.b32.xlu0 %v4752, 24
      %v5521 = vpop.permute.xlu0 %5520
      %5522 = vrot.lane.b32.xlu0 %v4753, 24
      %v5523 = vpop.permute.xlu0 %5522
      %5524 = vrot.lane.b32.xlu0 %v4754, 24
      %v5525 = vpop.permute.xlu0 %5524
      %5526 = vrot.lane.b32.xlu0 %v4755, 24
      %v5527 = vpop.permute.xlu0 %5526
      %5528 = vrot.lane.b32.xlu0 %v4756, 24
      %v5529 = vpop.permute.xlu0 %5528
      %5530 = vrot.lane.b32.xlu0 %v4757, 24
      %v5531 = vpop.permute.xlu0 %5530
      %5532 = vrot.lane.b32.xlu0 %v4758, 24
      %v5533 = vpop.permute.xlu0 %5532
      %5534 = vrot.lane.b32.xlu0 %v4759, 24
      %v5535 = vpop.permute.xlu0 %5534
      %5536 = vrot.lane.b32.xlu0 %v4760, 24
      %v5537 = vpop.permute.xlu0 %5536
      %5538 = vrot.lane.b32.xlu0 %v4761, 24
      %v5539 = vpop.permute.xlu0 %5538
      %5540 = vrot.lane.b32.xlu0 %v4762, 24
      %v5541 = vpop.permute.xlu0 %5540
      %5542 = vrot.lane.b32.xlu0 %v4763, 24
      %v5543 = vpop.permute.xlu0 %5542
      %5544 = vrot.lane.b32.xlu0 %v4764, 24
      %v5545 = vpop.permute.xlu0 %5544
      %5546 = vrot.lane.b32.xlu0 %v4765, 24
      %v5547 = vpop.permute.xlu0 %5546
      %5548 = vrot.lane.b32.xlu0 %v4766, 24
      %v5549 = vpop.permute.xlu0 %5548
      %5550 = vrot.lane.b32.xlu0 %v4767, 24
      %v5551 = vpop.permute.xlu0 %5550
      %5552 = vrot.lane.b32.xlu0 %v4768, 24
      %v5553 = vpop.permute.xlu0 %5552
      %5554 = vrot.lane.b32.xlu0 %v4769, 24
      %v5555 = vpop.permute.xlu0 %5554
      %5556 = vrot.lane.b32.xlu0 %v4770, 24
      %v5557 = vpop.permute.xlu0 %5556
      %5558 = vrot.lane.b32.xlu0 %v4771, 24
      %v5559 = vpop.permute.xlu0 %5558
      %5560 = vrot.lane.b32.xlu0 %v4772, 24
      %v5561 = vpop.permute.xlu0 %5560
      %5562 = vrot.lane.b32.xlu0 %v4773, 24
      %v5563 = vpop.permute.xlu0 %5562
      %5564 = vrot.lane.b32.xlu0 %v4774, 24
      %v5565 = vpop.permute.xlu0 %5564
      %5566 = vrot.lane.b32.xlu0 %v4775, 24
      %v5567 = vpop.permute.xlu0 %5566
      %5568 = vrot.lane.b32.xlu0 %v4776, 24
      %v5569 = vpop.permute.xlu0 %5568
      %5570 = vrot.lane.b32.xlu0 %v4777, 24
      %v5571 = vpop.permute.xlu0 %5570
      %5572 = vrot.lane.b32.xlu0 %v4778, 24
      %v5573 = vpop.permute.xlu0 %5572
      %5574 = vrot.lane.b32.xlu0 %v4779, 24
      %v5575 = vpop.permute.xlu0 %5574
      %5576 = vrot.lane.b32.xlu0 %v4780, 24
      %v5577 = vpop.permute.xlu0 %5576
      %5578 = vrot.lane.b32.xlu0 %v4781, 24
      %v5579 = vpop.permute.xlu0 %5578
      %5580 = vrot.lane.b32.xlu0 %v4782, 24
      %v5581 = vpop.permute.xlu0 %5580
      %5582 = vrot.lane.b32.xlu0 %v4783, 24
      %v5583 = vpop.permute.xlu0 %5582
      %5648 = vrot.lane.b32.xlu0 %v4784, 28
      %v5649 = vpop.permute.xlu0 %5648
      %5650 = vrot.lane.b32.xlu0 %v4785, 28
      %v5651 = vpop.permute.xlu0 %5650
      %5652 = vrot.lane.b32.xlu0 %v4786, 28
      %v5653 = vpop.permute.xlu0 %5652
      %5654 = vrot.lane.b32.xlu0 %v4787, 28
      %v5655 = vpop.permute.xlu0 %5654
      %5656 = vrot.lane.b32.xlu0 %v4788, 28
      %v5657 = vpop.permute.xlu0 %5656
      %5658 = vrot.lane.b32.xlu0 %v4789, 28
      %v5659 = vpop.permute.xlu0 %5658
      %5660 = vrot.lane.b32.xlu0 %v4790, 28
      %v5661 = vpop.permute.xlu0 %5660
      %5662 = vrot.lane.b32.xlu0 %v4791, 28
      %v5663 = vpop.permute.xlu0 %5662
      %5664 = vrot.lane.b32.xlu0 %v4792, 28
      %v5665 = vpop.permute.xlu0 %5664
      %5666 = vrot.lane.b32.xlu0 %v4793, 28
      %v5667 = vpop.permute.xlu0 %5666
      %5668 = vrot.lane.b32.xlu0 %v4794, 28
      %v5669 = vpop.permute.xlu0 %5668
      %5670 = vrot.lane.b32.xlu0 %v4795, 28
      %v5671 = vpop.permute.xlu0 %5670
      %5672 = vrot.lane.b32.xlu0 %v4796, 28
      %v5673 = vpop.permute.xlu0 %5672
      %5674 = vrot.lane.b32.xlu0 %v4797, 28
      %v5675 = vpop.permute.xlu0 %5674
      %5676 = vrot.lane.b32.xlu0 %v4798, 28
      %v5677 = vpop.permute.xlu0 %5676
      %5678 = vrot.lane.b32.xlu0 %v4799, 28
      %v5679 = vpop.permute.xlu0 %5678
      %5680 = vrot.lane.b32.xlu0 %v4800, 28
      %v5681 = vpop.permute.xlu0 %5680
      %5682 = vrot.lane.b32.xlu0 %v4801, 28
      %v5683 = vpop.permute.xlu0 %5682
      %5684 = vrot.lane.b32.xlu0 %v4802, 28
      %v5685 = vpop.permute.xlu0 %5684
      %5686 = vrot.lane.b32.xlu0 %v4803, 28
      %v5687 = vpop.permute.xlu0 %5686
      %5688 = vrot.lane.b32.xlu0 %v4804, 28
      %v5689 = vpop.permute.xlu0 %5688
      %5690 = vrot.lane.b32.xlu0 %v4805, 28
      %v5691 = vpop.permute.xlu0 %5690
      %5692 = vrot.lane.b32.xlu0 %v4806, 28
      %v5693 = vpop.permute.xlu0 %5692
      %5694 = vrot.lane.b32.xlu0 %v4807, 28
      %v5695 = vpop.permute.xlu0 %5694
      %5696 = vrot.lane.b32.xlu0 %v4808, 28
      %v5697 = vpop.permute.xlu0 %5696
      %5698 = vrot.lane.b32.xlu0 %v4809, 28
      %v5699 = vpop.permute.xlu0 %5698
      %5700 = vrot.lane.b32.xlu0 %v4810, 28
      %v5701 = vpop.permute.xlu0 %5700
      %5702 = vrot.lane.b32.xlu0 %v4811, 28
      %v5703 = vpop.permute.xlu0 %5702
      %5704 = vrot.lane.b32.xlu0 %v4812, 28
      %v5705 = vpop.permute.xlu0 %5704
      %5706 = vrot.lane.b32.xlu0 %v4813, 28
      %v5707 = vpop.permute.xlu0 %5706
      %5708 = vrot.lane.b32.xlu0 %v4814, 28
      %v5709 = vpop.permute.xlu0 %5708
      %5710 = vrot.lane.b32.xlu0 %v4815, 28
      %v5711 = vpop.permute.xlu0 %5710
      %5776 = vrot.lane.b32.xlu0 %v4816, 32
      %v5777 = vpop.permute.xlu0 %5776
      %5778 = vrot.lane.b32.xlu0 %v4817, 32
      %v5779 = vpop.permute.xlu0 %5778
      %5780 = vrot.lane.b32.xlu0 %v4818, 32
      %v5781 = vpop.permute.xlu0 %5780
      %5782 = vrot.lane.b32.xlu0 %v4819, 32
      %v5783 = vpop.permute.xlu0 %5782
      %5784 = vrot.lane.b32.xlu0 %v4820, 32
      %v5785 = vpop.permute.xlu0 %5784
      %5786 = vrot.lane.b32.xlu0 %v4821, 32
      %v5787 = vpop.permute.xlu0 %5786
      %5788 = vrot.lane.b32.xlu0 %v4822, 32
      %v5789 = vpop.permute.xlu0 %5788
      %5790 = vrot.lane.b32.xlu0 %v4823, 32
      %v5791 = vpop.permute.xlu0 %5790
      %5792 = vrot.lane.b32.xlu0 %v4824, 32
      %v5793 = vpop.permute.xlu0 %5792
      %5794 = vrot.lane.b32.xlu0 %v4825, 32
      %v5795 = vpop.permute.xlu0 %5794
      %5796 = vrot.lane.b32.xlu0 %v4826, 32
      %v5797 = vpop.permute.xlu0 %5796
      %5798 = vrot.lane.b32.xlu0 %v4827, 32
      %v5799 = vpop.permute.xlu0 %5798
      %5800 = vrot.lane.b32.xlu0 %v4828, 32
      %v5801 = vpop.permute.xlu0 %5800
      %5802 = vrot.lane.b32.xlu0 %v4829, 32
      %v5803 = vpop.permute.xlu0 %5802
      %5804 = vrot.lane.b32.xlu0 %v4830, 32
      %v5805 = vpop.permute.xlu0 %5804
      %5806 = vrot.lane.b32.xlu0 %v4831, 32
      %v5807 = vpop.permute.xlu0 %5806
      %5808 = vrot.lane.b32.xlu0 %v4832, 32
      %v5809 = vpop.permute.xlu0 %5808
      %5810 = vrot.lane.b32.xlu0 %v4833, 32
      %v5811 = vpop.permute.xlu0 %5810
      %5812 = vrot.lane.b32.xlu0 %v4834, 32
      %v5813 = vpop.permute.xlu0 %5812
      %5814 = vrot.lane.b32.xlu0 %v4835, 32
      %v5815 = vpop.permute.xlu0 %5814
      %5816 = vrot.lane.b32.xlu0 %v4836, 32
      %v5817 = vpop.permute.xlu0 %5816
      %5818 = vrot.lane.b32.xlu0 %v4837, 32
      %v5819 = vpop.permute.xlu0 %5818
      %5820 = vrot.lane.b32.xlu0 %v4838, 32
      %v5821 = vpop.permute.xlu0 %5820
      %5822 = vrot.lane.b32.xlu0 %v4839, 32
      %v5823 = vpop.permute.xlu0 %5822
      %5824 = vrot.lane.b32.xlu0 %v4840, 32
      %v5825 = vpop.permute.xlu0 %5824
      %5826 = vrot.lane.b32.xlu0 %v4841, 32
      %v5827 = vpop.permute.xlu0 %5826
      %5828 = vrot.lane.b32.xlu0 %v4842, 32
      %v5829 = vpop.permute.xlu0 %5828
      %5830 = vrot.lane.b32.xlu0 %v4843, 32
      %v5831 = vpop.permute.xlu0 %5830
      %5832 = vrot.lane.b32.xlu0 %v4844, 32
      %v5833 = vpop.permute.xlu0 %5832
      %5834 = vrot.lane.b32.xlu0 %v4845, 32
      %v5835 = vpop.permute.xlu0 %5834
      %5836 = vrot.lane.b32.xlu0 %v4846, 32
      %v5837 = vpop.permute.xlu0 %5836
      %5838 = vrot.lane.b32.xlu0 %v4847, 32
      %v5839 = vpop.permute.xlu0 %5838
      %v5872 = vsel %vm602, %v4560, %v4881
      %v5873 = vsel %vm602, %v4561, %v4883
      %v5874 = vsel %vm602, %v4562, %v4885
      %v5875 = vsel %vm602, %v4563, %v4887
      %v5876 = vsel %vm602, %v4564, %v4889
      %v5877 = vsel %vm602, %v4565, %v4891
      %v5878 = vsel %vm602, %v4566, %v4893
      %v5879 = vsel %vm602, %v4567, %v4895
      %v5880 = vsel %vm602, %v4568, %v4897
      %v5881 = vsel %vm602, %v4569, %v4899
      %v5882 = vsel %vm602, %v4570, %v4901
      %v5883 = vsel %vm602, %v4571, %v4903
      %v5884 = vsel %vm602, %v4572, %v4905
      %v5885 = vsel %vm602, %v4573, %v4907
      %v5886 = vsel %vm602, %v4574, %v4909
      %v5887 = vsel %vm602, %v4575, %v4911
      %v5888 = vsel %vm602, %v4576, %v4913
      %v5889 = vsel %vm602, %v4577, %v4915
      %v5890 = vsel %vm602, %v4578, %v4917
      %v5891 = vsel %vm602, %v4579, %v4919
      %v5892 = vsel %vm602, %v4580, %v4921
      %v5893 = vsel %vm602, %v4581, %v4923
      %v5894 = vsel %vm602, %v4582, %v4925
      %v5895 = vsel %vm602, %v4583, %v4927
      %v5896 = vsel %vm602, %v4584, %v4929
      %v5897 = vsel %vm602, %v4585, %v4931
      %v5898 = vsel %vm602, %v4586, %v4933
      %v5899 = vsel %vm602, %v4587, %v4935
      %v5900 = vsel %vm602, %v4588, %v4937
      %v5901 = vsel %vm602, %v4589, %v4939
      %v5902 = vsel %vm602, %v4590, %v4941
      %v5903 = vsel %vm602, %v4591, %v4943
      %v5904 = vsel %vm658, %v5872, %v5009
      %v5905 = vsel %vm658, %v5873, %v5011
      %v5906 = vsel %vm658, %v5874, %v5013
      %v5907 = vsel %vm658, %v5875, %v5015
      %v5908 = vsel %vm658, %v5876, %v5017
      %v5909 = vsel %vm658, %v5877, %v5019
      %v5910 = vsel %vm658, %v5878, %v5021
      %v5911 = vsel %vm658, %v5879, %v5023
      %v5912 = vsel %vm658, %v5880, %v5025
      %v5913 = vsel %vm658, %v5881, %v5027
      %v5914 = vsel %vm658, %v5882, %v5029
      %v5915 = vsel %vm658, %v5883, %v5031
      %v5916 = vsel %vm658, %v5884, %v5033
      %v5917 = vsel %vm658, %v5885, %v5035
      %v5918 = vsel %vm658, %v5886, %v5037
      %v5919 = vsel %vm658, %v5887, %v5039
      %v5920 = vsel %vm658, %v5888, %v5041
      %v5921 = vsel %vm658, %v5889, %v5043
      %v5922 = vsel %vm658, %v5890, %v5045
      %v5923 = vsel %vm658, %v5891, %v5047
      %v5924 = vsel %vm658, %v5892, %v5049
      %v5925 = vsel %vm658, %v5893, %v5051
      %v5926 = vsel %vm658, %v5894, %v5053
      %v5927 = vsel %vm658, %v5895, %v5055
      %v5928 = vsel %vm658, %v5896, %v5057
      %v5929 = vsel %vm658, %v5897, %v5059
      %v5930 = vsel %vm658, %v5898, %v5061
      %v5931 = vsel %vm658, %v5899, %v5063
      %v5932 = vsel %vm658, %v5900, %v5065
      %v5933 = vsel %vm658, %v5901, %v5067
      %v5934 = vsel %vm658, %v5902, %v5069
      %v5935 = vsel %vm658, %v5903, %v5071
      %v5936 = vsel %vm2122, %v5904, %v5137
      %v5937 = vsel %vm2122, %v5905, %v5139
      %v5938 = vsel %vm2122, %v5906, %v5141
      %v5939 = vsel %vm2122, %v5907, %v5143
      %v5940 = vsel %vm2122, %v5908, %v5145
      %v5941 = vsel %vm2122, %v5909, %v5147
      %v5942 = vsel %vm2122, %v5910, %v5149
      %v5943 = vsel %vm2122, %v5911, %v5151
      %v5944 = vsel %vm2122, %v5912, %v5153
      %v5945 = vsel %vm2122, %v5913, %v5155
      %v5946 = vsel %vm2122, %v5914, %v5157
      %v5947 = vsel %vm2122, %v5915, %v5159
      %v5948 = vsel %vm2122, %v5916, %v5161
      %v5949 = vsel %vm2122, %v5917, %v5163
      %v5950 = vsel %vm2122, %v5918, %v5165
      %v5951 = vsel %vm2122, %v5919, %v5167
      %v5952 = vsel %vm2122, %v5920, %v5169
      %v5953 = vsel %vm2122, %v5921, %v5171
      %v5954 = vsel %vm2122, %v5922, %v5173
      %v5955 = vsel %vm2122, %v5923, %v5175
      %v5956 = vsel %vm2122, %v5924, %v5177
      %v5957 = vsel %vm2122, %v5925, %v5179
      %v5958 = vsel %vm2122, %v5926, %v5181
      %v5959 = vsel %vm2122, %v5927, %v5183
      %v5960 = vsel %vm2122, %v5928, %v5185
      %v5961 = vsel %vm2122, %v5929, %v5187
      %v5962 = vsel %vm2122, %v5930, %v5189
      %v5963 = vsel %vm2122, %v5931, %v5191
      %v5964 = vsel %vm2122, %v5932, %v5193
      %v5965 = vsel %vm2122, %v5933, %v5195
      %v5966 = vsel %vm2122, %v5934, %v5197
      %v5967 = vsel %vm2122, %v5935, %v5199
      %v5968 = vsel %vm2155, %v5936, %v5265
      %v5969 = vsel %vm2155, %v5937, %v5267
      %v5970 = vsel %vm2155, %v5938, %v5269
      %v5971 = vsel %vm2155, %v5939, %v5271
      %v5972 = vsel %vm2155, %v5940, %v5273
      %v5973 = vsel %vm2155, %v5941, %v5275
      %v5974 = vsel %vm2155, %v5942, %v5277
      %v5975 = vsel %vm2155, %v5943, %v5279
      %v5976 = vsel %vm2155, %v5944, %v5281
      %v5977 = vsel %vm2155, %v5945, %v5283
      %v5978 = vsel %vm2155, %v5946, %v5285
      %v5979 = vsel %vm2155, %v5947, %v5287
      %v5980 = vsel %vm2155, %v5948, %v5289
      %v5981 = vsel %vm2155, %v5949, %v5291
      %v5982 = vsel %vm2155, %v5950, %v5293
      %v5983 = vsel %vm2155, %v5951, %v5295
      %v5984 = vsel %vm2155, %v5952, %v5297
      %v5985 = vsel %vm2155, %v5953, %v5299
      %v5986 = vsel %vm2155, %v5954, %v5301
      %v5987 = vsel %vm2155, %v5955, %v5303
      %v5988 = vsel %vm2155, %v5956, %v5305
      %v5989 = vsel %vm2155, %v5957, %v5307
      %v5990 = vsel %vm2155, %v5958, %v5309
      %v5991 = vsel %vm2155, %v5959, %v5311
      %v5992 = vsel %vm2155, %v5960, %v5313
      %v5993 = vsel %vm2155, %v5961, %v5315
      %v5994 = vsel %vm2155, %v5962, %v5317
      %v5995 = vsel %vm2155, %v5963, %v5319
      %v5996 = vsel %vm2155, %v5964, %v5321
      %v5997 = vsel %vm2155, %v5965, %v5323
      %v5998 = vsel %vm2155, %v5966, %v5325
      %v5999 = vsel %vm2155, %v5967, %v5327
      %v6000 = vsel %vm2188, %v5968, %v5393
      %v6001 = vsel %vm2188, %v5969, %v5395
      %v6002 = vsel %vm2188, %v5970, %v5397
      %v6003 = vsel %vm2188, %v5971, %v5399
      %v6004 = vsel %vm2188, %v5972, %v5401
      %v6005 = vsel %vm2188, %v5973, %v5403
      %v6006 = vsel %vm2188, %v5974, %v5405
      %v6007 = vsel %vm2188, %v5975, %v5407
      %v6008 = vsel %vm2188, %v5976, %v5409
      %v6009 = vsel %vm2188, %v5977, %v5411
      %v6010 = vsel %vm2188, %v5978, %v5413
      %v6011 = vsel %vm2188, %v5979, %v5415
      %v6012 = vsel %vm2188, %v5980, %v5417
      %v6013 = vsel %vm2188, %v5981, %v5419
      %v6014 = vsel %vm2188, %v5982, %v5421
      %v6015 = vsel %vm2188, %v5983, %v5423
      %v6016 = vsel %vm2188, %v5984, %v5425
      %v6017 = vsel %vm2188, %v5985, %v5427
      %v6018 = vsel %vm2188, %v5986, %v5429
      %v6019 = vsel %vm2188, %v5987, %v5431
      %v6020 = vsel %vm2188, %v5988, %v5433
      %v6021 = vsel %vm2188, %v5989, %v5435
      %v6022 = vsel %vm2188, %v5990, %v5437
      %v6023 = vsel %vm2188, %v5991, %v5439
      %v6024 = vsel %vm2188, %v5992, %v5441
      %v6025 = vsel %vm2188, %v5993, %v5443
      %v6026 = vsel %vm2188, %v5994, %v5445
      %v6027 = vsel %vm2188, %v5995, %v5447
      %v6028 = vsel %vm2188, %v5996, %v5449
      %v6029 = vsel %vm2188, %v5997, %v5451
      %v6030 = vsel %vm2188, %v5998, %v5453
      %v6031 = vsel %vm2188, %v5999, %v5455
      %v6032 = vsel %vm2221, %v6000, %v5521
      %v6033 = vsel %vm2221, %v6001, %v5523
      %v6034 = vsel %vm2221, %v6002, %v5525
      %v6035 = vsel %vm2221, %v6003, %v5527
      %v6036 = vsel %vm2221, %v6004, %v5529
      %v6037 = vsel %vm2221, %v6005, %v5531
      %v6038 = vsel %vm2221, %v6006, %v5533
      %v6039 = vsel %vm2221, %v6007, %v5535
      %v6040 = vsel %vm2221, %v6008, %v5537
      %v6041 = vsel %vm2221, %v6009, %v5539
      %v6042 = vsel %vm2221, %v6010, %v5541
      %v6043 = vsel %vm2221, %v6011, %v5543
      %v6044 = vsel %vm2221, %v6012, %v5545
      %v6045 = vsel %vm2221, %v6013, %v5547
      %v6046 = vsel %vm2221, %v6014, %v5549
      %v6047 = vsel %vm2221, %v6015, %v5551
      %v6048 = vsel %vm2221, %v6016, %v5553
      %v6049 = vsel %vm2221, %v6017, %v5555
      %v6050 = vsel %vm2221, %v6018, %v5557
      %v6051 = vsel %vm2221, %v6019, %v5559
      %v6052 = vsel %vm2221, %v6020, %v5561
      %v6053 = vsel %vm2221, %v6021, %v5563
      %v6054 = vsel %vm2221, %v6022, %v5565
      %v6055 = vsel %vm2221, %v6023, %v5567
      %v6056 = vsel %vm2221, %v6024, %v5569
      %v6057 = vsel %vm2221, %v6025, %v5571
      %v6058 = vsel %vm2221, %v6026, %v5573
      %v6059 = vsel %vm2221, %v6027, %v5575
      %v6060 = vsel %vm2221, %v6028, %v5577
      %v6061 = vsel %vm2221, %v6029, %v5579
      %v6062 = vsel %vm2221, %v6030, %v5581
      %v6063 = vsel %vm2221, %v6031, %v5583
      %v6064 = vsel %vm2254, %v6032, %v5649
      %v6065 = vsel %vm2254, %v6033, %v5651
      %v6066 = vsel %vm2254, %v6034, %v5653
      %v6067 = vsel %vm2254, %v6035, %v5655
      %v6068 = vsel %vm2254, %v6036, %v5657
      %v6069 = vsel %vm2254, %v6037, %v5659
      %v6070 = vsel %vm2254, %v6038, %v5661
      %v6071 = vsel %vm2254, %v6039, %v5663
      %v6072 = vsel %vm2254, %v6040, %v5665
      %v6073 = vsel %vm2254, %v6041, %v5667
      %v6074 = vsel %vm2254, %v6042, %v5669
      %v6075 = vsel %vm2254, %v6043, %v5671
      %v6076 = vsel %vm2254, %v6044, %v5673
      %v6077 = vsel %vm2254, %v6045, %v5675
      %v6078 = vsel %vm2254, %v6046, %v5677
      %v6079 = vsel %vm2254, %v6047, %v5679
      %v6080 = vsel %vm2254, %v6048, %v5681
      %v6081 = vsel %vm2254, %v6049, %v5683
      %v6082 = vsel %vm2254, %v6050, %v5685
      %v6083 = vsel %vm2254, %v6051, %v5687
      %v6084 = vsel %vm2254, %v6052, %v5689
      %v6085 = vsel %vm2254, %v6053, %v5691
      %v6086 = vsel %vm2254, %v6054, %v5693
      %v6087 = vsel %vm2254, %v6055, %v5695
      %v6088 = vsel %vm2254, %v6056, %v5697
      %v6089 = vsel %vm2254, %v6057, %v5699
      %v6090 = vsel %vm2254, %v6058, %v5701
      %v6091 = vsel %vm2254, %v6059, %v5703
      %v6092 = vsel %vm2254, %v6060, %v5705
      %v6093 = vsel %vm2254, %v6061, %v5707
      %v6094 = vsel %vm2254, %v6062, %v5709
      %v6095 = vsel %vm2254, %v6063, %v5711
      %v6096 = vsel %vm2287, %v6064, %v5777
      %v6097 = vsel %vm2287, %v6065, %v5779
      %v6098 = vsel %vm2287, %v6066, %v5781
      %v6099 = vsel %vm2287, %v6067, %v5783
      %v6100 = vsel %vm2287, %v6068, %v5785
      %v6101 = vsel %vm2287, %v6069, %v5787
      %v6102 = vsel %vm2287, %v6070, %v5789
      %v6103 = vsel %vm2287, %v6071, %v5791
      %v6104 = vsel %vm2287, %v6072, %v5793
      %v6105 = vsel %vm2287, %v6073, %v5795
      %v6106 = vsel %vm2287, %v6074, %v5797
      %v6107 = vsel %vm2287, %v6075, %v5799
      %v6108 = vsel %vm2287, %v6076, %v5801
      %v6109 = vsel %vm2287, %v6077, %v5803
      %v6110 = vsel %vm2287, %v6078, %v5805
      %v6111 = vsel %vm2287, %v6079, %v5807
      %v6112 = vsel %vm2287, %v6080, %v5809
      %v6113 = vsel %vm2287, %v6081, %v5811
      %v6114 = vsel %vm2287, %v6082, %v5813
      %v6115 = vsel %vm2287, %v6083, %v5815
      %v6116 = vsel %vm2287, %v6084, %v5817
      %v6117 = vsel %vm2287, %v6085, %v5819
      %v6118 = vsel %vm2287, %v6086, %v5821
      %v6119 = vsel %vm2287, %v6087, %v5823
      %v6120 = vsel %vm2287, %v6088, %v5825
      %v6121 = vsel %vm2287, %v6089, %v5827
      %v6122 = vsel %vm2287, %v6090, %v5829
      %v6123 = vsel %vm2287, %v6091, %v5831
      %v6124 = vsel %vm2287, %v6092, %v5833
      %v6125 = vsel %vm2287, %v6093, %v5835
      %v6126 = vsel %vm2287, %v6094, %v5837
      %v6127 = vsel %vm2287, %v6095, %v5839
      %v6128 = vpack.c.bf16 %v6097, %v6096
      %v6129 = vpack.c.bf16 %v6099, %v6098
      %v6130 = vpack.c.bf16 %v6101, %v6100
      %v6131 = vpack.c.bf16 %v6103, %v6102
      %v6132 = vpack.c.bf16 %v6105, %v6104
      %v6133 = vpack.c.bf16 %v6107, %v6106
      %v6134 = vpack.c.bf16 %v6109, %v6108
      %v6135 = vpack.c.bf16 %v6111, %v6110
      %v6136 = vpack.c.bf16 %v6113, %v6112
      %v6137 = vpack.c.bf16 %v6115, %v6114
      %v6138 = vpack.c.bf16 %v6117, %v6116
      %v6139 = vpack.c.bf16 %v6119, %v6118
      %v6140 = vpack.c.bf16 %v6121, %v6120
      %v6141 = vpack.c.bf16 %v6123, %v6122
      %v6142 = vpack.c.bf16 %v6125, %v6124
      %v6143 = vpack.c.bf16 %v6127, %v6126
      %v6144 = vld [vmem:[%s5] sm:$0xf]
      %v6145 = vld [vmem:[%s5 + $0x4] sm:$0xf]
      %v6146 = vld [vmem:[%s5 + $0x8] sm:$0xf]
      %v6147 = vld [vmem:[%s5 + $0xc] sm:$0xf]
      %v6148 = vld [vmem:[%s5 + $0x10] sm:$0x3]
      %v6149 = vld [vmem:[%s6] sm:$0x1]
      %v6151 = vlaneseq
      %v6152 = vshrl.u32 %v6151, 7
      %v6153 = vsub.s32 0, %v6152
      %v6154 = vrot.slane %v6149, %v6153
      %v6161 = vunpack.c.l.b16 %v6144
      %v6162 = vunpack.c.l.b16 %v6145
      %v6163 = vunpack.c.l.b16 %v6146
      %v6164 = vunpack.c.l.b16 %v6147
      %v6165 = vunpack.c.l.b16 %v6148
      %v6166 = vpack.c.b16 %v6162, %v6161
      %v6167 = vpack.c.b16 %v6164, %v6163
      %v6168 = vpack.c.b16 %v6165, %v6165
      %v6172 = vsel %vm2363, %v6128, 0
      %v6175 = vsel %vm2363, %v6129, 0
      %v6178 = vsel %vm2363, %v6130, 0
      %v6181 = vsel %vm2363, %v6131, 0
      %v6184 = vsel %vm2363, %v6132, 0
      %v6187 = vsel %vm2363, %v6133, 0
      %v6190 = vsel %vm2363, %v6134, 0
      %v6193 = vsel %vm2363, %v6135, 0
      %v6196 = vsel %vm2363, %v6136, 0
      %v6199 = vsel %vm2363, %v6137, 0
      %v6202 = vsel %vm2363, %v6138, 0
      %v6205 = vsel %vm2363, %v6139, 0
      %v6208 = vsel %vm2363, %v6140, 0
      %v6211 = vsel %vm2363, %v6141, 0
      %v6214 = vsel %vm2363, %v6142, 0
      %v6217 = vsel %vm2363, %v6143, 0
      %v6220 = vsel %vm2412, %v6168, 0
      %6222 = vmatprep.subr.bf16.mxu0 0
      %6223 = vmatpush1.bf16.msra.mxu0 0
      %6224 = vmatprep.subr.bf16.mxu0 0
      %6225 = vmatpush1.bf16.msra.mxu0 0
      %6226 = vmatprep.subr.bf16.mxu0 0
      %6227 = vmatpush1.bf16.msra.mxu0 0
      %6228 = vmatprep.subr.bf16.mxu0 0
      %6229 = vmatpush1.bf16.msra.mxu0 0
      %6230 = vmatprep.subr.bf16.mxu0 0
      %6231 = vmatpush1.bf16.msra.mxu0 0
      %6232 = vmatprep.subr.bf16.mxu0 0
      %6233 = vmatpush1.bf16.msra.mxu0 %v6220
      %6234 = vmatprep.subr.bf16.mxu0 0
      %6235 = vmatpush1.bf16.msra.mxu0 %v6167
      %6236 = vmatprep.subr.bf16.mxu0 0
      %6237 = vmatpush1.bf16.msra.mxu0 %v6166
      %6238 = vmatprep.subr.bf16.mxu0 0
      %6239 = vmatpush2.bf16.msra.mxu0 0
      %6240 = vmatprep.subr.bf16.mxu0 0
      %6241 = vmatpush2.bf16.msra.mxu0 0
      %6242 = vmatprep.subr.bf16.mxu0 0
      %6243 = vmatpush2.bf16.msra.mxu0 0
      %6244 = vmatprep.subr.bf16.mxu0 0
      %6245 = vmatpush2.bf16.msra.mxu0 0
      %6246 = vmatprep.subr.bf16.mxu0 0
      %6247 = vmatpush2.bf16.msra.mxu0 0
      %6248 = vmatprep.subr.bf16.mxu0 0
      %6249 = vmatpush2.bf16.msra.mxu0 0
      %6250 = vmatprep.subr.bf16.mxu0 0
      %6251 = vmatpush2.bf16.msra.mxu0 0
      %6252 = vmatprep.subr.bf16.mxu0 0
      %6253 = vmatpush2.bf16.msra.mxu0 0
      %6254 = vmatprep.mubr.bf16.mxu0 0
      %6255 = vmatmul.mubr.bf16.gmra.mxu0 %v6172
      %v6256 = vpop.f32.mrf.mxu0
      %v6257 = vadd.f32 %v6154, %v6256
      %v6258 = vpop.f32.mrf.mxu0
      %v6259 = vpop.f32.mrf.mxu0
      %v6260 = vadd.f32 %v6154, %v6259
      %v6261 = vpop.f32.mrf.mxu0
      %6262 = vmatprep.mubr.bf16.mxu0 0
      %6263 = vmatmul.mubr.bf16.gmra.mxu0 %v6175
      %v6264 = vpop.f32.mrf.mxu0
      %v6265 = vadd.f32 %v6154, %v6264
      %v6266 = vpop.f32.mrf.mxu0
      %v6267 = vpop.f32.mrf.mxu0
      %v6268 = vadd.f32 %v6154, %v6267
      %v6269 = vpop.f32.mrf.mxu0
      %6270 = vmatprep.mubr.bf16.mxu0 0
      %6271 = vmatmul.mubr.bf16.gmra.mxu0 %v6178
      %v6272 = vpop.f32.mrf.mxu0
      %v6273 = vadd.f32 %v6154, %v6272
      %v6274 = vpop.f32.mrf.mxu0
      %v6275 = vpop.f32.mrf.mxu0
      %v6276 = vadd.f32 %v6154, %v6275
      %v6277 = vpop.f32.mrf.mxu0
      %6278 = vmatprep.mubr.bf16.mxu0 0
      %6279 = vmatmul.mubr.bf16.gmra.mxu0 %v6181
      %v6280 = vpop.f32.mrf.mxu0
      %v6281 = vadd.f32 %v6154, %v6280
      %v6282 = vpop.f32.mrf.mxu0
      %v6283 = vpop.f32.mrf.mxu0
      %v6284 = vadd.f32 %v6154, %v6283
      %v6285 = vpop.f32.mrf.mxu0
      %6286 = vmatprep.mubr.bf16.mxu0 0
      %6287 = vmatmul.mubr.bf16.gmra.mxu0 %v6184
      %v6288 = vpop.f32.mrf.mxu0
      %v6289 = vadd.f32 %v6154, %v6288
      %v6290 = vpop.f32.mrf.mxu0
      %v6291 = vpop.f32.mrf.mxu0
      %v6292 = vadd.f32 %v6154, %v6291
      %v6293 = vpop.f32.mrf.mxu0
      %6294 = vmatprep.mubr.bf16.mxu0 0
      %6295 = vmatmul.mubr.bf16.gmra.mxu0 %v6187
      %v6296 = vpop.f32.mrf.mxu0
      %v6297 = vadd.f32 %v6154, %v6296
      %v6298 = vpop.f32.mrf.mxu0
      %v6299 = vpop.f32.mrf.mxu0
      %v6300 = vadd.f32 %v6154, %v6299
      %v6301 = vpop.f32.mrf.mxu0
      %6302 = vmatprep.mubr.bf16.mxu0 0
      %6303 = vmatmul.mubr.bf16.gmra.mxu0 %v6190
      %v6304 = vpop.f32.mrf.mxu0
      %v6305 = vadd.f32 %v6154, %v6304
      %v6306 = vpop.f32.mrf.mxu0
      %v6307 = vpop.f32.mrf.mxu0
      %v6308 = vadd.f32 %v6154, %v6307
      %v6309 = vpop.f32.mrf.mxu0
      %6310 = vmatprep.mubr.bf16.mxu0 0
      %6311 = vmatmul.mubr.bf16.gmra.mxu0 %v6193
      %v6312 = vpop.f32.mrf.mxu0
      %v6313 = vadd.f32 %v6154, %v6312
      %v6314 = vpop.f32.mrf.mxu0
      %v6315 = vpop.f32.mrf.mxu0
      %v6316 = vadd.f32 %v6154, %v6315
      %v6317 = vpop.f32.mrf.mxu0
      %6318 = vmatprep.mubr.bf16.mxu0 0
      %6319 = vmatmul.mubr.bf16.gmra.mxu0 %v6196
      %v6320 = vpop.f32.mrf.mxu0
      %v6321 = vadd.f32 %v6154, %v6320
      %v6322 = vpop.f32.mrf.mxu0
      %v6323 = vpop.f32.mrf.mxu0
      %v6324 = vadd.f32 %v6154, %v6323
      %v6325 = vpop.f32.mrf.mxu0
      %6326 = vmatprep.mubr.bf16.mxu0 0
      %6327 = vmatmul.mubr.bf16.gmra.mxu0 %v6199
      %v6328 = vpop.f32.mrf.mxu0
      %v6329 = vadd.f32 %v6154, %v6328
      %v6330 = vpop.f32.mrf.mxu0
      %v6331 = vpop.f32.mrf.mxu0
      %v6332 = vadd.f32 %v6154, %v6331
      %v6333 = vpop.f32.mrf.mxu0
      %6334 = vmatprep.mubr.bf16.mxu0 0
      %6335 = vmatmul.mubr.bf16.gmra.mxu0 %v6202
      %v6336 = vpop.f32.mrf.mxu0
      %v6337 = vadd.f32 %v6154, %v6336
      %v6338 = vpop.f32.mrf.mxu0
      %v6339 = vpop.f32.mrf.mxu0
      %v6340 = vadd.f32 %v6154, %v6339
      %v6341 = vpop.f32.mrf.mxu0
      %6342 = vmatprep.mubr.bf16.mxu0 0
      %6343 = vmatmul.mubr.bf16.gmra.mxu0 %v6205
      %v6344 = vpop.f32.mrf.mxu0
      %v6345 = vadd.f32 %v6154, %v6344
      %v6346 = vpop.f32.mrf.mxu0
      %v6347 = vpop.f32.mrf.mxu0
      %v6348 = vadd.f32 %v6154, %v6347
      %v6349 = vpop.f32.mrf.mxu0
      %6350 = vmatprep.mubr.bf16.mxu0 0
      %6351 = vmatmul.mubr.bf16.gmra.mxu0 %v6208
      %v6352 = vpop.f32.mrf.mxu0
      %v6353 = vadd.f32 %v6154, %v6352
      %v6354 = vpop.f32.mrf.mxu0
      %v6355 = vpop.f32.mrf.mxu0
      %v6356 = vadd.f32 %v6154, %v6355
      %v6357 = vpop.f32.mrf.mxu0
      %6358 = vmatprep.mubr.bf16.mxu0 0
      %6359 = vmatmul.mubr.bf16.gmra.mxu0 %v6211
      %v6360 = vpop.f32.mrf.mxu0
      %v6361 = vadd.f32 %v6154, %v6360
      %v6362 = vpop.f32.mrf.mxu0
      %v6363 = vpop.f32.mrf.mxu0
      %v6364 = vadd.f32 %v6154, %v6363
      %v6365 = vpop.f32.mrf.mxu0
      %6366 = vmatprep.mubr.bf16.mxu0 0
      %6367 = vmatmul.mubr.bf16.gmra.mxu0 %v6214
      %v6368 = vpop.f32.mrf.mxu0
      %v6369 = vadd.f32 %v6154, %v6368
      %v6370 = vpop.f32.mrf.mxu0
      %v6371 = vpop.f32.mrf.mxu0
      %v6372 = vadd.f32 %v6154, %v6371
      %v6373 = vpop.f32.mrf.mxu0
      %6374 = vmatprep.mubr.bf16.mxu0 0
      %6375 = vmatmul.mubr.bf16.gmra.mxu0 %v6217
      %v6376 = vpop.f32.mrf.mxu0
      %v6377 = vadd.f32 %v6154, %v6376
      %v6378 = vpop.f32.mrf.mxu0
      %v6379 = vpop.f32.mrf.mxu0
      %v6380 = vadd.f32 %v6154, %v6379
      %v6381 = vpop.f32.mrf.mxu0
      %6382 = vdwg.mxu0
      %v6383 = vmax.f32 %v6257, 0.0
      %v6384 = vmax.f32 %v6260, 0.0
      %v6385 = vmax.f32 %v6265, 0.0
      %v6386 = vmax.f32 %v6268, 0.0
      %v6387 = vmax.f32 %v6273, 0.0
      %v6388 = vmax.f32 %v6276, 0.0
      %v6389 = vmax.f32 %v6281, 0.0
      %v6390 = vmax.f32 %v6284, 0.0
      %v6391 = vmax.f32 %v6289, 0.0
      %v6392 = vmax.f32 %v6292, 0.0
      %v6393 = vmax.f32 %v6297, 0.0
      %v6394 = vmax.f32 %v6300, 0.0
      %v6395 = vmax.f32 %v6305, 0.0
      %v6396 = vmax.f32 %v6308, 0.0
      %v6397 = vmax.f32 %v6313, 0.0
      %v6398 = vmax.f32 %v6316, 0.0
      %v6399 = vmax.f32 %v6321, 0.0
      %v6400 = vmax.f32 %v6324, 0.0
      %v6401 = vmax.f32 %v6329, 0.0
      %v6402 = vmax.f32 %v6332, 0.0
      %v6403 = vmax.f32 %v6337, 0.0
      %v6404 = vmax.f32 %v6340, 0.0
      %v6405 = vmax.f32 %v6345, 0.0
      %v6406 = vmax.f32 %v6348, 0.0
      %v6407 = vmax.f32 %v6353, 0.0
      %v6408 = vmax.f32 %v6356, 0.0
      %v6409 = vmax.f32 %v6361, 0.0
      %v6410 = vmax.f32 %v6364, 0.0
      %v6411 = vmax.f32 %v6369, 0.0
      %v6412 = vmax.f32 %v6372, 0.0
      %v6413 = vmax.f32 %v6377, 0.0
      %v6414 = vmax.f32 %v6380, 0.0
      %6415 = vst.msk [vmem:[%s712 + $0x1] sm:$0xff] %vm602, %v6383
      %6416 = vst.msk [vmem:[%s712 + $0x9] sm:$0xff] %vm602, %v6384
      %6417 = vst.msk [vmem:[%s712 + $0x19] sm:$0xff] %vm602, %v6385
      %6418 = vst.msk [vmem:[%s712 + $0x21] sm:$0xff] %vm602, %v6386
      %6419 = vst.msk [vmem:[%s712 + $0x31] sm:$0xff] %vm602, %v6387
      %6420 = vst.msk [vmem:[%s712 + $0x39] sm:$0xff] %vm602, %v6388
      %6421 = vst.msk [vmem:[%s712 + $0x49] sm:$0xff] %vm602, %v6389
      %6422 = vst.msk [vmem:[%s712 + $0x51] sm:$0xff] %vm602, %v6390
      %6423 = vst.msk [vmem:[%s712 + $0x61] sm:$0xff] %vm602, %v6391
      %6424 = vst.msk [vmem:[%s712 + $0x69] sm:$0xff] %vm602, %v6392
      %6425 = vst.msk [vmem:[%s712 + $0x79] sm:$0xff] %vm602, %v6393
      %6426 = vst.msk [vmem:[%s712 + $0x81] sm:$0xff] %vm602, %v6394
      %6427 = vst.msk [vmem:[%s712 + $0x91] sm:$0xff] %vm602, %v6395
      %6428 = vst.msk [vmem:[%s712 + $0x99] sm:$0xff] %vm602, %v6396
      %6429 = vst.msk [vmem:[%s712 + $0xa9] sm:$0xff] %vm602, %v6397
      %6430 = vst.msk [vmem:[%s712 + $0xb1] sm:$0xff] %vm602, %v6398
      %6431 = vst.msk [vmem:[%s712 + $0xc1] sm:$0xff] %vm602, %v6399
      %6432 = vst.msk [vmem:[%s712 + $0xc9] sm:$0xff] %vm602, %v6400
      %6433 = vst.msk [vmem:[%s712 + $0xd9] sm:$0xff] %vm602, %v6401
      %6434 = vst.msk [vmem:[%s712 + $0xe1] sm:$0xff] %vm602, %v6402
      %6435 = vst.msk [vmem:[%s712 + $0xf1] sm:$0xff] %vm602, %v6403
      %6436 = vst.msk [vmem:[%s712 + $0xf9] sm:$0xff] %vm602, %v6404
      %6437 = vst.msk [vmem:[%s712 + $0x109] sm:$0xff] %vm602, %v6405
      %6438 = vst.msk [vmem:[%s712 + $0x111] sm:$0xff] %vm602, %v6406
      %6439 = vst.msk [vmem:[%s712 + $0x121] sm:$0xff] %vm602, %v6407
      %6440 = vst.msk [vmem:[%s712 + $0x129] sm:$0xff] %vm602, %v6408
      %6441 = vst.msk [vmem:[%s712 + $0x139] sm:$0xff] %vm602, %v6409
      %6442 = vst.msk [vmem:[%s712 + $0x141] sm:$0xff] %vm602, %v6410
      %6443 = vst.msk [vmem:[%s712 + $0x151] sm:$0xff] %vm602, %v6411
      %6444 = vst.msk [vmem:[%s712 + $0x159] sm:$0xff] %vm602, %v6412
      %6445 = vst.msk [vmem:[%s712 + $0x169] sm:$0xff] %vm602, %v6413
      %6446 = vst.msk [vmem:[%s712 + $0x171] sm:$0xff] %vm602, %v6414
      %v6447 = vld [vmem:[#allocation2] sm:$0xff]
      %v6448 = vld [vmem:[#allocation2 + $0x8] sm:$0xff]
      %v6449 = vld [vmem:[#allocation2 + $0x18] sm:$0xff]
      %v6450 = vld [vmem:[#allocation2 + $0x20] sm:$0xff]
      %v6451 = vld [vmem:[#allocation2 + $0x30] sm:$0xff]
      %v6452 = vld [vmem:[#allocation2 + $0x38] sm:$0xff]
      %v6453 = vld [vmem:[#allocation2 + $0x48] sm:$0xff]
      %v6454 = vld [vmem:[#allocation2 + $0x50] sm:$0xff]
      %v6455 = vld [vmem:[#allocation2 + $0x60] sm:$0xff]
      %v6456 = vld [vmem:[#allocation2 + $0x68] sm:$0xff]
      %v6457 = vld [vmem:[#allocation2 + $0x78] sm:$0xff]
      %v6458 = vld [vmem:[#allocation2 + $0x80] sm:$0xff]
      %v6459 = vld [vmem:[#allocation2 + $0x90] sm:$0xff]
      %v6460 = vld [vmem:[#allocation2 + $0x98] sm:$0xff]
      %v6461 = vld [vmem:[#allocation2 + $0xa8] sm:$0xff]
      %v6462 = vld [vmem:[#allocation2 + $0xb0] sm:$0xff]
      %v6463 = vld [vmem:[#allocation2 + $0xc0] sm:$0xff]
      %v6464 = vld [vmem:[#allocation2 + $0xc8] sm:$0xff]
      %v6465 = vld [vmem:[#allocation2 + $0xd8] sm:$0xff]
      %v6466 = vld [vmem:[#allocation2 + $0xe0] sm:$0xff]
      %v6467 = vld [vmem:[#allocation2 + $0xf0] sm:$0xff]
      %v6468 = vld [vmem:[#allocation2 + $0xf8] sm:$0xff]
      %v6469 = vld [vmem:[#allocation2 + $0x108] sm:$0xff]
      %v6470 = vld [vmem:[#allocation2 + $0x110] sm:$0xff]
      %v6471 = vld [vmem:[#allocation2 + $0x120] sm:$0xff]
      %v6472 = vld [vmem:[#allocation2 + $0x128] sm:$0xff]
      %v6473 = vld [vmem:[#allocation2 + $0x138] sm:$0xff]
      %v6474 = vld [vmem:[#allocation2 + $0x140] sm:$0xff]
      %v6475 = vld [vmem:[#allocation2 + $0x150] sm:$0xff]
      %v6476 = vld [vmem:[#allocation2 + $0x158] sm:$0xff]
      %v6477 = vld [vmem:[#allocation2 + $0x168] sm:$0xff]
      %v6478 = vld [vmem:[#allocation2 + $0x170] sm:$0xff]
      %v6479 = vld [vmem:[#allocation2 + $0x1] sm:$0xff]
      %v6480 = vld [vmem:[#allocation2 + $0x9] sm:$0xff]
      %v6481 = vld [vmem:[#allocation2 + $0x19] sm:$0xff]
      %v6482 = vld [vmem:[#allocation2 + $0x21] sm:$0xff]
      %v6483 = vld [vmem:[#allocation2 + $0x31] sm:$0xff]
      %v6484 = vld [vmem:[#allocation2 + $0x39] sm:$0xff]
      %v6485 = vld [vmem:[#allocation2 + $0x49] sm:$0xff]
      %v6486 = vld [vmem:[#allocation2 + $0x51] sm:$0xff]
      %v6487 = vld [vmem:[#allocation2 + $0x61] sm:$0xff]
      %v6488 = vld [vmem:[#allocation2 + $0x69] sm:$0xff]
      %v6489 = vld [vmem:[#allocation2 + $0x79] sm:$0xff]
      %v6490 = vld [vmem:[#allocation2 + $0x81] sm:$0xff]
      %v6491 = vld [vmem:[#allocation2 + $0x91] sm:$0xff]
      %v6492 = vld [vmem:[#allocation2 + $0x99] sm:$0xff]
      %v6493 = vld [vmem:[#allocation2 + $0xa9] sm:$0xff]
      %v6494 = vld [vmem:[#allocation2 + $0xb1] sm:$0xff]
      %v6495 = vld [vmem:[#allocation2 + $0xc1] sm:$0xff]
      %v6496 = vld [vmem:[#allocation2 + $0xc9] sm:$0xff]
      %v6497 = vld [vmem:[#allocation2 + $0xd9] sm:$0xff]
      %v6498 = vld [vmem:[#allocation2 + $0xe1] sm:$0xff]
      %v6499 = vld [vmem:[#allocation2 + $0xf1] sm:$0xff]
      %v6500 = vld [vmem:[#allocation2 + $0xf9] sm:$0xff]
      %v6501 = vld [vmem:[#allocation2 + $0x109] sm:$0xff]
      %v6502 = vld [vmem:[#allocation2 + $0x111] sm:$0xff]
      %v6503 = vld [vmem:[#allocation2 + $0x121] sm:$0xff]
      %v6504 = vld [vmem:[#allocation2 + $0x129] sm:$0xff]
      %v6505 = vld [vmem:[#allocation2 + $0x139] sm:$0xff]
      %v6506 = vld [vmem:[#allocation2 + $0x141] sm:$0xff]
      %v6507 = vld [vmem:[#allocation2 + $0x151] sm:$0xff]
      %v6508 = vld [vmem:[#allocation2 + $0x159] sm:$0xff]
      %v6509 = vld [vmem:[#allocation2 + $0x169] sm:$0xff]
      %v6510 = vld [vmem:[#allocation2 + $0x171] sm:$0xff]
      %v6511 = vld [vmem:[#allocation2 + $0x2] sm:$0xff]
      %v6512 = vld [vmem:[#allocation2 + $0xa] sm:$0xff]
      %v6513 = vld [vmem:[#allocation2 + $0x1a] sm:$0xff]
      %v6514 = vld [vmem:[#allocation2 + $0x22] sm:$0xff]
      %v6515 = vld [vmem:[#allocation2 + $0x32] sm:$0xff]
      %v6516 = vld [vmem:[#allocation2 + $0x3a] sm:$0xff]
      %v6517 = vld [vmem:[#allocation2 + $0x4a] sm:$0xff]
      %v6518 = vld [vmem:[#allocation2 + $0x52] sm:$0xff]
      %v6519 = vld [vmem:[#allocation2 + $0x62] sm:$0xff]
      %v6520 = vld [vmem:[#allocation2 + $0x6a] sm:$0xff]
      %v6521 = vld [vmem:[#allocation2 + $0x7a] sm:$0xff]
      %v6522 = vld [vmem:[#allocation2 + $0x82] sm:$0xff]
      %v6523 = vld [vmem:[#allocation2 + $0x92] sm:$0xff]
      %v6524 = vld [vmem:[#allocation2 + $0x9a] sm:$0xff]
      %v6525 = vld [vmem:[#allocation2 + $0xaa] sm:$0xff]
      %v6526 = vld [vmem:[#allocation2 + $0xb2] sm:$0xff]
      %v6527 = vld [vmem:[#allocation2 + $0xc2] sm:$0xff]
      %v6528 = vld [vmem:[#allocation2 + $0xca] sm:$0xff]
      %v6529 = vld [vmem:[#allocation2 + $0xda] sm:$0xff]
      %v6530 = vld [vmem:[#allocation2 + $0xe2] sm:$0xff]
      %v6531 = vld [vmem:[#allocation2 + $0xf2] sm:$0xff]
      %v6532 = vld [vmem:[#allocation2 + $0xfa] sm:$0xff]
      %v6533 = vld [vmem:[#allocation2 + $0x10a] sm:$0xff]
      %v6534 = vld [vmem:[#allocation2 + $0x112] sm:$0xff]
      %v6535 = vld [vmem:[#allocation2 + $0x122] sm:$0xff]
      %v6536 = vld [vmem:[#allocation2 + $0x12a] sm:$0xff]
      %v6537 = vld [vmem:[#allocation2 + $0x13a] sm:$0xff]
      %v6538 = vld [vmem:[#allocation2 + $0x142] sm:$0xff]
      %v6539 = vld [vmem:[#allocation2 + $0x152] sm:$0xff]
      %v6540 = vld [vmem:[#allocation2 + $0x15a] sm:$0xff]
      %v6541 = vld [vmem:[#allocation2 + $0x16a] sm:$0xff]
      %v6542 = vld [vmem:[#allocation2 + $0x172] sm:$0xff]
      %v6543 = vld [vmem:[%s712] sm:$0xff]
      %v6544 = vld [vmem:[%s712 + $0x8] sm:$0xff]
      %v6545 = vld [vmem:[%s712 + $0x18] sm:$0xff]
      %v6546 = vld [vmem:[%s712 + $0x20] sm:$0xff]
      %v6547 = vld [vmem:[%s712 + $0x30] sm:$0xff]
      %v6548 = vld [vmem:[%s712 + $0x38] sm:$0xff]
      %v6549 = vld [vmem:[%s712 + $0x48] sm:$0xff]
      %v6550 = vld [vmem:[%s712 + $0x50] sm:$0xff]
      %v6551 = vld [vmem:[%s712 + $0x60] sm:$0xff]
      %v6552 = vld [vmem:[%s712 + $0x68] sm:$0xff]
      %v6553 = vld [vmem:[%s712 + $0x78] sm:$0xff]
      %v6554 = vld [vmem:[%s712 + $0x80] sm:$0xff]
      %v6555 = vld [vmem:[%s712 + $0x90] sm:$0xff]
      %v6556 = vld [vmem:[%s712 + $0x98] sm:$0xff]
      %v6557 = vld [vmem:[%s712 + $0xa8] sm:$0xff]
      %v6558 = vld [vmem:[%s712 + $0xb0] sm:$0xff]
      %v6559 = vld [vmem:[%s712 + $0xc0] sm:$0xff]
      %v6560 = vld [vmem:[%s712 + $0xc8] sm:$0xff]
      %v6561 = vld [vmem:[%s712 + $0xd8] sm:$0xff]
      %v6562 = vld [vmem:[%s712 + $0xe0] sm:$0xff]
      %v6563 = vld [vmem:[%s712 + $0xf0] sm:$0xff]
      %v6564 = vld [vmem:[%s712 + $0xf8] sm:$0xff]
      %v6565 = vld [vmem:[%s712 + $0x108] sm:$0xff]
      %v6566 = vld [vmem:[%s712 + $0x110] sm:$0xff]
      %v6567 = vld [vmem:[%s712 + $0x120] sm:$0xff]
      %v6568 = vld [vmem:[%s712 + $0x128] sm:$0xff]
      %v6569 = vld [vmem:[%s712 + $0x138] sm:$0xff]
      %v6570 = vld [vmem:[%s712 + $0x140] sm:$0xff]
      %v6571 = vld [vmem:[%s712 + $0x150] sm:$0xff]
      %v6572 = vld [vmem:[%s712 + $0x158] sm:$0xff]
      %v6573 = vld [vmem:[%s712 + $0x168] sm:$0xff]
      %v6574 = vld [vmem:[%s712 + $0x170] sm:$0xff]
      %v6575 = vld [vmem:[%s712 + $0x1] sm:$0xff]
      %v6576 = vld [vmem:[%s712 + $0x9] sm:$0xff]
      %v6577 = vld [vmem:[%s712 + $0x19] sm:$0xff]
      %v6578 = vld [vmem:[%s712 + $0x21] sm:$0xff]
      %v6579 = vld [vmem:[%s712 + $0x31] sm:$0xff]
      %v6580 = vld [vmem:[%s712 + $0x39] sm:$0xff]
      %v6581 = vld [vmem:[%s712 + $0x49] sm:$0xff]
      %v6582 = vld [vmem:[%s712 + $0x51] sm:$0xff]
      %v6583 = vld [vmem:[%s712 + $0x61] sm:$0xff]
      %v6584 = vld [vmem:[%s712 + $0x69] sm:$0xff]
      %v6585 = vld [vmem:[%s712 + $0x79] sm:$0xff]
      %v6586 = vld [vmem:[%s712 + $0x81] sm:$0xff]
      %v6587 = vld [vmem:[%s712 + $0x91] sm:$0xff]
      %v6588 = vld [vmem:[%s712 + $0x99] sm:$0xff]
      %v6589 = vld [vmem:[%s712 + $0xa9] sm:$0xff]
      %v6590 = vld [vmem:[%s712 + $0xb1] sm:$0xff]
      %v6591 = vld [vmem:[%s712 + $0xc1] sm:$0xff]
      %v6592 = vld [vmem:[%s712 + $0xc9] sm:$0xff]
      %v6593 = vld [vmem:[%s712 + $0xd9] sm:$0xff]
      %v6594 = vld [vmem:[%s712 + $0xe1] sm:$0xff]
      %v6595 = vld [vmem:[%s712 + $0xf1] sm:$0xff]
      %v6596 = vld [vmem:[%s712 + $0xf9] sm:$0xff]
      %v6597 = vld [vmem:[%s712 + $0x109] sm:$0xff]
      %v6598 = vld [vmem:[%s712 + $0x111] sm:$0xff]
      %v6599 = vld [vmem:[%s712 + $0x121] sm:$0xff]
      %v6600 = vld [vmem:[%s712 + $0x129] sm:$0xff]
      %v6601 = vld [vmem:[%s712 + $0x139] sm:$0xff]
      %v6602 = vld [vmem:[%s712 + $0x141] sm:$0xff]
      %v6603 = vld [vmem:[%s712 + $0x151] sm:$0xff]
      %v6604 = vld [vmem:[%s712 + $0x159] sm:$0xff]
      %v6605 = vld [vmem:[%s712 + $0x169] sm:$0xff]
      %v6606 = vld [vmem:[%s712 + $0x171] sm:$0xff]
      %v6607 = vld [vmem:[%s712 + $0x2] sm:$0xff]
      %v6608 = vld [vmem:[%s712 + $0xa] sm:$0xff]
      %v6609 = vld [vmem:[%s712 + $0x1a] sm:$0xff]
      %v6610 = vld [vmem:[%s712 + $0x22] sm:$0xff]
      %v6611 = vld [vmem:[%s712 + $0x32] sm:$0xff]
      %v6612 = vld [vmem:[%s712 + $0x3a] sm:$0xff]
      %v6613 = vld [vmem:[%s712 + $0x4a] sm:$0xff]
      %v6614 = vld [vmem:[%s712 + $0x52] sm:$0xff]
      %v6615 = vld [vmem:[%s712 + $0x62] sm:$0xff]
      %v6616 = vld [vmem:[%s712 + $0x6a] sm:$0xff]
      %v6617 = vld [vmem:[%s712 + $0x7a] sm:$0xff]
      %v6618 = vld [vmem:[%s712 + $0x82] sm:$0xff]
      %v6619 = vld [vmem:[%s712 + $0x92] sm:$0xff]
      %v6620 = vld [vmem:[%s712 + $0x9a] sm:$0xff]
      %v6621 = vld [vmem:[%s712 + $0xaa] sm:$0xff]
      %v6622 = vld [vmem:[%s712 + $0xb2] sm:$0xff]
      %v6623 = vld [vmem:[%s712 + $0xc2] sm:$0xff]
      %v6624 = vld [vmem:[%s712 + $0xca] sm:$0xff]
      %v6625 = vld [vmem:[%s712 + $0xda] sm:$0xff]
      %v6626 = vld [vmem:[%s712 + $0xe2] sm:$0xff]
      %v6627 = vld [vmem:[%s712 + $0xf2] sm:$0xff]
      %v6628 = vld [vmem:[%s712 + $0xfa] sm:$0xff]
      %v6629 = vld [vmem:[%s712 + $0x10a] sm:$0xff]
      %v6630 = vld [vmem:[%s712 + $0x112] sm:$0xff]
      %v6631 = vld [vmem:[%s712 + $0x122] sm:$0xff]
      %v6632 = vld [vmem:[%s712 + $0x12a] sm:$0xff]
      %v6633 = vld [vmem:[%s712 + $0x13a] sm:$0xff]
      %v6634 = vld [vmem:[%s712 + $0x142] sm:$0xff]
      %v6635 = vld [vmem:[%s712 + $0x152] sm:$0xff]
      %v6636 = vld [vmem:[%s712 + $0x15a] sm:$0xff]
      %v6637 = vld [vmem:[%s712 + $0x16a] sm:$0xff]
      %v6638 = vld [vmem:[%s712 + $0x172] sm:$0xff]
      %v6639 = vld [vmem:[%s937] sm:$0xff]
      %v6640 = vld [vmem:[%s937 + $0x8] sm:$0xff]
      %v6641 = vld [vmem:[%s937 + $0x18] sm:$0xff]
      %v6642 = vld [vmem:[%s937 + $0x20] sm:$0xff]
      %v6643 = vld [vmem:[%s937 + $0x30] sm:$0xff]
      %v6644 = vld [vmem:[%s937 + $0x38] sm:$0xff]
      %v6645 = vld [vmem:[%s937 + $0x48] sm:$0xff]
      %v6646 = vld [vmem:[%s937 + $0x50] sm:$0xff]
      %v6647 = vld [vmem:[%s937 + $0x60] sm:$0xff]
      %v6648 = vld [vmem:[%s937 + $0x68] sm:$0xff]
      %v6649 = vld [vmem:[%s937 + $0x78] sm:$0xff]
      %v6650 = vld [vmem:[%s937 + $0x80] sm:$0xff]
      %v6651 = vld [vmem:[%s937 + $0x90] sm:$0xff]
      %v6652 = vld [vmem:[%s937 + $0x98] sm:$0xff]
      %v6653 = vld [vmem:[%s937 + $0xa8] sm:$0xff]
      %v6654 = vld [vmem:[%s937 + $0xb0] sm:$0xff]
      %v6655 = vld [vmem:[%s937 + $0xc0] sm:$0xff]
      %v6656 = vld [vmem:[%s937 + $0xc8] sm:$0xff]
      %v6657 = vld [vmem:[%s937 + $0xd8] sm:$0xff]
      %v6658 = vld [vmem:[%s937 + $0xe0] sm:$0xff]
      %v6659 = vld [vmem:[%s937 + $0xf0] sm:$0xff]
      %v6660 = vld [vmem:[%s937 + $0xf8] sm:$0xff]
      %v6661 = vld [vmem:[%s937 + $0x108] sm:$0xff]
      %v6662 = vld [vmem:[%s937 + $0x110] sm:$0xff]
      %v6663 = vld [vmem:[%s937 + $0x120] sm:$0xff]
      %v6664 = vld [vmem:[%s937 + $0x128] sm:$0xff]
      %v6665 = vld [vmem:[%s937 + $0x138] sm:$0xff]
      %v6666 = vld [vmem:[%s937 + $0x140] sm:$0xff]
      %v6667 = vld [vmem:[%s937 + $0x150] sm:$0xff]
      %v6668 = vld [vmem:[%s937 + $0x158] sm:$0xff]
      %v6669 = vld [vmem:[%s937 + $0x168] sm:$0xff]
      %v6670 = vld [vmem:[%s937 + $0x170] sm:$0xff]
      %v6671 = vld [vmem:[%s937 + $0x1] sm:$0xff]
      %v6672 = vld [vmem:[%s937 + $0x9] sm:$0xff]
      %v6673 = vld [vmem:[%s937 + $0x19] sm:$0xff]
      %v6674 = vld [vmem:[%s937 + $0x21] sm:$0xff]
      %v6675 = vld [vmem:[%s937 + $0x31] sm:$0xff]
      %v6676 = vld [vmem:[%s937 + $0x39] sm:$0xff]
      %v6677 = vld [vmem:[%s937 + $0x49] sm:$0xff]
      %v6678 = vld [vmem:[%s937 + $0x51] sm:$0xff]
      %v6679 = vld [vmem:[%s937 + $0x61] sm:$0xff]
      %v6680 = vld [vmem:[%s937 + $0x69] sm:$0xff]
      %v6681 = vld [vmem:[%s937 + $0x79] sm:$0xff]
      %v6682 = vld [vmem:[%s937 + $0x81] sm:$0xff]
      %v6683 = vld [vmem:[%s937 + $0x91] sm:$0xff]
      %v6684 = vld [vmem:[%s937 + $0x99] sm:$0xff]
      %v6685 = vld [vmem:[%s937 + $0xa9] sm:$0xff]
      %v6686 = vld [vmem:[%s937 + $0xb1] sm:$0xff]
      %v6687 = vld [vmem:[%s937 + $0xc1] sm:$0xff]
      %v6688 = vld [vmem:[%s937 + $0xc9] sm:$0xff]
      %v6689 = vld [vmem:[%s937 + $0xd9] sm:$0xff]
      %v6690 = vld [vmem:[%s937 + $0xe1] sm:$0xff]
      %v6691 = vld [vmem:[%s937 + $0xf1] sm:$0xff]
      %v6692 = vld [vmem:[%s937 + $0xf9] sm:$0xff]
      %v6693 = vld [vmem:[%s937 + $0x109] sm:$0xff]
      %v6694 = vld [vmem:[%s937 + $0x111] sm:$0xff]
      %v6695 = vld [vmem:[%s937 + $0x121] sm:$0xff]
      %v6696 = vld [vmem:[%s937 + $0x129] sm:$0xff]
      %v6697 = vld [vmem:[%s937 + $0x139] sm:$0xff]
      %v6698 = vld [vmem:[%s937 + $0x141] sm:$0xff]
      %v6699 = vld [vmem:[%s937 + $0x151] sm:$0xff]
      %v6700 = vld [vmem:[%s937 + $0x159] sm:$0xff]
      %v6701 = vld [vmem:[%s937 + $0x169] sm:$0xff]
      %v6702 = vld [vmem:[%s937 + $0x171] sm:$0xff]
      %v6703 = vld [vmem:[%s937 + $0x2] sm:$0xff]
      %v6704 = vld [vmem:[%s937 + $0xa] sm:$0xff]
      %v6705 = vld [vmem:[%s937 + $0x1a] sm:$0xff]
      %v6706 = vld [vmem:[%s937 + $0x22] sm:$0xff]
      %v6707 = vld [vmem:[%s937 + $0x32] sm:$0xff]
      %v6708 = vld [vmem:[%s937 + $0x3a] sm:$0xff]
      %v6709 = vld [vmem:[%s937 + $0x4a] sm:$0xff]
      %v6710 = vld [vmem:[%s937 + $0x52] sm:$0xff]
      %v6711 = vld [vmem:[%s937 + $0x62] sm:$0xff]
      %v6712 = vld [vmem:[%s937 + $0x6a] sm:$0xff]
      %v6713 = vld [vmem:[%s937 + $0x7a] sm:$0xff]
      %v6714 = vld [vmem:[%s937 + $0x82] sm:$0xff]
      %v6715 = vld [vmem:[%s937 + $0x92] sm:$0xff]
      %v6716 = vld [vmem:[%s937 + $0x9a] sm:$0xff]
      %v6717 = vld [vmem:[%s937 + $0xaa] sm:$0xff]
      %v6718 = vld [vmem:[%s937 + $0xb2] sm:$0xff]
      %v6719 = vld [vmem:[%s937 + $0xc2] sm:$0xff]
      %v6720 = vld [vmem:[%s937 + $0xca] sm:$0xff]
      %v6721 = vld [vmem:[%s937 + $0xda] sm:$0xff]
      %v6722 = vld [vmem:[%s937 + $0xe2] sm:$0xff]
      %v6723 = vld [vmem:[%s937 + $0xf2] sm:$0xff]
      %v6724 = vld [vmem:[%s937 + $0xfa] sm:$0xff]
      %v6725 = vld [vmem:[%s937 + $0x10a] sm:$0xff]
      %v6726 = vld [vmem:[%s937 + $0x112] sm:$0xff]
      %v6727 = vld [vmem:[%s937 + $0x122] sm:$0xff]
      %v6728 = vld [vmem:[%s937 + $0x12a] sm:$0xff]
      %v6729 = vld [vmem:[%s937 + $0x13a] sm:$0xff]
      %v6730 = vld [vmem:[%s937 + $0x142] sm:$0xff]
      %v6731 = vld [vmem:[%s937 + $0x152] sm:$0xff]
      %v6732 = vld [vmem:[%s937 + $0x15a] sm:$0xff]
      %v6733 = vld [vmem:[%s937 + $0x16a] sm:$0xff]
      %v6734 = vld [vmem:[%s937 + $0x172] sm:$0xff]
      %6767 = vrot.lane.b32.xlu0 %v6479, 4
      %v6768 = vpop.permute.xlu0 %6767
      %6769 = vrot.lane.b32.xlu0 %v6480, 4
      %v6770 = vpop.permute.xlu0 %6769
      %6771 = vrot.lane.b32.xlu0 %v6481, 4
      %v6772 = vpop.permute.xlu0 %6771
      %6773 = vrot.lane.b32.xlu0 %v6482, 4
      %v6774 = vpop.permute.xlu0 %6773
      %6775 = vrot.lane.b32.xlu0 %v6483, 4
      %v6776 = vpop.permute.xlu0 %6775
      %6777 = vrot.lane.b32.xlu0 %v6484, 4
      %v6778 = vpop.permute.xlu0 %6777
      %6779 = vrot.lane.b32.xlu0 %v6485, 4
      %v6780 = vpop.permute.xlu0 %6779
      %6781 = vrot.lane.b32.xlu0 %v6486, 4
      %v6782 = vpop.permute.xlu0 %6781
      %6783 = vrot.lane.b32.xlu0 %v6487, 4
      %v6784 = vpop.permute.xlu0 %6783
      %6785 = vrot.lane.b32.xlu0 %v6488, 4
      %v6786 = vpop.permute.xlu0 %6785
      %6787 = vrot.lane.b32.xlu0 %v6489, 4
      %v6788 = vpop.permute.xlu0 %6787
      %6789 = vrot.lane.b32.xlu0 %v6490, 4
      %v6790 = vpop.permute.xlu0 %6789
      %6791 = vrot.lane.b32.xlu0 %v6491, 4
      %v6792 = vpop.permute.xlu0 %6791
      %6793 = vrot.lane.b32.xlu0 %v6492, 4
      %v6794 = vpop.permute.xlu0 %6793
      %6795 = vrot.lane.b32.xlu0 %v6493, 4
      %v6796 = vpop.permute.xlu0 %6795
      %6797 = vrot.lane.b32.xlu0 %v6494, 4
      %v6798 = vpop.permute.xlu0 %6797
      %6799 = vrot.lane.b32.xlu0 %v6495, 4
      %v6800 = vpop.permute.xlu0 %6799
      %6801 = vrot.lane.b32.xlu0 %v6496, 4
      %v6802 = vpop.permute.xlu0 %6801
      %6803 = vrot.lane.b32.xlu0 %v6497, 4
      %v6804 = vpop.permute.xlu0 %6803
      %6805 = vrot.lane.b32.xlu0 %v6498, 4
      %v6806 = vpop.permute.xlu0 %6805
      %6807 = vrot.lane.b32.xlu0 %v6499, 4
      %v6808 = vpop.permute.xlu0 %6807
      %6809 = vrot.lane.b32.xlu0 %v6500, 4
      %v6810 = vpop.permute.xlu0 %6809
      %6811 = vrot.lane.b32.xlu0 %v6501, 4
      %v6812 = vpop.permute.xlu0 %6811
      %6813 = vrot.lane.b32.xlu0 %v6502, 4
      %v6814 = vpop.permute.xlu0 %6813
      %6815 = vrot.lane.b32.xlu0 %v6503, 4
      %v6816 = vpop.permute.xlu0 %6815
      %6817 = vrot.lane.b32.xlu0 %v6504, 4
      %v6818 = vpop.permute.xlu0 %6817
      %6819 = vrot.lane.b32.xlu0 %v6505, 4
      %v6820 = vpop.permute.xlu0 %6819
      %6821 = vrot.lane.b32.xlu0 %v6506, 4
      %v6822 = vpop.permute.xlu0 %6821
      %6823 = vrot.lane.b32.xlu0 %v6507, 4
      %v6824 = vpop.permute.xlu0 %6823
      %6825 = vrot.lane.b32.xlu0 %v6508, 4
      %v6826 = vpop.permute.xlu0 %6825
      %6827 = vrot.lane.b32.xlu0 %v6509, 4
      %v6828 = vpop.permute.xlu0 %6827
      %6829 = vrot.lane.b32.xlu0 %v6510, 4
      %v6830 = vpop.permute.xlu0 %6829
      %6895 = vrot.lane.b32.xlu0 %v6511, 8
      %v6896 = vpop.permute.xlu0 %6895
      %6897 = vrot.lane.b32.xlu0 %v6512, 8
      %v6898 = vpop.permute.xlu0 %6897
      %6899 = vrot.lane.b32.xlu0 %v6513, 8
      %v6900 = vpop.permute.xlu0 %6899
      %6901 = vrot.lane.b32.xlu0 %v6514, 8
      %v6902 = vpop.permute.xlu0 %6901
      %6903 = vrot.lane.b32.xlu0 %v6515, 8
      %v6904 = vpop.permute.xlu0 %6903
      %6905 = vrot.lane.b32.xlu0 %v6516, 8
      %v6906 = vpop.permute.xlu0 %6905
      %6907 = vrot.lane.b32.xlu0 %v6517, 8
      %v6908 = vpop.permute.xlu0 %6907
      %6909 = vrot.lane.b32.xlu0 %v6518, 8
      %v6910 = vpop.permute.xlu0 %6909
      %6911 = vrot.lane.b32.xlu0 %v6519, 8
      %v6912 = vpop.permute.xlu0 %6911
      %6913 = vrot.lane.b32.xlu0 %v6520, 8
      %v6914 = vpop.permute.xlu0 %6913
      %6915 = vrot.lane.b32.xlu0 %v6521, 8
      %v6916 = vpop.permute.xlu0 %6915
      %6917 = vrot.lane.b32.xlu0 %v6522, 8
      %v6918 = vpop.permute.xlu0 %6917
      %6919 = vrot.lane.b32.xlu0 %v6523, 8
      %v6920 = vpop.permute.xlu0 %6919
      %6921 = vrot.lane.b32.xlu0 %v6524, 8
      %v6922 = vpop.permute.xlu0 %6921
      %6923 = vrot.lane.b32.xlu0 %v6525, 8
      %v6924 = vpop.permute.xlu0 %6923
      %6925 = vrot.lane.b32.xlu0 %v6526, 8
      %v6926 = vpop.permute.xlu0 %6925
      %6927 = vrot.lane.b32.xlu0 %v6527, 8
      %v6928 = vpop.permute.xlu0 %6927
      %6929 = vrot.lane.b32.xlu0 %v6528, 8
      %v6930 = vpop.permute.xlu0 %6929
      %6931 = vrot.lane.b32.xlu0 %v6529, 8
      %v6932 = vpop.permute.xlu0 %6931
      %6933 = vrot.lane.b32.xlu0 %v6530, 8
      %v6934 = vpop.permute.xlu0 %6933
      %6935 = vrot.lane.b32.xlu0 %v6531, 8
      %v6936 = vpop.permute.xlu0 %6935
      %6937 = vrot.lane.b32.xlu0 %v6532, 8
      %v6938 = vpop.permute.xlu0 %6937
      %6939 = vrot.lane.b32.xlu0 %v6533, 8
      %v6940 = vpop.permute.xlu0 %6939
      %6941 = vrot.lane.b32.xlu0 %v6534, 8
      %v6942 = vpop.permute.xlu0 %6941
      %6943 = vrot.lane.b32.xlu0 %v6535, 8
      %v6944 = vpop.permute.xlu0 %6943
      %6945 = vrot.lane.b32.xlu0 %v6536, 8
      %v6946 = vpop.permute.xlu0 %6945
      %6947 = vrot.lane.b32.xlu0 %v6537, 8
      %v6948 = vpop.permute.xlu0 %6947
      %6949 = vrot.lane.b32.xlu0 %v6538, 8
      %v6950 = vpop.permute.xlu0 %6949
      %6951 = vrot.lane.b32.xlu0 %v6539, 8
      %v6952 = vpop.permute.xlu0 %6951
      %6953 = vrot.lane.b32.xlu0 %v6540, 8
      %v6954 = vpop.permute.xlu0 %6953
      %6955 = vrot.lane.b32.xlu0 %v6541, 8
      %v6956 = vpop.permute.xlu0 %6955
      %6957 = vrot.lane.b32.xlu0 %v6542, 8
      %v6958 = vpop.permute.xlu0 %6957
      %7023 = vrot.lane.b32.xlu0 %v6543, 12
      %v7024 = vpop.permute.xlu0 %7023
      %7025 = vrot.lane.b32.xlu0 %v6544, 12
      %v7026 = vpop.permute.xlu0 %7025
      %7027 = vrot.lane.b32.xlu0 %v6545, 12
      %v7028 = vpop.permute.xlu0 %7027
      %7029 = vrot.lane.b32.xlu0 %v6546, 12
      %v7030 = vpop.permute.xlu0 %7029
      %7031 = vrot.lane.b32.xlu0 %v6547, 12
      %v7032 = vpop.permute.xlu0 %7031
      %7033 = vrot.lane.b32.xlu0 %v6548, 12
      %v7034 = vpop.permute.xlu0 %7033
      %7035 = vrot.lane.b32.xlu0 %v6549, 12
      %v7036 = vpop.permute.xlu0 %7035
      %7037 = vrot.lane.b32.xlu0 %v6550, 12
      %v7038 = vpop.permute.xlu0 %7037
      %7039 = vrot.lane.b32.xlu0 %v6551, 12
      %v7040 = vpop.permute.xlu0 %7039
      %7041 = vrot.lane.b32.xlu0 %v6552, 12
      %v7042 = vpop.permute.xlu0 %7041
      %7043 = vrot.lane.b32.xlu0 %v6553, 12
      %v7044 = vpop.permute.xlu0 %7043
      %7045 = vrot.lane.b32.xlu0 %v6554, 12
      %v7046 = vpop.permute.xlu0 %7045
      %7047 = vrot.lane.b32.xlu0 %v6555, 12
      %v7048 = vpop.permute.xlu0 %7047
      %7049 = vrot.lane.b32.xlu0 %v6556, 12
      %v7050 = vpop.permute.xlu0 %7049
      %7051 = vrot.lane.b32.xlu0 %v6557, 12
      %v7052 = vpop.permute.xlu0 %7051
      %7053 = vrot.lane.b32.xlu0 %v6558, 12
      %v7054 = vpop.permute.xlu0 %7053
      %7055 = vrot.lane.b32.xlu0 %v6559, 12
      %v7056 = vpop.permute.xlu0 %7055
      %7057 = vrot.lane.b32.xlu0 %v6560, 12
      %v7058 = vpop.permute.xlu0 %7057
      %7059 = vrot.lane.b32.xlu0 %v6561, 12
      %v7060 = vpop.permute.xlu0 %7059
      %7061 = vrot.lane.b32.xlu0 %v6562, 12
      %v7062 = vpop.permute.xlu0 %7061
      %7063 = vrot.lane.b32.xlu0 %v6563, 12
      %v7064 = vpop.permute.xlu0 %7063
      %7065 = vrot.lane.b32.xlu0 %v6564, 12
      %v7066 = vpop.permute.xlu0 %7065
      %7067 = vrot.lane.b32.xlu0 %v6565, 12
      %v7068 = vpop.permute.xlu0 %7067
      %7069 = vrot.lane.b32.xlu0 %v6566, 12
      %v7070 = vpop.permute.xlu0 %7069
      %7071 = vrot.lane.b32.xlu0 %v6567, 12
      %v7072 = vpop.permute.xlu0 %7071
      %7073 = vrot.lane.b32.xlu0 %v6568, 12
      %v7074 = vpop.permute.xlu0 %7073
      %7075 = vrot.lane.b32.xlu0 %v6569, 12
      %v7076 = vpop.permute.xlu0 %7075
      %7077 = vrot.lane.b32.xlu0 %v6570, 12
      %v7078 = vpop.permute.xlu0 %7077
      %7079 = vrot.lane.b32.xlu0 %v6571, 12
      %v7080 = vpop.permute.xlu0 %7079
      %7081 = vrot.lane.b32.xlu0 %v6572, 12
      %v7082 = vpop.permute.xlu0 %7081
      %7083 = vrot.lane.b32.xlu0 %v6573, 12
      %v7084 = vpop.permute.xlu0 %7083
      %7085 = vrot.lane.b32.xlu0 %v6574, 12
      %v7086 = vpop.permute.xlu0 %7085
      %7151 = vrot.lane.b32.xlu0 %v6575, 16
      %v7152 = vpop.permute.xlu0 %7151
      %7153 = vrot.lane.b32.xlu0 %v6576, 16
      %v7154 = vpop.permute.xlu0 %7153
      %7155 = vrot.lane.b32.xlu0 %v6577, 16
      %v7156 = vpop.permute.xlu0 %7155
      %7157 = vrot.lane.b32.xlu0 %v6578, 16
      %v7158 = vpop.permute.xlu0 %7157
      %7159 = vrot.lane.b32.xlu0 %v6579, 16
      %v7160 = vpop.permute.xlu0 %7159
      %7161 = vrot.lane.b32.xlu0 %v6580, 16
      %v7162 = vpop.permute.xlu0 %7161
      %7163 = vrot.lane.b32.xlu0 %v6581, 16
      %v7164 = vpop.permute.xlu0 %7163
      %7165 = vrot.lane.b32.xlu0 %v6582, 16
      %v7166 = vpop.permute.xlu0 %7165
      %7167 = vrot.lane.b32.xlu0 %v6583, 16
      %v7168 = vpop.permute.xlu0 %7167
      %7169 = vrot.lane.b32.xlu0 %v6584, 16
      %v7170 = vpop.permute.xlu0 %7169
      %7171 = vrot.lane.b32.xlu0 %v6585, 16
      %v7172 = vpop.permute.xlu0 %7171
      %7173 = vrot.lane.b32.xlu0 %v6586, 16
      %v7174 = vpop.permute.xlu0 %7173
      %7175 = vrot.lane.b32.xlu0 %v6587, 16
      %v7176 = vpop.permute.xlu0 %7175
      %7177 = vrot.lane.b32.xlu0 %v6588, 16
      %v7178 = vpop.permute.xlu0 %7177
      %7179 = vrot.lane.b32.xlu0 %v6589, 16
      %v7180 = vpop.permute.xlu0 %7179
      %7181 = vrot.lane.b32.xlu0 %v6590, 16
      %v7182 = vpop.permute.xlu0 %7181
      %7183 = vrot.lane.b32.xlu0 %v6591, 16
      %v7184 = vpop.permute.xlu0 %7183
      %7185 = vrot.lane.b32.xlu0 %v6592, 16
      %v7186 = vpop.permute.xlu0 %7185
      %7187 = vrot.lane.b32.xlu0 %v6593, 16
      %v7188 = vpop.permute.xlu0 %7187
      %7189 = vrot.lane.b32.xlu0 %v6594, 16
      %v7190 = vpop.permute.xlu0 %7189
      %7191 = vrot.lane.b32.xlu0 %v6595, 16
      %v7192 = vpop.permute.xlu0 %7191
      %7193 = vrot.lane.b32.xlu0 %v6596, 16
      %v7194 = vpop.permute.xlu0 %7193
      %7195 = vrot.lane.b32.xlu0 %v6597, 16
      %v7196 = vpop.permute.xlu0 %7195
      %7197 = vrot.lane.b32.xlu0 %v6598, 16
      %v7198 = vpop.permute.xlu0 %7197
      %7199 = vrot.lane.b32.xlu0 %v6599, 16
      %v7200 = vpop.permute.xlu0 %7199
      %7201 = vrot.lane.b32.xlu0 %v6600, 16
      %v7202 = vpop.permute.xlu0 %7201
      %7203 = vrot.lane.b32.xlu0 %v6601, 16
      %v7204 = vpop.permute.xlu0 %7203
      %7205 = vrot.lane.b32.xlu0 %v6602, 16
      %v7206 = vpop.permute.xlu0 %7205
      %7207 = vrot.lane.b32.xlu0 %v6603, 16
      %v7208 = vpop.permute.xlu0 %7207
      %7209 = vrot.lane.b32.xlu0 %v6604, 16
      %v7210 = vpop.permute.xlu0 %7209
      %7211 = vrot.lane.b32.xlu0 %v6605, 16
      %v7212 = vpop.permute.xlu0 %7211
      %7213 = vrot.lane.b32.xlu0 %v6606, 16
      %v7214 = vpop.permute.xlu0 %7213
      %7279 = vrot.lane.b32.xlu0 %v6607, 20
      %v7280 = vpop.permute.xlu0 %7279
      %7281 = vrot.lane.b32.xlu0 %v6608, 20
      %v7282 = vpop.permute.xlu0 %7281
      %7283 = vrot.lane.b32.xlu0 %v6609, 20
      %v7284 = vpop.permute.xlu0 %7283
      %7285 = vrot.lane.b32.xlu0 %v6610, 20
      %v7286 = vpop.permute.xlu0 %7285
      %7287 = vrot.lane.b32.xlu0 %v6611, 20
      %v7288 = vpop.permute.xlu0 %7287
      %7289 = vrot.lane.b32.xlu0 %v6612, 20
      %v7290 = vpop.permute.xlu0 %7289
      %7291 = vrot.lane.b32.xlu0 %v6613, 20
      %v7292 = vpop.permute.xlu0 %7291
      %7293 = vrot.lane.b32.xlu0 %v6614, 20
      %v7294 = vpop.permute.xlu0 %7293
      %7295 = vrot.lane.b32.xlu0 %v6615, 20
      %v7296 = vpop.permute.xlu0 %7295
      %7297 = vrot.lane.b32.xlu0 %v6616, 20
      %v7298 = vpop.permute.xlu0 %7297
      %7299 = vrot.lane.b32.xlu0 %v6617, 20
      %v7300 = vpop.permute.xlu0 %7299
      %7301 = vrot.lane.b32.xlu0 %v6618, 20
      %v7302 = vpop.permute.xlu0 %7301
      %7303 = vrot.lane.b32.xlu0 %v6619, 20
      %v7304 = vpop.permute.xlu0 %7303
      %7305 = vrot.lane.b32.xlu0 %v6620, 20
      %v7306 = vpop.permute.xlu0 %7305
      %7307 = vrot.lane.b32.xlu0 %v6621, 20
      %v7308 = vpop.permute.xlu0 %7307
      %7309 = vrot.lane.b32.xlu0 %v6622, 20
      %v7310 = vpop.permute.xlu0 %7309
      %7311 = vrot.lane.b32.xlu0 %v6623, 20
      %v7312 = vpop.permute.xlu0 %7311
      %7313 = vrot.lane.b32.xlu0 %v6624, 20
      %v7314 = vpop.permute.xlu0 %7313
      %7315 = vrot.lane.b32.xlu0 %v6625, 20
      %v7316 = vpop.permute.xlu0 %7315
      %7317 = vrot.lane.b32.xlu0 %v6626, 20
      %v7318 = vpop.permute.xlu0 %7317
      %7319 = vrot.lane.b32.xlu0 %v6627, 20
      %v7320 = vpop.permute.xlu0 %7319
      %7321 = vrot.lane.b32.xlu0 %v6628, 20
      %v7322 = vpop.permute.xlu0 %7321
      %7323 = vrot.lane.b32.xlu0 %v6629, 20
      %v7324 = vpop.permute.xlu0 %7323
      %7325 = vrot.lane.b32.xlu0 %v6630, 20
      %v7326 = vpop.permute.xlu0 %7325
      %7327 = vrot.lane.b32.xlu0 %v6631, 20
      %v7328 = vpop.permute.xlu0 %7327
      %7329 = vrot.lane.b32.xlu0 %v6632, 20
      %v7330 = vpop.permute.xlu0 %7329
      %7331 = vrot.lane.b32.xlu0 %v6633, 20
      %v7332 = vpop.permute.xlu0 %7331
      %7333 = vrot.lane.b32.xlu0 %v6634, 20
      %v7334 = vpop.permute.xlu0 %7333
      %7335 = vrot.lane.b32.xlu0 %v6635, 20
      %v7336 = vpop.permute.xlu0 %7335
      %7337 = vrot.lane.b32.xlu0 %v6636, 20
      %v7338 = vpop.permute.xlu0 %7337
      %7339 = vrot.lane.b32.xlu0 %v6637, 20
      %v7340 = vpop.permute.xlu0 %7339
      %7341 = vrot.lane.b32.xlu0 %v6638, 20
      %v7342 = vpop.permute.xlu0 %7341
      %7407 = vrot.lane.b32.xlu0 %v6639, 24
      %v7408 = vpop.permute.xlu0 %7407
      %7409 = vrot.lane.b32.xlu0 %v6640, 24
      %v7410 = vpop.permute.xlu0 %7409
      %7411 = vrot.lane.b32.xlu0 %v6641, 24
      %v7412 = vpop.permute.xlu0 %7411
      %7413 = vrot.lane.b32.xlu0 %v6642, 24
      %v7414 = vpop.permute.xlu0 %7413
      %7415 = vrot.lane.b32.xlu0 %v6643, 24
      %v7416 = vpop.permute.xlu0 %7415
      %7417 = vrot.lane.b32.xlu0 %v6644, 24
      %v7418 = vpop.permute.xlu0 %7417
      %7419 = vrot.lane.b32.xlu0 %v6645, 24
      %v7420 = vpop.permute.xlu0 %7419
      %7421 = vrot.lane.b32.xlu0 %v6646, 24
      %v7422 = vpop.permute.xlu0 %7421
      %7423 = vrot.lane.b32.xlu0 %v6647, 24
      %v7424 = vpop.permute.xlu0 %7423
      %7425 = vrot.lane.b32.xlu0 %v6648, 24
      %v7426 = vpop.permute.xlu0 %7425
      %7427 = vrot.lane.b32.xlu0 %v6649, 24
      %v7428 = vpop.permute.xlu0 %7427
      %7429 = vrot.lane.b32.xlu0 %v6650, 24
      %v7430 = vpop.permute.xlu0 %7429
      %7431 = vrot.lane.b32.xlu0 %v6651, 24
      %v7432 = vpop.permute.xlu0 %7431
      %7433 = vrot.lane.b32.xlu0 %v6652, 24
      %v7434 = vpop.permute.xlu0 %7433
      %7435 = vrot.lane.b32.xlu0 %v6653, 24
      %v7436 = vpop.permute.xlu0 %7435
      %7437 = vrot.lane.b32.xlu0 %v6654, 24
      %v7438 = vpop.permute.xlu0 %7437
      %7439 = vrot.lane.b32.xlu0 %v6655, 24
      %v7440 = vpop.permute.xlu0 %7439
      %7441 = vrot.lane.b32.xlu0 %v6656, 24
      %v7442 = vpop.permute.xlu0 %7441
      %7443 = vrot.lane.b32.xlu0 %v6657, 24
      %v7444 = vpop.permute.xlu0 %7443
      %7445 = vrot.lane.b32.xlu0 %v6658, 24
      %v7446 = vpop.permute.xlu0 %7445
      %7447 = vrot.lane.b32.xlu0 %v6659, 24
      %v7448 = vpop.permute.xlu0 %7447
      %7449 = vrot.lane.b32.xlu0 %v6660, 24
      %v7450 = vpop.permute.xlu0 %7449
      %7451 = vrot.lane.b32.xlu0 %v6661, 24
      %v7452 = vpop.permute.xlu0 %7451
      %7453 = vrot.lane.b32.xlu0 %v6662, 24
      %v7454 = vpop.permute.xlu0 %7453
      %7455 = vrot.lane.b32.xlu0 %v6663, 24
      %v7456 = vpop.permute.xlu0 %7455
      %7457 = vrot.lane.b32.xlu0 %v6664, 24
      %v7458 = vpop.permute.xlu0 %7457
      %7459 = vrot.lane.b32.xlu0 %v6665, 24
      %v7460 = vpop.permute.xlu0 %7459
      %7461 = vrot.lane.b32.xlu0 %v6666, 24
      %v7462 = vpop.permute.xlu0 %7461
      %7463 = vrot.lane.b32.xlu0 %v6667, 24
      %v7464 = vpop.permute.xlu0 %7463
      %7465 = vrot.lane.b32.xlu0 %v6668, 24
      %v7466 = vpop.permute.xlu0 %7465
      %7467 = vrot.lane.b32.xlu0 %v6669, 24
      %v7468 = vpop.permute.xlu0 %7467
      %7469 = vrot.lane.b32.xlu0 %v6670, 24
      %v7470 = vpop.permute.xlu0 %7469
      %7535 = vrot.lane.b32.xlu0 %v6671, 28
      %v7536 = vpop.permute.xlu0 %7535
      %7537 = vrot.lane.b32.xlu0 %v6672, 28
      %v7538 = vpop.permute.xlu0 %7537
      %7539 = vrot.lane.b32.xlu0 %v6673, 28
      %v7540 = vpop.permute.xlu0 %7539
      %7541 = vrot.lane.b32.xlu0 %v6674, 28
      %v7542 = vpop.permute.xlu0 %7541
      %7543 = vrot.lane.b32.xlu0 %v6675, 28
      %v7544 = vpop.permute.xlu0 %7543
      %7545 = vrot.lane.b32.xlu0 %v6676, 28
      %v7546 = vpop.permute.xlu0 %7545
      %7547 = vrot.lane.b32.xlu0 %v6677, 28
      %v7548 = vpop.permute.xlu0 %7547
      %7549 = vrot.lane.b32.xlu0 %v6678, 28
      %v7550 = vpop.permute.xlu0 %7549
      %7551 = vrot.lane.b32.xlu0 %v6679, 28
      %v7552 = vpop.permute.xlu0 %7551
      %7553 = vrot.lane.b32.xlu0 %v6680, 28
      %v7554 = vpop.permute.xlu0 %7553
      %7555 = vrot.lane.b32.xlu0 %v6681, 28
      %v7556 = vpop.permute.xlu0 %7555
      %7557 = vrot.lane.b32.xlu0 %v6682, 28
      %v7558 = vpop.permute.xlu0 %7557
      %7559 = vrot.lane.b32.xlu0 %v6683, 28
      %v7560 = vpop.permute.xlu0 %7559
      %7561 = vrot.lane.b32.xlu0 %v6684, 28
      %v7562 = vpop.permute.xlu0 %7561
      %7563 = vrot.lane.b32.xlu0 %v6685, 28
      %v7564 = vpop.permute.xlu0 %7563
      %7565 = vrot.lane.b32.xlu0 %v6686, 28
      %v7566 = vpop.permute.xlu0 %7565
      %7567 = vrot.lane.b32.xlu0 %v6687, 28
      %v7568 = vpop.permute.xlu0 %7567
      %7569 = vrot.lane.b32.xlu0 %v6688, 28
      %v7570 = vpop.permute.xlu0 %7569
      %7571 = vrot.lane.b32.xlu0 %v6689, 28
      %v7572 = vpop.permute.xlu0 %7571
      %7573 = vrot.lane.b32.xlu0 %v6690, 28
      %v7574 = vpop.permute.xlu0 %7573
      %7575 = vrot.lane.b32.xlu0 %v6691, 28
      %v7576 = vpop.permute.xlu0 %7575
      %7577 = vrot.lane.b32.xlu0 %v6692, 28
      %v7578 = vpop.permute.xlu0 %7577
      %7579 = vrot.lane.b32.xlu0 %v6693, 28
      %v7580 = vpop.permute.xlu0 %7579
      %7581 = vrot.lane.b32.xlu0 %v6694, 28
      %v7582 = vpop.permute.xlu0 %7581
      %7583 = vrot.lane.b32.xlu0 %v6695, 28
      %v7584 = vpop.permute.xlu0 %7583
      %7585 = vrot.lane.b32.xlu0 %v6696, 28
      %v7586 = vpop.permute.xlu0 %7585
      %7587 = vrot.lane.b32.xlu0 %v6697, 28
      %v7588 = vpop.permute.xlu0 %7587
      %7589 = vrot.lane.b32.xlu0 %v6698, 28
      %v7590 = vpop.permute.xlu0 %7589
      %7591 = vrot.lane.b32.xlu0 %v6699, 28
      %v7592 = vpop.permute.xlu0 %7591
      %7593 = vrot.lane.b32.xlu0 %v6700, 28
      %v7594 = vpop.permute.xlu0 %7593
      %7595 = vrot.lane.b32.xlu0 %v6701, 28
      %v7596 = vpop.permute.xlu0 %7595
      %7597 = vrot.lane.b32.xlu0 %v6702, 28
      %v7598 = vpop.permute.xlu0 %7597
      %7663 = vrot.lane.b32.xlu0 %v6703, 32
      %v7664 = vpop.permute.xlu0 %7663
      %7665 = vrot.lane.b32.xlu0 %v6704, 32
      %v7666 = vpop.permute.xlu0 %7665
      %7667 = vrot.lane.b32.xlu0 %v6705, 32
      %v7668 = vpop.permute.xlu0 %7667
      %7669 = vrot.lane.b32.xlu0 %v6706, 32
      %v7670 = vpop.permute.xlu0 %7669
      %7671 = vrot.lane.b32.xlu0 %v6707, 32
      %v7672 = vpop.permute.xlu0 %7671
      %7673 = vrot.lane.b32.xlu0 %v6708, 32
      %v7674 = vpop.permute.xlu0 %7673
      %7675 = vrot.lane.b32.xlu0 %v6709, 32
      %v7676 = vpop.permute.xlu0 %7675
      %7677 = vrot.lane.b32.xlu0 %v6710, 32
      %v7678 = vpop.permute.xlu0 %7677
      %7679 = vrot.lane.b32.xlu0 %v6711, 32
      %v7680 = vpop.permute.xlu0 %7679
      %7681 = vrot.lane.b32.xlu0 %v6712, 32
      %v7682 = vpop.permute.xlu0 %7681
      %7683 = vrot.lane.b32.xlu0 %v6713, 32
      %v7684 = vpop.permute.xlu0 %7683
      %7685 = vrot.lane.b32.xlu0 %v6714, 32
      %v7686 = vpop.permute.xlu0 %7685
      %7687 = vrot.lane.b32.xlu0 %v6715, 32
      %v7688 = vpop.permute.xlu0 %7687
      %7689 = vrot.lane.b32.xlu0 %v6716, 32
      %v7690 = vpop.permute.xlu0 %7689
      %7691 = vrot.lane.b32.xlu0 %v6717, 32
      %v7692 = vpop.permute.xlu0 %7691
      %7693 = vrot.lane.b32.xlu0 %v6718, 32
      %v7694 = vpop.permute.xlu0 %7693
      %7695 = vrot.lane.b32.xlu0 %v6719, 32
      %v7696 = vpop.permute.xlu0 %7695
      %7697 = vrot.lane.b32.xlu0 %v6720, 32
      %v7698 = vpop.permute.xlu0 %7697
      %7699 = vrot.lane.b32.xlu0 %v6721, 32
      %v7700 = vpop.permute.xlu0 %7699
      %7701 = vrot.lane.b32.xlu0 %v6722, 32
      %v7702 = vpop.permute.xlu0 %7701
      %7703 = vrot.lane.b32.xlu0 %v6723, 32
      %v7704 = vpop.permute.xlu0 %7703
      %7705 = vrot.lane.b32.xlu0 %v6724, 32
      %v7706 = vpop.permute.xlu0 %7705
      %7707 = vrot.lane.b32.xlu0 %v6725, 32
      %v7708 = vpop.permute.xlu0 %7707
      %7709 = vrot.lane.b32.xlu0 %v6726, 32
      %v7710 = vpop.permute.xlu0 %7709
      %7711 = vrot.lane.b32.xlu0 %v6727, 32
      %v7712 = vpop.permute.xlu0 %7711
      %7713 = vrot.lane.b32.xlu0 %v6728, 32
      %v7714 = vpop.permute.xlu0 %7713
      %7715 = vrot.lane.b32.xlu0 %v6729, 32
      %v7716 = vpop.permute.xlu0 %7715
      %7717 = vrot.lane.b32.xlu0 %v6730, 32
      %v7718 = vpop.permute.xlu0 %7717
      %7719 = vrot.lane.b32.xlu0 %v6731, 32
      %v7720 = vpop.permute.xlu0 %7719
      %7721 = vrot.lane.b32.xlu0 %v6732, 32
      %v7722 = vpop.permute.xlu0 %7721
      %7723 = vrot.lane.b32.xlu0 %v6733, 32
      %v7724 = vpop.permute.xlu0 %7723
      %7725 = vrot.lane.b32.xlu0 %v6734, 32
      %v7726 = vpop.permute.xlu0 %7725
      %v7759 = vsel %vm602, %v6447, %v6768
      %v7760 = vsel %vm602, %v6448, %v6770
      %v7761 = vsel %vm602, %v6449, %v6772
      %v7762 = vsel %vm602, %v6450, %v6774
      %v7763 = vsel %vm602, %v6451, %v6776
      %v7764 = vsel %vm602, %v6452, %v6778
      %v7765 = vsel %vm602, %v6453, %v6780
      %v7766 = vsel %vm602, %v6454, %v6782
      %v7767 = vsel %vm602, %v6455, %v6784
      %v7768 = vsel %vm602, %v6456, %v6786
      %v7769 = vsel %vm602, %v6457, %v6788
      %v7770 = vsel %vm602, %v6458, %v6790
      %v7771 = vsel %vm602, %v6459, %v6792
      %v7772 = vsel %vm602, %v6460, %v6794
      %v7773 = vsel %vm602, %v6461, %v6796
      %v7774 = vsel %vm602, %v6462, %v6798
      %v7775 = vsel %vm602, %v6463, %v6800
      %v7776 = vsel %vm602, %v6464, %v6802
      %v7777 = vsel %vm602, %v6465, %v6804
      %v7778 = vsel %vm602, %v6466, %v6806
      %v7779 = vsel %vm602, %v6467, %v6808
      %v7780 = vsel %vm602, %v6468, %v6810
      %v7781 = vsel %vm602, %v6469, %v6812
      %v7782 = vsel %vm602, %v6470, %v6814
      %v7783 = vsel %vm602, %v6471, %v6816
      %v7784 = vsel %vm602, %v6472, %v6818
      %v7785 = vsel %vm602, %v6473, %v6820
      %v7786 = vsel %vm602, %v6474, %v6822
      %v7787 = vsel %vm602, %v6475, %v6824
      %v7788 = vsel %vm602, %v6476, %v6826
      %v7789 = vsel %vm602, %v6477, %v6828
      %v7790 = vsel %vm602, %v6478, %v6830
      %v7791 = vsel %vm658, %v7759, %v6896
      %v7792 = vsel %vm658, %v7760, %v6898
      %v7793 = vsel %vm658, %v7761, %v6900
      %v7794 = vsel %vm658, %v7762, %v6902
      %v7795 = vsel %vm658, %v7763, %v6904
      %v7796 = vsel %vm658, %v7764, %v6906
      %v7797 = vsel %vm658, %v7765, %v6908
      %v7798 = vsel %vm658, %v7766, %v6910
      %v7799 = vsel %vm658, %v7767, %v6912
      %v7800 = vsel %vm658, %v7768, %v6914
      %v7801 = vsel %vm658, %v7769, %v6916
      %v7802 = vsel %vm658, %v7770, %v6918
      %v7803 = vsel %vm658, %v7771, %v6920
      %v7804 = vsel %vm658, %v7772, %v6922
      %v7805 = vsel %vm658, %v7773, %v6924
      %v7806 = vsel %vm658, %v7774, %v6926
      %v7807 = vsel %vm658, %v7775, %v6928
      %v7808 = vsel %vm658, %v7776, %v6930
      %v7809 = vsel %vm658, %v7777, %v6932
      %v7810 = vsel %vm658, %v7778, %v6934
      %v7811 = vsel %vm658, %v7779, %v6936
      %v7812 = vsel %vm658, %v7780, %v6938
      %v7813 = vsel %vm658, %v7781, %v6940
      %v7814 = vsel %vm658, %v7782, %v6942
      %v7815 = vsel %vm658, %v7783, %v6944
      %v7816 = vsel %vm658, %v7784, %v6946
      %v7817 = vsel %vm658, %v7785, %v6948
      %v7818 = vsel %vm658, %v7786, %v6950
      %v7819 = vsel %vm658, %v7787, %v6952
      %v7820 = vsel %vm658, %v7788, %v6954
      %v7821 = vsel %vm658, %v7789, %v6956
      %v7822 = vsel %vm658, %v7790, %v6958
      %v7823 = vsel %vm2122, %v7791, %v7024
      %v7824 = vsel %vm2122, %v7792, %v7026
      %v7825 = vsel %vm2122, %v7793, %v7028
      %v7826 = vsel %vm2122, %v7794, %v7030
      %v7827 = vsel %vm2122, %v7795, %v7032
      %v7828 = vsel %vm2122, %v7796, %v7034
      %v7829 = vsel %vm2122, %v7797, %v7036
      %v7830 = vsel %vm2122, %v7798, %v7038
      %v7831 = vsel %vm2122, %v7799, %v7040
      %v7832 = vsel %vm2122, %v7800, %v7042
      %v7833 = vsel %vm2122, %v7801, %v7044
      %v7834 = vsel %vm2122, %v7802, %v7046
      %v7835 = vsel %vm2122, %v7803, %v7048
      %v7836 = vsel %vm2122, %v7804, %v7050
      %v7837 = vsel %vm2122, %v7805, %v7052
      %v7838 = vsel %vm2122, %v7806, %v7054
      %v7839 = vsel %vm2122, %v7807, %v7056
      %v7840 = vsel %vm2122, %v7808, %v7058
      %v7841 = vsel %vm2122, %v7809, %v7060
      %v7842 = vsel %vm2122, %v7810, %v7062
      %v7843 = vsel %vm2122, %v7811, %v7064
      %v7844 = vsel %vm2122, %v7812, %v7066
      %v7845 = vsel %vm2122, %v7813, %v7068
      %v7846 = vsel %vm2122, %v7814, %v7070
      %v7847 = vsel %vm2122, %v7815, %v7072
      %v7848 = vsel %vm2122, %v7816, %v7074
      %v7849 = vsel %vm2122, %v7817, %v7076
      %v7850 = vsel %vm2122, %v7818, %v7078
      %v7851 = vsel %vm2122, %v7819, %v7080
      %v7852 = vsel %vm2122, %v7820, %v7082
      %v7853 = vsel %vm2122, %v7821, %v7084
      %v7854 = vsel %vm2122, %v7822, %v7086
      %v7855 = vsel %vm2155, %v7823, %v7152
      %v7856 = vsel %vm2155, %v7824, %v7154
      %v7857 = vsel %vm2155, %v7825, %v7156
      %v7858 = vsel %vm2155, %v7826, %v7158
      %v7859 = vsel %vm2155, %v7827, %v7160
      %v7860 = vsel %vm2155, %v7828, %v7162
      %v7861 = vsel %vm2155, %v7829, %v7164
      %v7862 = vsel %vm2155, %v7830, %v7166
      %v7863 = vsel %vm2155, %v7831, %v7168
      %v7864 = vsel %vm2155, %v7832, %v7170
      %v7865 = vsel %vm2155, %v7833, %v7172
      %v7866 = vsel %vm2155, %v7834, %v7174
      %v7867 = vsel %vm2155, %v7835, %v7176
      %v7868 = vsel %vm2155, %v7836, %v7178
      %v7869 = vsel %vm2155, %v7837, %v7180
      %v7870 = vsel %vm2155, %v7838, %v7182
      %v7871 = vsel %vm2155, %v7839, %v7184
      %v7872 = vsel %vm2155, %v7840, %v7186
      %v7873 = vsel %vm2155, %v7841, %v7188
      %v7874 = vsel %vm2155, %v7842, %v7190
      %v7875 = vsel %vm2155, %v7843, %v7192
      %v7876 = vsel %vm2155, %v7844, %v7194
      %v7877 = vsel %vm2155, %v7845, %v7196
      %v7878 = vsel %vm2155, %v7846, %v7198
      %v7879 = vsel %vm2155, %v7847, %v7200
      %v7880 = vsel %vm2155, %v7848, %v7202
      %v7881 = vsel %vm2155, %v7849, %v7204
      %v7882 = vsel %vm2155, %v7850, %v7206
      %v7883 = vsel %vm2155, %v7851, %v7208
      %v7884 = vsel %vm2155, %v7852, %v7210
      %v7885 = vsel %vm2155, %v7853, %v7212
      %v7886 = vsel %vm2155, %v7854, %v7214
      %v7887 = vsel %vm2188, %v7855, %v7280
      %v7888 = vsel %vm2188, %v7856, %v7282
      %v7889 = vsel %vm2188, %v7857, %v7284
      %v7890 = vsel %vm2188, %v7858, %v7286
      %v7891 = vsel %vm2188, %v7859, %v7288
      %v7892 = vsel %vm2188, %v7860, %v7290
      %v7893 = vsel %vm2188, %v7861, %v7292
      %v7894 = vsel %vm2188, %v7862, %v7294
      %v7895 = vsel %vm2188, %v7863, %v7296
      %v7896 = vsel %vm2188, %v7864, %v7298
      %v7897 = vsel %vm2188, %v7865, %v7300
      %v7898 = vsel %vm2188, %v7866, %v7302
      %v7899 = vsel %vm2188, %v7867, %v7304
      %v7900 = vsel %vm2188, %v7868, %v7306
      %v7901 = vsel %vm2188, %v7869, %v7308
      %v7902 = vsel %vm2188, %v7870, %v7310
      %v7903 = vsel %vm2188, %v7871, %v7312
      %v7904 = vsel %vm2188, %v7872, %v7314
      %v7905 = vsel %vm2188, %v7873, %v7316
      %v7906 = vsel %vm2188, %v7874, %v7318
      %v7907 = vsel %vm2188, %v7875, %v7320
      %v7908 = vsel %vm2188, %v7876, %v7322
      %v7909 = vsel %vm2188, %v7877, %v7324
      %v7910 = vsel %vm2188, %v7878, %v7326
      %v7911 = vsel %vm2188, %v7879, %v7328
      %v7912 = vsel %vm2188, %v7880, %v7330
      %v7913 = vsel %vm2188, %v7881, %v7332
      %v7914 = vsel %vm2188, %v7882, %v7334
      %v7915 = vsel %vm2188, %v7883, %v7336
      %v7916 = vsel %vm2188, %v7884, %v7338
      %v7917 = vsel %vm2188, %v7885, %v7340
      %v7918 = vsel %vm2188, %v7886, %v7342
      %v7919 = vsel %vm2221, %v7887, %v7408
      %v7920 = vsel %vm2221, %v7888, %v7410
      %v7921 = vsel %vm2221, %v7889, %v7412
      %v7922 = vsel %vm2221, %v7890, %v7414
      %v7923 = vsel %vm2221, %v7891, %v7416
      %v7924 = vsel %vm2221, %v7892, %v7418
      %v7925 = vsel %vm2221, %v7893, %v7420
      %v7926 = vsel %vm2221, %v7894, %v7422
      %v7927 = vsel %vm2221, %v7895, %v7424
      %v7928 = vsel %vm2221, %v7896, %v7426
      %v7929 = vsel %vm2221, %v7897, %v7428
      %v7930 = vsel %vm2221, %v7898, %v7430
      %v7931 = vsel %vm2221, %v7899, %v7432
      %v7932 = vsel %vm2221, %v7900, %v7434
      %v7933 = vsel %vm2221, %v7901, %v7436
      %v7934 = vsel %vm2221, %v7902, %v7438
      %v7935 = vsel %vm2221, %v7903, %v7440
      %v7936 = vsel %vm2221, %v7904, %v7442
      %v7937 = vsel %vm2221, %v7905, %v7444
      %v7938 = vsel %vm2221, %v7906, %v7446
      %v7939 = vsel %vm2221, %v7907, %v7448
      %v7940 = vsel %vm2221, %v7908, %v7450
      %v7941 = vsel %vm2221, %v7909, %v7452
      %v7942 = vsel %vm2221, %v7910, %v7454
      %v7943 = vsel %vm2221, %v7911, %v7456
      %v7944 = vsel %vm2221, %v7912, %v7458
      %v7945 = vsel %vm2221, %v7913, %v7460
      %v7946 = vsel %vm2221, %v7914, %v7462
      %v7947 = vsel %vm2221, %v7915, %v7464
      %v7948 = vsel %vm2221, %v7916, %v7466
      %v7949 = vsel %vm2221, %v7917, %v7468
      %v7950 = vsel %vm2221, %v7918, %v7470
      %v7951 = vsel %vm2254, %v7919, %v7536
      %v7952 = vsel %vm2254, %v7920, %v7538
      %v7953 = vsel %vm2254, %v7921, %v7540
      %v7954 = vsel %vm2254, %v7922, %v7542
      %v7955 = vsel %vm2254, %v7923, %v7544
      %v7956 = vsel %vm2254, %v7924, %v7546
      %v7957 = vsel %vm2254, %v7925, %v7548
      %v7958 = vsel %vm2254, %v7926, %v7550
      %v7959 = vsel %vm2254, %v7927, %v7552
      %v7960 = vsel %vm2254, %v7928, %v7554
      %v7961 = vsel %vm2254, %v7929, %v7556
      %v7962 = vsel %vm2254, %v7930, %v7558
      %v7963 = vsel %vm2254, %v7931, %v7560
      %v7964 = vsel %vm2254, %v7932, %v7562
      %v7965 = vsel %vm2254, %v7933, %v7564
      %v7966 = vsel %vm2254, %v7934, %v7566
      %v7967 = vsel %vm2254, %v7935, %v7568
      %v7968 = vsel %vm2254, %v7936, %v7570
      %v7969 = vsel %vm2254, %v7937, %v7572
      %v7970 = vsel %vm2254, %v7938, %v7574
      %v7971 = vsel %vm2254, %v7939, %v7576
      %v7972 = vsel %vm2254, %v7940, %v7578
      %v7973 = vsel %vm2254, %v7941, %v7580
      %v7974 = vsel %vm2254, %v7942, %v7582
      %v7975 = vsel %vm2254, %v7943, %v7584
      %v7976 = vsel %vm2254, %v7944, %v7586
      %v7977 = vsel %vm2254, %v7945, %v7588
      %v7978 = vsel %vm2254, %v7946, %v7590
      %v7979 = vsel %vm2254, %v7947, %v7592
      %v7980 = vsel %vm2254, %v7948, %v7594
      %v7981 = vsel %vm2254, %v7949, %v7596
      %v7982 = vsel %vm2254, %v7950, %v7598
      %v7983 = vsel %vm2287, %v7951, %v7664
      %v7984 = vsel %vm2287, %v7952, %v7666
      %v7985 = vsel %vm2287, %v7953, %v7668
      %v7986 = vsel %vm2287, %v7954, %v7670
      %v7987 = vsel %vm2287, %v7955, %v7672
      %v7988 = vsel %vm2287, %v7956, %v7674
      %v7989 = vsel %vm2287, %v7957, %v7676
      %v7990 = vsel %vm2287, %v7958, %v7678
      %v7991 = vsel %vm2287, %v7959, %v7680
      %v7992 = vsel %vm2287, %v7960, %v7682
      %v7993 = vsel %vm2287, %v7961, %v7684
      %v7994 = vsel %vm2287, %v7962, %v7686
      %v7995 = vsel %vm2287, %v7963, %v7688
      %v7996 = vsel %vm2287, %v7964, %v7690
      %v7997 = vsel %vm2287, %v7965, %v7692
      %v7998 = vsel %vm2287, %v7966, %v7694
      %v7999 = vsel %vm2287, %v7967, %v7696
      %v8000 = vsel %vm2287, %v7968, %v7698
      %v8001 = vsel %vm2287, %v7969, %v7700
      %v8002 = vsel %vm2287, %v7970, %v7702
      %v8003 = vsel %vm2287, %v7971, %v7704
      %v8004 = vsel %vm2287, %v7972, %v7706
      %v8005 = vsel %vm2287, %v7973, %v7708
      %v8006 = vsel %vm2287, %v7974, %v7710
      %v8007 = vsel %vm2287, %v7975, %v7712
      %v8008 = vsel %vm2287, %v7976, %v7714
      %v8009 = vsel %vm2287, %v7977, %v7716
      %v8010 = vsel %vm2287, %v7978, %v7718
      %v8011 = vsel %vm2287, %v7979, %v7720
      %v8012 = vsel %vm2287, %v7980, %v7722
      %v8013 = vsel %vm2287, %v7981, %v7724
      %v8014 = vsel %vm2287, %v7982, %v7726
      %v8015 = vpack.c.bf16 %v7984, %v7983
      %v8016 = vpack.c.bf16 %v7986, %v7985
      %v8017 = vpack.c.bf16 %v7988, %v7987
      %v8018 = vpack.c.bf16 %v7990, %v7989
      %v8019 = vpack.c.bf16 %v7992, %v7991
      %v8020 = vpack.c.bf16 %v7994, %v7993
      %v8021 = vpack.c.bf16 %v7996, %v7995
      %v8022 = vpack.c.bf16 %v7998, %v7997
      %v8023 = vpack.c.bf16 %v8000, %v7999
      %v8024 = vpack.c.bf16 %v8002, %v8001
      %v8025 = vpack.c.bf16 %v8004, %v8003
      %v8026 = vpack.c.bf16 %v8006, %v8005
      %v8027 = vpack.c.bf16 %v8008, %v8007
      %v8028 = vpack.c.bf16 %v8010, %v8009
      %v8029 = vpack.c.bf16 %v8012, %v8011
      %v8030 = vpack.c.bf16 %v8014, %v8013
      %v8031 = vld [vmem:[%s7] sm:$0xf]
      %v8032 = vld [vmem:[%s7 + $0x4] sm:$0xf]
      %v8033 = vld [vmem:[%s7 + $0x8] sm:$0xf]
      %v8034 = vld [vmem:[%s7 + $0xc] sm:$0xf]
      %v8035 = vld [vmem:[%s7 + $0x10] sm:$0x3]
      %v8036 = vld [vmem:[%s8] sm:$0x1]
      %v8038 = vlaneseq
      %v8039 = vshrl.u32 %v8038, 7
      %v8040 = vsub.s32 0, %v8039
      %v8041 = vrot.slane %v8036, %v8040
      %v8048 = vunpack.c.l.b16 %v8031
      %v8049 = vunpack.c.l.b16 %v8032
      %v8050 = vunpack.c.l.b16 %v8033
      %v8051 = vunpack.c.l.b16 %v8034
      %v8052 = vunpack.c.l.b16 %v8035
      %v8053 = vpack.c.b16 %v8049, %v8048
      %v8054 = vpack.c.b16 %v8051, %v8050
      %v8055 = vpack.c.b16 %v8052, %v8052
      %v8059 = vsel %vm2363, %v8015, 0
      %v8062 = vsel %vm2363, %v8016, 0
      %v8065 = vsel %vm2363, %v8017, 0
      %v8068 = vsel %vm2363, %v8018, 0
      %v8071 = vsel %vm2363, %v8019, 0
      %v8074 = vsel %vm2363, %v8020, 0
      %v8077 = vsel %vm2363, %v8021, 0
      %v8080 = vsel %vm2363, %v8022, 0
      %v8083 = vsel %vm2363, %v8023, 0
      %v8086 = vsel %vm2363, %v8024, 0
      %v8089 = vsel %vm2363, %v8025, 0
      %v8092 = vsel %vm2363, %v8026, 0
      %v8095 = vsel %vm2363, %v8027, 0
      %v8098 = vsel %vm2363, %v8028, 0
      %v8101 = vsel %vm2363, %v8029, 0
      %v8104 = vsel %vm2363, %v8030, 0
      %v8107 = vsel %vm2412, %v8055, 0
      %8109 = vmatprep.subr.bf16.mxu0 0
      %8110 = vmatpush1.bf16.msra.mxu0 0
      %8111 = vmatprep.subr.bf16.mxu0 0
      %8112 = vmatpush1.bf16.msra.mxu0 0
      %8113 = vmatprep.subr.bf16.mxu0 0
      %8114 = vmatpush1.bf16.msra.mxu0 0
      %8115 = vmatprep.subr.bf16.mxu0 0
      %8116 = vmatpush1.bf16.msra.mxu0 0
      %8117 = vmatprep.subr.bf16.mxu0 0
      %8118 = vmatpush1.bf16.msra.mxu0 0
      %8119 = vmatprep.subr.bf16.mxu0 0
      %8120 = vmatpush1.bf16.msra.mxu0 %v8107
      %8121 = vmatprep.subr.bf16.mxu0 0
      %8122 = vmatpush1.bf16.msra.mxu0 %v8054
      %8123 = vmatprep.subr.bf16.mxu0 0
      %8124 = vmatpush1.bf16.msra.mxu0 %v8053
      %8125 = vmatprep.subr.bf16.mxu0 0
      %8126 = vmatpush2.bf16.msra.mxu0 0
      %8127 = vmatprep.subr.bf16.mxu0 0
      %8128 = vmatpush2.bf16.msra.mxu0 0
      %8129 = vmatprep.subr.bf16.mxu0 0
      %8130 = vmatpush2.bf16.msra.mxu0 0
      %8131 = vmatprep.subr.bf16.mxu0 0
      %8132 = vmatpush2.bf16.msra.mxu0 0
      %8133 = vmatprep.subr.bf16.mxu0 0
      %8134 = vmatpush2.bf16.msra.mxu0 0
      %8135 = vmatprep.subr.bf16.mxu0 0
      %8136 = vmatpush2.bf16.msra.mxu0 0
      %8137 = vmatprep.subr.bf16.mxu0 0
      %8138 = vmatpush2.bf16.msra.mxu0 0
      %8139 = vmatprep.subr.bf16.mxu0 0
      %8140 = vmatpush2.bf16.msra.mxu0 0
      %8141 = vmatprep.mubr.bf16.mxu0 0
      %8142 = vmatmul.mubr.bf16.gmra.mxu0 %v8059
      %v8143 = vpop.f32.mrf.mxu0
      %v8144 = vadd.f32 %v8041, %v8143
      %v8145 = vpop.f32.mrf.mxu0
      %v8146 = vpop.f32.mrf.mxu0
      %v8147 = vadd.f32 %v8041, %v8146
      %v8148 = vpop.f32.mrf.mxu0
      %8149 = vmatprep.mubr.bf16.mxu0 0
      %8150 = vmatmul.mubr.bf16.gmra.mxu0 %v8062
      %v8151 = vpop.f32.mrf.mxu0
      %v8152 = vadd.f32 %v8041, %v8151
      %v8153 = vpop.f32.mrf.mxu0
      %v8154 = vpop.f32.mrf.mxu0
      %v8155 = vadd.f32 %v8041, %v8154
      %v8156 = vpop.f32.mrf.mxu0
      %8157 = vmatprep.mubr.bf16.mxu0 0
      %8158 = vmatmul.mubr.bf16.gmra.mxu0 %v8065
      %v8159 = vpop.f32.mrf.mxu0
      %v8160 = vadd.f32 %v8041, %v8159
      %v8161 = vpop.f32.mrf.mxu0
      %v8162 = vpop.f32.mrf.mxu0
      %v8163 = vadd.f32 %v8041, %v8162
      %v8164 = vpop.f32.mrf.mxu0
      %8165 = vmatprep.mubr.bf16.mxu0 0
      %8166 = vmatmul.mubr.bf16.gmra.mxu0 %v8068
      %v8167 = vpop.f32.mrf.mxu0
      %v8168 = vadd.f32 %v8041, %v8167
      %v8169 = vpop.f32.mrf.mxu0
      %v8170 = vpop.f32.mrf.mxu0
      %v8171 = vadd.f32 %v8041, %v8170
      %v8172 = vpop.f32.mrf.mxu0
      %8173 = vmatprep.mubr.bf16.mxu0 0
      %8174 = vmatmul.mubr.bf16.gmra.mxu0 %v8071
      %v8175 = vpop.f32.mrf.mxu0
      %v8176 = vadd.f32 %v8041, %v8175
      %v8177 = vpop.f32.mrf.mxu0
      %v8178 = vpop.f32.mrf.mxu0
      %v8179 = vadd.f32 %v8041, %v8178
      %v8180 = vpop.f32.mrf.mxu0
      %8181 = vmatprep.mubr.bf16.mxu0 0
      %8182 = vmatmul.mubr.bf16.gmra.mxu0 %v8074
      %v8183 = vpop.f32.mrf.mxu0
      %v8184 = vadd.f32 %v8041, %v8183
      %v8185 = vpop.f32.mrf.mxu0
      %v8186 = vpop.f32.mrf.mxu0
      %v8187 = vadd.f32 %v8041, %v8186
      %v8188 = vpop.f32.mrf.mxu0
      %8189 = vmatprep.mubr.bf16.mxu0 0
      %8190 = vmatmul.mubr.bf16.gmra.mxu0 %v8077
      %v8191 = vpop.f32.mrf.mxu0
      %v8192 = vadd.f32 %v8041, %v8191
      %v8193 = vpop.f32.mrf.mxu0
      %v8194 = vpop.f32.mrf.mxu0
      %v8195 = vadd.f32 %v8041, %v8194
      %v8196 = vpop.f32.mrf.mxu0
      %8197 = vmatprep.mubr.bf16.mxu0 0
      %8198 = vmatmul.mubr.bf16.gmra.mxu0 %v8080
      %v8199 = vpop.f32.mrf.mxu0
      %v8200 = vadd.f32 %v8041, %v8199
      %v8201 = vpop.f32.mrf.mxu0
      %v8202 = vpop.f32.mrf.mxu0
      %v8203 = vadd.f32 %v8041, %v8202
      %v8204 = vpop.f32.mrf.mxu0
      %8205 = vmatprep.mubr.bf16.mxu0 0
      %8206 = vmatmul.mubr.bf16.gmra.mxu0 %v8083
      %v8207 = vpop.f32.mrf.mxu0
      %v8208 = vadd.f32 %v8041, %v8207
      %v8209 = vpop.f32.mrf.mxu0
      %v8210 = vpop.f32.mrf.mxu0
      %v8211 = vadd.f32 %v8041, %v8210
      %v8212 = vpop.f32.mrf.mxu0
      %8213 = vmatprep.mubr.bf16.mxu0 0
      %8214 = vmatmul.mubr.bf16.gmra.mxu0 %v8086
      %v8215 = vpop.f32.mrf.mxu0
      %v8216 = vadd.f32 %v8041, %v8215
      %v8217 = vpop.f32.mrf.mxu0
      %v8218 = vpop.f32.mrf.mxu0
      %v8219 = vadd.f32 %v8041, %v8218
      %v8220 = vpop.f32.mrf.mxu0
      %8221 = vmatprep.mubr.bf16.mxu0 0
      %8222 = vmatmul.mubr.bf16.gmra.mxu0 %v8089
      %v8223 = vpop.f32.mrf.mxu0
      %v8224 = vadd.f32 %v8041, %v8223
      %v8225 = vpop.f32.mrf.mxu0
      %v8226 = vpop.f32.mrf.mxu0
      %v8227 = vadd.f32 %v8041, %v8226
      %v8228 = vpop.f32.mrf.mxu0
      %8229 = vmatprep.mubr.bf16.mxu0 0
      %8230 = vmatmul.mubr.bf16.gmra.mxu0 %v8092
      %v8231 = vpop.f32.mrf.mxu0
      %v8232 = vadd.f32 %v8041, %v8231
      %v8233 = vpop.f32.mrf.mxu0
      %v8234 = vpop.f32.mrf.mxu0
      %v8235 = vadd.f32 %v8041, %v8234
      %v8236 = vpop.f32.mrf.mxu0
      %8237 = vmatprep.mubr.bf16.mxu0 0
      %8238 = vmatmul.mubr.bf16.gmra.mxu0 %v8095
      %v8239 = vpop.f32.mrf.mxu0
      %v8240 = vadd.f32 %v8041, %v8239
      %v8241 = vpop.f32.mrf.mxu0
      %v8242 = vpop.f32.mrf.mxu0
      %v8243 = vadd.f32 %v8041, %v8242
      %v8244 = vpop.f32.mrf.mxu0
      %8245 = vmatprep.mubr.bf16.mxu0 0
      %8246 = vmatmul.mubr.bf16.gmra.mxu0 %v8098
      %v8247 = vpop.f32.mrf.mxu0
      %v8248 = vadd.f32 %v8041, %v8247
      %v8249 = vpop.f32.mrf.mxu0
      %v8250 = vpop.f32.mrf.mxu0
      %v8251 = vadd.f32 %v8041, %v8250
      %v8252 = vpop.f32.mrf.mxu0
      %8253 = vmatprep.mubr.bf16.mxu0 0
      %8254 = vmatmul.mubr.bf16.gmra.mxu0 %v8101
      %v8255 = vpop.f32.mrf.mxu0
      %v8256 = vadd.f32 %v8041, %v8255
      %v8257 = vpop.f32.mrf.mxu0
      %v8258 = vpop.f32.mrf.mxu0
      %v8259 = vadd.f32 %v8041, %v8258
      %v8260 = vpop.f32.mrf.mxu0
      %8261 = vmatprep.mubr.bf16.mxu0 0
      %8262 = vmatmul.mubr.bf16.gmra.mxu0 %v8104
      %v8263 = vpop.f32.mrf.mxu0
      %v8264 = vadd.f32 %v8041, %v8263
      %v8265 = vpop.f32.mrf.mxu0
      %v8266 = vpop.f32.mrf.mxu0
      %v8267 = vadd.f32 %v8041, %v8266
      %v8268 = vpop.f32.mrf.mxu0
      %8269 = vdwg.mxu0
      %v8270 = vadd.f32 %v8144, %v4496
      %v8271 = vadd.f32 %v8147, %v4497
      %v8272 = vadd.f32 %v8152, %v4498
      %v8273 = vadd.f32 %v8155, %v4499
      %v8274 = vadd.f32 %v8160, %v4500
      %v8275 = vadd.f32 %v8163, %v4501
      %v8276 = vadd.f32 %v8168, %v4502
      %v8277 = vadd.f32 %v8171, %v4503
      %v8278 = vadd.f32 %v8176, %v4504
      %v8279 = vadd.f32 %v8179, %v4505
      %v8280 = vadd.f32 %v8184, %v4506
      %v8281 = vadd.f32 %v8187, %v4507
      %v8282 = vadd.f32 %v8192, %v4508
      %v8283 = vadd.f32 %v8195, %v4509
      %v8284 = vadd.f32 %v8200, %v4510
      %v8285 = vadd.f32 %v8203, %v4511
      %v8286 = vadd.f32 %v8208, %v4512
      %v8287 = vadd.f32 %v8211, %v4513
      %v8288 = vadd.f32 %v8216, %v4514
      %v8289 = vadd.f32 %v8219, %v4515
      %v8290 = vadd.f32 %v8224, %v4516
      %v8291 = vadd.f32 %v8227, %v4517
      %v8292 = vadd.f32 %v8232, %v4518
      %v8293 = vadd.f32 %v8235, %v4519
      %v8294 = vadd.f32 %v8240, %v4520
      %v8295 = vadd.f32 %v8243, %v4521
      %v8296 = vadd.f32 %v8248, %v4522
      %v8297 = vadd.f32 %v8251, %v4523
      %v8298 = vadd.f32 %v8256, %v4524
      %v8299 = vadd.f32 %v8259, %v4525
      %v8300 = vadd.f32 %v8264, %v4526
      %v8301 = vadd.f32 %v8267, %v4527
      %v8302 = vmax.f32 %v8270, 0.0
      %v8303 = vmax.f32 %v8271, 0.0
      %v8304 = vmax.f32 %v8272, 0.0
      %v8305 = vmax.f32 %v8273, 0.0
      %v8306 = vmax.f32 %v8274, 0.0
      %v8307 = vmax.f32 %v8275, 0.0
      %v8308 = vmax.f32 %v8276, 0.0
      %v8309 = vmax.f32 %v8277, 0.0
      %v8310 = vmax.f32 %v8278, 0.0
      %v8311 = vmax.f32 %v8279, 0.0
      %v8312 = vmax.f32 %v8280, 0.0
      %v8313 = vmax.f32 %v8281, 0.0
      %v8314 = vmax.f32 %v8282, 0.0
      %v8315 = vmax.f32 %v8283, 0.0
      %v8316 = vmax.f32 %v8284, 0.0
      %v8317 = vmax.f32 %v8285, 0.0
      %v8318 = vmax.f32 %v8286, 0.0
      %v8319 = vmax.f32 %v8287, 0.0
      %v8320 = vmax.f32 %v8288, 0.0
      %v8321 = vmax.f32 %v8289, 0.0
      %v8322 = vmax.f32 %v8290, 0.0
      %v8323 = vmax.f32 %v8291, 0.0
      %v8324 = vmax.f32 %v8292, 0.0
      %v8325 = vmax.f32 %v8293, 0.0
      %v8326 = vmax.f32 %v8294, 0.0
      %v8327 = vmax.f32 %v8295, 0.0
      %v8328 = vmax.f32 %v8296, 0.0
      %v8329 = vmax.f32 %v8297, 0.0
      %v8330 = vmax.f32 %v8298, 0.0
      %v8331 = vmax.f32 %v8299, 0.0
      %v8332 = vmax.f32 %v8300, 0.0
      %v8333 = vmax.f32 %v8301, 0.0
      %8334 = vst.msk [vmem:[%s712 + $0x1] sm:$0xff] %vm602, %v8302
      %8335 = vst.msk [vmem:[%s712 + $0x9] sm:$0xff] %vm602, %v8303
      %8336 = vst.msk [vmem:[%s712 + $0x19] sm:$0xff] %vm602, %v8304
      %8337 = vst.msk [vmem:[%s712 + $0x21] sm:$0xff] %vm602, %v8305
      %8338 = vst.msk [vmem:[%s712 + $0x31] sm:$0xff] %vm602, %v8306
      %8339 = vst.msk [vmem:[%s712 + $0x39] sm:$0xff] %vm602, %v8307
      %8340 = vst.msk [vmem:[%s712 + $0x49] sm:$0xff] %vm602, %v8308
      %8341 = vst.msk [vmem:[%s712 + $0x51] sm:$0xff] %vm602, %v8309
      %8342 = vst.msk [vmem:[%s712 + $0x61] sm:$0xff] %vm602, %v8310
      %8343 = vst.msk [vmem:[%s712 + $0x69] sm:$0xff] %vm602, %v8311
      %8344 = vst.msk [vmem:[%s712 + $0x79] sm:$0xff] %vm602, %v8312
      %8345 = vst.msk [vmem:[%s712 + $0x81] sm:$0xff] %vm602, %v8313
      %8346 = vst.msk [vmem:[%s712 + $0x91] sm:$0xff] %vm602, %v8314
      %8347 = vst.msk [vmem:[%s712 + $0x99] sm:$0xff] %vm602, %v8315
      %8348 = vst.msk [vmem:[%s712 + $0xa9] sm:$0xff] %vm602, %v8316
      %8349 = vst.msk [vmem:[%s712 + $0xb1] sm:$0xff] %vm602, %v8317
      %8350 = vst.msk [vmem:[%s712 + $0xc1] sm:$0xff] %vm602, %v8318
      %8351 = vst.msk [vmem:[%s712 + $0xc9] sm:$0xff] %vm602, %v8319
      %8352 = vst.msk [vmem:[%s712 + $0xd9] sm:$0xff] %vm602, %v8320
      %8353 = vst.msk [vmem:[%s712 + $0xe1] sm:$0xff] %vm602, %v8321
      %8354 = vst.msk [vmem:[%s712 + $0xf1] sm:$0xff] %vm602, %v8322
      %8355 = vst.msk [vmem:[%s712 + $0xf9] sm:$0xff] %vm602, %v8323
      %8356 = vst.msk [vmem:[%s712 + $0x109] sm:$0xff] %vm602, %v8324
      %8357 = vst.msk [vmem:[%s712 + $0x111] sm:$0xff] %vm602, %v8325
      %8358 = vst.msk [vmem:[%s712 + $0x121] sm:$0xff] %vm602, %v8326
      %8359 = vst.msk [vmem:[%s712 + $0x129] sm:$0xff] %vm602, %v8327
      %8360 = vst.msk [vmem:[%s712 + $0x139] sm:$0xff] %vm602, %v8328
      %8361 = vst.msk [vmem:[%s712 + $0x141] sm:$0xff] %vm602, %v8329
      %8362 = vst.msk [vmem:[%s712 + $0x151] sm:$0xff] %vm602, %v8330
      %8363 = vst.msk [vmem:[%s712 + $0x159] sm:$0xff] %vm602, %v8331
      %8364 = vst.msk [vmem:[%s712 + $0x169] sm:$0xff] %vm602, %v8332
      %8365 = vst.msk [vmem:[%s712 + $0x171] sm:$0xff] %vm602, %v8333
      %v8366 = vld [vmem:[#allocation2] ss:$2 sm:$0xff]
      %s8367 = scalar_lea.vmem [#allocation2], 48
      %v8368 = vld [vmem:[%s8367] ss:$2 sm:$0xff]
      %s8369 = scalar_lea.vmem [#allocation2], 96
      %v8370 = vld [vmem:[%s8369] ss:$2 sm:$0xff]
      %s8371 = scalar_lea.vmem [#allocation2], 144
      %v8372 = vld [vmem:[%s8371] ss:$2 sm:$0xff]
      %s8373 = scalar_lea.vmem [#allocation2], 192
      %v8374 = vld [vmem:[%s8373] ss:$2 sm:$0xff]
      %s8375 = scalar_lea.vmem [#allocation2], 240
      %v8376 = vld [vmem:[%s8375] ss:$2 sm:$0xff]
      %s8377 = scalar_lea.vmem [#allocation2], 288
      %v8378 = vld [vmem:[%s8377] ss:$2 sm:$0xff]
      %s8379 = scalar_lea.vmem [#allocation2], 336
      %v8380 = vld [vmem:[%s8379] ss:$2 sm:$0xff]
      %s8381 = scalar_lea.vmem [#allocation2], 1
      %v8382 = vld [vmem:[%s8381] ss:$2 sm:$0xff]
      %s8383 = scalar_lea.vmem [#allocation2], 49
      %v8384 = vld [vmem:[%s8383] ss:$2 sm:$0xff]
      %s8385 = scalar_lea.vmem [#allocation2], 97
      %v8386 = vld [vmem:[%s8385] ss:$2 sm:$0xff]
      %s8387 = scalar_lea.vmem [#allocation2], 145
      %v8388 = vld [vmem:[%s8387] ss:$2 sm:$0xff]
      %s8389 = scalar_lea.vmem [#allocation2], 193
      %v8390 = vld [vmem:[%s8389] ss:$2 sm:$0xff]
      %s8391 = scalar_lea.vmem [#allocation2], 241
      %v8392 = vld [vmem:[%s8391] ss:$2 sm:$0xff]
      %s8393 = scalar_lea.vmem [#allocation2], 289
      %v8394 = vld [vmem:[%s8393] ss:$2 sm:$0xff]
      %s8395 = scalar_lea.vmem [#allocation2], 337
      %v8396 = vld [vmem:[%s8395] ss:$2 sm:$0xff]
      %s8397 = scalar_lea.vmem [#allocation2], 2
      %v8398 = vld [vmem:[%s8397] ss:$2 sm:$0xff]
      %s8399 = scalar_lea.vmem [#allocation2], 50
      %v8400 = vld [vmem:[%s8399] ss:$2 sm:$0xff]
      %s8401 = scalar_lea.vmem [#allocation2], 98
      %v8402 = vld [vmem:[%s8401] ss:$2 sm:$0xff]
      %s8403 = scalar_lea.vmem [#allocation2], 146
      %v8404 = vld [vmem:[%s8403] ss:$2 sm:$0xff]
      %s8405 = scalar_lea.vmem [#allocation2], 194
      %v8406 = vld [vmem:[%s8405] ss:$2 sm:$0xff]
      %s8407 = scalar_lea.vmem [#allocation2], 242
      %v8408 = vld [vmem:[%s8407] ss:$2 sm:$0xff]
      %s8409 = scalar_lea.vmem [#allocation2], 290
      %v8410 = vld [vmem:[%s8409] ss:$2 sm:$0xff]
      %s8411 = scalar_lea.vmem [#allocation2], 338
      %v8412 = vld [vmem:[%s8411] ss:$2 sm:$0xff]
      %v8413 = vld [vmem:[%s712] ss:$2 sm:$0xff]
      %s8414 = scalar_lea.vmem %s712, 48 [#allocation2]
      %v8415 = vld [vmem:[%s8414] ss:$2 sm:$0xff]
      %s8416 = scalar_lea.vmem %s712, 96 [#allocation2]
      %v8417 = vld [vmem:[%s8416] ss:$2 sm:$0xff]
      %s8418 = scalar_lea.vmem %s712, 144 [#allocation2]
      %v8419 = vld [vmem:[%s8418] ss:$2 sm:$0xff]
      %s8420 = scalar_lea.vmem %s712, 192 [#allocation2]
      %v8421 = vld [vmem:[%s8420] ss:$2 sm:$0xff]
      %s8422 = scalar_lea.vmem %s712, 240 [#allocation2]
      %v8423 = vld [vmem:[%s8422] ss:$2 sm:$0xff]
      %s8424 = scalar_lea.vmem %s712, 288 [#allocation2]
      %v8425 = vld [vmem:[%s8424] ss:$2 sm:$0xff]
      %s8426 = scalar_lea.vmem %s712, 336 [#allocation2]
      %v8427 = vld [vmem:[%s8426] ss:$2 sm:$0xff]
      %s8428 = scalar_lea.vmem %s712, 1 [#allocation2]
      %v8429 = vld [vmem:[%s8428] ss:$2 sm:$0xff]
      %s8430 = scalar_lea.vmem %s712, 49 [#allocation2]
      %v8431 = vld [vmem:[%s8430] ss:$2 sm:$0xff]
      %s8432 = scalar_lea.vmem %s712, 97 [#allocation2]
      %v8433 = vld [vmem:[%s8432] ss:$2 sm:$0xff]
      %s8434 = scalar_lea.vmem %s712, 145 [#allocation2]
      %v8435 = vld [vmem:[%s8434] ss:$2 sm:$0xff]
      %s8436 = scalar_lea.vmem %s712, 193 [#allocation2]
      %v8437 = vld [vmem:[%s8436] ss:$2 sm:$0xff]
      %s8438 = scalar_lea.vmem %s712, 241 [#allocation2]
      %v8439 = vld [vmem:[%s8438] ss:$2 sm:$0xff]
      %s8440 = scalar_lea.vmem %s712, 289 [#allocation2]
      %v8441 = vld [vmem:[%s8440] ss:$2 sm:$0xff]
      %s8442 = scalar_lea.vmem %s712, 337 [#allocation2]
      %v8443 = vld [vmem:[%s8442] ss:$2 sm:$0xff]
      %s8444 = scalar_lea.vmem %s712, 2 [#allocation2]
      %v8445 = vld [vmem:[%s8444] ss:$2 sm:$0xff]
      %s8446 = scalar_lea.vmem %s712, 50 [#allocation2]
      %v8447 = vld [vmem:[%s8446] ss:$2 sm:$0xff]
      %s8448 = scalar_lea.vmem %s712, 98 [#allocation2]
      %v8449 = vld [vmem:[%s8448] ss:$2 sm:$0xff]
      %s8450 = scalar_lea.vmem %s712, 146 [#allocation2]
      %v8451 = vld [vmem:[%s8450] ss:$2 sm:$0xff]
      %s8452 = scalar_lea.vmem %s712, 194 [#allocation2]
      %v8453 = vld [vmem:[%s8452] ss:$2 sm:$0xff]
      %s8454 = scalar_lea.vmem %s712, 242 [#allocation2]
      %v8455 = vld [vmem:[%s8454] ss:$2 sm:$0xff]
      %s8456 = scalar_lea.vmem %s712, 290 [#allocation2]
      %v8457 = vld [vmem:[%s8456] ss:$2 sm:$0xff]
      %s8458 = scalar_lea.vmem %s712, 338 [#allocation2]
      %v8459 = vld [vmem:[%s8458] ss:$2 sm:$0xff]
      %v8460 = vld [vmem:[%s937] ss:$2 sm:$0xff]
      %s8461 = scalar_lea.vmem %s937, 48 [#allocation2]
      %v8462 = vld [vmem:[%s8461] ss:$2 sm:$0xff]
      %s8463 = scalar_lea.vmem %s937, 96 [#allocation2]
      %v8464 = vld [vmem:[%s8463] ss:$2 sm:$0xff]
      %s8465 = scalar_lea.vmem %s937, 144 [#allocation2]
      %v8466 = vld [vmem:[%s8465] ss:$2 sm:$0xff]
      %s8467 = scalar_lea.vmem %s937, 192 [#allocation2]
      %v8468 = vld [vmem:[%s8467] ss:$2 sm:$0xff]
      %s8469 = scalar_lea.vmem %s937, 240 [#allocation2]
      %v8470 = vld [vmem:[%s8469] ss:$2 sm:$0xff]
      %s8471 = scalar_lea.vmem %s937, 288 [#allocation2]
      %v8472 = vld [vmem:[%s8471] ss:$2 sm:$0xff]
      %s8473 = scalar_lea.vmem %s937, 336 [#allocation2]
      %v8474 = vld [vmem:[%s8473] ss:$2 sm:$0xff]
      %s8475 = scalar_lea.vmem %s937, 1 [#allocation2]
      %v8476 = vld [vmem:[%s8475] ss:$2 sm:$0xff]
      %s8477 = scalar_lea.vmem %s937, 49 [#allocation2]
      %v8478 = vld [vmem:[%s8477] ss:$2 sm:$0xff]
      %s8479 = scalar_lea.vmem %s937, 97 [#allocation2]
      %v8480 = vld [vmem:[%s8479] ss:$2 sm:$0xff]
      %s8481 = scalar_lea.vmem %s937, 145 [#allocation2]
      %v8482 = vld [vmem:[%s8481] ss:$2 sm:$0xff]
      %s8483 = scalar_lea.vmem %s937, 193 [#allocation2]
      %v8484 = vld [vmem:[%s8483] ss:$2 sm:$0xff]
      %s8485 = scalar_lea.vmem %s937, 241 [#allocation2]
      %v8486 = vld [vmem:[%s8485] ss:$2 sm:$0xff]
      %s8487 = scalar_lea.vmem %s937, 289 [#allocation2]
      %v8488 = vld [vmem:[%s8487] ss:$2 sm:$0xff]
      %s8489 = scalar_lea.vmem %s937, 337 [#allocation2]
      %v8490 = vld [vmem:[%s8489] ss:$2 sm:$0xff]
      %s8491 = scalar_lea.vmem %s937, 2 [#allocation2]
      %v8492 = vld [vmem:[%s8491] ss:$2 sm:$0xff]
      %s8493 = scalar_lea.vmem %s937, 50 [#allocation2]
      %v8494 = vld [vmem:[%s8493] ss:$2 sm:$0xff]
      %s8495 = scalar_lea.vmem %s937, 98 [#allocation2]
      %v8496 = vld [vmem:[%s8495] ss:$2 sm:$0xff]
      %s8497 = scalar_lea.vmem %s937, 146 [#allocation2]
      %v8498 = vld [vmem:[%s8497] ss:$2 sm:$0xff]
      %s8499 = scalar_lea.vmem %s937, 194 [#allocation2]
      %v8500 = vld [vmem:[%s8499] ss:$2 sm:$0xff]
      %s8501 = scalar_lea.vmem %s937, 242 [#allocation2]
      %v8502 = vld [vmem:[%s8501] ss:$2 sm:$0xff]
      %s8503 = scalar_lea.vmem %s937, 290 [#allocation2]
      %v8504 = vld [vmem:[%s8503] ss:$2 sm:$0xff]
      %s8505 = scalar_lea.vmem %s937, 338 [#allocation2]
      %v8506 = vld [vmem:[%s8505] ss:$2 sm:$0xff]
      %8515 = vrot.lane.b32.xlu0 %v8382, 4
      %v8516 = vpop.permute.xlu0 %8515
      %8517 = vrot.lane.b32.xlu0 %v8384, 4
      %v8518 = vpop.permute.xlu0 %8517
      %8519 = vrot.lane.b32.xlu0 %v8386, 4
      %v8520 = vpop.permute.xlu0 %8519
      %8521 = vrot.lane.b32.xlu0 %v8388, 4
      %v8522 = vpop.permute.xlu0 %8521
      %8523 = vrot.lane.b32.xlu0 %v8390, 4
      %v8524 = vpop.permute.xlu0 %8523
      %8525 = vrot.lane.b32.xlu0 %v8392, 4
      %v8526 = vpop.permute.xlu0 %8525
      %8527 = vrot.lane.b32.xlu0 %v8394, 4
      %v8528 = vpop.permute.xlu0 %8527
      %8529 = vrot.lane.b32.xlu0 %v8396, 4
      %v8530 = vpop.permute.xlu0 %8529
      %8547 = vrot.lane.b32.xlu0 %v8398, 8
      %v8548 = vpop.permute.xlu0 %8547
      %8549 = vrot.lane.b32.xlu0 %v8400, 8
      %v8550 = vpop.permute.xlu0 %8549
      %8551 = vrot.lane.b32.xlu0 %v8402, 8
      %v8552 = vpop.permute.xlu0 %8551
      %8553 = vrot.lane.b32.xlu0 %v8404, 8
      %v8554 = vpop.permute.xlu0 %8553
      %8555 = vrot.lane.b32.xlu0 %v8406, 8
      %v8556 = vpop.permute.xlu0 %8555
      %8557 = vrot.lane.b32.xlu0 %v8408, 8
      %v8558 = vpop.permute.xlu0 %8557
      %8559 = vrot.lane.b32.xlu0 %v8410, 8
      %v8560 = vpop.permute.xlu0 %8559
      %8561 = vrot.lane.b32.xlu0 %v8412, 8
      %v8562 = vpop.permute.xlu0 %8561
      %8579 = vrot.lane.b32.xlu0 %v8413, 12
      %v8580 = vpop.permute.xlu0 %8579
      %8581 = vrot.lane.b32.xlu0 %v8415, 12
      %v8582 = vpop.permute.xlu0 %8581
      %8583 = vrot.lane.b32.xlu0 %v8417, 12
      %v8584 = vpop.permute.xlu0 %8583
      %8585 = vrot.lane.b32.xlu0 %v8419, 12
      %v8586 = vpop.permute.xlu0 %8585
      %8587 = vrot.lane.b32.xlu0 %v8421, 12
      %v8588 = vpop.permute.xlu0 %8587
      %8589 = vrot.lane.b32.xlu0 %v8423, 12
      %v8590 = vpop.permute.xlu0 %8589
      %8591 = vrot.lane.b32.xlu0 %v8425, 12
      %v8592 = vpop.permute.xlu0 %8591
      %8593 = vrot.lane.b32.xlu0 %v8427, 12
      %v8594 = vpop.permute.xlu0 %8593
      %8611 = vrot.lane.b32.xlu0 %v8429, 16
      %v8612 = vpop.permute.xlu0 %8611
      %8613 = vrot.lane.b32.xlu0 %v8431, 16
      %v8614 = vpop.permute.xlu0 %8613
      %8615 = vrot.lane.b32.xlu0 %v8433, 16
      %v8616 = vpop.permute.xlu0 %8615
      %8617 = vrot.lane.b32.xlu0 %v8435, 16
      %v8618 = vpop.permute.xlu0 %8617
      %8619 = vrot.lane.b32.xlu0 %v8437, 16
      %v8620 = vpop.permute.xlu0 %8619
      %8621 = vrot.lane.b32.xlu0 %v8439, 16
      %v8622 = vpop.permute.xlu0 %8621
      %8623 = vrot.lane.b32.xlu0 %v8441, 16
      %v8624 = vpop.permute.xlu0 %8623
      %8625 = vrot.lane.b32.xlu0 %v8443, 16
      %v8626 = vpop.permute.xlu0 %8625
      %8643 = vrot.lane.b32.xlu0 %v8445, 20
      %v8644 = vpop.permute.xlu0 %8643
      %8645 = vrot.lane.b32.xlu0 %v8447, 20
      %v8646 = vpop.permute.xlu0 %8645
      %8647 = vrot.lane.b32.xlu0 %v8449, 20
      %v8648 = vpop.permute.xlu0 %8647
      %8649 = vrot.lane.b32.xlu0 %v8451, 20
      %v8650 = vpop.permute.xlu0 %8649
      %8651 = vrot.lane.b32.xlu0 %v8453, 20
      %v8652 = vpop.permute.xlu0 %8651
      %8653 = vrot.lane.b32.xlu0 %v8455, 20
      %v8654 = vpop.permute.xlu0 %8653
      %8655 = vrot.lane.b32.xlu0 %v8457, 20
      %v8656 = vpop.permute.xlu0 %8655
      %8657 = vrot.lane.b32.xlu0 %v8459, 20
      %v8658 = vpop.permute.xlu0 %8657
      %8675 = vrot.lane.b32.xlu0 %v8460, 24
      %v8676 = vpop.permute.xlu0 %8675
      %8677 = vrot.lane.b32.xlu0 %v8462, 24
      %v8678 = vpop.permute.xlu0 %8677
      %8679 = vrot.lane.b32.xlu0 %v8464, 24
      %v8680 = vpop.permute.xlu0 %8679
      %8681 = vrot.lane.b32.xlu0 %v8466, 24
      %v8682 = vpop.permute.xlu0 %8681
      %8683 = vrot.lane.b32.xlu0 %v8468, 24
      %v8684 = vpop.permute.xlu0 %8683
      %8685 = vrot.lane.b32.xlu0 %v8470, 24
      %v8686 = vpop.permute.xlu0 %8685
      %8687 = vrot.lane.b32.xlu0 %v8472, 24
      %v8688 = vpop.permute.xlu0 %8687
      %8689 = vrot.lane.b32.xlu0 %v8474, 24
      %v8690 = vpop.permute.xlu0 %8689
      %8707 = vrot.lane.b32.xlu0 %v8476, 28
      %v8708 = vpop.permute.xlu0 %8707
      %8709 = vrot.lane.b32.xlu0 %v8478, 28
      %v8710 = vpop.permute.xlu0 %8709
      %8711 = vrot.lane.b32.xlu0 %v8480, 28
      %v8712 = vpop.permute.xlu0 %8711
      %8713 = vrot.lane.b32.xlu0 %v8482, 28
      %v8714 = vpop.permute.xlu0 %8713
      %8715 = vrot.lane.b32.xlu0 %v8484, 28
      %v8716 = vpop.permute.xlu0 %8715
      %8717 = vrot.lane.b32.xlu0 %v8486, 28
      %v8718 = vpop.permute.xlu0 %8717
      %8719 = vrot.lane.b32.xlu0 %v8488, 28
      %v8720 = vpop.permute.xlu0 %8719
      %8721 = vrot.lane.b32.xlu0 %v8490, 28
      %v8722 = vpop.permute.xlu0 %8721
      %8739 = vrot.lane.b32.xlu0 %v8492, 32
      %v8740 = vpop.permute.xlu0 %8739
      %8741 = vrot.lane.b32.xlu0 %v8494, 32
      %v8742 = vpop.permute.xlu0 %8741
      %8743 = vrot.lane.b32.xlu0 %v8496, 32
      %v8744 = vpop.permute.xlu0 %8743
      %8745 = vrot.lane.b32.xlu0 %v8498, 32
      %v8746 = vpop.permute.xlu0 %8745
      %8747 = vrot.lane.b32.xlu0 %v8500, 32
      %v8748 = vpop.permute.xlu0 %8747
      %8749 = vrot.lane.b32.xlu0 %v8502, 32
      %v8750 = vpop.permute.xlu0 %8749
      %8751 = vrot.lane.b32.xlu0 %v8504, 32
      %v8752 = vpop.permute.xlu0 %8751
      %8753 = vrot.lane.b32.xlu0 %v8506, 32
      %v8754 = vpop.permute.xlu0 %8753
      %v8763 = vsel %vm602, %v8366, %v8516
      %v8764 = vsel %vm602, %v8368, %v8518
      %v8765 = vsel %vm602, %v8370, %v8520
      %v8766 = vsel %vm602, %v8372, %v8522
      %v8767 = vsel %vm602, %v8374, %v8524
      %v8768 = vsel %vm602, %v8376, %v8526
      %v8769 = vsel %vm602, %v8378, %v8528
      %v8770 = vsel %vm602, %v8380, %v8530
      %v8771 = vsel %vm658, %v8763, %v8548
      %v8772 = vsel %vm658, %v8764, %v8550
      %v8773 = vsel %vm658, %v8765, %v8552
      %v8774 = vsel %vm658, %v8766, %v8554
      %v8775 = vsel %vm658, %v8767, %v8556
      %v8776 = vsel %vm658, %v8768, %v8558
      %v8777 = vsel %vm658, %v8769, %v8560
      %v8778 = vsel %vm658, %v8770, %v8562
      %v8779 = vsel %vm2122, %v8771, %v8580
      %v8780 = vsel %vm2122, %v8772, %v8582
      %v8781 = vsel %vm2122, %v8773, %v8584
      %v8782 = vsel %vm2122, %v8774, %v8586
      %v8783 = vsel %vm2122, %v8775, %v8588
      %v8784 = vsel %vm2122, %v8776, %v8590
      %v8785 = vsel %vm2122, %v8777, %v8592
      %v8786 = vsel %vm2122, %v8778, %v8594
      %v8787 = vsel %vm2155, %v8779, %v8612
      %v8788 = vsel %vm2155, %v8780, %v8614
      %v8789 = vsel %vm2155, %v8781, %v8616
      %v8790 = vsel %vm2155, %v8782, %v8618
      %v8791 = vsel %vm2155, %v8783, %v8620
      %v8792 = vsel %vm2155, %v8784, %v8622
      %v8793 = vsel %vm2155, %v8785, %v8624
      %v8794 = vsel %vm2155, %v8786, %v8626
      %v8795 = vsel %vm2188, %v8787, %v8644
      %v8796 = vsel %vm2188, %v8788, %v8646
      %v8797 = vsel %vm2188, %v8789, %v8648
      %v8798 = vsel %vm2188, %v8790, %v8650
      %v8799 = vsel %vm2188, %v8791, %v8652
      %v8800 = vsel %vm2188, %v8792, %v8654
      %v8801 = vsel %vm2188, %v8793, %v8656
      %v8802 = vsel %vm2188, %v8794, %v8658
      %v8803 = vsel %vm2221, %v8795, %v8676
      %v8804 = vsel %vm2221, %v8796, %v8678
      %v8805 = vsel %vm2221, %v8797, %v8680
      %v8806 = vsel %vm2221, %v8798, %v8682
      %v8807 = vsel %vm2221, %v8799, %v8684
      %v8808 = vsel %vm2221, %v8800, %v8686
      %v8809 = vsel %vm2221, %v8801, %v8688
      %v8810 = vsel %vm2221, %v8802, %v8690
      %v8811 = vsel %vm2254, %v8803, %v8708
      %v8812 = vsel %vm2254, %v8804, %v8710
      %v8813 = vsel %vm2254, %v8805, %v8712
      %v8814 = vsel %vm2254, %v8806, %v8714
      %v8815 = vsel %vm2254, %v8807, %v8716
      %v8816 = vsel %vm2254, %v8808, %v8718
      %v8817 = vsel %vm2254, %v8809, %v8720
      %v8818 = vsel %vm2254, %v8810, %v8722
      %v8819 = vsel %vm2287, %v8811, %v8740
      %v8820 = vsel %vm2287, %v8812, %v8742
      %v8821 = vsel %vm2287, %v8813, %v8744
      %v8822 = vsel %vm2287, %v8814, %v8746
      %v8823 = vsel %vm2287, %v8815, %v8748
      %v8824 = vsel %vm2287, %v8816, %v8750
      %v8825 = vsel %vm2287, %v8817, %v8752
      %v8826 = vsel %vm2287, %v8818, %v8754
      %v8827 = vpack.c.bf16 %v8820, %v8819
      %v8828 = vpack.c.bf16 %v8822, %v8821
      %v8829 = vpack.c.bf16 %v8824, %v8823
      %v8830 = vpack.c.bf16 %v8826, %v8825
      %v8831 = vld [vmem:[%s9] sm:$0xf]
      %v8832 = vld [vmem:[%s9 + $0x4] sm:$0xf]
      %v8833 = vld [vmem:[%s9 + $0x8] sm:$0xf]
      %v8834 = vld [vmem:[%s9 + $0xc] sm:$0xf]
      %v8835 = vld [vmem:[%s9 + $0x10] sm:$0x3]
      %v8836 = vld [vmem:[%s10] sm:$0x1]
      %v8838 = vlaneseq
      %v8839 = vshrl.u32 %v8838, 7
      %v8840 = vsub.s32 0, %v8839
      %v8841 = vrot.slane %v8836, %v8840
      %v8848 = vunpack.c.l.b16 %v8831
      %v8849 = vunpack.c.l.b16 %v8832
      %v8850 = vunpack.c.l.b16 %v8833
      %v8851 = vunpack.c.l.b16 %v8834
      %v8852 = vunpack.c.l.b16 %v8835
      %v8853 = vpack.c.b16 %v8849, %v8848
      %v8854 = vpack.c.b16 %v8851, %v8850
      %v8855 = vpack.c.b16 %v8852, %v8852
      %v8859 = vsel %vm2363, %v8827, 0
      %v8862 = vsel %vm2363, %v8828, 0
      %v8865 = vsel %vm2363, %v8829, 0
      %v8868 = vsel %vm2363, %v8830, 0
      %v8871 = vsel %vm2412, %v8855, 0
      %8873 = vmatprep.subr.bf16.mxu0 0
      %8874 = vmatpush1.bf16.msra.mxu0 0
      %8875 = vmatprep.subr.bf16.mxu0 0
      %8876 = vmatpush1.bf16.msra.mxu0 0
      %8877 = vmatprep.subr.bf16.mxu0 0
      %8878 = vmatpush1.bf16.msra.mxu0 0
      %8879 = vmatprep.subr.bf16.mxu0 0
      %8880 = vmatpush1.bf16.msra.mxu0 0
      %8881 = vmatprep.subr.bf16.mxu0 0
      %8882 = vmatpush1.bf16.msra.mxu0 0
      %8883 = vmatprep.subr.bf16.mxu0 0
      %8884 = vmatpush1.bf16.msra.mxu0 %v8871
      %8885 = vmatprep.subr.bf16.mxu0 0
      %8886 = vmatpush1.bf16.msra.mxu0 %v8854
      %8887 = vmatprep.subr.bf16.mxu0 0
      %8888 = vmatpush1.bf16.msra.mxu0 %v8853
      %8889 = vmatprep.subr.bf16.mxu0 0
      %8890 = vmatpush2.bf16.msra.mxu0 0
      %8891 = vmatprep.subr.bf16.mxu0 0
      %8892 = vmatpush2.bf16.msra.mxu0 0
      %8893 = vmatprep.subr.bf16.mxu0 0
      %8894 = vmatpush2.bf16.msra.mxu0 0
      %8895 = vmatprep.subr.bf16.mxu0 0
      %8896 = vmatpush2.bf16.msra.mxu0 0
      %8897 = vmatprep.subr.bf16.mxu0 0
      %8898 = vmatpush2.bf16.msra.mxu0 0
      %8899 = vmatprep.subr.bf16.mxu0 0
      %8900 = vmatpush2.bf16.msra.mxu0 0
      %8901 = vmatprep.subr.bf16.mxu0 0
      %8902 = vmatpush2.bf16.msra.mxu0 0
      %8903 = vmatprep.subr.bf16.mxu0 0
      %8904 = vmatpush2.bf16.msra.mxu0 0
      %8905 = vmatprep.mubr.bf16.mxu0 0
      %8906 = vmatmul.mubr.bf16.gmra.mxu0 %v8859
      %v8907 = vpop.f32.mrf.mxu0
      %v8908 = vadd.f32 %v8841, %v8907
      %v8909 = vpop.f32.mrf.mxu0
      %v8910 = vpop.f32.mrf.mxu0
      %v8911 = vadd.f32 %v8841, %v8910
      %v8912 = vpop.f32.mrf.mxu0
      %8913 = vmatprep.mubr.bf16.mxu0 0
      %8914 = vmatmul.mubr.bf16.gmra.mxu0 %v8862
      %v8915 = vpop.f32.mrf.mxu0
      %v8916 = vadd.f32 %v8841, %v8915
      %v8917 = vpop.f32.mrf.mxu0
      %v8918 = vpop.f32.mrf.mxu0
      %v8919 = vadd.f32 %v8841, %v8918
      %v8920 = vpop.f32.mrf.mxu0
      %8921 = vmatprep.mubr.bf16.mxu0 0
      %8922 = vmatmul.mubr.bf16.gmra.mxu0 %v8865
      %v8923 = vpop.f32.mrf.mxu0
      %v8924 = vadd.f32 %v8841, %v8923
      %v8925 = vpop.f32.mrf.mxu0
      %v8926 = vpop.f32.mrf.mxu0
      %v8927 = vadd.f32 %v8841, %v8926
      %v8928 = vpop.f32.mrf.mxu0
      %8929 = vmatprep.mubr.bf16.mxu0 0
      %8930 = vmatmul.mubr.bf16.gmra.mxu0 %v8868
      %v8931 = vpop.f32.mrf.mxu0
      %v8932 = vadd.f32 %v8841, %v8931
      %v8933 = vpop.f32.mrf.mxu0
      %v8934 = vpop.f32.mrf.mxu0
      %v8935 = vadd.f32 %v8841, %v8934
      %v8936 = vpop.f32.mrf.mxu0
      %8937 = vdwg.mxu0
      %v8938 = vmax.f32 %v8908, 0.0
      %v8939 = vmax.f32 %v8911, 0.0
      %v8940 = vmax.f32 %v8916, 0.0
      %v8941 = vmax.f32 %v8919, 0.0
      %v8942 = vmax.f32 %v8924, 0.0
      %v8943 = vmax.f32 %v8927, 0.0
      %v8944 = vmax.f32 %v8932, 0.0
      %v8945 = vmax.f32 %v8935, 0.0
      %v8946 = vpack.c.bf16 %v8431, %v8429
      %v8947 = vpack.c.bf16 %v8435, %v8433
      %v8948 = vpack.c.bf16 %v8439, %v8437
      %v8949 = vpack.c.bf16 %v8443, %v8441
      %v8950 = vld [vmem:[%s11] sm:$0x3]
      %v8951 = vld [vmem:[%s12] sm:$0x1]
      %v8953 = vlaneseq
      %v8954 = vshrl.u32 %v8953, 7
      %v8955 = vsub.s32 0, %v8954
      %v8956 = vrot.slane %v8951, %v8955
      %v8959 = vsel %vm602, %v8946, 0
      %v8962 = vsel %vm602, %v8947, 0
      %v8965 = vsel %vm602, %v8948, 0
      %v8968 = vsel %vm602, %v8949, 0
      %v8971 = vsel %vm2412, %v8950, 0
      %8973 = vmatprep.subr.bf16.mxu0 0
      %8974 = vmatpush1.bf16.msra.mxu0 0
      %8975 = vmatprep.subr.bf16.mxu0 0
      %8976 = vmatpush1.bf16.msra.mxu0 0
      %8977 = vmatprep.subr.bf16.mxu0 0
      %8978 = vmatpush1.bf16.msra.mxu0 0
      %8979 = vmatprep.subr.bf16.mxu0 0
      %8980 = vmatpush1.bf16.msra.mxu0 0
      %8981 = vmatprep.subr.bf16.mxu0 0
      %8982 = vmatpush1.bf16.msra.mxu0 0
      %8983 = vmatprep.subr.bf16.mxu0 0
      %8984 = vmatpush1.bf16.msra.mxu0 0
      %8985 = vmatprep.subr.bf16.mxu0 0
      %8986 = vmatpush1.bf16.msra.mxu0 0
      %8987 = vmatprep.subr.bf16.mxu0 0
      %8988 = vmatpush1.bf16.msra.mxu0 %v8971
      %8989 = vmatprep.subr.bf16.mxu0 0
      %8990 = vmatpush2.bf16.msra.mxu0 0
      %8991 = vmatprep.subr.bf16.mxu0 0
      %8992 = vmatpush2.bf16.msra.mxu0 0
      %8993 = vmatprep.subr.bf16.mxu0 0
      %8994 = vmatpush2.bf16.msra.mxu0 0
      %8995 = vmatprep.subr.bf16.mxu0 0
      %8996 = vmatpush2.bf16.msra.mxu0 0
      %8997 = vmatprep.subr.bf16.mxu0 0
      %8998 = vmatpush2.bf16.msra.mxu0 0
      %8999 = vmatprep.subr.bf16.mxu0 0
      %9000 = vmatpush2.bf16.msra.mxu0 0
      %9001 = vmatprep.subr.bf16.mxu0 0
      %9002 = vmatpush2.bf16.msra.mxu0 0
      %9003 = vmatprep.subr.bf16.mxu0 0
      %9004 = vmatpush2.bf16.msra.mxu0 0
      %9005 = vmatprep.mubr.bf16.mxu0 0
      %9006 = vmatmul.mubr.bf16.gmra.mxu0 %v8959
      %v9007 = vpop.f32.mrf.mxu0
      %v9008 = vadd.f32 %v8956, %v9007
      %v9009 = vpop.f32.mrf.mxu0
      %v9010 = vpop.f32.mrf.mxu0
      %v9011 = vadd.f32 %v8956, %v9010
      %v9012 = vpop.f32.mrf.mxu0
      %9013 = vmatprep.mubr.bf16.mxu0 0
      %9014 = vmatmul.mubr.bf16.gmra.mxu0 %v8962
      %v9015 = vpop.f32.mrf.mxu0
      %v9016 = vadd.f32 %v8956, %v9015
      %v9017 = vpop.f32.mrf.mxu0
      %v9018 = vpop.f32.mrf.mxu0
      %v9019 = vadd.f32 %v8956, %v9018
      %v9020 = vpop.f32.mrf.mxu0
      %9021 = vmatprep.mubr.bf16.mxu0 0
      %9022 = vmatmul.mubr.bf16.gmra.mxu0 %v8965
      %v9023 = vpop.f32.mrf.mxu0
      %v9024 = vadd.f32 %v8956, %v9023
      %v9025 = vpop.f32.mrf.mxu0
      %v9026 = vpop.f32.mrf.mxu0
      %v9027 = vadd.f32 %v8956, %v9026
      %v9028 = vpop.f32.mrf.mxu0
      %9029 = vmatprep.mubr.bf16.mxu0 0
      %9030 = vmatmul.mubr.bf16.gmra.mxu0 %v8968
      %v9031 = vpop.f32.mrf.mxu0
      %v9032 = vadd.f32 %v8956, %v9031
      %v9033 = vpop.f32.mrf.mxu0
      %v9034 = vpop.f32.mrf.mxu0
      %v9035 = vadd.f32 %v8956, %v9034
      %v9036 = vpop.f32.mrf.mxu0
      %9037 = vdwg.mxu0
      %s9038 = scalar_lea.vmem [#allocation3], 16
      %9039 = vst.msk [vmem:[%s9038 + $0x1] sm:$0xff] %vm658, %v8938
      %9040 = vst.msk [vmem:[%s9038 + $0x11] sm:$0xff] %vm658, %v8939
      %9041 = vst.msk [vmem:[%s9038 + $0x21] sm:$0xff] %vm658, %v8940
      %9042 = vst.msk [vmem:[%s9038 + $0x31] sm:$0xff] %vm658, %v8941
      %9043 = vst.msk [vmem:[%s9038 + $0x41] sm:$0xff] %vm658, %v8942
      %9044 = vst.msk [vmem:[%s9038 + $0x51] sm:$0xff] %vm658, %v8943
      %9045 = vst.msk [vmem:[%s9038 + $0x61] sm:$0xff] %vm658, %v8944
      %9046 = vst.msk [vmem:[%s9038 + $0x71] sm:$0xff] %vm658, %v8945
      %v9047 = vld [vmem:[#allocation3] sm:$0xff]
      %v9048 = vld [vmem:[#allocation3 + $0x10] sm:$0xff]
      %v9049 = vld [vmem:[#allocation3 + $0x20] sm:$0xff]
      %v9050 = vld [vmem:[#allocation3 + $0x30] sm:$0xff]
      %v9051 = vld [vmem:[#allocation3 + $0x40] sm:$0xff]
      %v9052 = vld [vmem:[#allocation3 + $0x50] sm:$0xff]
      %v9053 = vld [vmem:[#allocation3 + $0x60] sm:$0xff]
      %v9054 = vld [vmem:[#allocation3 + $0x70] sm:$0xff]
      %v9055 = vld [vmem:[#allocation3 + $0x1] sm:$0xff]
      %v9056 = vld [vmem:[#allocation3 + $0x11] sm:$0xff]
      %v9057 = vld [vmem:[#allocation3 + $0x21] sm:$0xff]
      %v9058 = vld [vmem:[#allocation3 + $0x31] sm:$0xff]
      %v9059 = vld [vmem:[#allocation3 + $0x41] sm:$0xff]
      %v9060 = vld [vmem:[#allocation3 + $0x51] sm:$0xff]
      %v9061 = vld [vmem:[#allocation3 + $0x61] sm:$0xff]
      %v9062 = vld [vmem:[#allocation3 + $0x71] sm:$0xff]
      %v9063 = vld [vmem:[#allocation3 + $0x2] sm:$0xff]
      %v9064 = vld [vmem:[#allocation3 + $0x12] sm:$0xff]
      %v9065 = vld [vmem:[#allocation3 + $0x22] sm:$0xff]
      %v9066 = vld [vmem:[#allocation3 + $0x32] sm:$0xff]
      %v9067 = vld [vmem:[#allocation3 + $0x42] sm:$0xff]
      %v9068 = vld [vmem:[#allocation3 + $0x52] sm:$0xff]
      %v9069 = vld [vmem:[#allocation3 + $0x62] sm:$0xff]
      %v9070 = vld [vmem:[#allocation3 + $0x72] sm:$0xff]
      %v9071 = vld [vmem:[%s9038] sm:$0xff]
      %v9072 = vld [vmem:[%s9038 + $0x10] sm:$0xff]
      %v9073 = vld [vmem:[%s9038 + $0x20] sm:$0xff]
      %v9074 = vld [vmem:[%s9038 + $0x30] sm:$0xff]
      %v9075 = vld [vmem:[%s9038 + $0x40] sm:$0xff]
      %v9076 = vld [vmem:[%s9038 + $0x50] sm:$0xff]
      %v9077 = vld [vmem:[%s9038 + $0x60] sm:$0xff]
      %v9078 = vld [vmem:[%s9038 + $0x70] sm:$0xff]
      %v9079 = vld [vmem:[%s9038 + $0x1] sm:$0xff]
      %v9080 = vld [vmem:[%s9038 + $0x11] sm:$0xff]
      %v9081 = vld [vmem:[%s9038 + $0x21] sm:$0xff]
      %v9082 = vld [vmem:[%s9038 + $0x31] sm:$0xff]
      %v9083 = vld [vmem:[%s9038 + $0x41] sm:$0xff]
      %v9084 = vld [vmem:[%s9038 + $0x51] sm:$0xff]
      %v9085 = vld [vmem:[%s9038 + $0x61] sm:$0xff]
      %v9086 = vld [vmem:[%s9038 + $0x71] sm:$0xff]
      %v9087 = vld [vmem:[%s9038 + $0x2] sm:$0xff]
      %v9088 = vld [vmem:[%s9038 + $0x12] sm:$0xff]
      %v9089 = vld [vmem:[%s9038 + $0x22] sm:$0xff]
      %v9090 = vld [vmem:[%s9038 + $0x32] sm:$0xff]
      %v9091 = vld [vmem:[%s9038 + $0x42] sm:$0xff]
      %v9092 = vld [vmem:[%s9038 + $0x52] sm:$0xff]
      %v9093 = vld [vmem:[%s9038 + $0x62] sm:$0xff]
      %v9094 = vld [vmem:[%s9038 + $0x72] sm:$0xff]
      %s9095 = scalar_lea.vmem [#allocation3], 32
      %v9096 = vld [vmem:[%s9095] sm:$0xff]
      %v9097 = vld [vmem:[%s9095 + $0x10] sm:$0xff]
      %v9098 = vld [vmem:[%s9095 + $0x20] sm:$0xff]
      %v9099 = vld [vmem:[%s9095 + $0x30] sm:$0xff]
      %v9100 = vld [vmem:[%s9095 + $0x40] sm:$0xff]
      %v9101 = vld [vmem:[%s9095 + $0x50] sm:$0xff]
      %v9102 = vld [vmem:[%s9095 + $0x60] sm:$0xff]
      %v9103 = vld [vmem:[%s9095 + $0x70] sm:$0xff]
      %v9104 = vld [vmem:[%s9095 + $0x1] sm:$0xff]
      %v9105 = vld [vmem:[%s9095 + $0x11] sm:$0xff]
      %v9106 = vld [vmem:[%s9095 + $0x21] sm:$0xff]
      %v9107 = vld [vmem:[%s9095 + $0x31] sm:$0xff]
      %v9108 = vld [vmem:[%s9095 + $0x41] sm:$0xff]
      %v9109 = vld [vmem:[%s9095 + $0x51] sm:$0xff]
      %v9110 = vld [vmem:[%s9095 + $0x61] sm:$0xff]
      %v9111 = vld [vmem:[%s9095 + $0x71] sm:$0xff]
      %v9112 = vld [vmem:[%s9095 + $0x2] sm:$0xff]
      %v9113 = vld [vmem:[%s9095 + $0x12] sm:$0xff]
      %v9114 = vld [vmem:[%s9095 + $0x22] sm:$0xff]
      %v9115 = vld [vmem:[%s9095 + $0x32] sm:$0xff]
      %v9116 = vld [vmem:[%s9095 + $0x42] sm:$0xff]
      %v9117 = vld [vmem:[%s9095 + $0x52] sm:$0xff]
      %v9118 = vld [vmem:[%s9095 + $0x62] sm:$0xff]
      %v9119 = vld [vmem:[%s9095 + $0x72] sm:$0xff]
      %9128 = vrot.lane.b32.xlu0 %v9055, 8
      %v9129 = vpop.permute.xlu0 %9128
      %9130 = vrot.lane.b32.xlu0 %v9056, 8
      %v9131 = vpop.permute.xlu0 %9130
      %9132 = vrot.lane.b32.xlu0 %v9057, 8
      %v9133 = vpop.permute.xlu0 %9132
      %9134 = vrot.lane.b32.xlu0 %v9058, 8
      %v9135 = vpop.permute.xlu0 %9134
      %9136 = vrot.lane.b32.xlu0 %v9059, 8
      %v9137 = vpop.permute.xlu0 %9136
      %9138 = vrot.lane.b32.xlu0 %v9060, 8
      %v9139 = vpop.permute.xlu0 %9138
      %9140 = vrot.lane.b32.xlu0 %v9061, 8
      %v9141 = vpop.permute.xlu0 %9140
      %9142 = vrot.lane.b32.xlu0 %v9062, 8
      %v9143 = vpop.permute.xlu0 %9142
      %9160 = vrot.lane.b32.xlu0 %v9063, 16
      %v9161 = vpop.permute.xlu0 %9160
      %9162 = vrot.lane.b32.xlu0 %v9064, 16
      %v9163 = vpop.permute.xlu0 %9162
      %9164 = vrot.lane.b32.xlu0 %v9065, 16
      %v9165 = vpop.permute.xlu0 %9164
      %9166 = vrot.lane.b32.xlu0 %v9066, 16
      %v9167 = vpop.permute.xlu0 %9166
      %9168 = vrot.lane.b32.xlu0 %v9067, 16
      %v9169 = vpop.permute.xlu0 %9168
      %9170 = vrot.lane.b32.xlu0 %v9068, 16
      %v9171 = vpop.permute.xlu0 %9170
      %9172 = vrot.lane.b32.xlu0 %v9069, 16
      %v9173 = vpop.permute.xlu0 %9172
      %9174 = vrot.lane.b32.xlu0 %v9070, 16
      %v9175 = vpop.permute.xlu0 %9174
      %9192 = vrot.lane.b32.xlu0 %v9071, 24
      %v9193 = vpop.permute.xlu0 %9192
      %9194 = vrot.lane.b32.xlu0 %v9072, 24
      %v9195 = vpop.permute.xlu0 %9194
      %9196 = vrot.lane.b32.xlu0 %v9073, 24
      %v9197 = vpop.permute.xlu0 %9196
      %9198 = vrot.lane.b32.xlu0 %v9074, 24
      %v9199 = vpop.permute.xlu0 %9198
      %9200 = vrot.lane.b32.xlu0 %v9075, 24
      %v9201 = vpop.permute.xlu0 %9200
      %9202 = vrot.lane.b32.xlu0 %v9076, 24
      %v9203 = vpop.permute.xlu0 %9202
      %9204 = vrot.lane.b32.xlu0 %v9077, 24
      %v9205 = vpop.permute.xlu0 %9204
      %9206 = vrot.lane.b32.xlu0 %v9078, 24
      %v9207 = vpop.permute.xlu0 %9206
      %9224 = vrot.lane.b32.xlu0 %v9079, 32
      %v9225 = vpop.permute.xlu0 %9224
      %9226 = vrot.lane.b32.xlu0 %v9080, 32
      %v9227 = vpop.permute.xlu0 %9226
      %9228 = vrot.lane.b32.xlu0 %v9081, 32
      %v9229 = vpop.permute.xlu0 %9228
      %9230 = vrot.lane.b32.xlu0 %v9082, 32
      %v9231 = vpop.permute.xlu0 %9230
      %9232 = vrot.lane.b32.xlu0 %v9083, 32
      %v9233 = vpop.permute.xlu0 %9232
      %9234 = vrot.lane.b32.xlu0 %v9084, 32
      %v9235 = vpop.permute.xlu0 %9234
      %9236 = vrot.lane.b32.xlu0 %v9085, 32
      %v9237 = vpop.permute.xlu0 %9236
      %9238 = vrot.lane.b32.xlu0 %v9086, 32
      %v9239 = vpop.permute.xlu0 %9238
      %9256 = vrot.lane.b32.xlu0 %v9087, 40
      %v9257 = vpop.permute.xlu0 %9256
      %9258 = vrot.lane.b32.xlu0 %v9088, 40
      %v9259 = vpop.permute.xlu0 %9258
      %9260 = vrot.lane.b32.xlu0 %v9089, 40
      %v9261 = vpop.permute.xlu0 %9260
      %9262 = vrot.lane.b32.xlu0 %v9090, 40
      %v9263 = vpop.permute.xlu0 %9262
      %9264 = vrot.lane.b32.xlu0 %v9091, 40
      %v9265 = vpop.permute.xlu0 %9264
      %9266 = vrot.lane.b32.xlu0 %v9092, 40
      %v9267 = vpop.permute.xlu0 %9266
      %9268 = vrot.lane.b32.xlu0 %v9093, 40
      %v9269 = vpop.permute.xlu0 %9268
      %9270 = vrot.lane.b32.xlu0 %v9094, 40
      %v9271 = vpop.permute.xlu0 %9270
      %9288 = vrot.lane.b32.xlu0 %v9096, 48
      %v9289 = vpop.permute.xlu0 %9288
      %9290 = vrot.lane.b32.xlu0 %v9097, 48
      %v9291 = vpop.permute.xlu0 %9290
      %9292 = vrot.lane.b32.xlu0 %v9098, 48
      %v9293 = vpop.permute.xlu0 %9292
      %9294 = vrot.lane.b32.xlu0 %v9099, 48
      %v9295 = vpop.permute.xlu0 %9294
      %9296 = vrot.lane.b32.xlu0 %v9100, 48
      %v9297 = vpop.permute.xlu0 %9296
      %9298 = vrot.lane.b32.xlu0 %v9101, 48
      %v9299 = vpop.permute.xlu0 %9298
      %9300 = vrot.lane.b32.xlu0 %v9102, 48
      %v9301 = vpop.permute.xlu0 %9300
      %9302 = vrot.lane.b32.xlu0 %v9103, 48
      %v9303 = vpop.permute.xlu0 %9302
      %9320 = vrot.lane.b32.xlu0 %v9104, 56
      %v9321 = vpop.permute.xlu0 %9320
      %9322 = vrot.lane.b32.xlu0 %v9105, 56
      %v9323 = vpop.permute.xlu0 %9322
      %9324 = vrot.lane.b32.xlu0 %v9106, 56
      %v9325 = vpop.permute.xlu0 %9324
      %9326 = vrot.lane.b32.xlu0 %v9107, 56
      %v9327 = vpop.permute.xlu0 %9326
      %9328 = vrot.lane.b32.xlu0 %v9108, 56
      %v9329 = vpop.permute.xlu0 %9328
      %9330 = vrot.lane.b32.xlu0 %v9109, 56
      %v9331 = vpop.permute.xlu0 %9330
      %9332 = vrot.lane.b32.xlu0 %v9110, 56
      %v9333 = vpop.permute.xlu0 %9332
      %9334 = vrot.lane.b32.xlu0 %v9111, 56
      %v9335 = vpop.permute.xlu0 %9334
      %9352 = vrot.lane.b32.xlu0 %v9112, 64
      %v9353 = vpop.permute.xlu0 %9352
      %9354 = vrot.lane.b32.xlu0 %v9113, 64
      %v9355 = vpop.permute.xlu0 %9354
      %9356 = vrot.lane.b32.xlu0 %v9114, 64
      %v9357 = vpop.permute.xlu0 %9356
      %9358 = vrot.lane.b32.xlu0 %v9115, 64
      %v9359 = vpop.permute.xlu0 %9358
      %9360 = vrot.lane.b32.xlu0 %v9116, 64
      %v9361 = vpop.permute.xlu0 %9360
      %9362 = vrot.lane.b32.xlu0 %v9117, 64
      %v9363 = vpop.permute.xlu0 %9362
      %9364 = vrot.lane.b32.xlu0 %v9118, 64
      %v9365 = vpop.permute.xlu0 %9364
      %9366 = vrot.lane.b32.xlu0 %v9119, 64
      %v9367 = vpop.permute.xlu0 %9366
      %v9376 = vsel %vm658, %v9047, %v9129
      %v9377 = vsel %vm658, %v9048, %v9131
      %v9378 = vsel %vm658, %v9049, %v9133
      %v9379 = vsel %vm658, %v9050, %v9135
      %v9380 = vsel %vm658, %v9051, %v9137
      %v9381 = vsel %vm658, %v9052, %v9139
      %v9382 = vsel %vm658, %v9053, %v9141
      %v9383 = vsel %vm658, %v9054, %v9143
      %v9384 = vsel %vm2155, %v9376, %v9161
      %v9385 = vsel %vm2155, %v9377, %v9163
      %v9386 = vsel %vm2155, %v9378, %v9165
      %v9387 = vsel %vm2155, %v9379, %v9167
      %v9388 = vsel %vm2155, %v9380, %v9169
      %v9389 = vsel %vm2155, %v9381, %v9171
      %v9390 = vsel %vm2155, %v9382, %v9173
      %v9391 = vsel %vm2155, %v9383, %v9175
      %v9392 = vsel %vm2221, %v9384, %v9193
      %v9393 = vsel %vm2221, %v9385, %v9195
      %v9394 = vsel %vm2221, %v9386, %v9197
      %v9395 = vsel %vm2221, %v9387, %v9199
      %v9396 = vsel %vm2221, %v9388, %v9201
      %v9397 = vsel %vm2221, %v9389, %v9203
      %v9398 = vsel %vm2221, %v9390, %v9205
      %v9399 = vsel %vm2221, %v9391, %v9207
      %v9400 = vsel %vm2287, %v9392, %v9225
      %v9401 = vsel %vm2287, %v9393, %v9227
      %v9402 = vsel %vm2287, %v9394, %v9229
      %v9403 = vsel %vm2287, %v9395, %v9231
      %v9404 = vsel %vm2287, %v9396, %v9233
      %v9405 = vsel %vm2287, %v9397, %v9235
      %v9406 = vsel %vm2287, %v9398, %v9237
      %v9407 = vsel %vm2287, %v9399, %v9239
      %vm9408 = vcmask 326656
      %v9409 = vsel %vm9408, %v9400, %v9257
      %v9410 = vsel %vm9408, %v9401, %v9259
      %v9411 = vsel %vm9408, %v9402, %v9261
      %v9412 = vsel %vm9408, %v9403, %v9263
      %v9413 = vsel %vm9408, %v9404, %v9265
      %v9414 = vsel %vm9408, %v9405, %v9267
      %v9415 = vsel %vm9408, %v9406, %v9269
      %v9416 = vsel %vm9408, %v9407, %v9271
      %vm9417 = vcmask 392192
      %v9418 = vsel %vm9417, %v9409, %v9289
      %v9419 = vsel %vm9417, %v9410, %v9291
      %v9420 = vsel %vm9417, %v9411, %v9293
      %v9421 = vsel %vm9417, %v9412, %v9295
      %v9422 = vsel %vm9417, %v9413, %v9297
      %v9423 = vsel %vm9417, %v9414, %v9299
      %v9424 = vsel %vm9417, %v9415, %v9301
      %v9425 = vsel %vm9417, %v9416, %v9303
      %vm9426 = vcmask 457728
      %v9427 = vsel %vm9426, %v9418, %v9321
      %v9428 = vsel %vm9426, %v9419, %v9323
      %v9429 = vsel %vm9426, %v9420, %v9325
      %v9430 = vsel %vm9426, %v9421, %v9327
      %v9431 = vsel %vm9426, %v9422, %v9329
      %v9432 = vsel %vm9426, %v9423, %v9331
      %v9433 = vsel %vm9426, %v9424, %v9333
      %v9434 = vsel %vm9426, %v9425, %v9335
      %vm9435 = vcmask 523264
      %v9436 = vsel %vm9435, %v9427, %v9353
      %v9437 = vsel %vm9435, %v9428, %v9355
      %v9438 = vsel %vm9435, %v9429, %v9357
      %v9439 = vsel %vm9435, %v9430, %v9359
      %v9440 = vsel %vm9435, %v9431, %v9361
      %v9441 = vsel %vm9435, %v9432, %v9363
      %v9442 = vsel %vm9435, %v9433, %v9365
      %v9443 = vsel %vm9435, %v9434, %v9367
      %v9444 = vpack.c.bf16 %v9437, %v9436
      %v9445 = vpack.c.bf16 %v9439, %v9438
      %v9446 = vpack.c.bf16 %v9441, %v9440
      %v9447 = vpack.c.bf16 %v9443, %v9442
      %v9448 = vld [vmem:[%s13] sm:$0xf]
      %v9449 = vld [vmem:[%s13 + $0x4] sm:$0xf]
      %v9450 = vld [vmem:[%s13 + $0x8] sm:$0xf]
      %v9451 = vld [vmem:[%s13 + $0xc] sm:$0xf]
      %v9452 = vld [vmem:[%s13 + $0x10] sm:$0xf]
      %v9453 = vld [vmem:[%s13 + $0x14] sm:$0xf]
      %v9454 = vld [vmem:[%s13 + $0x18] sm:$0xf]
      %v9455 = vld [vmem:[%s13 + $0x1c] sm:$0xf]
      %v9456 = vld [vmem:[%s13 + $0x20] sm:$0xf]
      %v9457 = vld [vmem:[%s14] sm:$0x1]
      %v9459 = vlaneseq
      %v9460 = vshrl.u32 %v9459, 7
      %v9461 = vsub.s32 0, %v9460
      %v9462 = vrot.slane %v9457, %v9461
      %v9473 = vunpack.c.l.b16 %v9448
      %v9474 = vunpack.c.l.b16 %v9449
      %v9475 = vunpack.c.l.b16 %v9450
      %v9476 = vunpack.c.l.b16 %v9451
      %v9477 = vunpack.c.l.b16 %v9452
      %v9478 = vunpack.c.l.b16 %v9453
      %v9479 = vunpack.c.l.b16 %v9454
      %v9480 = vunpack.c.l.b16 %v9455
      %v9481 = vunpack.c.l.b16 %v9456
      %v9482 = vpack.c.b16 %v9474, %v9473
      %v9483 = vpack.c.b16 %v9476, %v9475
      %v9484 = vpack.c.b16 %v9478, %v9477
      %v9485 = vpack.c.b16 %v9480, %v9479
      %v9486 = vpack.c.b16 %v9481, %v9481
      %vm9491 = vcmask 588800
      %v9493 = vsel %vm9491, %v9444, 0
      %v9496 = vsel %vm9491, %v9445, 0
      %v9499 = vsel %vm9491, %v9446, 0
      %v9502 = vsel %vm9491, %v9447, 0
      %vm9504 = vcmask 1043456
      %v9506 = vsel %vm9504, %v9486, 0
      %9508 = vmatprep.subr.bf16.mxu0 0
      %9509 = vmatpush1.bf16.msra.mxu0 0
      %9510 = vmatprep.subr.bf16.mxu0 0
      %9511 = vmatpush1.bf16.msra.mxu0 0
      %9512 = vmatprep.subr.bf16.mxu0 0
      %9513 = vmatpush1.bf16.msra.mxu0 0
      %9514 = vmatprep.subr.bf16.mxu0 0
      %9515 = vmatpush1.bf16.msra.mxu0 %v9506
      %9516 = vmatprep.subr.bf16.mxu0 0
      %9517 = vmatpush1.bf16.msra.mxu0 %v9485
      %9518 = vmatprep.subr.bf16.mxu0 0
      %9519 = vmatpush1.bf16.msra.mxu0 %v9484
      %9520 = vmatprep.subr.bf16.mxu0 0
      %9521 = vmatpush1.bf16.msra.mxu0 %v9483
      %9522 = vmatprep.subr.bf16.mxu0 0
      %9523 = vmatpush1.bf16.msra.mxu0 %v9482
      %9524 = vmatprep.subr.bf16.mxu0 0
      %9525 = vmatpush2.bf16.msra.mxu0 0
      %9526 = vmatprep.subr.bf16.mxu0 0
      %9527 = vmatpush2.bf16.msra.mxu0 0
      %9528 = vmatprep.subr.bf16.mxu0 0
      %9529 = vmatpush2.bf16.msra.mxu0 0
      %9530 = vmatprep.subr.bf16.mxu0 0
      %9531 = vmatpush2.bf16.msra.mxu0 0
      %9532 = vmatprep.subr.bf16.mxu0 0
      %9533 = vmatpush2.bf16.msra.mxu0 0
      %9534 = vmatprep.subr.bf16.mxu0 0
      %9535 = vmatpush2.bf16.msra.mxu0 0
      %9536 = vmatprep.subr.bf16.mxu0 0
      %9537 = vmatpush2.bf16.msra.mxu0 0
      %9538 = vmatprep.subr.bf16.mxu0 0
      %9539 = vmatpush2.bf16.msra.mxu0 0
      %9540 = vmatprep.mubr.bf16.mxu0 0
      %9541 = vmatmul.mubr.bf16.gmra.mxu0 %v9493
      %v9542 = vpop.f32.mrf.mxu0
      %v9543 = vadd.f32 %v9462, %v9542
      %v9544 = vpop.f32.mrf.mxu0
      %v9545 = vpop.f32.mrf.mxu0
      %v9546 = vadd.f32 %v9462, %v9545
      %v9547 = vpop.f32.mrf.mxu0
      %9548 = vmatprep.mubr.bf16.mxu0 0
      %9549 = vmatmul.mubr.bf16.gmra.mxu0 %v9496
      %v9550 = vpop.f32.mrf.mxu0
      %v9551 = vadd.f32 %v9462, %v9550
      %v9552 = vpop.f32.mrf.mxu0
      %v9553 = vpop.f32.mrf.mxu0
      %v9554 = vadd.f32 %v9462, %v9553
      %v9555 = vpop.f32.mrf.mxu0
      %9556 = vmatprep.mubr.bf16.mxu0 0
      %9557 = vmatmul.mubr.bf16.gmra.mxu0 %v9499
      %v9558 = vpop.f32.mrf.mxu0
      %v9559 = vadd.f32 %v9462, %v9558
      %v9560 = vpop.f32.mrf.mxu0
      %v9561 = vpop.f32.mrf.mxu0
      %v9562 = vadd.f32 %v9462, %v9561
      %v9563 = vpop.f32.mrf.mxu0
      %9564 = vmatprep.mubr.bf16.mxu0 0
      %9565 = vmatmul.mubr.bf16.gmra.mxu0 %v9502
      %v9566 = vpop.f32.mrf.mxu0
      %v9567 = vadd.f32 %v9462, %v9566
      %v9568 = vpop.f32.mrf.mxu0
      %v9569 = vpop.f32.mrf.mxu0
      %v9570 = vadd.f32 %v9462, %v9569
      %v9571 = vpop.f32.mrf.mxu0
      %9572 = vdwg.mxu0
      %v9573 = vadd.f32 %v9543, %v9008
      %v9574 = vadd.f32 %v9546, %v9011
      %v9575 = vadd.f32 %v9551, %v9016
      %v9576 = vadd.f32 %v9554, %v9019
      %v9577 = vadd.f32 %v9559, %v9024
      %v9578 = vadd.f32 %v9562, %v9027
      %v9579 = vadd.f32 %v9567, %v9032
      %v9580 = vadd.f32 %v9570, %v9035
      %v9581 = vmax.f32 %v9573, 0.0
      %v9582 = vmax.f32 %v9574, 0.0
      %v9583 = vmax.f32 %v9575, 0.0
      %v9584 = vmax.f32 %v9576, 0.0
      %v9585 = vmax.f32 %v9577, 0.0
      %v9586 = vmax.f32 %v9578, 0.0
      %v9587 = vmax.f32 %v9579, 0.0
      %v9588 = vmax.f32 %v9580, 0.0
      %9589 = vst.msk [vmem:[%s9038 + $0x1] sm:$0xff] %vm658, %v9581
      %9590 = vst.msk [vmem:[%s9038 + $0x11] sm:$0xff] %vm658, %v9582
      %9591 = vst.msk [vmem:[%s9038 + $0x21] sm:$0xff] %vm658, %v9583
      %9592 = vst.msk [vmem:[%s9038 + $0x31] sm:$0xff] %vm658, %v9584
      %9593 = vst.msk [vmem:[%s9038 + $0x41] sm:$0xff] %vm658, %v9585
      %9594 = vst.msk [vmem:[%s9038 + $0x51] sm:$0xff] %vm658, %v9586
      %9595 = vst.msk [vmem:[%s9038 + $0x61] sm:$0xff] %vm658, %v9587
      %9596 = vst.msk [vmem:[%s9038 + $0x71] sm:$0xff] %vm658, %v9588
      %v9597 = vld [vmem:[#allocation3] sm:$0xff]
      %v9598 = vld [vmem:[#allocation3 + $0x10] sm:$0xff]
      %v9599 = vld [vmem:[#allocation3 + $0x20] sm:$0xff]
      %v9600 = vld [vmem:[#allocation3 + $0x30] sm:$0xff]
      %v9601 = vld [vmem:[#allocation3 + $0x40] sm:$0xff]
      %v9602 = vld [vmem:[#allocation3 + $0x50] sm:$0xff]
      %v9603 = vld [vmem:[#allocation3 + $0x60] sm:$0xff]
      %v9604 = vld [vmem:[#allocation3 + $0x70] sm:$0xff]
      %v9605 = vld [vmem:[#allocation3 + $0x1] sm:$0xff]
      %v9606 = vld [vmem:[#allocation3 + $0x11] sm:$0xff]
      %v9607 = vld [vmem:[#allocation3 + $0x21] sm:$0xff]
      %v9608 = vld [vmem:[#allocation3 + $0x31] sm:$0xff]
      %v9609 = vld [vmem:[#allocation3 + $0x41] sm:$0xff]
      %v9610 = vld [vmem:[#allocation3 + $0x51] sm:$0xff]
      %v9611 = vld [vmem:[#allocation3 + $0x61] sm:$0xff]
      %v9612 = vld [vmem:[#allocation3 + $0x71] sm:$0xff]
      %v9613 = vld [vmem:[#allocation3 + $0x2] sm:$0xff]
      %v9614 = vld [vmem:[#allocation3 + $0x12] sm:$0xff]
      %v9615 = vld [vmem:[#allocation3 + $0x22] sm:$0xff]
      %v9616 = vld [vmem:[#allocation3 + $0x32] sm:$0xff]
      %v9617 = vld [vmem:[#allocation3 + $0x42] sm:$0xff]
      %v9618 = vld [vmem:[#allocation3 + $0x52] sm:$0xff]
      %v9619 = vld [vmem:[#allocation3 + $0x62] sm:$0xff]
      %v9620 = vld [vmem:[#allocation3 + $0x72] sm:$0xff]
      %v9621 = vld [vmem:[%s9038] sm:$0xff]
      %v9622 = vld [vmem:[%s9038 + $0x10] sm:$0xff]
      %v9623 = vld [vmem:[%s9038 + $0x20] sm:$0xff]
      %v9624 = vld [vmem:[%s9038 + $0x30] sm:$0xff]
      %v9625 = vld [vmem:[%s9038 + $0x40] sm:$0xff]
      %v9626 = vld [vmem:[%s9038 + $0x50] sm:$0xff]
      %v9627 = vld [vmem:[%s9038 + $0x60] sm:$0xff]
      %v9628 = vld [vmem:[%s9038 + $0x70] sm:$0xff]
      %v9629 = vld [vmem:[%s9038 + $0x1] sm:$0xff]
      %v9630 = vld [vmem:[%s9038 + $0x11] sm:$0xff]
      %v9631 = vld [vmem:[%s9038 + $0x21] sm:$0xff]
      %v9632 = vld [vmem:[%s9038 + $0x31] sm:$0xff]
      %v9633 = vld [vmem:[%s9038 + $0x41] sm:$0xff]
      %v9634 = vld [vmem:[%s9038 + $0x51] sm:$0xff]
      %v9635 = vld [vmem:[%s9038 + $0x61] sm:$0xff]
      %v9636 = vld [vmem:[%s9038 + $0x71] sm:$0xff]
      %v9637 = vld [vmem:[%s9038 + $0x2] sm:$0xff]
      %v9638 = vld [vmem:[%s9038 + $0x12] sm:$0xff]
      %v9639 = vld [vmem:[%s9038 + $0x22] sm:$0xff]
      %v9640 = vld [vmem:[%s9038 + $0x32] sm:$0xff]
      %v9641 = vld [vmem:[%s9038 + $0x42] sm:$0xff]
      %v9642 = vld [vmem:[%s9038 + $0x52] sm:$0xff]
      %v9643 = vld [vmem:[%s9038 + $0x62] sm:$0xff]
      %v9644 = vld [vmem:[%s9038 + $0x72] sm:$0xff]
      %v9645 = vld [vmem:[%s9095] sm:$0xff]
      %v9646 = vld [vmem:[%s9095 + $0x10] sm:$0xff]
      %v9647 = vld [vmem:[%s9095 + $0x20] sm:$0xff]
      %v9648 = vld [vmem:[%s9095 + $0x30] sm:$0xff]
      %v9649 = vld [vmem:[%s9095 + $0x40] sm:$0xff]
      %v9650 = vld [vmem:[%s9095 + $0x50] sm:$0xff]
      %v9651 = vld [vmem:[%s9095 + $0x60] sm:$0xff]
      %v9652 = vld [vmem:[%s9095 + $0x70] sm:$0xff]
      %v9653 = vld [vmem:[%s9095 + $0x1] sm:$0xff]
      %v9654 = vld [vmem:[%s9095 + $0x11] sm:$0xff]
      %v9655 = vld [vmem:[%s9095 + $0x21] sm:$0xff]
      %v9656 = vld [vmem:[%s9095 + $0x31] sm:$0xff]
      %v9657 = vld [vmem:[%s9095 + $0x41] sm:$0xff]
      %v9658 = vld [vmem:[%s9095 + $0x51] sm:$0xff]
      %v9659 = vld [vmem:[%s9095 + $0x61] sm:$0xff]
      %v9660 = vld [vmem:[%s9095 + $0x71] sm:$0xff]
      %v9661 = vld [vmem:[%s9095 + $0x2] sm:$0xff]
      %v9662 = vld [vmem:[%s9095 + $0x12] sm:$0xff]
      %v9663 = vld [vmem:[%s9095 + $0x22] sm:$0xff]
      %v9664 = vld [vmem:[%s9095 + $0x32] sm:$0xff]
      %v9665 = vld [vmem:[%s9095 + $0x42] sm:$0xff]
      %v9666 = vld [vmem:[%s9095 + $0x52] sm:$0xff]
      %v9667 = vld [vmem:[%s9095 + $0x62] sm:$0xff]
      %v9668 = vld [vmem:[%s9095 + $0x72] sm:$0xff]
      %9677 = vrot.lane.b32.xlu0 %v9605, 8
      %v9678 = vpop.permute.xlu0 %9677
      %9679 = vrot.lane.b32.xlu0 %v9606, 8
      %v9680 = vpop.permute.xlu0 %9679
      %9681 = vrot.lane.b32.xlu0 %v9607, 8
      %v9682 = vpop.permute.xlu0 %9681
      %9683 = vrot.lane.b32.xlu0 %v9608, 8
      %v9684 = vpop.permute.xlu0 %9683
      %9685 = vrot.lane.b32.xlu0 %v9609, 8
      %v9686 = vpop.permute.xlu0 %9685
      %9687 = vrot.lane.b32.xlu0 %v9610, 8
      %v9688 = vpop.permute.xlu0 %9687
      %9689 = vrot.lane.b32.xlu0 %v9611, 8
      %v9690 = vpop.permute.xlu0 %9689
      %9691 = vrot.lane.b32.xlu0 %v9612, 8
      %v9692 = vpop.permute.xlu0 %9691
      %9709 = vrot.lane.b32.xlu0 %v9613, 16
      %v9710 = vpop.permute.xlu0 %9709
      %9711 = vrot.lane.b32.xlu0 %v9614, 16
      %v9712 = vpop.permute.xlu0 %9711
      %9713 = vrot.lane.b32.xlu0 %v9615, 16
      %v9714 = vpop.permute.xlu0 %9713
      %9715 = vrot.lane.b32.xlu0 %v9616, 16
      %v9716 = vpop.permute.xlu0 %9715
      %9717 = vrot.lane.b32.xlu0 %v9617, 16
      %v9718 = vpop.permute.xlu0 %9717
      %9719 = vrot.lane.b32.xlu0 %v9618, 16
      %v9720 = vpop.permute.xlu0 %9719
      %9721 = vrot.lane.b32.xlu0 %v9619, 16
      %v9722 = vpop.permute.xlu0 %9721
      %9723 = vrot.lane.b32.xlu0 %v9620, 16
      %v9724 = vpop.permute.xlu0 %9723
      %9741 = vrot.lane.b32.xlu0 %v9621, 24
      %v9742 = vpop.permute.xlu0 %9741
      %9743 = vrot.lane.b32.xlu0 %v9622, 24
      %v9744 = vpop.permute.xlu0 %9743
      %9745 = vrot.lane.b32.xlu0 %v9623, 24
      %v9746 = vpop.permute.xlu0 %9745
      %9747 = vrot.lane.b32.xlu0 %v9624, 24
      %v9748 = vpop.permute.xlu0 %9747
      %9749 = vrot.lane.b32.xlu0 %v9625, 24
      %v9750 = vpop.permute.xlu0 %9749
      %9751 = vrot.lane.b32.xlu0 %v9626, 24
      %v9752 = vpop.permute.xlu0 %9751
      %9753 = vrot.lane.b32.xlu0 %v9627, 24
      %v9754 = vpop.permute.xlu0 %9753
      %9755 = vrot.lane.b32.xlu0 %v9628, 24
      %v9756 = vpop.permute.xlu0 %9755
      %9773 = vrot.lane.b32.xlu0 %v9629, 32
      %v9774 = vpop.permute.xlu0 %9773
      %9775 = vrot.lane.b32.xlu0 %v9630, 32
      %v9776 = vpop.permute.xlu0 %9775
      %9777 = vrot.lane.b32.xlu0 %v9631, 32
      %v9778 = vpop.permute.xlu0 %9777
      %9779 = vrot.lane.b32.xlu0 %v9632, 32
      %v9780 = vpop.permute.xlu0 %9779
      %9781 = vrot.lane.b32.xlu0 %v9633, 32
      %v9782 = vpop.permute.xlu0 %9781
      %9783 = vrot.lane.b32.xlu0 %v9634, 32
      %v9784 = vpop.permute.xlu0 %9783
      %9785 = vrot.lane.b32.xlu0 %v9635, 32
      %v9786 = vpop.permute.xlu0 %9785
      %9787 = vrot.lane.b32.xlu0 %v9636, 32
      %v9788 = vpop.permute.xlu0 %9787
      %9805 = vrot.lane.b32.xlu0 %v9637, 40
      %v9806 = vpop.permute.xlu0 %9805
      %9807 = vrot.lane.b32.xlu0 %v9638, 40
      %v9808 = vpop.permute.xlu0 %9807
      %9809 = vrot.lane.b32.xlu0 %v9639, 40
      %v9810 = vpop.permute.xlu0 %9809
      %9811 = vrot.lane.b32.xlu0 %v9640, 40
      %v9812 = vpop.permute.xlu0 %9811
      %9813 = vrot.lane.b32.xlu0 %v9641, 40
      %v9814 = vpop.permute.xlu0 %9813
      %9815 = vrot.lane.b32.xlu0 %v9642, 40
      %v9816 = vpop.permute.xlu0 %9815
      %9817 = vrot.lane.b32.xlu0 %v9643, 40
      %v9818 = vpop.permute.xlu0 %9817
      %9819 = vrot.lane.b32.xlu0 %v9644, 40
      %v9820 = vpop.permute.xlu0 %9819
      %9837 = vrot.lane.b32.xlu0 %v9645, 48
      %v9838 = vpop.permute.xlu0 %9837
      %9839 = vrot.lane.b32.xlu0 %v9646, 48
      %v9840 = vpop.permute.xlu0 %9839
      %9841 = vrot.lane.b32.xlu0 %v9647, 48
      %v9842 = vpop.permute.xlu0 %9841
      %9843 = vrot.lane.b32.xlu0 %v9648, 48
      %v9844 = vpop.permute.xlu0 %9843
      %9845 = vrot.lane.b32.xlu0 %v9649, 48
      %v9846 = vpop.permute.xlu0 %9845
      %9847 = vrot.lane.b32.xlu0 %v9650, 48
      %v9848 = vpop.permute.xlu0 %9847
      %9849 = vrot.lane.b32.xlu0 %v9651, 48
      %v9850 = vpop.permute.xlu0 %9849
      %9851 = vrot.lane.b32.xlu0 %v9652, 48
      %v9852 = vpop.permute.xlu0 %9851
      %9869 = vrot.lane.b32.xlu0 %v9653, 56
      %v9870 = vpop.permute.xlu0 %9869
      %9871 = vrot.lane.b32.xlu0 %v9654, 56
      %v9872 = vpop.permute.xlu0 %9871
      %9873 = vrot.lane.b32.xlu0 %v9655, 56
      %v9874 = vpop.permute.xlu0 %9873
      %9875 = vrot.lane.b32.xlu0 %v9656, 56
      %v9876 = vpop.permute.xlu0 %9875
      %9877 = vrot.lane.b32.xlu0 %v9657, 56
      %v9878 = vpop.permute.xlu0 %9877
      %9879 = vrot.lane.b32.xlu0 %v9658, 56
      %v9880 = vpop.permute.xlu0 %9879
      %9881 = vrot.lane.b32.xlu0 %v9659, 56
      %v9882 = vpop.permute.xlu0 %9881
      %9883 = vrot.lane.b32.xlu0 %v9660, 56
      %v9884 = vpop.permute.xlu0 %9883
      %9901 = vrot.lane.b32.xlu0 %v9661, 64
      %v9902 = vpop.permute.xlu0 %9901
      %9903 = vrot.lane.b32.xlu0 %v9662, 64
      %v9904 = vpop.permute.xlu0 %9903
      %9905 = vrot.lane.b32.xlu0 %v9663, 64
      %v9906 = vpop.permute.xlu0 %9905
      %9907 = vrot.lane.b32.xlu0 %v9664, 64
      %v9908 = vpop.permute.xlu0 %9907
      %9909 = vrot.lane.b32.xlu0 %v9665, 64
      %v9910 = vpop.permute.xlu0 %9909
      %9911 = vrot.lane.b32.xlu0 %v9666, 64
      %v9912 = vpop.permute.xlu0 %9911
      %9913 = vrot.lane.b32.xlu0 %v9667, 64
      %v9914 = vpop.permute.xlu0 %9913
      %9915 = vrot.lane.b32.xlu0 %v9668, 64
      %v9916 = vpop.permute.xlu0 %9915
      %v9925 = vsel %vm658, %v9597, %v9678
      %v9926 = vsel %vm658, %v9598, %v9680
      %v9927 = vsel %vm658, %v9599, %v9682
      %v9928 = vsel %vm658, %v9600, %v9684
      %v9929 = vsel %vm658, %v9601, %v9686
      %v9930 = vsel %vm658, %v9602, %v9688
      %v9931 = vsel %vm658, %v9603, %v9690
      %v9932 = vsel %vm658, %v9604, %v9692
      %v9933 = vsel %vm2155, %v9925, %v9710
      %v9934 = vsel %vm2155, %v9926, %v9712
      %v9935 = vsel %vm2155, %v9927, %v9714
      %v9936 = vsel %vm2155, %v9928, %v9716
      %v9937 = vsel %vm2155, %v9929, %v9718
      %v9938 = vsel %vm2155, %v9930, %v9720
      %v9939 = vsel %vm2155, %v9931, %v9722
      %v9940 = vsel %vm2155, %v9932, %v9724
      %v9941 = vsel %vm2221, %v9933, %v9742
      %v9942 = vsel %vm2221, %v9934, %v9744
      %v9943 = vsel %vm2221, %v9935, %v9746
      %v9944 = vsel %vm2221, %v9936, %v9748
      %v9945 = vsel %vm2221, %v9937, %v9750
      %v9946 = vsel %vm2221, %v9938, %v9752
      %v9947 = vsel %vm2221, %v9939, %v9754
      %v9948 = vsel %vm2221, %v9940, %v9756
      %v9949 = vsel %vm2287, %v9941, %v9774
      %v9950 = vsel %vm2287, %v9942, %v9776
      %v9951 = vsel %vm2287, %v9943, %v9778
      %v9952 = vsel %vm2287, %v9944, %v9780
      %v9953 = vsel %vm2287, %v9945, %v9782
      %v9954 = vsel %vm2287, %v9946, %v9784
      %v9955 = vsel %vm2287, %v9947, %v9786
      %v9956 = vsel %vm2287, %v9948, %v9788
      %v9957 = vsel %vm9408, %v9949, %v9806
      %v9958 = vsel %vm9408, %v9950, %v9808
      %v9959 = vsel %vm9408, %v9951, %v9810
      %v9960 = vsel %vm9408, %v9952, %v9812
      %v9961 = vsel %vm9408, %v9953, %v9814
      %v9962 = vsel %vm9408, %v9954, %v9816
      %v9963 = vsel %vm9408, %v9955, %v9818
      %v9964 = vsel %vm9408, %v9956, %v9820
      %v9965 = vsel %vm9417, %v9957, %v9838
      %v9966 = vsel %vm9417, %v9958, %v9840
      %v9967 = vsel %vm9417, %v9959, %v9842
      %v9968 = vsel %vm9417, %v9960, %v9844
      %v9969 = vsel %vm9417, %v9961, %v9846
      %v9970 = vsel %vm9417, %v9962, %v9848
      %v9971 = vsel %vm9417, %v9963, %v9850
      %v9972 = vsel %vm9417, %v9964, %v9852
      %v9973 = vsel %vm9426, %v9965, %v9870
      %v9974 = vsel %vm9426, %v9966, %v9872
      %v9975 = vsel %vm9426, %v9967, %v9874
      %v9976 = vsel %vm9426, %v9968, %v9876
      %v9977 = vsel %vm9426, %v9969, %v9878
      %v9978 = vsel %vm9426, %v9970, %v9880
      %v9979 = vsel %vm9426, %v9971, %v9882
      %v9980 = vsel %vm9426, %v9972, %v9884
      %v9981 = vsel %vm9435, %v9973, %v9902
      %v9982 = vsel %vm9435, %v9974, %v9904
      %v9983 = vsel %vm9435, %v9975, %v9906
      %v9984 = vsel %vm9435, %v9976, %v9908
      %v9985 = vsel %vm9435, %v9977, %v9910
      %v9986 = vsel %vm9435, %v9978, %v9912
      %v9987 = vsel %vm9435, %v9979, %v9914
      %v9988 = vsel %vm9435, %v9980, %v9916
      %v9989 = vpack.c.bf16 %v9982, %v9981
      %v9990 = vpack.c.bf16 %v9984, %v9983
      %v9991 = vpack.c.bf16 %v9986, %v9985
      %v9992 = vpack.c.bf16 %v9988, %v9987
      %v9993 = vld [vmem:[%s15] sm:$0xf]
      %v9994 = vld [vmem:[%s15 + $0x4] sm:$0xf]
      %v9995 = vld [vmem:[%s15 + $0x8] sm:$0xf]
      %v9996 = vld [vmem:[%s15 + $0xc] sm:$0xf]
      %v9997 = vld [vmem:[%s15 + $0x10] sm:$0xf]
      %v9998 = vld [vmem:[%s15 + $0x14] sm:$0xf]
      %v9999 = vld [vmem:[%s15 + $0x18] sm:$0xf]
      %v10000 = vld [vmem:[%s15 + $0x1c] sm:$0xf]
      %v10001 = vld [vmem:[%s15 + $0x20] sm:$0xf]
      %v10002 = vld [vmem:[%s16] sm:$0x1]
      %v10004 = vlaneseq
      %v10005 = vshrl.u32 %v10004, 7
      %v10006 = vsub.s32 0, %v10005
      %v10007 = vrot.slane %v10002, %v10006
      %v10018 = vunpack.c.l.b16 %v9993
      %v10019 = vunpack.c.l.b16 %v9994
      %v10020 = vunpack.c.l.b16 %v9995
      %v10021 = vunpack.c.l.b16 %v9996
      %v10022 = vunpack.c.l.b16 %v9997
      %v10023 = vunpack.c.l.b16 %v9998
      %v10024 = vunpack.c.l.b16 %v9999
      %v10025 = vunpack.c.l.b16 %v10000
      %v10026 = vunpack.c.l.b16 %v10001
      %v10027 = vpack.c.b16 %v10019, %v10018
      %v10028 = vpack.c.b16 %v10021, %v10020
      %v10029 = vpack.c.b16 %v10023, %v10022
      %v10030 = vpack.c.b16 %v10025, %v10024
      %v10031 = vpack.c.b16 %v10026, %v10026
      %v10037 = vsel %vm9491, %v9989, 0
      %v10040 = vsel %vm9491, %v9990, 0
      %v10043 = vsel %vm9491, %v9991, 0
      %v10046 = vsel %vm9491, %v9992, 0
      %v10049 = vsel %vm9504, %v10031, 0
      %10051 = vmatprep.subr.bf16.mxu0 0
      %10052 = vmatpush1.bf16.msra.mxu0 0
      %10053 = vmatprep.subr.bf16.mxu0 0
      %10054 = vmatpush1.bf16.msra.mxu0 0
      %10055 = vmatprep.subr.bf16.mxu0 0
      %10056 = vmatpush1.bf16.msra.mxu0 0
      %10057 = vmatprep.subr.bf16.mxu0 0
      %10058 = vmatpush1.bf16.msra.mxu0 %v10049
      %10059 = vmatprep.subr.bf16.mxu0 0
      %10060 = vmatpush1.bf16.msra.mxu0 %v10030
      %10061 = vmatprep.subr.bf16.mxu0 0
      %10062 = vmatpush1.bf16.msra.mxu0 %v10029
      %10063 = vmatprep.subr.bf16.mxu0 0
      %10064 = vmatpush1.bf16.msra.mxu0 %v10028
      %10065 = vmatprep.subr.bf16.mxu0 0
      %10066 = vmatpush1.bf16.msra.mxu0 %v10027
      %10067 = vmatprep.subr.bf16.mxu0 0
      %10068 = vmatpush2.bf16.msra.mxu0 0
      %10069 = vmatprep.subr.bf16.mxu0 0
      %10070 = vmatpush2.bf16.msra.mxu0 0
      %10071 = vmatprep.subr.bf16.mxu0 0
      %10072 = vmatpush2.bf16.msra.mxu0 0
      %10073 = vmatprep.subr.bf16.mxu0 0
      %10074 = vmatpush2.bf16.msra.mxu0 0
      %10075 = vmatprep.subr.bf16.mxu0 0
      %10076 = vmatpush2.bf16.msra.mxu0 0
      %10077 = vmatprep.subr.bf16.mxu0 0
      %10078 = vmatpush2.bf16.msra.mxu0 0
      %10079 = vmatprep.subr.bf16.mxu0 0
      %10080 = vmatpush2.bf16.msra.mxu0 0
      %10081 = vmatprep.subr.bf16.mxu0 0
      %10082 = vmatpush2.bf16.msra.mxu0 0
      %10083 = vmatprep.mubr.bf16.mxu0 0
      %10084 = vmatmul.mubr.bf16.gmra.mxu0 %v10037
      %v10085 = vpop.f32.mrf.mxu0
      %v10086 = vadd.f32 %v10007, %v10085
      %v10087 = vpop.f32.mrf.mxu0
      %v10088 = vpop.f32.mrf.mxu0
      %v10089 = vadd.f32 %v10007, %v10088
      %v10090 = vpop.f32.mrf.mxu0
      %10091 = vmatprep.mubr.bf16.mxu0 0
      %10092 = vmatmul.mubr.bf16.gmra.mxu0 %v10040
      %v10093 = vpop.f32.mrf.mxu0
      %v10094 = vadd.f32 %v10007, %v10093
      %v10095 = vpop.f32.mrf.mxu0
      %v10096 = vpop.f32.mrf.mxu0
      %v10097 = vadd.f32 %v10007, %v10096
      %v10098 = vpop.f32.mrf.mxu0
      %10099 = vmatprep.mubr.bf16.mxu0 0
      %10100 = vmatmul.mubr.bf16.gmra.mxu0 %v10043
      %v10101 = vpop.f32.mrf.mxu0
      %v10102 = vadd.f32 %v10007, %v10101
      %v10103 = vpop.f32.mrf.mxu0
      %v10104 = vpop.f32.mrf.mxu0
      %v10105 = vadd.f32 %v10007, %v10104
      %v10106 = vpop.f32.mrf.mxu0
      %10107 = vmatprep.mubr.bf16.mxu0 0
      %10108 = vmatmul.mubr.bf16.gmra.mxu0 %v10046
      %v10109 = vpop.f32.mrf.mxu0
      %v10110 = vadd.f32 %v10007, %v10109
      %v10111 = vpop.f32.mrf.mxu0
      %v10112 = vpop.f32.mrf.mxu0
      %v10113 = vadd.f32 %v10007, %v10112
      %v10114 = vpop.f32.mrf.mxu0
      %10115 = vdwg.mxu0
      %v10116 = vmax.f32 %v10086, 0.0
      %v10117 = vmax.f32 %v10089, 0.0
      %v10118 = vmax.f32 %v10094, 0.0
      %v10119 = vmax.f32 %v10097, 0.0
      %v10120 = vmax.f32 %v10102, 0.0
      %v10121 = vmax.f32 %v10105, 0.0
      %v10122 = vmax.f32 %v10110, 0.0
      %v10123 = vmax.f32 %v10113, 0.0
      %10124 = vst.msk [vmem:[%s9038 + $0x1] sm:$0xff] %vm658, %v10116
      %10125 = vst.msk [vmem:[%s9038 + $0x11] sm:$0xff] %vm658, %v10117
      %10126 = vst.msk [vmem:[%s9038 + $0x21] sm:$0xff] %vm658, %v10118
      %10127 = vst.msk [vmem:[%s9038 + $0x31] sm:$0xff] %vm658, %v10119
      %10128 = vst.msk [vmem:[%s9038 + $0x41] sm:$0xff] %vm658, %v10120
      %10129 = vst.msk [vmem:[%s9038 + $0x51] sm:$0xff] %vm658, %v10121
      %10130 = vst.msk [vmem:[%s9038 + $0x61] sm:$0xff] %vm658, %v10122
      %10131 = vst.msk [vmem:[%s9038 + $0x71] sm:$0xff] %vm658, %v10123
      %v10132 = vld [vmem:[#allocation3] sm:$0xff]
      %v10133 = vld [vmem:[#allocation3 + $0x10] sm:$0xff]
      %v10134 = vld [vmem:[#allocation3 + $0x20] sm:$0xff]
      %v10135 = vld [vmem:[#allocation3 + $0x30] sm:$0xff]
      %v10136 = vld [vmem:[#allocation3 + $0x40] sm:$0xff]
      %v10137 = vld [vmem:[#allocation3 + $0x50] sm:$0xff]
      %v10138 = vld [vmem:[#allocation3 + $0x60] sm:$0xff]
      %v10139 = vld [vmem:[#allocation3 + $0x70] sm:$0xff]
      %v10140 = vld [vmem:[#allocation3 + $0x1] sm:$0xff]
      %v10141 = vld [vmem:[#allocation3 + $0x11] sm:$0xff]
      %v10142 = vld [vmem:[#allocation3 + $0x21] sm:$0xff]
      %v10143 = vld [vmem:[#allocation3 + $0x31] sm:$0xff]
      %v10144 = vld [vmem:[#allocation3 + $0x41] sm:$0xff]
      %v10145 = vld [vmem:[#allocation3 + $0x51] sm:$0xff]
      %v10146 = vld [vmem:[#allocation3 + $0x61] sm:$0xff]
      %v10147 = vld [vmem:[#allocation3 + $0x71] sm:$0xff]
      %v10148 = vld [vmem:[#allocation3 + $0x2] sm:$0xff]
      %v10149 = vld [vmem:[#allocation3 + $0x12] sm:$0xff]
      %v10150 = vld [vmem:[#allocation3 + $0x22] sm:$0xff]
      %v10151 = vld [vmem:[#allocation3 + $0x32] sm:$0xff]
      %v10152 = vld [vmem:[#allocation3 + $0x42] sm:$0xff]
      %v10153 = vld [vmem:[#allocation3 + $0x52] sm:$0xff]
      %v10154 = vld [vmem:[#allocation3 + $0x62] sm:$0xff]
      %v10155 = vld [vmem:[#allocation3 + $0x72] sm:$0xff]
      %v10156 = vld [vmem:[%s9038] sm:$0xff]
      %v10157 = vld [vmem:[%s9038 + $0x10] sm:$0xff]
      %v10158 = vld [vmem:[%s9038 + $0x20] sm:$0xff]
      %v10159 = vld [vmem:[%s9038 + $0x30] sm:$0xff]
      %v10160 = vld [vmem:[%s9038 + $0x40] sm:$0xff]
      %v10161 = vld [vmem:[%s9038 + $0x50] sm:$0xff]
      %v10162 = vld [vmem:[%s9038 + $0x60] sm:$0xff]
      %v10163 = vld [vmem:[%s9038 + $0x70] sm:$0xff]
      %v10164 = vld [vmem:[%s9038 + $0x1] sm:$0xff]
      %v10165 = vld [vmem:[%s9038 + $0x11] sm:$0xff]
      %v10166 = vld [vmem:[%s9038 + $0x21] sm:$0xff]
      %v10167 = vld [vmem:[%s9038 + $0x31] sm:$0xff]
      %v10168 = vld [vmem:[%s9038 + $0x41] sm:$0xff]
      %v10169 = vld [vmem:[%s9038 + $0x51] sm:$0xff]
      %v10170 = vld [vmem:[%s9038 + $0x61] sm:$0xff]
      %v10171 = vld [vmem:[%s9038 + $0x71] sm:$0xff]
      %v10172 = vld [vmem:[%s9038 + $0x2] sm:$0xff]
      %v10173 = vld [vmem:[%s9038 + $0x12] sm:$0xff]
      %v10174 = vld [vmem:[%s9038 + $0x22] sm:$0xff]
      %v10175 = vld [vmem:[%s9038 + $0x32] sm:$0xff]
      %v10176 = vld [vmem:[%s9038 + $0x42] sm:$0xff]
      %v10177 = vld [vmem:[%s9038 + $0x52] sm:$0xff]
      %v10178 = vld [vmem:[%s9038 + $0x62] sm:$0xff]
      %v10179 = vld [vmem:[%s9038 + $0x72] sm:$0xff]
      %v10180 = vld [vmem:[%s9095] sm:$0xff]
      %v10181 = vld [vmem:[%s9095 + $0x10] sm:$0xff]
      %v10182 = vld [vmem:[%s9095 + $0x20] sm:$0xff]
      %v10183 = vld [vmem:[%s9095 + $0x30] sm:$0xff]
      %v10184 = vld [vmem:[%s9095 + $0x40] sm:$0xff]
      %v10185 = vld [vmem:[%s9095 + $0x50] sm:$0xff]
      %v10186 = vld [vmem:[%s9095 + $0x60] sm:$0xff]
      %v10187 = vld [vmem:[%s9095 + $0x70] sm:$0xff]
      %v10188 = vld [vmem:[%s9095 + $0x1] sm:$0xff]
      %v10189 = vld [vmem:[%s9095 + $0x11] sm:$0xff]
      %v10190 = vld [vmem:[%s9095 + $0x21] sm:$0xff]
      %v10191 = vld [vmem:[%s9095 + $0x31] sm:$0xff]
      %v10192 = vld [vmem:[%s9095 + $0x41] sm:$0xff]
      %v10193 = vld [vmem:[%s9095 + $0x51] sm:$0xff]
      %v10194 = vld [vmem:[%s9095 + $0x61] sm:$0xff]
      %v10195 = vld [vmem:[%s9095 + $0x71] sm:$0xff]
      %v10196 = vld [vmem:[%s9095 + $0x2] sm:$0xff]
      %v10197 = vld [vmem:[%s9095 + $0x12] sm:$0xff]
      %v10198 = vld [vmem:[%s9095 + $0x22] sm:$0xff]
      %v10199 = vld [vmem:[%s9095 + $0x32] sm:$0xff]
      %v10200 = vld [vmem:[%s9095 + $0x42] sm:$0xff]
      %v10201 = vld [vmem:[%s9095 + $0x52] sm:$0xff]
      %v10202 = vld [vmem:[%s9095 + $0x62] sm:$0xff]
      %v10203 = vld [vmem:[%s9095 + $0x72] sm:$0xff]
      %10212 = vrot.lane.b32.xlu0 %v10140, 8
      %v10213 = vpop.permute.xlu0 %10212
      %10214 = vrot.lane.b32.xlu0 %v10141, 8
      %v10215 = vpop.permute.xlu0 %10214
      %10216 = vrot.lane.b32.xlu0 %v10142, 8
      %v10217 = vpop.permute.xlu0 %10216
      %10218 = vrot.lane.b32.xlu0 %v10143, 8
      %v10219 = vpop.permute.xlu0 %10218
      %10220 = vrot.lane.b32.xlu0 %v10144, 8
      %v10221 = vpop.permute.xlu0 %10220
      %10222 = vrot.lane.b32.xlu0 %v10145, 8
      %v10223 = vpop.permute.xlu0 %10222
      %10224 = vrot.lane.b32.xlu0 %v10146, 8
      %v10225 = vpop.permute.xlu0 %10224
      %10226 = vrot.lane.b32.xlu0 %v10147, 8
      %v10227 = vpop.permute.xlu0 %10226
      %10244 = vrot.lane.b32.xlu0 %v10148, 16
      %v10245 = vpop.permute.xlu0 %10244
      %10246 = vrot.lane.b32.xlu0 %v10149, 16
      %v10247 = vpop.permute.xlu0 %10246
      %10248 = vrot.lane.b32.xlu0 %v10150, 16
      %v10249 = vpop.permute.xlu0 %10248
      %10250 = vrot.lane.b32.xlu0 %v10151, 16
      %v10251 = vpop.permute.xlu0 %10250
      %10252 = vrot.lane.b32.xlu0 %v10152, 16
      %v10253 = vpop.permute.xlu0 %10252
      %10254 = vrot.lane.b32.xlu0 %v10153, 16
      %v10255 = vpop.permute.xlu0 %10254
      %10256 = vrot.lane.b32.xlu0 %v10154, 16
      %v10257 = vpop.permute.xlu0 %10256
      %10258 = vrot.lane.b32.xlu0 %v10155, 16
      %v10259 = vpop.permute.xlu0 %10258
      %10276 = vrot.lane.b32.xlu0 %v10156, 24
      %v10277 = vpop.permute.xlu0 %10276
      %10278 = vrot.lane.b32.xlu0 %v10157, 24
      %v10279 = vpop.permute.xlu0 %10278
      %10280 = vrot.lane.b32.xlu0 %v10158, 24
      %v10281 = vpop.permute.xlu0 %10280
      %10282 = vrot.lane.b32.xlu0 %v10159, 24
      %v10283 = vpop.permute.xlu0 %10282
      %10284 = vrot.lane.b32.xlu0 %v10160, 24
      %v10285 = vpop.permute.xlu0 %10284
      %10286 = vrot.lane.b32.xlu0 %v10161, 24
      %v10287 = vpop.permute.xlu0 %10286
      %10288 = vrot.lane.b32.xlu0 %v10162, 24
      %v10289 = vpop.permute.xlu0 %10288
      %10290 = vrot.lane.b32.xlu0 %v10163, 24
      %v10291 = vpop.permute.xlu0 %10290
      %10308 = vrot.lane.b32.xlu0 %v10164, 32
      %v10309 = vpop.permute.xlu0 %10308
      %10310 = vrot.lane.b32.xlu0 %v10165, 32
      %v10311 = vpop.permute.xlu0 %10310
      %10312 = vrot.lane.b32.xlu0 %v10166, 32
      %v10313 = vpop.permute.xlu0 %10312
      %10314 = vrot.lane.b32.xlu0 %v10167, 32
      %v10315 = vpop.permute.xlu0 %10314
      %10316 = vrot.lane.b32.xlu0 %v10168, 32
      %v10317 = vpop.permute.xlu0 %10316
      %10318 = vrot.lane.b32.xlu0 %v10169, 32
      %v10319 = vpop.permute.xlu0 %10318
      %10320 = vrot.lane.b32.xlu0 %v10170, 32
      %v10321 = vpop.permute.xlu0 %10320
      %10322 = vrot.lane.b32.xlu0 %v10171, 32
      %v10323 = vpop.permute.xlu0 %10322
      %10340 = vrot.lane.b32.xlu0 %v10172, 40
      %v10341 = vpop.permute.xlu0 %10340
      %10342 = vrot.lane.b32.xlu0 %v10173, 40
      %v10343 = vpop.permute.xlu0 %10342
      %10344 = vrot.lane.b32.xlu0 %v10174, 40
      %v10345 = vpop.permute.xlu0 %10344
      %10346 = vrot.lane.b32.xlu0 %v10175, 40
      %v10347 = vpop.permute.xlu0 %10346
      %10348 = vrot.lane.b32.xlu0 %v10176, 40
      %v10349 = vpop.permute.xlu0 %10348
      %10350 = vrot.lane.b32.xlu0 %v10177, 40
      %v10351 = vpop.permute.xlu0 %10350
      %10352 = vrot.lane.b32.xlu0 %v10178, 40
      %v10353 = vpop.permute.xlu0 %10352
      %10354 = vrot.lane.b32.xlu0 %v10179, 40
      %v10355 = vpop.permute.xlu0 %10354
      %10372 = vrot.lane.b32.xlu0 %v10180, 48
      %v10373 = vpop.permute.xlu0 %10372
      %10374 = vrot.lane.b32.xlu0 %v10181, 48
      %v10375 = vpop.permute.xlu0 %10374
      %10376 = vrot.lane.b32.xlu0 %v10182, 48
      %v10377 = vpop.permute.xlu0 %10376
      %10378 = vrot.lane.b32.xlu0 %v10183, 48
      %v10379 = vpop.permute.xlu0 %10378
      %10380 = vrot.lane.b32.xlu0 %v10184, 48
      %v10381 = vpop.permute.xlu0 %10380
      %10382 = vrot.lane.b32.xlu0 %v10185, 48
      %v10383 = vpop.permute.xlu0 %10382
      %10384 = vrot.lane.b32.xlu0 %v10186, 48
      %v10385 = vpop.permute.xlu0 %10384
      %10386 = vrot.lane.b32.xlu0 %v10187, 48
      %v10387 = vpop.permute.xlu0 %10386
      %10404 = vrot.lane.b32.xlu0 %v10188, 56
      %v10405 = vpop.permute.xlu0 %10404
      %10406 = vrot.lane.b32.xlu0 %v10189, 56
      %v10407 = vpop.permute.xlu0 %10406
      %10408 = vrot.lane.b32.xlu0 %v10190, 56
      %v10409 = vpop.permute.xlu0 %10408
      %10410 = vrot.lane.b32.xlu0 %v10191, 56
      %v10411 = vpop.permute.xlu0 %10410
      %10412 = vrot.lane.b32.xlu0 %v10192, 56
      %v10413 = vpop.permute.xlu0 %10412
      %10414 = vrot.lane.b32.xlu0 %v10193, 56
      %v10415 = vpop.permute.xlu0 %10414
      %10416 = vrot.lane.b32.xlu0 %v10194, 56
      %v10417 = vpop.permute.xlu0 %10416
      %10418 = vrot.lane.b32.xlu0 %v10195, 56
      %v10419 = vpop.permute.xlu0 %10418
      %10436 = vrot.lane.b32.xlu0 %v10196, 64
      %v10437 = vpop.permute.xlu0 %10436
      %10438 = vrot.lane.b32.xlu0 %v10197, 64
      %v10439 = vpop.permute.xlu0 %10438
      %10440 = vrot.lane.b32.xlu0 %v10198, 64
      %v10441 = vpop.permute.xlu0 %10440
      %10442 = vrot.lane.b32.xlu0 %v10199, 64
      %v10443 = vpop.permute.xlu0 %10442
      %10444 = vrot.lane.b32.xlu0 %v10200, 64
      %v10445 = vpop.permute.xlu0 %10444
      %10446 = vrot.lane.b32.xlu0 %v10201, 64
      %v10447 = vpop.permute.xlu0 %10446
      %10448 = vrot.lane.b32.xlu0 %v10202, 64
      %v10449 = vpop.permute.xlu0 %10448
      %10450 = vrot.lane.b32.xlu0 %v10203, 64
      %v10451 = vpop.permute.xlu0 %10450
      %v10460 = vsel %vm658, %v10132, %v10213
      %v10461 = vsel %vm658, %v10133, %v10215
      %v10462 = vsel %vm658, %v10134, %v10217
      %v10463 = vsel %vm658, %v10135, %v10219
      %v10464 = vsel %vm658, %v10136, %v10221
      %v10465 = vsel %vm658, %v10137, %v10223
      %v10466 = vsel %vm658, %v10138, %v10225
      %v10467 = vsel %vm658, %v10139, %v10227
      %v10468 = vsel %vm2155, %v10460, %v10245
      %v10469 = vsel %vm2155, %v10461, %v10247
      %v10470 = vsel %vm2155, %v10462, %v10249
      %v10471 = vsel %vm2155, %v10463, %v10251
      %v10472 = vsel %vm2155, %v10464, %v10253
      %v10473 = vsel %vm2155, %v10465, %v10255
      %v10474 = vsel %vm2155, %v10466, %v10257
      %v10475 = vsel %vm2155, %v10467, %v10259
      %v10476 = vsel %vm2221, %v10468, %v10277
      %v10477 = vsel %vm2221, %v10469, %v10279
      %v10478 = vsel %vm2221, %v10470, %v10281
      %v10479 = vsel %vm2221, %v10471, %v10283
      %v10480 = vsel %vm2221, %v10472, %v10285
      %v10481 = vsel %vm2221, %v10473, %v10287
      %v10482 = vsel %vm2221, %v10474, %v10289
      %v10483 = vsel %vm2221, %v10475, %v10291
      %v10484 = vsel %vm2287, %v10476, %v10309
      %v10485 = vsel %vm2287, %v10477, %v10311
      %v10486 = vsel %vm2287, %v10478, %v10313
      %v10487 = vsel %vm2287, %v10479, %v10315
      %v10488 = vsel %vm2287, %v10480, %v10317
      %v10489 = vsel %vm2287, %v10481, %v10319
      %v10490 = vsel %vm2287, %v10482, %v10321
      %v10491 = vsel %vm2287, %v10483, %v10323
      %v10492 = vsel %vm9408, %v10484, %v10341
      %v10493 = vsel %vm9408, %v10485, %v10343
      %v10494 = vsel %vm9408, %v10486, %v10345
      %v10495 = vsel %vm9408, %v10487, %v10347
      %v10496 = vsel %vm9408, %v10488, %v10349
      %v10497 = vsel %vm9408, %v10489, %v10351
      %v10498 = vsel %vm9408, %v10490, %v10353
      %v10499 = vsel %vm9408, %v10491, %v10355
      %v10500 = vsel %vm9417, %v10492, %v10373
      %v10501 = vsel %vm9417, %v10493, %v10375
      %v10502 = vsel %vm9417, %v10494, %v10377
      %v10503 = vsel %vm9417, %v10495, %v10379
      %v10504 = vsel %vm9417, %v10496, %v10381
      %v10505 = vsel %vm9417, %v10497, %v10383
      %v10506 = vsel %vm9417, %v10498, %v10385
      %v10507 = vsel %vm9417, %v10499, %v10387
      %v10508 = vsel %vm9426, %v10500, %v10405
      %v10509 = vsel %vm9426, %v10501, %v10407
      %v10510 = vsel %vm9426, %v10502, %v10409
      %v10511 = vsel %vm9426, %v10503, %v10411
      %v10512 = vsel %vm9426, %v10504, %v10413
      %v10513 = vsel %vm9426, %v10505, %v10415
      %v10514 = vsel %vm9426, %v10506, %v10417
      %v10515 = vsel %vm9426, %v10507, %v10419
      %v10516 = vsel %vm9435, %v10508, %v10437
      %v10517 = vsel %vm9435, %v10509, %v10439
      %v10518 = vsel %vm9435, %v10510, %v10441
      %v10519 = vsel %vm9435, %v10511, %v10443
      %v10520 = vsel %vm9435, %v10512, %v10445
      %v10521 = vsel %vm9435, %v10513, %v10447
      %v10522 = vsel %vm9435, %v10514, %v10449
      %v10523 = vsel %vm9435, %v10515, %v10451
      %v10524 = vpack.c.bf16 %v10517, %v10516
      %v10525 = vpack.c.bf16 %v10519, %v10518
      %v10526 = vpack.c.bf16 %v10521, %v10520
      %v10527 = vpack.c.bf16 %v10523, %v10522
      %v10528 = vld [vmem:[%s17] sm:$0xf]
      %v10529 = vld [vmem:[%s17 + $0x4] sm:$0xf]
      %v10530 = vld [vmem:[%s17 + $0x8] sm:$0xf]
      %v10531 = vld [vmem:[%s17 + $0xc] sm:$0xf]
      %v10532 = vld [vmem:[%s17 + $0x10] sm:$0xf]
      %v10533 = vld [vmem:[%s17 + $0x14] sm:$0xf]
      %v10534 = vld [vmem:[%s17 + $0x18] sm:$0xf]
      %v10535 = vld [vmem:[%s17 + $0x1c] sm:$0xf]
      %v10536 = vld [vmem:[%s17 + $0x20] sm:$0xf]
      %v10537 = vld [vmem:[%s18] sm:$0x1]
      %v10539 = vlaneseq
      %v10540 = vshrl.u32 %v10539, 7
      %v10541 = vsub.s32 0, %v10540
      %v10542 = vrot.slane %v10537, %v10541
      %v10553 = vunpack.c.l.b16 %v10528
      %v10554 = vunpack.c.l.b16 %v10529
      %v10555 = vunpack.c.l.b16 %v10530
      %v10556 = vunpack.c.l.b16 %v10531
      %v10557 = vunpack.c.l.b16 %v10532
      %v10558 = vunpack.c.l.b16 %v10533
      %v10559 = vunpack.c.l.b16 %v10534
      %v10560 = vunpack.c.l.b16 %v10535
      %v10561 = vunpack.c.l.b16 %v10536
      %v10562 = vpack.c.b16 %v10554, %v10553
      %v10563 = vpack.c.b16 %v10556, %v10555
      %v10564 = vpack.c.b16 %v10558, %v10557
      %v10565 = vpack.c.b16 %v10560, %v10559
      %v10566 = vpack.c.b16 %v10561, %v10561
      %v10572 = vsel %vm9491, %v10524, 0
      %v10575 = vsel %vm9491, %v10525, 0
      %v10578 = vsel %vm9491, %v10526, 0
      %v10581 = vsel %vm9491, %v10527, 0
      %v10584 = vsel %vm9504, %v10566, 0
      %10586 = vmatprep.subr.bf16.mxu0 0
      %10587 = vmatpush1.bf16.msra.mxu0 0
      %10588 = vmatprep.subr.bf16.mxu0 0
      %10589 = vmatpush1.bf16.msra.mxu0 0
      %10590 = vmatprep.subr.bf16.mxu0 0
      %10591 = vmatpush1.bf16.msra.mxu0 0
      %10592 = vmatprep.subr.bf16.mxu0 0
      %10593 = vmatpush1.bf16.msra.mxu0 %v10584
      %10594 = vmatprep.subr.bf16.mxu0 0
      %10595 = vmatpush1.bf16.msra.mxu0 %v10565
      %10596 = vmatprep.subr.bf16.mxu0 0
      %10597 = vmatpush1.bf16.msra.mxu0 %v10564
      %10598 = vmatprep.subr.bf16.mxu0 0
      %10599 = vmatpush1.bf16.msra.mxu0 %v10563
      %10600 = vmatprep.subr.bf16.mxu0 0
      %10601 = vmatpush1.bf16.msra.mxu0 %v10562
      %10602 = vmatprep.subr.bf16.mxu0 0
      %10603 = vmatpush2.bf16.msra.mxu0 0
      %10604 = vmatprep.subr.bf16.mxu0 0
      %10605 = vmatpush2.bf16.msra.mxu0 0
      %10606 = vmatprep.subr.bf16.mxu0 0
      %10607 = vmatpush2.bf16.msra.mxu0 0
      %10608 = vmatprep.subr.bf16.mxu0 0
      %10609 = vmatpush2.bf16.msra.mxu0 0
      %10610 = vmatprep.subr.bf16.mxu0 0
      %10611 = vmatpush2.bf16.msra.mxu0 0
      %10612 = vmatprep.subr.bf16.mxu0 0
      %10613 = vmatpush2.bf16.msra.mxu0 0
      %10614 = vmatprep.subr.bf16.mxu0 0
      %10615 = vmatpush2.bf16.msra.mxu0 0
      %10616 = vmatprep.subr.bf16.mxu0 0
      %10617 = vmatpush2.bf16.msra.mxu0 0
      %10618 = vmatprep.mubr.bf16.mxu0 0
      %10619 = vmatmul.mubr.bf16.gmra.mxu0 %v10572
      %v10620 = vpop.f32.mrf.mxu0
      %v10621 = vadd.f32 %v10542, %v10620
      %v10622 = vpop.f32.mrf.mxu0
      %v10623 = vpop.f32.mrf.mxu0
      %v10624 = vadd.f32 %v10542, %v10623
      %v10625 = vpop.f32.mrf.mxu0
      %10626 = vmatprep.mubr.bf16.mxu0 0
      %10627 = vmatmul.mubr.bf16.gmra.mxu0 %v10575
      %v10628 = vpop.f32.mrf.mxu0
      %v10629 = vadd.f32 %v10542, %v10628
      %v10630 = vpop.f32.mrf.mxu0
      %v10631 = vpop.f32.mrf.mxu0
      %v10632 = vadd.f32 %v10542, %v10631
      %v10633 = vpop.f32.mrf.mxu0
      %10634 = vmatprep.mubr.bf16.mxu0 0
      %10635 = vmatmul.mubr.bf16.gmra.mxu0 %v10578
      %v10636 = vpop.f32.mrf.mxu0
      %v10637 = vadd.f32 %v10542, %v10636
      %v10638 = vpop.f32.mrf.mxu0
      %v10639 = vpop.f32.mrf.mxu0
      %v10640 = vadd.f32 %v10542, %v10639
      %v10641 = vpop.f32.mrf.mxu0
      %10642 = vmatprep.mubr.bf16.mxu0 0
      %10643 = vmatmul.mubr.bf16.gmra.mxu0 %v10581
      %v10644 = vpop.f32.mrf.mxu0
      %v10645 = vadd.f32 %v10542, %v10644
      %v10646 = vpop.f32.mrf.mxu0
      %v10647 = vpop.f32.mrf.mxu0
      %v10648 = vadd.f32 %v10542, %v10647
      %v10649 = vpop.f32.mrf.mxu0
      %10650 = vdwg.mxu0
      %v10651 = vadd.f32 %v10621, %v9581
      %v10652 = vadd.f32 %v10624, %v9582
      %v10653 = vadd.f32 %v10629, %v9583
      %v10654 = vadd.f32 %v10632, %v9584
      %v10655 = vadd.f32 %v10637, %v9585
      %v10656 = vadd.f32 %v10640, %v9586
      %v10657 = vadd.f32 %v10645, %v9587
      %v10658 = vadd.f32 %v10648, %v9588
      %v10659 = vmax.f32 %v10651, 0.0
      %v10660 = vmax.f32 %v10652, 0.0
      %v10661 = vmax.f32 %v10653, 0.0
      %v10662 = vmax.f32 %v10654, 0.0
      %v10663 = vmax.f32 %v10655, 0.0
      %v10664 = vmax.f32 %v10656, 0.0
      %v10665 = vmax.f32 %v10657, 0.0
      %v10666 = vmax.f32 %v10658, 0.0
      %10667 = vxpose.xlu0.b32.start [1/16] %v10659, 128
      %10668 = vxpose.xlu0.b32.cont [2/16] %v10660, 128
      %10669 = vxpose.xlu0.b32.cont [3/16] %v10661, 128
      %10670 = vxpose.xlu0.b32.cont [4/16] %v10662, 128
      %10671 = vxpose.xlu0.b32.cont [5/16] %v10663, 128
      %10672 = vxpose.xlu0.b32.cont [6/16] %v10664, 128
      %10673 = vxpose.xlu0.b32.cont [7/16] %v10665, 128
      %10674 = vxpose.xlu0.b32.cont [8/16] %v10666, 128
      %10675 = vxpose.xlu0.b32.cont [9/16] 0.0, 128
      %10676 = vxpose.xlu0.b32.cont [10/16] 0.0, 128
      %10677 = vxpose.xlu0.b32.cont [11/16] 0.0, 128
      %10678 = vxpose.xlu0.b32.cont [12/16] 0.0, 128
      %10679 = vxpose.xlu0.b32.cont [13/16] 0.0, 128
      %10680 = vxpose.xlu0.b32.cont [14/16] 0.0, 128
      %10681 = vxpose.xlu0.b32.cont [15/16] 0.0, 128
      %10682 = vxpose.xlu0.b32.end [16/16] 0.0, 128
      %v10683 = vpop.trf.xlu0
      %v10684 = vpop.trf.xlu0
      %v10685 = vpop.trf.xlu0
      %v10686 = vpop.trf.xlu0
      %v10687 = vpop.trf.xlu0
      %v10688 = vpop.trf.xlu0
      %v10689 = vpop.trf.xlu0
      %v10690 = vpop.trf.xlu0
      %v10691 = vpop.trf.xlu0
      %v10692 = vpop.trf.xlu0
      %v10693 = vpop.trf.xlu0
      %v10694 = vpop.trf.xlu0
      %v10695 = vpop.trf.xlu0
      %v10696 = vpop.trf.xlu0
      %v10697 = vpop.trf.xlu0
      %v10698 = vpop.trf.xlu0
      %10699 = vst.msk [vmem:[%s600] sm:$0xff] %vm9435, %v10683
      %p10700 = scmp.lt.s32.totalorder %s30, 1
      %s10701 = scalar_select %p10700, %s30, 1
      %s10702 = smul.addr %s10701, 8
      %s10703 = scalar_lea.vmem %s19, %s10702
      // Predicated region
      $region97: #{layer2_forward.1} parent=95 // pred_check
        %p10704 = pneg %p452
      $region98: #{layer2_forward.1} parent=95 // pred_check_branch
        %10706 = sbr.rel (%p10704) target = $region100
      $region99: #{layer2_forward.1} parent=95 // pred_region
        _
      $region100: #{layer2_forward.1} parent=95 // pred_fallthru
        _
    $region96: #{layer2_forward.1} parent=5 // pred_fallthru
      _
    %p10707 = scmp.le.s32.totalorder 2, %s25
    // Predicated region
    $region101: #{layer2_forward.1} parent=5 // pred_check
      %p10708 = pneg %p10707
    $region102: #{layer2_forward.1} parent=5 // pred_check_branch
      %10710 = sbr.rel (%p10708) target = $region104
    $region103: #{layer2_forward.1} parent=5 // pred_region
      %s10711 = ssub.s32 %s25, 2
      // Predicated region
      $region105: #{layer2_forward.1} parent=103 // pred_check
        %p10712 = pneg %p458
      $region106: #{layer2_forward.1} parent=103 // pred_check_branch
        %10714 = sbr.rel (%p10712) target = $region108
      $region107: #{layer2_forward.1} parent=103 // pred_region
        %p10715 = scmp.lt.s32.totalorder %s31, 1
        %s10716 = scalar_select %p10715, %s31, 1
        %s10717 = smul.addr %s10716, 8
        %s10718 = scalar_lea.vmem %s19, %s10717
      $region108: #{layer2_forward.1} parent=103 // pred_fallthru
        _
    $region104: #{layer2_forward.1} parent=5 // pred_fallthru
      _
  $region6: #{layer2_forward.1} parent=0 // loop_footer
    %s29 = sadd.s32 1, %s25
  $region7: #{layer2_forward.1} parent=0 // loop_footer_branch
    %24 = sbr.rel target = $region3
  $region8: #{layer2_forward.1} parent=0 // loop_exit
    _

</llo_original>
